<compile_context>
chip_gen: v7x
topology: tpu7x:2x2x1
jax: 0.10.0
libtpu: 0.0.40
codegen_flags: <defaults>
</compile_context>

<pallas_src>
import math

import numpy as np
import jax
import jax.numpy as jnp
from jax.experimental import pallas as pl
from jax.experimental.pallas import tpu as pltpu

BN_EPS = 1e-5
HID = 66  # hard-coded hidden width in the PyTorch model


def _round_up(x, m):
    return ((x + m - 1) // m) * m


# ----------------------------------------------------------------------------
# Fused Pallas kernel: whole network for one batch sample per grid step.
# ----------------------------------------------------------------------------
def _fused_kernel(x_ref,
                  mt_ref, resw_ref, resb_ref, dwsc_ref, dwbi_ref,
                  pww_ref, pwb_ref, pa_st_ref,
                  dh_ref, r0_ref, r12_ref, btx_ref, pa_tx_ref,
                  o_ref):
    f32, bf16 = jnp.float32, jnp.bfloat16
    n_st = mt_ref.shape[0]

    # ---------------- ST-GCNN stage: x is (C_pad, T*V) ----------------
    x = x_ref[0]
    for l in range(n_st):
        xb = x.astype(bf16)
        # residual branch (1x1 conv + folded BN; identity for equal channels)
        res = jnp.dot(resw_ref[l], xb, preferred_element_type=f32) + resb_ref[l]
        # graph + temporal einsums folded into a single (TV,TV) operator
        y = jnp.dot(xb, mt_ref[l], preferred_element_type=f32)
        # depthwise 1x1 (+ folded BN) -> ReLU6
        z = jnp.clip(y * dwsc_ref[l] + dwbi_ref[l], 0.0, 6.0)
        # pointwise 1x1
        out = jnp.dot(pww_ref[l], z.astype(bf16),
                      preferred_element_type=f32) + pwb_ref[l]
        out = out + res
        x = jnp.where(out >= 0.0, out, pa_st_ref[l] * out)           # PReLU

    # ---------------- TXCNN stage: xt is (H_pad, Tout_pad*V) ----------------
    n_kh = dh_ref.shape[0]
    h8 = btx_ref.shape[1]
    xt = x[0:h8, :]                           # (H_pad, T_in*V); rows >= C are zero

    # layer 0 (no residual)
    acc = btx_ref[0]                          # bias (folded BN), only on real rows/lanes
    xb = xt.astype(bf16)
    for kh in range(n_kh):
        sh = jnp.dot(dh_ref[kh], xb, preferred_element_type=f32)     # H-axis shift + zero pad
        acc = acc + jnp.dot(sh.astype(bf16), r0_ref[kh],
                            preferred_element_type=f32)              # (kw, time) taps folded
    xt = jnp.where(acc >= 0.0, acc, pa_tx_ref[0] * acc)

    # layers 1..n_tx-1 (with residual add)
    for i in range(r12_ref.shape[0]):
        xb = xt.astype(bf16)
        acc = btx_ref[i + 1]
        for kh in range(n_kh):
            sh = jnp.dot(dh_ref[kh], xb, preferred_element_type=f32)
            acc = acc + jnp.dot(sh.astype(bf16), r12_ref[i, kh],
                                preferred_element_type=f32)
        xt = jnp.where(acc >= 0.0, acc, pa_tx_ref[i + 1] * acc) + xt

    o_ref[0] = xt


def fused_forward_pallas(x_st, fp):
    N, CP, TV = x_st.shape
    H8, TVo = fp["btx"].shape[1], fp["btx"].shape[2]

    args = [x_st, fp["mt"], fp["resw"], fp["resb"], fp["dwsc"], fp["dwbi"],
            fp["pww"], fp["pwb"], fp["pa_st"],
            fp["dh"], fp["r0"], fp["r12"], fp["btx"], fp["pa_tx"]]

    def _full(a):
        nd = a.ndim
        return pl.BlockSpec(a.shape, lambda n, _nd=nd: (0,) * _nd)

    in_specs = ([pl.BlockSpec((1, CP, TV), lambda n: (n, 0, 0))]
                + [_full(a) for a in args[1:]])

    return pl.pallas_call(
        _fused_kernel,
        out_shape=jax.ShapeDtypeStruct((N, H8, TVo), jnp.float32),
        grid=(N,),
        in_specs=in_specs,
        out_specs=pl.BlockSpec((1, H8, TVo), lambda n: (n, 0, 0)),
        compiler_params=pltpu.CompilerParams(dimension_semantics=("parallel",)),
    )(*args)


# ----------------------------------------------------------------------------
# Parameter setup (deterministic) and operator folding
# ----------------------------------------------------------------------------
def _bn_fold(d):
    s = d["gamma"] / jnp.sqrt(d["var"] + BN_EPS)
    return s, d["beta"] - d["mean"] * s


def _bn_init(c):
    return dict(gamma=jnp.ones((c,), jnp.float32), beta=jnp.zeros((c,), jnp.float32),
                mean=jnp.zeros((c,), jnp.float32), var=jnp.ones((c,), jnp.float32))


def make_params(key, C_in, T_in, T_out, V, n_tx, txk):
    keys = iter(jax.random.split(key, 256))

    def u(shape, bound):
        return jax.random.uniform(next(keys), shape, jnp.float32, -bound, bound)

    st = []
    chans = [(C_in, HID), (HID, HID), (HID, HID), (HID, HID), (HID, C_in)]
    for ci, co in chans:
        p = dict(
            A=u((T_in, V, V), 1.0 / math.sqrt(V)),
            T=u((V, T_in, T_in), 1.0 / math.sqrt(T_in)),
            dw_w=u((ci,), 1.0), dw_b=u((ci,), 1.0), dw_bn=_bn_init(ci),
            pw_w=u((co, ci), 1.0 / math.sqrt(ci)),
            pw_b=u((co,), 1.0 / math.sqrt(ci)),
            prelu=jnp.float32(0.25),
        )
        if ci != co:
            p["res_w"] = u((co, ci), 1.0 / math.sqrt(ci))
            p["res_b"] = u((co,), 1.0 / math.sqrt(ci))
            p["res_bn"] = _bn_init(co)
        st.append(p)

    KH, KW = txk
    tx = []
    tio = [(T_in, T_out)] + [(T_out, T_out)] * (n_tx - 1)
    for ti, to in tio:
        bound = 1.0 / math.sqrt(ti * KH * KW)
        tx.append(dict(w=u((to, ti, KH, KW), bound), b=u((to,), bound),
                       bn=_bn_init(to), prelu=jnp.float32(0.25)))
    return dict(st=st, tx=tx)


def prepare_fused_params(params, maskA, maskT, C_in, T_in, T_out, V, txk):
    bf16 = jnp.bfloat16
    TV = T_in * V

    ch_max = C_in
    for p in params["st"]:
        ch_max = max(ch_max, p["pw_w"].shape[0], p["pw_w"].shape[1])
    CP = _round_up(ch_max, 8)                  # 66 -> 72

    eyeV = jnp.eye(V, dtype=jnp.float32)
    eyeT = jnp.eye(T_in, dtype=jnp.float32)

    mt_l, resw_l, resb_l = [], [], []
    dwsc_l, dwbi_l, pww_l, pwb_l, pa_l = [], [], [], [], []
    for l, p in enumerate(params["st"]):
        co, ci = p["pw_w"].shape
        Tt = maskT[l] * p["T"]                 # (V, T, T)
        Aa = maskA[l] * p["A"]                 # (T, V, V)
        # block matrices realizing the two einsums on the flattened (t*V+v) axis
        c1 = (jnp.transpose(Tt, (2, 0, 1))[:, :, :, None] *
              eyeV[None, :, None, :]).reshape(TV, TV)
        bd = (jnp.transpose(Aa, (0, 2, 1))[:, :, None, :] *
              eyeT[:, None, :, None]).reshape(TV, TV)
        mt_l.append(jnp.dot(bd, c1, precision="highest").T)   # fused operator (transposed)

        s, sh = _bn_fold(p["dw_bn"])
        dwsc_l.append(jnp.zeros((CP, 1), jnp.float32).at[:ci, 0].set(p["dw_w"] * s))
        dwbi_l.append(jnp.zeros((CP, 1), jnp.float32).at[:ci, 0].set(p["dw_b"] * s + sh))

        pww_l.append(jnp.zeros((CP, CP), jnp.float32).at[:co, :ci].set(p["pw_w"]))
        pwb_l.append(jnp.zeros((CP, 1), jnp.float32).at[:co, 0].set(p["pw_b"]))

        if "res_w" in p:
            rs, rsh = _bn_fold(p["res_bn"])
            resw_l.append(jnp.zeros((CP, CP), jnp.float32)
                          .at[:co, :ci].set(p["res_w"] * rs[:, None]))
            resb_l.append(jnp.zeros((CP, 1), jnp.float32)
                          .at[:co, 0].set(p["res_b"] * rs + rsh))
        else:
            resw_l.append(jnp.zeros((CP, CP), jnp.float32).at[:ci, :ci].set(jnp.eye(ci)))
            resb_l.append(jnp.zeros((CP, 1), jnp.float32))
        pa_l.append(jnp.full((CP, 1), p["prelu"], jnp.float32))

    fp = dict(
        mt=jnp.stack(mt_l).astype(bf16),
        resw=jnp.stack(resw_l).astype(bf16),
        resb=jnp.stack(resb_l),
        dwsc=jnp.stack(dwsc_l),
        dwbi=jnp.stack(dwbi_l),
        pww=jnp.stack(pww_l).astype(bf16),
        pwb=jnp.stack(pwb_l),
        pa_st=jnp.stack(pa_l),
    )

    # ------------------- TXCNN stage operators -------------------
    KH, KW = txk
    ph, pw = (KH - 1) // 2, (KW - 1) // 2
    H = C_in                                   # conv "height" = coordinate channels
    H8 = _round_up(H, 8)
    ToutP = _round_up(T_out, 8)                # 10 -> 16
    TVo = ToutP * V                            # lane-dense output width (256)

    # kw-tap selection matrices over the joint axis (W), SAME padding folded in
    S = np.zeros((KW, V, V), np.float32)
    for kw in range(KW):
        dw = kw - pw
        for vo in range(V):
            vi = vo + dw
            if 0 <= vi < V:
                S[kw, vi, vo] = 1.0
    S = jnp.asarray(S)

    # kh row-shift matrices over the coordinate axis (H), zero-pad + mask rows>=H
    D = np.zeros((KH, H8, H8), np.float32)
    for kh in range(KH):
        dh = kh - ph
        for c in range(H):
            cc = c + dh
            if 0 <= cc < H:
                D[kh, c, cc] = 1.0

    r_list, btx_l, patx_l = [], [], []
    for i, p in enumerate(params["tx"]):
        to_ch, ti_ch = p["w"].shape[0], p["w"].shape[1]
        s, sh = _bn_fold(p["bn"])
        Wf = p["w"] * s[:, None, None, None]   # (to, ti, KH, KW), BN scale folded
        bias_f = p["b"] * s + sh               # (to,)
        tin_lanes = ti_ch * V if i == 0 else TVo
        Rs = []
        for kh in range(KH):
            # R4[ti, vi, to, vo] = Wf[to, ti, kh, vi - vo + pw] (in-bounds), else 0
            R4 = jnp.einsum("oik,kvw->ivow", Wf[:, :, kh, :], S, precision="highest")
            R = R4.reshape(ti_ch * V, to_ch * V)
            Rs.append(jnp.zeros((tin_lanes, TVo), jnp.float32)
                      .at[:ti_ch * V, :to_ch * V].set(R))
        r_list.append(jnp.stack(Rs))           # (KH, tin_lanes, TVo)

        bias_lane = jnp.zeros((TVo,), jnp.float32).at[:to_ch * V].set(jnp.repeat(bias_f, V))
        btx_l.append(jnp.zeros((H8, TVo), jnp.float32).at[:H, :].set(bias_lane[None, :]))
        patx_l.append(jnp.full((H8, 1), p["prelu"], jnp.float32))

    fp.update(
        dh=jnp.asarray(D).astype(bf16),
        r0=r_list[0].astype(bf16),
        r12=jnp.stack(r_list[1:]).astype(bf16),
        btx=jnp.stack(btx_l),
        pa_tx=jnp.stack(patx_l),
    )
    return fp, CP, H8, TVo


def model_forward(x_nctv, maskA, maskT, params, txc_kernel_size):
    N, C, T, V = x_nctv.shape
    T_out = params["tx"][0]["w"].shape[0]
    fp, CP, H8, TVo = prepare_fused_params(params, maskA, maskT, C, T, T_out, V,
                                           txc_kernel_size)
    # (N, C, T, V) -> (N, C_pad, T*V): channels on sublanes, TV lane-dense
    x_st = jnp.zeros((N, CP, T * V), jnp.float32).at[:, :C, :].set(
        x_nctv.astype(jnp.float32).reshape(N, C, T * V))
    out = fused_forward_pallas(x_st, fp)                 # (N, H_pad, Tout_pad*V)
    out = out[:, :C, :T_out * V].reshape(N, C, T_out, V)
    return jnp.transpose(out, (0, 2, 1, 3))              # (N, T_out, C, V)


# ----------------------------------------------------------------------------
# Pure-JAX reference (mirrors the PyTorch forward in NCHW) for validation
# ----------------------------------------------------------------------------
def reference_forward(x, maskA, maskT, params, txc_kernel_size):
    def bn(y, d):
        s = d["gamma"] / jnp.sqrt(d["var"] + BN_EPS)
        return y * s[None, :, None, None] + (d["beta"] - d["mean"] * s)[None, :, None, None]

    def prelu(y, a):
        return jnp.where(y >= 0, y, a * y)

    for l, p in enumerate(params["st"]):
        if "res_w" in p:
            res = jnp.einsum("oi,nihw->nohw", p["res_w"], x) + p["res_b"][None, :, None, None]
            res = bn(res, p["res_bn"])
        else:
            res = x
        Tt = maskT[l] * p["T"]
        Aa = maskA[l] * p["A"]
        g = jnp.einsum("nctv,vtq->ncqv", x, Tt)
        g = jnp.einsum("nctv,tvw->nctw", g, Aa)
        z = g * p["dw_w"][None, :, None, None] + p["dw_b"][None, :, None, None]
        z = jnp.clip(bn(z, p["dw_bn"]), 0.0, 6.0)
        y = jnp.einsum("oi,nihw->nohw", p["pw_w"], z) + p["pw_b"][None, :, None, None]
        x = prelu(y + res, p["prelu"])

    x = jnp.transpose(x, (0, 2, 1, 3))             # (N, T, C, V)
    KH, KW = txc_kernel_size
    ph, pw = (KH - 1) // 2, (KW - 1) // 2
    for i, p in enumerate(params["tx"]):
        xp = jnp.pad(x, ((0, 0), (0, 0), (ph, ph), (pw, pw)))
        H, Wd = x.shape[2], x.shape[3]
        y = jnp.zeros((x.shape[0], p["w"].shape[0], H, Wd), jnp.float32)
        for kh in range(KH):
            for kw in range(KW):
                y = y + jnp.einsum("oi,nihw->nohw", p["w"][:, :, kh, kw],
                                   xp[:, :, kh:kh + H, kw:kw + Wd])
        y = prelu(bn(y + p["b"][None, :, None, None], p["bn"]), p["prelu"])
        x = (y + x) if i > 0 else y
    return x


# ----------------------------------------------------------------------------
if __name__ == "__main__":
    N, C_in, T_in, T_out, V = 2, 3, 8, 10, 16
    n_tx, txk = 3, (3, 3)

    key = jax.random.PRNGKey(0)
    kx, km1, km2, kp = jax.random.split(key, 4)
    x = jax.random.normal(kx, (N, C_in, T_in, V), jnp.float32)
    maskA = jax.random.bernoulli(km1, 0.9, (5, T_in, V, V)).astype(jnp.float32)
    maskT = jax.random.bernoulli(km2, 0.9, (5, V, T_in, T_in)).astype(jnp.float32)
    params = make_params(kp, C_in, T_in, T_out, V, n_tx, txk)

    out = jax.block_until_ready(model_forward(x, maskA, maskT, params, txk))
    ref = jax.block_until_ready(reference_forward(x, maskA, maskT, params, txk))

    assert out.shape == (N, T_out, C_in, V), out.shape
    np.testing.assert_allclose(np.asarray(out), np.asarray(ref), rtol=5e-2, atol=5e-2)
    print("KERNEL_OK")
</pallas_src>

<mosaic_0001>
module attributes {stable_mosaic.version = 11 : i64} {
  func.func @_fused_kernel(%arg0: i32, %arg1: memref<1x72x128xf32, #tpu.memory_space<vmem>>, %arg2: memref<5x128x128xbf16, #tpu.memory_space<vmem>>, %arg3: memref<5x72x72xbf16, #tpu.memory_space<vmem>>, %arg4: memref<5x72x1xf32, #tpu.memory_space<vmem>>, %arg5: memref<5x72x1xf32, #tpu.memory_space<vmem>>, %arg6: memref<5x72x1xf32, #tpu.memory_space<vmem>>, %arg7: memref<5x72x72xbf16, #tpu.memory_space<vmem>>, %arg8: memref<5x72x1xf32, #tpu.memory_space<vmem>>, %arg9: memref<5x72x1xf32, #tpu.memory_space<vmem>>, %arg10: memref<3x8x8xbf16, #tpu.memory_space<vmem>>, %arg11: memref<3x128x256xbf16, #tpu.memory_space<vmem>>, %arg12: memref<2x3x256x256xbf16, #tpu.memory_space<vmem>>, %arg13: memref<3x8x256xf32, #tpu.memory_space<vmem>>, %arg14: memref<3x8x1xf32, #tpu.memory_space<vmem>>, %arg15: memref<1x8x256xf32, #tpu.memory_space<vmem>>) attributes {dimension_semantics = [#tpu.dimension_semantics<parallel>], iteration_bounds = array<i64: 2>, scalar_prefetch = 0 : i64, scratch_operands = 0 : i64, tpu.core_type = #tpu.core_type<tc>, window_params = [{transform_indices = @transform_0, window_bounds = array<i64: 1, 72, 128>}, {pipeline_mode = #tpu.pipeline_mode<synchronous>, transform_indices = @transform_1, window_bounds = array<i64: 5, 128, 128>}, {pipeline_mode = #tpu.pipeline_mode<synchronous>, transform_indices = @transform_2, window_bounds = array<i64: 5, 72, 72>}, {pipeline_mode = #tpu.pipeline_mode<synchronous>, transform_indices = @transform_3, window_bounds = array<i64: 5, 72, 1>}, {pipeline_mode = #tpu.pipeline_mode<synchronous>, transform_indices = @transform_4, window_bounds = array<i64: 5, 72, 1>}, {pipeline_mode = #tpu.pipeline_mode<synchronous>, transform_indices = @transform_5, window_bounds = array<i64: 5, 72, 1>}, {pipeline_mode = #tpu.pipeline_mode<synchronous>, transform_indices = @transform_6, window_bounds = array<i64: 5, 72, 72>}, {pipeline_mode = #tpu.pipeline_mode<synchronous>, transform_indices = @transform_7, window_bounds = array<i64: 5, 72, 1>}, {pipeline_mode = #tpu.pipeline_mode<synchronous>, transform_indices = @transform_8, window_bounds = array<i64: 5, 72, 1>}, {pipeline_mode = #tpu.pipeline_mode<synchronous>, transform_indices = @transform_9, window_bounds = array<i64: 3, 8, 8>}, {pipeline_mode = #tpu.pipeline_mode<synchronous>, transform_indices = @transform_10, window_bounds = array<i64: 3, 128, 256>}, {pipeline_mode = #tpu.pipeline_mode<synchronous>, transform_indices = @transform_11, window_bounds = array<i64: 2, 3, 256, 256>}, {pipeline_mode = #tpu.pipeline_mode<synchronous>, transform_indices = @transform_12, window_bounds = array<i64: 3, 8, 256>}, {pipeline_mode = #tpu.pipeline_mode<synchronous>, transform_indices = @transform_13, window_bounds = array<i64: 3, 8, 1>}, {transform_indices = @transform_14, window_bounds = array<i64: 1, 8, 256>}]} {
    %c0 = arith.constant 0 : index
    %c0_0 = arith.constant 0 : index
    %c0_1 = arith.constant 0 : index
    %0 = vector.load %arg1[%c0, %c0_0, %c0_1] : memref<1x72x128xf32, #tpu.memory_space<vmem>>, vector<1x72x128xf32>
    %1 = vector.shape_cast %0 : vector<1x72x128xf32> to vector<72x128xf32>
    %2 = arith.truncf %1 : vector<72x128xf32> to vector<72x128xbf16>
    %c0_2 = arith.constant 0 : index
    %c0_3 = arith.constant 0 : index
    %c0_4 = arith.constant 0 : index
    %3 = vector.load %arg3[%c0_2, %c0_3, %c0_4] : memref<5x72x72xbf16, #tpu.memory_space<vmem>>, vector<1x72x72xbf16>
    %4 = vector.shape_cast %3 : vector<1x72x72xbf16> to vector<72x72xbf16>
    %cst = arith.constant dense<0.000000e+00> : vector<72x128xf32>
    %5 = tpu.matmul %4, %2, %cst {dimension_numbers = #tpu.dot_dimension_numbers<[1], [0], [0], [1], [0, 0, 1, 1], [], []>} : vector<72x72xbf16>, vector<72x128xbf16>, vector<72x128xf32> -> vector<72x128xf32>
    %c0_5 = arith.constant 0 : index
    %c0_6 = arith.constant 0 : index
    %c0_7 = arith.constant 0 : index
    %6 = vector.load %arg4[%c0_5, %c0_6, %c0_7] : memref<5x72x1xf32, #tpu.memory_space<vmem>>, vector<1x72x1xf32>
    %7 = vector.shape_cast %6 : vector<1x72x1xf32> to vector<72x1xf32>
    %8 = vector.broadcast %7 : vector<72x1xf32> to vector<72x128xf32>
    %9 = arith.addf %5, %8 : vector<72x128xf32>
    %c0_8 = arith.constant 0 : index
    %c0_9 = arith.constant 0 : index
    %c0_10 = arith.constant 0 : index
    %10 = vector.load %arg2[%c0_8, %c0_9, %c0_10] : memref<5x128x128xbf16, #tpu.memory_space<vmem>>, vector<1x128x128xbf16>
    %11 = vector.shape_cast %10 : vector<1x128x128xbf16> to vector<128x128xbf16>
    %cst_11 = arith.constant dense<0.000000e+00> : vector<72x128xf32>
    %12 = tpu.matmul %2, %11, %cst_11 {dimension_numbers = #tpu.dot_dimension_numbers<[1], [0], [0], [1], [0, 0, 1, 1], [], []>} : vector<72x128xbf16>, vector<128x128xbf16>, vector<72x128xf32> -> vector<72x128xf32>
    %c0_12 = arith.constant 0 : index
    %c0_13 = arith.constant 0 : index
    %c0_14 = arith.constant 0 : index
    %13 = vector.load %arg5[%c0_12, %c0_13, %c0_14] : memref<5x72x1xf32, #tpu.memory_space<vmem>>, vector<1x72x1xf32>
    %14 = vector.shape_cast %13 : vector<1x72x1xf32> to vector<72x1xf32>
    %15 = vector.broadcast %14 : vector<72x1xf32> to vector<72x128xf32>
    %16 = arith.mulf %12, %15 : vector<72x128xf32>
    %c0_15 = arith.constant 0 : index
    %c0_16 = arith.constant 0 : index
    %c0_17 = arith.constant 0 : index
    %17 = vector.load %arg6[%c0_15, %c0_16, %c0_17] : memref<5x72x1xf32, #tpu.memory_space<vmem>>, vector<1x72x1xf32>
    %18 = vector.shape_cast %17 : vector<1x72x1xf32> to vector<72x1xf32>
    %19 = vector.broadcast %18 : vector<72x1xf32> to vector<72x128xf32>
    %20 = arith.addf %16, %19 : vector<72x128xf32>
    %cst_18 = arith.constant 0.000000e+00 : f32
    %cst_19 = arith.constant 6.000000e+00 : f32
    %21 = vector.broadcast %cst_18 : f32 to vector<72x128xf32>
    %22 = arith.maximumf %21, %20 : vector<72x128xf32>
    %23 = vector.broadcast %cst_19 : f32 to vector<72x128xf32>
    %24 = arith.minimumf %23, %22 : vector<72x128xf32>
    %c0_20 = arith.constant 0 : index
    %c0_21 = arith.constant 0 : index
    %c0_22 = arith.constant 0 : index
    %25 = vector.load %arg7[%c0_20, %c0_21, %c0_22] : memref<5x72x72xbf16, #tpu.memory_space<vmem>>, vector<1x72x72xbf16>
    %26 = vector.shape_cast %25 : vector<1x72x72xbf16> to vector<72x72xbf16>
    %27 = arith.truncf %24 : vector<72x128xf32> to vector<72x128xbf16>
    %cst_23 = arith.constant dense<0.000000e+00> : vector<72x128xf32>
    %28 = tpu.matmul %26, %27, %cst_23 {dimension_numbers = #tpu.dot_dimension_numbers<[1], [0], [0], [1], [0, 0, 1, 1], [], []>} : vector<72x72xbf16>, vector<72x128xbf16>, vector<72x128xf32> -> vector<72x128xf32>
    %c0_24 = arith.constant 0 : index
    %c0_25 = arith.constant 0 : index
    %c0_26 = arith.constant 0 : index
    %29 = vector.load %arg8[%c0_24, %c0_25, %c0_26] : memref<5x72x1xf32, #tpu.memory_space<vmem>>, vector<1x72x1xf32>
    %30 = vector.shape_cast %29 : vector<1x72x1xf32> to vector<72x1xf32>
    %31 = vector.broadcast %30 : vector<72x1xf32> to vector<72x128xf32>
    %32 = arith.addf %28, %31 : vector<72x128xf32>
    %33 = arith.addf %32, %9 : vector<72x128xf32>
    %cst_27 = arith.constant 0.000000e+00 : f32
    %34 = vector.broadcast %cst_27 : f32 to vector<72x128xf32>
    %35 = arith.cmpf oge, %33, %34 : vector<72x128xf32>
    %c0_28 = arith.constant 0 : index
    %c0_29 = arith.constant 0 : index
    %c0_30 = arith.constant 0 : index
    %36 = vector.load %arg9[%c0_28, %c0_29, %c0_30] : memref<5x72x1xf32, #tpu.memory_space<vmem>>, vector<1x72x1xf32>
    %37 = vector.shape_cast %36 : vector<1x72x1xf32> to vector<72x1xf32>
    %38 = vector.broadcast %37 : vector<72x1xf32> to vector<72x128xf32>
    %39 = arith.mulf %38, %33 : vector<72x128xf32>
    %40 = arith.select %35, %33, %39 : vector<72x128xi1>, vector<72x128xf32>
    %41 = arith.truncf %40 : vector<72x128xf32> to vector<72x128xbf16>
    %c1 = arith.constant 1 : index
    %c0_31 = arith.constant 0 : index
    %c0_32 = arith.constant 0 : index
    %42 = vector.load %arg3[%c1, %c0_31, %c0_32] : memref<5x72x72xbf16, #tpu.memory_space<vmem>>, vector<1x72x72xbf16>
    %43 = vector.shape_cast %42 : vector<1x72x72xbf16> to vector<72x72xbf16>
    %cst_33 = arith.constant dense<0.000000e+00> : vector<72x128xf32>
    %44 = tpu.matmul %43, %41, %cst_33 {dimension_numbers = #tpu.dot_dimension_numbers<[1], [0], [0], [1], [0, 0, 1, 1], [], []>} : vector<72x72xbf16>, vector<72x128xbf16>, vector<72x128xf32> -> vector<72x128xf32>
    %c1_34 = arith.constant 1 : index
    %c0_35 = arith.constant 0 : index
    %c0_36 = arith.constant 0 : index
    %45 = vector.load %arg4[%c1_34, %c0_35, %c0_36] : memref<5x72x1xf32, #tpu.memory_space<vmem>>, vector<1x72x1xf32>
    %46 = vector.shape_cast %45 : vector<1x72x1xf32> to vector<72x1xf32>
    %47 = vector.broadcast %46 : vector<72x1xf32> to vector<72x128xf32>
    %48 = arith.addf %44, %47 : vector<72x128xf32>
    %c1_37 = arith.constant 1 : index
    %c0_38 = arith.constant 0 : index
    %c0_39 = arith.constant 0 : index
    %49 = vector.load %arg2[%c1_37, %c0_38, %c0_39] : memref<5x128x128xbf16, #tpu.memory_space<vmem>>, vector<1x128x128xbf16>
    %50 = vector.shape_cast %49 : vector<1x128x128xbf16> to vector<128x128xbf16>
    %cst_40 = arith.constant dense<0.000000e+00> : vector<72x128xf32>
    %51 = tpu.matmul %41, %50, %cst_40 {dimension_numbers = #tpu.dot_dimension_numbers<[1], [0], [0], [1], [0, 0, 1, 1], [], []>} : vector<72x128xbf16>, vector<128x128xbf16>, vector<72x128xf32> -> vector<72x128xf32>
    %c1_41 = arith.constant 1 : index
    %c0_42 = arith.constant 0 : index
    %c0_43 = arith.constant 0 : index
    %52 = vector.load %arg5[%c1_41, %c0_42, %c0_43] : memref<5x72x1xf32, #tpu.memory_space<vmem>>, vector<1x72x1xf32>
    %53 = vector.shape_cast %52 : vector<1x72x1xf32> to vector<72x1xf32>
    %54 = vector.broadcast %53 : vector<72x1xf32> to vector<72x128xf32>
    %55 = arith.mulf %51, %54 : vector<72x128xf32>
    %c1_44 = arith.constant 1 : index
    %c0_45 = arith.constant 0 : index
    %c0_46 = arith.constant 0 : index
    %56 = vector.load %arg6[%c1_44, %c0_45, %c0_46] : memref<5x72x1xf32, #tpu.memory_space<vmem>>, vector<1x72x1xf32>
    %57 = vector.shape_cast %56 : vector<1x72x1xf32> to vector<72x1xf32>
    %58 = vector.broadcast %57 : vector<72x1xf32> to vector<72x128xf32>
    %59 = arith.addf %55, %58 : vector<72x128xf32>
    %cst_47 = arith.constant 0.000000e+00 : f32
    %cst_48 = arith.constant 6.000000e+00 : f32
    %60 = vector.broadcast %cst_47 : f32 to vector<72x128xf32>
    %61 = arith.maximumf %60, %59 : vector<72x128xf32>
    %62 = vector.broadcast %cst_48 : f32 to vector<72x128xf32>
    %63 = arith.minimumf %62, %61 : vector<72x128xf32>
    %c1_49 = arith.constant 1 : index
    %c0_50 = arith.constant 0 : index
    %c0_51 = arith.constant 0 : index
    %64 = vector.load %arg7[%c1_49, %c0_50, %c0_51] : memref<5x72x72xbf16, #tpu.memory_space<vmem>>, vector<1x72x72xbf16>
    %65 = vector.shape_cast %64 : vector<1x72x72xbf16> to vector<72x72xbf16>
    %66 = arith.truncf %63 : vector<72x128xf32> to vector<72x128xbf16>
    %cst_52 = arith.constant dense<0.000000e+00> : vector<72x128xf32>
    %67 = tpu.matmul %65, %66, %cst_52 {dimension_numbers = #tpu.dot_dimension_numbers<[1], [0], [0], [1], [0, 0, 1, 1], [], []>} : vector<72x72xbf16>, vector<72x128xbf16>, vector<72x128xf32> -> vector<72x128xf32>
    %c1_53 = arith.constant 1 : index
    %c0_54 = arith.constant 0 : index
    %c0_55 = arith.constant 0 : index
    %68 = vector.load %arg8[%c1_53, %c0_54, %c0_55] : memref<5x72x1xf32, #tpu.memory_space<vmem>>, vector<1x72x1xf32>
    %69 = vector.shape_cast %68 : vector<1x72x1xf32> to vector<72x1xf32>
    %70 = vector.broadcast %69 : vector<72x1xf32> to vector<72x128xf32>
    %71 = arith.addf %67, %70 : vector<72x128xf32>
    %72 = arith.addf %71, %48 : vector<72x128xf32>
    %cst_56 = arith.constant 0.000000e+00 : f32
    %73 = vector.broadcast %cst_56 : f32 to vector<72x128xf32>
    %74 = arith.cmpf oge, %72, %73 : vector<72x128xf32>
    %c1_57 = arith.constant 1 : index
    %c0_58 = arith.constant 0 : index
    %c0_59 = arith.constant 0 : index
    %75 = vector.load %arg9[%c1_57, %c0_58, %c0_59] : memref<5x72x1xf32, #tpu.memory_space<vmem>>, vector<1x72x1xf32>
    %76 = vector.shape_cast %75 : vector<1x72x1xf32> to vector<72x1xf32>
    %77 = vector.broadcast %76 : vector<72x1xf32> to vector<72x128xf32>
    %78 = arith.mulf %77, %72 : vector<72x128xf32>
    %79 = arith.select %74, %72, %78 : vector<72x128xi1>, vector<72x128xf32>
    %80 = arith.truncf %79 : vector<72x128xf32> to vector<72x128xbf16>
    %c2 = arith.constant 2 : index
    %c0_60 = arith.constant 0 : index
    %c0_61 = arith.constant 0 : index
    %81 = vector.load %arg3[%c2, %c0_60, %c0_61] : memref<5x72x72xbf16, #tpu.memory_space<vmem>>, vector<1x72x72xbf16>
    %82 = vector.shape_cast %81 : vector<1x72x72xbf16> to vector<72x72xbf16>
    %cst_62 = arith.constant dense<0.000000e+00> : vector<72x128xf32>
    %83 = tpu.matmul %82, %80, %cst_62 {dimension_numbers = #tpu.dot_dimension_numbers<[1], [0], [0], [1], [0, 0, 1, 1], [], []>} : vector<72x72xbf16>, vector<72x128xbf16>, vector<72x128xf32> -> vector<72x128xf32>
    %c2_63 = arith.constant 2 : index
    %c0_64 = arith.constant 0 : index
    %c0_65 = arith.constant 0 : index
    %84 = vector.load %arg4[%c2_63, %c0_64, %c0_65] : memref<5x72x1xf32, #tpu.memory_space<vmem>>, vector<1x72x1xf32>
    %85 = vector.shape_cast %84 : vector<1x72x1xf32> to vector<72x1xf32>
    %86 = vector.broadcast %85 : vector<72x1xf32> to vector<72x128xf32>
    %87 = arith.addf %83, %86 : vector<72x128xf32>
    %c2_66 = arith.constant 2 : index
    %c0_67 = arith.constant 0 : index
    %c0_68 = arith.constant 0 : index
    %88 = vector.load %arg2[%c2_66, %c0_67, %c0_68] : memref<5x128x128xbf16, #tpu.memory_space<vmem>>, vector<1x128x128xbf16>
    %89 = vector.shape_cast %88 : vector<1x128x128xbf16> to vector<128x128xbf16>
    %cst_69 = arith.constant dense<0.000000e+00> : vector<72x128xf32>
    %90 = tpu.matmul %80, %89, %cst_69 {dimension_numbers = #tpu.dot_dimension_numbers<[1], [0], [0], [1], [0, 0, 1, 1], [], []>} : vector<72x128xbf16>, vector<128x128xbf16>, vector<72x128xf32> -> vector<72x128xf32>
    %c2_70 = arith.constant 2 : index
    %c0_71 = arith.constant 0 : index
    %c0_72 = arith.constant 0 : index
    %91 = vector.load %arg5[%c2_70, %c0_71, %c0_72] : memref<5x72x1xf32, #tpu.memory_space<vmem>>, vector<1x72x1xf32>
    %92 = vector.shape_cast %91 : vector<1x72x1xf32> to vector<72x1xf32>
    %93 = vector.broadcast %92 : vector<72x1xf32> to vector<72x128xf32>
    %94 = arith.mulf %90, %93 : vector<72x128xf32>
    %c2_73 = arith.constant 2 : index
    %c0_74 = arith.constant 0 : index
    %c0_75 = arith.constant 0 : index
    %95 = vector.load %arg6[%c2_73, %c0_74, %c0_75] : memref<5x72x1xf32, #tpu.memory_space<vmem>>, vector<1x72x1xf32>
    %96 = vector.shape_cast %95 : vector<1x72x1xf32> to vector<72x1xf32>
    %97 = vector.broadcast %96 : vector<72x1xf32> to vector<72x128xf32>
    %98 = arith.addf %94, %97 : vector<72x128xf32>
    %cst_76 = arith.constant 0.000000e+00 : f32
    %cst_77 = arith.constant 6.000000e+00 : f32
    %99 = vector.broadcast %cst_76 : f32 to vector<72x128xf32>
    %100 = arith.maximumf %99, %98 : vector<72x128xf32>
    %101 = vector.broadcast %cst_77 : f32 to vector<72x128xf32>
    %102 = arith.minimumf %101, %100 : vector<72x128xf32>
    %c2_78 = arith.constant 2 : index
    %c0_79 = arith.constant 0 : index
    %c0_80 = arith.constant 0 : index
    %103 = vector.load %arg7[%c2_78, %c0_79, %c0_80] : memref<5x72x72xbf16, #tpu.memory_space<vmem>>, vector<1x72x72xbf16>
    %104 = vector.shape_cast %103 : vector<1x72x72xbf16> to vector<72x72xbf16>
    %105 = arith.truncf %102 : vector<72x128xf32> to vector<72x128xbf16>
    %cst_81 = arith.constant dense<0.000000e+00> : vector<72x128xf32>
    %106 = tpu.matmul %104, %105, %cst_81 {dimension_numbers = #tpu.dot_dimension_numbers<[1], [0], [0], [1], [0, 0, 1, 1], [], []>} : vector<72x72xbf16>, vector<72x128xbf16>, vector<72x128xf32> -> vector<72x128xf32>
    %c2_82 = arith.constant 2 : index
    %c0_83 = arith.constant 0 : index
    %c0_84 = arith.constant 0 : index
    %107 = vector.load %arg8[%c2_82, %c0_83, %c0_84] : memref<5x72x1xf32, #tpu.memory_space<vmem>>, vector<1x72x1xf32>
    %108 = vector.shape_cast %107 : vector<1x72x1xf32> to vector<72x1xf32>
    %109 = vector.broadcast %108 : vector<72x1xf32> to vector<72x128xf32>
    %110 = arith.addf %106, %109 : vector<72x128xf32>
    %111 = arith.addf %110, %87 : vector<72x128xf32>
    %cst_85 = arith.constant 0.000000e+00 : f32
    %112 = vector.broadcast %cst_85 : f32 to vector<72x128xf32>
    %113 = arith.cmpf oge, %111, %112 : vector<72x128xf32>
    %c2_86 = arith.constant 2 : index
    %c0_87 = arith.constant 0 : index
    %c0_88 = arith.constant 0 : index
    %114 = vector.load %arg9[%c2_86, %c0_87, %c0_88] : memref<5x72x1xf32, #tpu.memory_space<vmem>>, vector<1x72x1xf32>
    %115 = vector.shape_cast %114 : vector<1x72x1xf32> to vector<72x1xf32>
    %116 = vector.broadcast %115 : vector<72x1xf32> to vector<72x128xf32>
    %117 = arith.mulf %116, %111 : vector<72x128xf32>
    %118 = arith.select %113, %111, %117 : vector<72x128xi1>, vector<72x128xf32>
    %119 = arith.truncf %118 : vector<72x128xf32> to vector<72x128xbf16>
    %c3 = arith.constant 3 : index
    %c0_89 = arith.constant 0 : index
    %c0_90 = arith.constant 0 : index
    %120 = vector.load %arg3[%c3, %c0_89, %c0_90] : memref<5x72x72xbf16, #tpu.memory_space<vmem>>, vector<1x72x72xbf16>
    %121 = vector.shape_cast %120 : vector<1x72x72xbf16> to vector<72x72xbf16>
    %cst_91 = arith.constant dense<0.000000e+00> : vector<72x128xf32>
    %122 = tpu.matmul %121, %119, %cst_91 {dimension_numbers = #tpu.dot_dimension_numbers<[1], [0], [0], [1], [0, 0, 1, 1], [], []>} : vector<72x72xbf16>, vector<72x128xbf16>, vector<72x128xf32> -> vector<72x128xf32>
    %c3_92 = arith.constant 3 : index
    %c0_93 = arith.constant 0 : index
    %c0_94 = arith.constant 0 : index
    %123 = vector.load %arg4[%c3_92, %c0_93, %c0_94] : memref<5x72x1xf32, #tpu.memory_space<vmem>>, vector<1x72x1xf32>
    %124 = vector.shape_cast %123 : vector<1x72x1xf32> to vector<72x1xf32>
    %125 = vector.broadcast %124 : vector<72x1xf32> to vector<72x128xf32>
    %126 = arith.addf %122, %125 : vector<72x128xf32>
    %c3_95 = arith.constant 3 : index
    %c0_96 = arith.constant 0 : index
    %c0_97 = arith.constant 0 : index
    %127 = vector.load %arg2[%c3_95, %c0_96, %c0_97] : memref<5x128x128xbf16, #tpu.memory_space<vmem>>, vector<1x128x128xbf16>
    %128 = vector.shape_cast %127 : vector<1x128x128xbf16> to vector<128x128xbf16>
    %cst_98 = arith.constant dense<0.000000e+00> : vector<72x128xf32>
    %129 = tpu.matmul %119, %128, %cst_98 {dimension_numbers = #tpu.dot_dimension_numbers<[1], [0], [0], [1], [0, 0, 1, 1], [], []>} : vector<72x128xbf16>, vector<128x128xbf16>, vector<72x128xf32> -> vector<72x128xf32>
    %c3_99 = arith.constant 3 : index
    %c0_100 = arith.constant 0 : index
    %c0_101 = arith.constant 0 : index
    %130 = vector.load %arg5[%c3_99, %c0_100, %c0_101] : memref<5x72x1xf32, #tpu.memory_space<vmem>>, vector<1x72x1xf32>
    %131 = vector.shape_cast %130 : vector<1x72x1xf32> to vector<72x1xf32>
    %132 = vector.broadcast %131 : vector<72x1xf32> to vector<72x128xf32>
    %133 = arith.mulf %129, %132 : vector<72x128xf32>
    %c3_102 = arith.constant 3 : index
    %c0_103 = arith.constant 0 : index
    %c0_104 = arith.constant 0 : index
    %134 = vector.load %arg6[%c3_102, %c0_103, %c0_104] : memref<5x72x1xf32, #tpu.memory_space<vmem>>, vector<1x72x1xf32>
    %135 = vector.shape_cast %134 : vector<1x72x1xf32> to vector<72x1xf32>
    %136 = vector.broadcast %135 : vector<72x1xf32> to vector<72x128xf32>
    %137 = arith.addf %133, %136 : vector<72x128xf32>
    %cst_105 = arith.constant 0.000000e+00 : f32
    %cst_106 = arith.constant 6.000000e+00 : f32
    %138 = vector.broadcast %cst_105 : f32 to vector<72x128xf32>
    %139 = arith.maximumf %138, %137 : vector<72x128xf32>
    %140 = vector.broadcast %cst_106 : f32 to vector<72x128xf32>
    %141 = arith.minimumf %140, %139 : vector<72x128xf32>
    %c3_107 = arith.constant 3 : index
    %c0_108 = arith.constant 0 : index
    %c0_109 = arith.constant 0 : index
    %142 = vector.load %arg7[%c3_107, %c0_108, %c0_109] : memref<5x72x72xbf16, #tpu.memory_space<vmem>>, vector<1x72x72xbf16>
    %143 = vector.shape_cast %142 : vector<1x72x72xbf16> to vector<72x72xbf16>
    %144 = arith.truncf %141 : vector<72x128xf32> to vector<72x128xbf16>
    %cst_110 = arith.constant dense<0.000000e+00> : vector<72x128xf32>
    %145 = tpu.matmul %143, %144, %cst_110 {dimension_numbers = #tpu.dot_dimension_numbers<[1], [0], [0], [1], [0, 0, 1, 1], [], []>} : vector<72x72xbf16>, vector<72x128xbf16>, vector<72x128xf32> -> vector<72x128xf32>
    %c3_111 = arith.constant 3 : index
    %c0_112 = arith.constant 0 : index
    %c0_113 = arith.constant 0 : index
    %146 = vector.load %arg8[%c3_111, %c0_112, %c0_113] : memref<5x72x1xf32, #tpu.memory_space<vmem>>, vector<1x72x1xf32>
    %147 = vector.shape_cast %146 : vector<1x72x1xf32> to vector<72x1xf32>
    %148 = vector.broadcast %147 : vector<72x1xf32> to vector<72x128xf32>
    %149 = arith.addf %145, %148 : vector<72x128xf32>
    %150 = arith.addf %149, %126 : vector<72x128xf32>
    %cst_114 = arith.constant 0.000000e+00 : f32
    %151 = vector.broadcast %cst_114 : f32 to vector<72x128xf32>
    %152 = arith.cmpf oge, %150, %151 : vector<72x128xf32>
    %c3_115 = arith.constant 3 : index
    %c0_116 = arith.constant 0 : index
    %c0_117 = arith.constant 0 : index
    %153 = vector.load %arg9[%c3_115, %c0_116, %c0_117] : memref<5x72x1xf32, #tpu.memory_space<vmem>>, vector<1x72x1xf32>
    %154 = vector.shape_cast %153 : vector<1x72x1xf32> to vector<72x1xf32>
    %155 = vector.broadcast %154 : vector<72x1xf32> to vector<72x128xf32>
    %156 = arith.mulf %155, %150 : vector<72x128xf32>
    %157 = arith.select %152, %150, %156 : vector<72x128xi1>, vector<72x128xf32>
    %158 = arith.truncf %157 : vector<72x128xf32> to vector<72x128xbf16>
    %c4 = arith.constant 4 : index
    %c0_118 = arith.constant 0 : index
    %c0_119 = arith.constant 0 : index
    %159 = vector.load %arg3[%c4, %c0_118, %c0_119] : memref<5x72x72xbf16, #tpu.memory_space<vmem>>, vector<1x72x72xbf16>
    %160 = vector.shape_cast %159 : vector<1x72x72xbf16> to vector<72x72xbf16>
    %cst_120 = arith.constant dense<0.000000e+00> : vector<72x128xf32>
    %161 = tpu.matmul %160, %158, %cst_120 {dimension_numbers = #tpu.dot_dimension_numbers<[1], [0], [0], [1], [0, 0, 1, 1], [], []>} : vector<72x72xbf16>, vector<72x128xbf16>, vector<72x128xf32> -> vector<72x128xf32>
    %c4_121 = arith.constant 4 : index
    %c0_122 = arith.constant 0 : index
    %c0_123 = arith.constant 0 : index
    %162 = vector.load %arg4[%c4_121, %c0_122, %c0_123] : memref<5x72x1xf32, #tpu.memory_space<vmem>>, vector<1x72x1xf32>
    %163 = vector.shape_cast %162 : vector<1x72x1xf32> to vector<72x1xf32>
    %164 = vector.broadcast %163 : vector<72x1xf32> to vector<72x128xf32>
    %165 = arith.addf %161, %164 : vector<72x128xf32>
    %c4_124 = arith.constant 4 : index
    %c0_125 = arith.constant 0 : index
    %c0_126 = arith.constant 0 : index
    %166 = vector.load %arg2[%c4_124, %c0_125, %c0_126] : memref<5x128x128xbf16, #tpu.memory_space<vmem>>, vector<1x128x128xbf16>
    %167 = vector.shape_cast %166 : vector<1x128x128xbf16> to vector<128x128xbf16>
    %cst_127 = arith.constant dense<0.000000e+00> : vector<72x128xf32>
    %168 = tpu.matmul %158, %167, %cst_127 {dimension_numbers = #tpu.dot_dimension_numbers<[1], [0], [0], [1], [0, 0, 1, 1], [], []>} : vector<72x128xbf16>, vector<128x128xbf16>, vector<72x128xf32> -> vector<72x128xf32>
    %c4_128 = arith.constant 4 : index
    %c0_129 = arith.constant 0 : index
    %c0_130 = arith.constant 0 : index
    %169 = vector.load %arg5[%c4_128, %c0_129, %c0_130] : memref<5x72x1xf32, #tpu.memory_space<vmem>>, vector<1x72x1xf32>
    %170 = vector.shape_cast %169 : vector<1x72x1xf32> to vector<72x1xf32>
    %171 = vector.broadcast %170 : vector<72x1xf32> to vector<72x128xf32>
    %172 = arith.mulf %168, %171 : vector<72x128xf32>
    %c4_131 = arith.constant 4 : index
    %c0_132 = arith.constant 0 : index
    %c0_133 = arith.constant 0 : index
    %173 = vector.load %arg6[%c4_131, %c0_132, %c0_133] : memref<5x72x1xf32, #tpu.memory_space<vmem>>, vector<1x72x1xf32>
    %174 = vector.shape_cast %173 : vector<1x72x1xf32> to vector<72x1xf32>
    %175 = vector.broadcast %174 : vector<72x1xf32> to vector<72x128xf32>
    %176 = arith.addf %172, %175 : vector<72x128xf32>
    %cst_134 = arith.constant 0.000000e+00 : f32
    %cst_135 = arith.constant 6.000000e+00 : f32
    %177 = vector.broadcast %cst_134 : f32 to vector<72x128xf32>
    %178 = arith.maximumf %177, %176 : vector<72x128xf32>
    %179 = vector.broadcast %cst_135 : f32 to vector<72x128xf32>
    %180 = arith.minimumf %179, %178 : vector<72x128xf32>
    %c4_136 = arith.constant 4 : index
    %c0_137 = arith.constant 0 : index
    %c0_138 = arith.constant 0 : index
    %181 = vector.load %arg7[%c4_136, %c0_137, %c0_138] : memref<5x72x72xbf16, #tpu.memory_space<vmem>>, vector<1x72x72xbf16>
    %182 = vector.shape_cast %181 : vector<1x72x72xbf16> to vector<72x72xbf16>
    %183 = arith.truncf %180 : vector<72x128xf32> to vector<72x128xbf16>
    %cst_139 = arith.constant dense<0.000000e+00> : vector<72x128xf32>
    %184 = tpu.matmul %182, %183, %cst_139 {dimension_numbers = #tpu.dot_dimension_numbers<[1], [0], [0], [1], [0, 0, 1, 1], [], []>} : vector<72x72xbf16>, vector<72x128xbf16>, vector<72x128xf32> -> vector<72x128xf32>
    %c4_140 = arith.constant 4 : index
    %c0_141 = arith.constant 0 : index
    %c0_142 = arith.constant 0 : index
    %185 = vector.load %arg8[%c4_140, %c0_141, %c0_142] : memref<5x72x1xf32, #tpu.memory_space<vmem>>, vector<1x72x1xf32>
    %186 = vector.shape_cast %185 : vector<1x72x1xf32> to vector<72x1xf32>
    %187 = vector.broadcast %186 : vector<72x1xf32> to vector<72x128xf32>
    %188 = arith.addf %184, %187 : vector<72x128xf32>
    %189 = arith.addf %188, %165 : vector<72x128xf32>
    %cst_143 = arith.constant 0.000000e+00 : f32
    %190 = vector.broadcast %cst_143 : f32 to vector<72x128xf32>
    %191 = arith.cmpf oge, %189, %190 : vector<72x128xf32>
    %c4_144 = arith.constant 4 : index
    %c0_145 = arith.constant 0 : index
    %c0_146 = arith.constant 0 : index
    %192 = vector.load %arg9[%c4_144, %c0_145, %c0_146] : memref<5x72x1xf32, #tpu.memory_space<vmem>>, vector<1x72x1xf32>
    %193 = vector.shape_cast %192 : vector<1x72x1xf32> to vector<72x1xf32>
    %194 = vector.broadcast %193 : vector<72x1xf32> to vector<72x128xf32>
    %195 = arith.mulf %194, %189 : vector<72x128xf32>
    %196 = arith.select %191, %189, %195 : vector<72x128xi1>, vector<72x128xf32>
    %197 = vector.extract_strided_slice %196 {offsets = [0, 0], sizes = [8, 128], strides = [1, 1]} : vector<72x128xf32> to vector<8x128xf32>
    %c0_147 = arith.constant 0 : index
    %c0_148 = arith.constant 0 : index
    %c0_149 = arith.constant 0 : index
    %198 = vector.load %arg13[%c0_147, %c0_148, %c0_149] : memref<3x8x256xf32, #tpu.memory_space<vmem>>, vector<1x8x256xf32>
    %199 = vector.shape_cast %198 : vector<1x8x256xf32> to vector<8x256xf32>
    %200 = arith.truncf %197 : vector<8x128xf32> to vector<8x128xbf16>
    %c0_150 = arith.constant 0 : index
    %c0_151 = arith.constant 0 : index
    %c0_152 = arith.constant 0 : index
    %201 = vector.load %arg10[%c0_150, %c0_151, %c0_152] : memref<3x8x8xbf16, #tpu.memory_space<vmem>>, vector<1x8x8xbf16>
    %202 = vector.shape_cast %201 : vector<1x8x8xbf16> to vector<8x8xbf16>
    %cst_153 = arith.constant dense<0.000000e+00> : vector<8x128xf32>
    %203 = tpu.matmul %202, %200, %cst_153 {dimension_numbers = #tpu.dot_dimension_numbers<[1], [0], [0], [1], [0, 0, 1, 1], [], []>} : vector<8x8xbf16>, vector<8x128xbf16>, vector<8x128xf32> -> vector<8x128xf32>
    %204 = arith.truncf %203 : vector<8x128xf32> to vector<8x128xbf16>
    %c0_154 = arith.constant 0 : index
    %c0_155 = arith.constant 0 : index
    %c0_156 = arith.constant 0 : index
    %205 = vector.load %arg11[%c0_154, %c0_155, %c0_156] : memref<3x128x256xbf16, #tpu.memory_space<vmem>>, vector<1x128x256xbf16>
    %206 = vector.shape_cast %205 : vector<1x128x256xbf16> to vector<128x256xbf16>
    %cst_157 = arith.constant dense<0.000000e+00> : vector<8x256xf32>
    %207 = tpu.matmul %204, %206, %cst_157 {dimension_numbers = #tpu.dot_dimension_numbers<[1], [0], [0], [1], [0, 0, 1, 1], [], []>} : vector<8x128xbf16>, vector<128x256xbf16>, vector<8x256xf32> -> vector<8x256xf32>
    %208 = arith.addf %199, %207 : vector<8x256xf32>
    %c1_158 = arith.constant 1 : index
    %c0_159 = arith.constant 0 : index
    %c0_160 = arith.constant 0 : index
    %209 = vector.load %arg10[%c1_158, %c0_159, %c0_160] : memref<3x8x8xbf16, #tpu.memory_space<vmem>>, vector<1x8x8xbf16>
    %210 = vector.shape_cast %209 : vector<1x8x8xbf16> to vector<8x8xbf16>
    %cst_161 = arith.constant dense<0.000000e+00> : vector<8x128xf32>
    %211 = tpu.matmul %210, %200, %cst_161 {dimension_numbers = #tpu.dot_dimension_numbers<[1], [0], [0], [1], [0, 0, 1, 1], [], []>} : vector<8x8xbf16>, vector<8x128xbf16>, vector<8x128xf32> -> vector<8x128xf32>
    %212 = arith.truncf %211 : vector<8x128xf32> to vector<8x128xbf16>
    %c1_162 = arith.constant 1 : index
    %c0_163 = arith.constant 0 : index
    %c0_164 = arith.constant 0 : index
    %213 = vector.load %arg11[%c1_162, %c0_163, %c0_164] : memref<3x128x256xbf16, #tpu.memory_space<vmem>>, vector<1x128x256xbf16>
    %214 = vector.shape_cast %213 : vector<1x128x256xbf16> to vector<128x256xbf16>
    %cst_165 = arith.constant dense<0.000000e+00> : vector<8x256xf32>
    %215 = tpu.matmul %212, %214, %cst_165 {dimension_numbers = #tpu.dot_dimension_numbers<[1], [0], [0], [1], [0, 0, 1, 1], [], []>} : vector<8x128xbf16>, vector<128x256xbf16>, vector<8x256xf32> -> vector<8x256xf32>
    %216 = arith.addf %208, %215 : vector<8x256xf32>
    %c2_166 = arith.constant 2 : index
    %c0_167 = arith.constant 0 : index
    %c0_168 = arith.constant 0 : index
    %217 = vector.load %arg10[%c2_166, %c0_167, %c0_168] : memref<3x8x8xbf16, #tpu.memory_space<vmem>>, vector<1x8x8xbf16>
    %218 = vector.shape_cast %217 : vector<1x8x8xbf16> to vector<8x8xbf16>
    %cst_169 = arith.constant dense<0.000000e+00> : vector<8x128xf32>
    %219 = tpu.matmul %218, %200, %cst_169 {dimension_numbers = #tpu.dot_dimension_numbers<[1], [0], [0], [1], [0, 0, 1, 1], [], []>} : vector<8x8xbf16>, vector<8x128xbf16>, vector<8x128xf32> -> vector<8x128xf32>
    %220 = arith.truncf %219 : vector<8x128xf32> to vector<8x128xbf16>
    %c2_170 = arith.constant 2 : index
    %c0_171 = arith.constant 0 : index
    %c0_172 = arith.constant 0 : index
    %221 = vector.load %arg11[%c2_170, %c0_171, %c0_172] : memref<3x128x256xbf16, #tpu.memory_space<vmem>>, vector<1x128x256xbf16>
    %222 = vector.shape_cast %221 : vector<1x128x256xbf16> to vector<128x256xbf16>
    %cst_173 = arith.constant dense<0.000000e+00> : vector<8x256xf32>
    %223 = tpu.matmul %220, %222, %cst_173 {dimension_numbers = #tpu.dot_dimension_numbers<[1], [0], [0], [1], [0, 0, 1, 1], [], []>} : vector<8x128xbf16>, vector<128x256xbf16>, vector<8x256xf32> -> vector<8x256xf32>
    %224 = arith.addf %216, %223 : vector<8x256xf32>
    %cst_174 = arith.constant 0.000000e+00 : f32
    %225 = vector.broadcast %cst_174 : f32 to vector<8x256xf32>
    %226 = arith.cmpf oge, %224, %225 : vector<8x256xf32>
    %c0_175 = arith.constant 0 : index
    %c0_176 = arith.constant 0 : index
    %c0_177 = arith.constant 0 : index
    %227 = vector.load %arg14[%c0_175, %c0_176, %c0_177] : memref<3x8x1xf32, #tpu.memory_space<vmem>>, vector<1x8x1xf32>
    %228 = vector.shape_cast %227 : vector<1x8x1xf32> to vector<8x1xf32>
    %229 = vector.broadcast %228 : vector<8x1xf32> to vector<8x256xf32>
    %230 = arith.mulf %229, %224 : vector<8x256xf32>
    %231 = arith.select %226, %224, %230 : vector<8x256xi1>, vector<8x256xf32>
    %232 = arith.truncf %231 : vector<8x256xf32> to vector<8x256xbf16>
    %c1_178 = arith.constant 1 : index
    %c0_179 = arith.constant 0 : index
    %c0_180 = arith.constant 0 : index
    %233 = vector.load %arg13[%c1_178, %c0_179, %c0_180] : memref<3x8x256xf32, #tpu.memory_space<vmem>>, vector<1x8x256xf32>
    %234 = vector.shape_cast %233 : vector<1x8x256xf32> to vector<8x256xf32>
    %c0_181 = arith.constant 0 : index
    %c0_182 = arith.constant 0 : index
    %c0_183 = arith.constant 0 : index
    %235 = vector.load %arg10[%c0_181, %c0_182, %c0_183] : memref<3x8x8xbf16, #tpu.memory_space<vmem>>, vector<1x8x8xbf16>
    %236 = vector.shape_cast %235 : vector<1x8x8xbf16> to vector<8x8xbf16>
    %cst_184 = arith.constant dense<0.000000e+00> : vector<8x256xf32>
    %237 = tpu.matmul %236, %232, %cst_184 {dimension_numbers = #tpu.dot_dimension_numbers<[1], [0], [0], [1], [0, 0, 1, 1], [], []>} : vector<8x8xbf16>, vector<8x256xbf16>, vector<8x256xf32> -> vector<8x256xf32>
    %238 = arith.truncf %237 : vector<8x256xf32> to vector<8x256xbf16>
    %c0_185 = arith.constant 0 : index
    %c0_186 = arith.constant 0 : index
    %c0_187 = arith.constant 0 : index
    %c0_188 = arith.constant 0 : index
    %239 = vector.load %arg12[%c0_185, %c0_186, %c0_187, %c0_188] : memref<2x3x256x256xbf16, #tpu.memory_space<vmem>>, vector<1x1x256x256xbf16>
    %240 = vector.shape_cast %239 : vector<1x1x256x256xbf16> to vector<256x256xbf16>
    %cst_189 = arith.constant dense<0.000000e+00> : vector<8x256xf32>
    %241 = tpu.matmul %238, %240, %cst_189 {dimension_numbers = #tpu.dot_dimension_numbers<[1], [0], [0], [1], [0, 0, 1, 1], [], []>} : vector<8x256xbf16>, vector<256x256xbf16>, vector<8x256xf32> -> vector<8x256xf32>
    %242 = arith.addf %234, %241 : vector<8x256xf32>
    %c1_190 = arith.constant 1 : index
    %c0_191 = arith.constant 0 : index
    %c0_192 = arith.constant 0 : index
    %243 = vector.load %arg10[%c1_190, %c0_191, %c0_192] : memref<3x8x8xbf16, #tpu.memory_space<vmem>>, vector<1x8x8xbf16>
    %244 = vector.shape_cast %243 : vector<1x8x8xbf16> to vector<8x8xbf16>
    %cst_193 = arith.constant dense<0.000000e+00> : vector<8x256xf32>
    %245 = tpu.matmul %244, %232, %cst_193 {dimension_numbers = #tpu.dot_dimension_numbers<[1], [0], [0], [1], [0, 0, 1, 1], [], []>} : vector<8x8xbf16>, vector<8x256xbf16>, vector<8x256xf32> -> vector<8x256xf32>
    %246 = arith.truncf %245 : vector<8x256xf32> to vector<8x256xbf16>
    %c0_194 = arith.constant 0 : index
    %c1_195 = arith.constant 1 : index
    %c0_196 = arith.constant 0 : index
    %c0_197 = arith.constant 0 : index
    %247 = vector.load %arg12[%c0_194, %c1_195, %c0_196, %c0_197] : memref<2x3x256x256xbf16, #tpu.memory_space<vmem>>, vector<1x1x256x256xbf16>
    %248 = vector.shape_cast %247 : vector<1x1x256x256xbf16> to vector<256x256xbf16>
    %cst_198 = arith.constant dense<0.000000e+00> : vector<8x256xf32>
    %249 = tpu.matmul %246, %248, %cst_198 {dimension_numbers = #tpu.dot_dimension_numbers<[1], [0], [0], [1], [0, 0, 1, 1], [], []>} : vector<8x256xbf16>, vector<256x256xbf16>, vector<8x256xf32> -> vector<8x256xf32>
    %250 = arith.addf %242, %249 : vector<8x256xf32>
    %c2_199 = arith.constant 2 : index
    %c0_200 = arith.constant 0 : index
    %c0_201 = arith.constant 0 : index
    %251 = vector.load %arg10[%c2_199, %c0_200, %c0_201] : memref<3x8x8xbf16, #tpu.memory_space<vmem>>, vector<1x8x8xbf16>
    %252 = vector.shape_cast %251 : vector<1x8x8xbf16> to vector<8x8xbf16>
    %cst_202 = arith.constant dense<0.000000e+00> : vector<8x256xf32>
    %253 = tpu.matmul %252, %232, %cst_202 {dimension_numbers = #tpu.dot_dimension_numbers<[1], [0], [0], [1], [0, 0, 1, 1], [], []>} : vector<8x8xbf16>, vector<8x256xbf16>, vector<8x256xf32> -> vector<8x256xf32>
    %254 = arith.truncf %253 : vector<8x256xf32> to vector<8x256xbf16>
    %c0_203 = arith.constant 0 : index
    %c2_204 = arith.constant 2 : index
    %c0_205 = arith.constant 0 : index
    %c0_206 = arith.constant 0 : index
    %255 = vector.load %arg12[%c0_203, %c2_204, %c0_205, %c0_206] : memref<2x3x256x256xbf16, #tpu.memory_space<vmem>>, vector<1x1x256x256xbf16>
    %256 = vector.shape_cast %255 : vector<1x1x256x256xbf16> to vector<256x256xbf16>
    %cst_207 = arith.constant dense<0.000000e+00> : vector<8x256xf32>
    %257 = tpu.matmul %254, %256, %cst_207 {dimension_numbers = #tpu.dot_dimension_numbers<[1], [0], [0], [1], [0, 0, 1, 1], [], []>} : vector<8x256xbf16>, vector<256x256xbf16>, vector<8x256xf32> -> vector<8x256xf32>
    %258 = arith.addf %250, %257 : vector<8x256xf32>
    %cst_208 = arith.constant 0.000000e+00 : f32
    %259 = vector.broadcast %cst_208 : f32 to vector<8x256xf32>
    %260 = arith.cmpf oge, %258, %259 : vector<8x256xf32>
    %c1_209 = arith.constant 1 : index
    %c0_210 = arith.constant 0 : index
    %c0_211 = arith.constant 0 : index
    %261 = vector.load %arg14[%c1_209, %c0_210, %c0_211] : memref<3x8x1xf32, #tpu.memory_space<vmem>>, vector<1x8x1xf32>
    %262 = vector.shape_cast %261 : vector<1x8x1xf32> to vector<8x1xf32>
    %263 = vector.broadcast %262 : vector<8x1xf32> to vector<8x256xf32>
    %264 = arith.mulf %263, %258 : vector<8x256xf32>
    %265 = arith.select %260, %258, %264 : vector<8x256xi1>, vector<8x256xf32>
    %266 = arith.addf %265, %231 : vector<8x256xf32>
    %267 = arith.truncf %266 : vector<8x256xf32> to vector<8x256xbf16>
    %c2_212 = arith.constant 2 : index
    %c0_213 = arith.constant 0 : index
    %c0_214 = arith.constant 0 : index
    %268 = vector.load %arg13[%c2_212, %c0_213, %c0_214] : memref<3x8x256xf32, #tpu.memory_space<vmem>>, vector<1x8x256xf32>
    %269 = vector.shape_cast %268 : vector<1x8x256xf32> to vector<8x256xf32>
    %c0_215 = arith.constant 0 : index
    %c0_216 = arith.constant 0 : index
    %c0_217 = arith.constant 0 : index
    %270 = vector.load %arg10[%c0_215, %c0_216, %c0_217] : memref<3x8x8xbf16, #tpu.memory_space<vmem>>, vector<1x8x8xbf16>
    %271 = vector.shape_cast %270 : vector<1x8x8xbf16> to vector<8x8xbf16>
    %cst_218 = arith.constant dense<0.000000e+00> : vector<8x256xf32>
    %272 = tpu.matmul %271, %267, %cst_218 {dimension_numbers = #tpu.dot_dimension_numbers<[1], [0], [0], [1], [0, 0, 1, 1], [], []>} : vector<8x8xbf16>, vector<8x256xbf16>, vector<8x256xf32> -> vector<8x256xf32>
    %273 = arith.truncf %272 : vector<8x256xf32> to vector<8x256xbf16>
    %c1_219 = arith.constant 1 : index
    %c0_220 = arith.constant 0 : index
    %c0_221 = arith.constant 0 : index
    %c0_222 = arith.constant 0 : index
    %274 = vector.load %arg12[%c1_219, %c0_220, %c0_221, %c0_222] : memref<2x3x256x256xbf16, #tpu.memory_space<vmem>>, vector<1x1x256x256xbf16>
    %275 = vector.shape_cast %274 : vector<1x1x256x256xbf16> to vector<256x256xbf16>
    %cst_223 = arith.constant dense<0.000000e+00> : vector<8x256xf32>
    %276 = tpu.matmul %273, %275, %cst_223 {dimension_numbers = #tpu.dot_dimension_numbers<[1], [0], [0], [1], [0, 0, 1, 1], [], []>} : vector<8x256xbf16>, vector<256x256xbf16>, vector<8x256xf32> -> vector<8x256xf32>
    %277 = arith.addf %269, %276 : vector<8x256xf32>
    %c1_224 = arith.constant 1 : index
    %c0_225 = arith.constant 0 : index
    %c0_226 = arith.constant 0 : index
    %278 = vector.load %arg10[%c1_224, %c0_225, %c0_226] : memref<3x8x8xbf16, #tpu.memory_space<vmem>>, vector<1x8x8xbf16>
    %279 = vector.shape_cast %278 : vector<1x8x8xbf16> to vector<8x8xbf16>
    %cst_227 = arith.constant dense<0.000000e+00> : vector<8x256xf32>
    %280 = tpu.matmul %279, %267, %cst_227 {dimension_numbers = #tpu.dot_dimension_numbers<[1], [0], [0], [1], [0, 0, 1, 1], [], []>} : vector<8x8xbf16>, vector<8x256xbf16>, vector<8x256xf32> -> vector<8x256xf32>
    %281 = arith.truncf %280 : vector<8x256xf32> to vector<8x256xbf16>
    %c1_228 = arith.constant 1 : index
    %c1_229 = arith.constant 1 : index
    %c0_230 = arith.constant 0 : index
    %c0_231 = arith.constant 0 : index
    %282 = vector.load %arg12[%c1_228, %c1_229, %c0_230, %c0_231] : memref<2x3x256x256xbf16, #tpu.memory_space<vmem>>, vector<1x1x256x256xbf16>
    %283 = vector.shape_cast %282 : vector<1x1x256x256xbf16> to vector<256x256xbf16>
    %cst_232 = arith.constant dense<0.000000e+00> : vector<8x256xf32>
    %284 = tpu.matmul %281, %283, %cst_232 {dimension_numbers = #tpu.dot_dimension_numbers<[1], [0], [0], [1], [0, 0, 1, 1], [], []>} : vector<8x256xbf16>, vector<256x256xbf16>, vector<8x256xf32> -> vector<8x256xf32>
    %285 = arith.addf %277, %284 : vector<8x256xf32>
    %c2_233 = arith.constant 2 : index
    %c0_234 = arith.constant 0 : index
    %c0_235 = arith.constant 0 : index
    %286 = vector.load %arg10[%c2_233, %c0_234, %c0_235] : memref<3x8x8xbf16, #tpu.memory_space<vmem>>, vector<1x8x8xbf16>
    %287 = vector.shape_cast %286 : vector<1x8x8xbf16> to vector<8x8xbf16>
    %cst_236 = arith.constant dense<0.000000e+00> : vector<8x256xf32>
    %288 = tpu.matmul %287, %267, %cst_236 {dimension_numbers = #tpu.dot_dimension_numbers<[1], [0], [0], [1], [0, 0, 1, 1], [], []>} : vector<8x8xbf16>, vector<8x256xbf16>, vector<8x256xf32> -> vector<8x256xf32>
    %289 = arith.truncf %288 : vector<8x256xf32> to vector<8x256xbf16>
    %c1_237 = arith.constant 1 : index
    %c2_238 = arith.constant 2 : index
    %c0_239 = arith.constant 0 : index
    %c0_240 = arith.constant 0 : index
    %290 = vector.load %arg12[%c1_237, %c2_238, %c0_239, %c0_240] : memref<2x3x256x256xbf16, #tpu.memory_space<vmem>>, vector<1x1x256x256xbf16>
    %291 = vector.shape_cast %290 : vector<1x1x256x256xbf16> to vector<256x256xbf16>
    %cst_241 = arith.constant dense<0.000000e+00> : vector<8x256xf32>
    %292 = tpu.matmul %289, %291, %cst_241 {dimension_numbers = #tpu.dot_dimension_numbers<[1], [0], [0], [1], [0, 0, 1, 1], [], []>} : vector<8x256xbf16>, vector<256x256xbf16>, vector<8x256xf32> -> vector<8x256xf32>
    %293 = arith.addf %285, %292 : vector<8x256xf32>
    %cst_242 = arith.constant 0.000000e+00 : f32
    %294 = vector.broadcast %cst_242 : f32 to vector<8x256xf32>
    %295 = arith.cmpf oge, %293, %294 : vector<8x256xf32>
    %c2_243 = arith.constant 2 : index
    %c0_244 = arith.constant 0 : index
    %c0_245 = arith.constant 0 : index
    %296 = vector.load %arg14[%c2_243, %c0_244, %c0_245] : memref<3x8x1xf32, #tpu.memory_space<vmem>>, vector<1x8x1xf32>
    %297 = vector.shape_cast %296 : vector<1x8x1xf32> to vector<8x1xf32>
    %298 = vector.broadcast %297 : vector<8x1xf32> to vector<8x256xf32>
    %299 = arith.mulf %298, %293 : vector<8x256xf32>
    %300 = arith.select %295, %293, %299 : vector<8x256xi1>, vector<8x256xf32>
    %301 = arith.addf %300, %266 : vector<8x256xf32>
    %c0_246 = arith.constant 0 : index
    %c0_247 = arith.constant 0 : index
    %c0_248 = arith.constant 0 : index
    %302 = vector.load %arg15[%c0_246, %c0_247, %c0_248] : memref<1x8x256xf32, #tpu.memory_space<vmem>>, vector<1x8x256xf32>
    %303 = vector.shape_cast %302 : vector<1x8x256xf32> to vector<8x256xf32>
    %304 = vector.shape_cast %301 : vector<8x256xf32> to vector<1x8x256xf32>
    tpu.vector_store %arg15[%c0_246, %c0_247, %c0_248], %304 {strides = array<i32>} : memref<1x8x256xf32, #tpu.memory_space<vmem>>, vector<1x8x256xf32>,
    return
  }
  func.func @transform_0(%arg0: i32) -> (i32, i32, i32) {
    %c0_i32 = arith.constant 0 : i32
    %c0_i32_0 = arith.constant 0 : i32
    %c0_i32_1 = arith.constant 0 : i32
    return %arg0, %c0_i32, %c0_i32_0 : i32, i32, i32
  }
  func.func @transform_1(%arg0: i32) -> (i32, i32, i32) {
    %c0_i32 = arith.constant 0 : i32
    %c0_i32_0 = arith.constant 0 : i32
    %c0_i32_1 = arith.constant 0 : i32
    %c0_i32_2 = arith.constant 0 : i32
    return %c0_i32, %c0_i32_0, %c0_i32_1 : i32, i32, i32
  }
  func.func @transform_2(%arg0: i32) -> (i32, i32, i32) {
    %c0_i32 = arith.constant 0 : i32
    %c0_i32_0 = arith.constant 0 : i32
    %c0_i32_1 = arith.constant 0 : i32
    %c0_i32_2 = arith.constant 0 : i32
    return %c0_i32, %c0_i32_0, %c0_i32_1 : i32, i32, i32
  }
  func.func @transform_3(%arg0: i32) -> (i32, i32, i32) {
    %c0_i32 = arith.constant 0 : i32
    %c0_i32_0 = arith.constant 0 : i32
    %c0_i32_1 = arith.constant 0 : i32
    %c0_i32_2 = arith.constant 0 : i32
    return %c0_i32, %c0_i32_0, %c0_i32_1 : i32, i32, i32
  }
  func.func @transform_4(%arg0: i32) -> (i32, i32, i32) {
    %c0_i32 = arith.constant 0 : i32
    %c0_i32_0 = arith.constant 0 : i32
    %c0_i32_1 = arith.constant 0 : i32
    %c0_i32_2 = arith.constant 0 : i32
    return %c0_i32, %c0_i32_0, %c0_i32_1 : i32, i32, i32
  }
  func.func @transform_5(%arg0: i32) -> (i32, i32, i32) {
    %c0_i32 = arith.constant 0 : i32
    %c0_i32_0 = arith.constant 0 : i32
    %c0_i32_1 = arith.constant 0 : i32
    %c0_i32_2 = arith.constant 0 : i32
    return %c0_i32, %c0_i32_0, %c0_i32_1 : i32, i32, i32
  }
  func.func @transform_6(%arg0: i32) -> (i32, i32, i32) {
    %c0_i32 = arith.constant 0 : i32
    %c0_i32_0 = arith.constant 0 : i32
    %c0_i32_1 = arith.constant 0 : i32
    %c0_i32_2 = arith.constant 0 : i32
    return %c0_i32, %c0_i32_0, %c0_i32_1 : i32, i32, i32
  }
  func.func @transform_7(%arg0: i32) -> (i32, i32, i32) {
    %c0_i32 = arith.constant 0 : i32
    %c0_i32_0 = arith.constant 0 : i32
    %c0_i32_1 = arith.constant 0 : i32
    %c0_i32_2 = arith.constant 0 : i32
    return %c0_i32, %c0_i32_0, %c0_i32_1 : i32, i32, i32
  }
  func.func @transform_8(%arg0: i32) -> (i32, i32, i32) {
    %c0_i32 = arith.constant 0 : i32
    %c0_i32_0 = arith.constant 0 : i32
    %c0_i32_1 = arith.constant 0 : i32
    %c0_i32_2 = arith.constant 0 : i32
    return %c0_i32, %c0_i32_0, %c0_i32_1 : i32, i32, i32
  }
  func.func @transform_9(%arg0: i32) -> (i32, i32, i32) {
    %c0_i32 = arith.constant 0 : i32
    %c0_i32_0 = arith.constant 0 : i32
    %c0_i32_1 = arith.constant 0 : i32
    %c0_i32_2 = arith.constant 0 : i32
    return %c0_i32, %c0_i32_0, %c0_i32_1 : i32, i32, i32
  }
  func.func @transform_10(%arg0: i32) -> (i32, i32, i32) {
    %c0_i32 = arith.constant 0 : i32
    %c0_i32_0 = arith.constant 0 : i32
    %c0_i32_1 = arith.constant 0 : i32
    %c0_i32_2 = arith.constant 0 : i32
    return %c0_i32, %c0_i32_0, %c0_i32_1 : i32, i32, i32
  }
  func.func @transform_11(%arg0: i32) -> (i32, i32, i32, i32) {
    %c0_i32 = arith.constant 0 : i32
    %c0_i32_0 = arith.constant 0 : i32
    %c0_i32_1 = arith.constant 0 : i32
    %c0_i32_2 = arith.constant 0 : i32
    %c0_i32_3 = arith.constant 0 : i32
    return %c0_i32, %c0_i32_0, %c0_i32_1, %c0_i32_2 : i32, i32, i32, i32
  }
  func.func @transform_12(%arg0: i32) -> (i32, i32, i32) {
    %c0_i32 = arith.constant 0 : i32
    %c0_i32_0 = arith.constant 0 : i32
    %c0_i32_1 = arith.constant 0 : i32
    %c0_i32_2 = arith.constant 0 : i32
    return %c0_i32, %c0_i32_0, %c0_i32_1 : i32, i32, i32
  }
  func.func @transform_13(%arg0: i32) -> (i32, i32, i32) {
    %c0_i32 = arith.constant 0 : i32
    %c0_i32_0 = arith.constant 0 : i32
    %c0_i32_1 = arith.constant 0 : i32
    %c0_i32_2 = arith.constant 0 : i32
    return %c0_i32, %c0_i32_0, %c0_i32_1 : i32, i32, i32
  }
  func.func @transform_14(%arg0: i32) -> (i32, i32, i32) {
    %c0_i32 = arith.constant 0 : i32
    %c0_i32_0 = arith.constant 0 : i32
    %c0_i32_1 = arith.constant 0 : i32
    return %arg0, %c0_i32, %c0_i32_0 : i32, i32, i32
  }
}

</mosaic_0001>

<llo_original>
// kernel: tpu_custom_call.1
$region0: #{tpu_custom_call.1}
  #allocation0 [shape = 'u32[]', space=smem, size = 0x4, offset = 0x4, fixed_abs, tag = 'smem constant byte address 0x4 - core index']
  #allocation1 [shape = 'u32[144,128]{1,0:T(1,128)}', space=vmem, size = 0x12000, scoped, tag = 'internal scratch']
  %s0 = inlined_call_operand.hbm [shape: f32[2,72,128], index: 0, kind: input, shape index: {}]
  %s1 = inlined_call_operand.vmem [shape: bf16[5,128,128], index: 1, kind: input, shape index: {}]
  %s2 = inlined_call_operand.hbm [shape: bf16[5,72,72], index: 2, kind: input, shape index: {}]
  %s3 = inlined_call_operand.vmem [shape: f32[5,72,1], index: 3, kind: input, shape index: {}]
  %s4 = inlined_call_operand.vmem [shape: f32[5,72,1], index: 4, kind: input, shape index: {}]
  %s5 = inlined_call_operand.vmem [shape: f32[5,72,1], index: 5, kind: input, shape index: {}]
  %s6 = inlined_call_operand.hbm [shape: bf16[5,72,72], index: 6, kind: input, shape index: {}]
  %s7 = inlined_call_operand.vmem [shape: f32[5,72,1], index: 7, kind: input, shape index: {}]
  %s8 = inlined_call_operand.vmem [shape: f32[5,72,1], index: 8, kind: input, shape index: {}]
  %s9 = inlined_call_operand.vmem [shape: bf16[3,8,8], index: 9, kind: input, shape index: {}]
  %s10 = inlined_call_operand.hbm [shape: bf16[3,128,256], index: 10, kind: input, shape index: {}]
  %s11 = inlined_call_operand.vmem [shape: bf16[2,3,256,256], index: 11, kind: input, shape index: {}]
  %s12 = inlined_call_operand.hbm [shape: f32[3,8,256], index: 12, kind: input, shape index: {}]
  %s13 = inlined_call_operand.vmem [shape: f32[3,8,1], index: 13, kind: input, shape index: {}]
  %s14 = inlined_call_operand.hbm [shape: f32[2,8,256], index: 14, kind: output, shape index: {}]
  %s15 = sld [smem:[#allocation0]]
  $region109: #{tpu_custom_call.1} parent=0
    _
  %s17 = ssub.s32 1, %s15
  %s18 = scalar_select 0, %s17, %s15
  $region1: #{tpu_custom_call.1} parent=0
    #allocation2 [shape = 'u8[73728]{0}', space=vmem, size = 0x12000, scoped, tag = 'input window, operand 0']
    #allocation3 [shape = 's32[2]{0}', space=sflag, size = 0x8, scoped, tag = 'scoped memory for tpu_custom_call.1']
    #allocation4 [shape = 's32[2]{0}', space=sflag, size = 0x8, scoped, tag = 'scoped memory for tpu_custom_call.1']
    #allocation5 [shape = 'u8[92160]{0}', space=vmem, size = 0x16800, scoped, tag = 'input window, operand 2, single buffered']
    #allocation6 [shape = 's32[1]{0}', space=sflag, size = 0x4, scoped, tag = 'scoped memory for tpu_custom_call.1']
    #allocation7 [shape = 'u8[92160]{0}', space=vmem, size = 0x16800, scoped, tag = 'input window, operand 6, single buffered']
    #allocation8 [shape = 'u8[196608]{0}', space=vmem, size = 0x30000, scoped, tag = 'input window, operand 10, single buffered']
    #allocation9 [shape = 's32[1]{0}', space=sflag, size = 0x4, scoped, tag = 'scoped memory for tpu_custom_call.1']
    #allocation10 [shape = 'u8[24576]{0}', space=vmem, size = 0x6000, scoped, tag = 'input window, operand 12, single buffered']
    #allocation11 [shape = 'u8[16384]{0}', space=vmem, size = 0x4000, scoped, tag = 'output window, operand 0']
    %19 = vsyncpa [#allocation3], 0
    %s20 = scalar_lea.sflag [#allocation3], 1
    %21 = vsyncpa %s20, 0
    %22 = vsyncpa [#allocation6], 0
    %23 = vsyncpa [#allocation9], 0
    %24 = vsyncpa [#allocation4], 0
    %s25 = scalar_lea.sflag [#allocation4], 1
    %26 = vsyncpa %s25, 0
    loop: start=0, step=1, limit=4
    $region2: #{tpu_custom_call.1} parent=1 // loop_pre_header
      _
    $region3: #{tpu_custom_call.1} parent=1 // loop_header
      %s28 = sphi 0, %s32
      %p29 = scmp.ge.s32.totalorder %s28, 4
      %s38 = sphi 0, %s40
      %s41 = sphi 0, %s38
      %s42 = sphi 0, %s41
      %s58 = sphi 0, %s42
      %s62 = sphi 0, %s62
      %s64 = sphi 0, %s62
      %s65 = sphi 0, %s64
      %s79 = sphi 0, %s65
      %s83 = sphi 0, %s83
      %s85 = sphi 0, %s83
      %s86 = sphi 0, %s85
      %s100 = sphi 0, %s86
      %s104 = sphi 0, %s104
      %s106 = sphi 0, %s104
      %s107 = sphi 0, %s106
      %s121 = sphi 0, %s107
      %s125 = sphi 0, %s125
      %s127 = sphi 0, %s125
      %s128 = sphi 0, %s127
      %s142 = sphi 0, %s128
      %s146 = sphi 0, %s146
      %s148 = sphi 0, %s146
      %s149 = sphi 0, %s148
      %s163 = sphi 0, %s149
      %s167 = sphi 0, %s167
      %s169 = sphi 0, %s167
      %s170 = sphi 0, %s169
      %s184 = sphi 0, %s170
      %s188 = sphi 0, %s188
      %s190 = sphi 0, %s188
      %s191 = sphi 0, %s190
      %s205 = sphi 0, %s191
      %s209 = sphi 0, %s209
      %s211 = sphi 0, %s209
      %s212 = sphi 0, %s211
      %s226 = sphi 0, %s212
      %s230 = sphi 0, %s230
      %s232 = sphi 0, %s230
      %s233 = sphi 0, %s232
      %s247 = sphi 0, %s233
      %s251 = sphi 0, %s251
      %s253 = sphi 0, %s251
      %s254 = sphi 0, %s253
      %s268 = sphi 0, %s254
      %s272 = sphi 0, %s272
      %s274 = sphi 0, %s272
      %s275 = sphi 0, %s274
      %s289 = sphi 0, %s275
      %s293 = sphi 0, %s293
      %s295 = sphi 0, %s293
      %s296 = sphi 0, %s295
      %s310 = sphi 0, %s296
      %s314 = sphi 0, %s314
      %s316 = sphi 0, %s314
      %s317 = sphi 0, %s316
      %s331 = sphi 0, %s317
      %s337 = sphi 0, %s339
      %s340 = sphi 0, %s337
      %s341 = sphi 0, %s340
      %s357 = sphi 0, %s341
    $region4: #{tpu_custom_call.1} parent=1 // loop_header_branch
      %31 = sbr.rel (%p29) target = $region8
    $region5: #{tpu_custom_call.1} parent=1 // loop_body
      %s33 = ssub.s32 %s28, 1
      %s34 = ssub.s32 %s28, 2
      %s35 = sadd.s32 %s28, 1
      %s36 = ssub.s32 %s28, %s35
      %p37 = scmp.eq.s32.totalorder %s36, 0
      %s39 = sadd.s32 %s38, 1
      %s40 = scalar_select %p37, %s38, %s39
      %p43 = pneg %p37
      %p44 = scmp.eq.s32.totalorder %s28, 1
      %p45 = por %p43, %p44
      %p46 = scmp.ne.s32.totalorder %s38, %s41
      %p47 = scmp.eq.s32.totalorder %s28, 0
      %p48 = por %p46, %p47
      %p49 = scmp.ne.s32.totalorder %s38, %s41
      %p50 = scmp.eq.s32.totalorder %s33, 1
      %p51 = por %p49, %p50
      %p52 = scmp.ne.s32.totalorder %s41, %s42
      %p53 = scmp.eq.s32.totalorder %s33, 0
      %p54 = por %p52, %p53
      %p55 = scmp.ne.s32.totalorder %s41, %s42
      %p56 = scmp.eq.s32.totalorder %s34, 1
      %p57 = por %p55, %p56
      %p59 = scmp.ne.s32.totalorder %s42, %s58
      %p60 = scmp.eq.s32.totalorder %s34, 0
      %p61 = por %p59, %p60
      %s63 = sadd.s32 %s62, 1
      %p66 = scmp.eq.s32.totalorder %s28, 1
      %p67 = scmp.ne.s32.totalorder %s62, %s64
      %p68 = scmp.eq.s32.totalorder %s28, 0
      %p69 = por %p67, %p68
      %p70 = scmp.ne.s32.totalorder %s62, %s64
      %p71 = scmp.eq.s32.totalorder %s33, 1
      %p72 = por %p70, %p71
      %p73 = scmp.ne.s32.totalorder %s64, %s65
      %p74 = scmp.eq.s32.totalorder %s33, 0
      %p75 = por %p73, %p74
      %p76 = scmp.ne.s32.totalorder %s64, %s65
      %p77 = scmp.eq.s32.totalorder %s34, 1
      %p78 = por %p76, %p77
      %p80 = scmp.ne.s32.totalorder %s65, %s79
      %p81 = scmp.eq.s32.totalorder %s34, 0
      %p82 = por %p80, %p81
      %s84 = sadd.s32 %s83, 1
      %p87 = scmp.eq.s32.totalorder %s28, 1
      %p88 = scmp.ne.s32.totalorder %s83, %s85
      %p89 = scmp.eq.s32.totalorder %s28, 0
      %p90 = por %p88, %p89
      %p91 = scmp.ne.s32.totalorder %s83, %s85
      %p92 = scmp.eq.s32.totalorder %s33, 1
      %p93 = por %p91, %p92
      %p94 = scmp.ne.s32.totalorder %s85, %s86
      %p95 = scmp.eq.s32.totalorder %s33, 0
      %p96 = por %p94, %p95
      %p97 = scmp.ne.s32.totalorder %s85, %s86
      %p98 = scmp.eq.s32.totalorder %s34, 1
      %p99 = por %p97, %p98
      %p101 = scmp.ne.s32.totalorder %s86, %s100
      %p102 = scmp.eq.s32.totalorder %s34, 0
      %p103 = por %p101, %p102
      %s105 = sadd.s32 %s104, 1
      %p108 = scmp.eq.s32.totalorder %s28, 1
      %p109 = scmp.ne.s32.totalorder %s104, %s106
      %p110 = scmp.eq.s32.totalorder %s28, 0
      %p111 = por %p109, %p110
      %p112 = scmp.ne.s32.totalorder %s104, %s106
      %p113 = scmp.eq.s32.totalorder %s33, 1
      %p114 = por %p112, %p113
      %p115 = scmp.ne.s32.totalorder %s106, %s107
      %p116 = scmp.eq.s32.totalorder %s33, 0
      %p117 = por %p115, %p116
      %p118 = scmp.ne.s32.totalorder %s106, %s107
      %p119 = scmp.eq.s32.totalorder %s34, 1
      %p120 = por %p118, %p119
      %p122 = scmp.ne.s32.totalorder %s107, %s121
      %p123 = scmp.eq.s32.totalorder %s34, 0
      %p124 = por %p122, %p123
      %s126 = sadd.s32 %s125, 1
      %p129 = scmp.eq.s32.totalorder %s28, 1
      %p130 = scmp.ne.s32.totalorder %s125, %s127
      %p131 = scmp.eq.s32.totalorder %s28, 0
      %p132 = por %p130, %p131
      %p133 = scmp.ne.s32.totalorder %s125, %s127
      %p134 = scmp.eq.s32.totalorder %s33, 1
      %p135 = por %p133, %p134
      %p136 = scmp.ne.s32.totalorder %s127, %s128
      %p137 = scmp.eq.s32.totalorder %s33, 0
      %p138 = por %p136, %p137
      %p139 = scmp.ne.s32.totalorder %s127, %s128
      %p140 = scmp.eq.s32.totalorder %s34, 1
      %p141 = por %p139, %p140
      %p143 = scmp.ne.s32.totalorder %s128, %s142
      %p144 = scmp.eq.s32.totalorder %s34, 0
      %p145 = por %p143, %p144
      %s147 = sadd.s32 %s146, 1
      %p150 = scmp.eq.s32.totalorder %s28, 1
      %p151 = scmp.ne.s32.totalorder %s146, %s148
      %p152 = scmp.eq.s32.totalorder %s28, 0
      %p153 = por %p151, %p152
      %p154 = scmp.ne.s32.totalorder %s146, %s148
      %p155 = scmp.eq.s32.totalorder %s33, 1
      %p156 = por %p154, %p155
      %p157 = scmp.ne.s32.totalorder %s148, %s149
      %p158 = scmp.eq.s32.totalorder %s33, 0
      %p159 = por %p157, %p158
      %p160 = scmp.ne.s32.totalorder %s148, %s149
      %p161 = scmp.eq.s32.totalorder %s34, 1
      %p162 = por %p160, %p161
      %p164 = scmp.ne.s32.totalorder %s149, %s163
      %p165 = scmp.eq.s32.totalorder %s34, 0
      %p166 = por %p164, %p165
      %s168 = sadd.s32 %s167, 1
      %p171 = scmp.eq.s32.totalorder %s28, 1
      %p172 = scmp.ne.s32.totalorder %s167, %s169
      %p173 = scmp.eq.s32.totalorder %s28, 0
      %p174 = por %p172, %p173
      %p175 = scmp.ne.s32.totalorder %s167, %s169
      %p176 = scmp.eq.s32.totalorder %s33, 1
      %p177 = por %p175, %p176
      %p178 = scmp.ne.s32.totalorder %s169, %s170
      %p179 = scmp.eq.s32.totalorder %s33, 0
      %p180 = por %p178, %p179
      %p181 = scmp.ne.s32.totalorder %s169, %s170
      %p182 = scmp.eq.s32.totalorder %s34, 1
      %p183 = por %p181, %p182
      %p185 = scmp.ne.s32.totalorder %s170, %s184
      %p186 = scmp.eq.s32.totalorder %s34, 0
      %p187 = por %p185, %p186
      %s189 = sadd.s32 %s188, 1
      %p192 = scmp.eq.s32.totalorder %s28, 1
      %p193 = scmp.ne.s32.totalorder %s188, %s190
      %p194 = scmp.eq.s32.totalorder %s28, 0
      %p195 = por %p193, %p194
      %p196 = scmp.ne.s32.totalorder %s188, %s190
      %p197 = scmp.eq.s32.totalorder %s33, 1
      %p198 = por %p196, %p197
      %p199 = scmp.ne.s32.totalorder %s190, %s191
      %p200 = scmp.eq.s32.totalorder %s33, 0
      %p201 = por %p199, %p200
      %p202 = scmp.ne.s32.totalorder %s190, %s191
      %p203 = scmp.eq.s32.totalorder %s34, 1
      %p204 = por %p202, %p203
      %p206 = scmp.ne.s32.totalorder %s191, %s205
      %p207 = scmp.eq.s32.totalorder %s34, 0
      %p208 = por %p206, %p207
      %s210 = sadd.s32 %s209, 1
      %p213 = scmp.eq.s32.totalorder %s28, 1
      %p214 = scmp.ne.s32.totalorder %s209, %s211
      %p215 = scmp.eq.s32.totalorder %s28, 0
      %p216 = por %p214, %p215
      %p217 = scmp.ne.s32.totalorder %s209, %s211
      %p218 = scmp.eq.s32.totalorder %s33, 1
      %p219 = por %p217, %p218
      %p220 = scmp.ne.s32.totalorder %s211, %s212
      %p221 = scmp.eq.s32.totalorder %s33, 0
      %p222 = por %p220, %p221
      %p223 = scmp.ne.s32.totalorder %s211, %s212
      %p224 = scmp.eq.s32.totalorder %s34, 1
      %p225 = por %p223, %p224
      %p227 = scmp.ne.s32.totalorder %s212, %s226
      %p228 = scmp.eq.s32.totalorder %s34, 0
      %p229 = por %p227, %p228
      %s231 = sadd.s32 %s230, 1
      %p234 = scmp.eq.s32.totalorder %s28, 1
      %p235 = scmp.ne.s32.totalorder %s230, %s232
      %p236 = scmp.eq.s32.totalorder %s28, 0
      %p237 = por %p235, %p236
      %p238 = scmp.ne.s32.totalorder %s230, %s232
      %p239 = scmp.eq.s32.totalorder %s33, 1
      %p240 = por %p238, %p239
      %p241 = scmp.ne.s32.totalorder %s232, %s233
      %p242 = scmp.eq.s32.totalorder %s33, 0
      %p243 = por %p241, %p242
      %p244 = scmp.ne.s32.totalorder %s232, %s233
      %p245 = scmp.eq.s32.totalorder %s34, 1
      %p246 = por %p244, %p245
      %p248 = scmp.ne.s32.totalorder %s233, %s247
      %p249 = scmp.eq.s32.totalorder %s34, 0
      %p250 = por %p248, %p249
      %s252 = sadd.s32 %s251, 1
      %p255 = scmp.eq.s32.totalorder %s28, 1
      %p256 = scmp.ne.s32.totalorder %s251, %s253
      %p257 = scmp.eq.s32.totalorder %s28, 0
      %p258 = por %p256, %p257
      %p259 = scmp.ne.s32.totalorder %s251, %s253
      %p260 = scmp.eq.s32.totalorder %s33, 1
      %p261 = por %p259, %p260
      %p262 = scmp.ne.s32.totalorder %s253, %s254
      %p263 = scmp.eq.s32.totalorder %s33, 0
      %p264 = por %p262, %p263
      %p265 = scmp.ne.s32.totalorder %s253, %s254
      %p266 = scmp.eq.s32.totalorder %s34, 1
      %p267 = por %p265, %p266
      %p269 = scmp.ne.s32.totalorder %s254, %s268
      %p270 = scmp.eq.s32.totalorder %s34, 0
      %p271 = por %p269, %p270
      %s273 = sadd.s32 %s272, 1
      %p276 = scmp.eq.s32.totalorder %s28, 1
      %p277 = scmp.ne.s32.totalorder %s272, %s274
      %p278 = scmp.eq.s32.totalorder %s28, 0
      %p279 = por %p277, %p278
      %p280 = scmp.ne.s32.totalorder %s272, %s274
      %p281 = scmp.eq.s32.totalorder %s33, 1
      %p282 = por %p280, %p281
      %p283 = scmp.ne.s32.totalorder %s274, %s275
      %p284 = scmp.eq.s32.totalorder %s33, 0
      %p285 = por %p283, %p284
      %p286 = scmp.ne.s32.totalorder %s274, %s275
      %p287 = scmp.eq.s32.totalorder %s34, 1
      %p288 = por %p286, %p287
      %p290 = scmp.ne.s32.totalorder %s275, %s289
      %p291 = scmp.eq.s32.totalorder %s34, 0
      %p292 = por %p290, %p291
      %s294 = sadd.s32 %s293, 1
      %p297 = scmp.eq.s32.totalorder %s28, 1
      %p298 = scmp.ne.s32.totalorder %s293, %s295
      %p299 = scmp.eq.s32.totalorder %s28, 0
      %p300 = por %p298, %p299
      %p301 = scmp.ne.s32.totalorder %s293, %s295
      %p302 = scmp.eq.s32.totalorder %s33, 1
      %p303 = por %p301, %p302
      %p304 = scmp.ne.s32.totalorder %s295, %s296
      %p305 = scmp.eq.s32.totalorder %s33, 0
      %p306 = por %p304, %p305
      %p307 = scmp.ne.s32.totalorder %s295, %s296
      %p308 = scmp.eq.s32.totalorder %s34, 1
      %p309 = por %p307, %p308
      %p311 = scmp.ne.s32.totalorder %s296, %s310
      %p312 = scmp.eq.s32.totalorder %s34, 0
      %p313 = por %p311, %p312
      %s315 = sadd.s32 %s314, 1
      %p318 = scmp.eq.s32.totalorder %s28, 1
      %p319 = scmp.ne.s32.totalorder %s314, %s316
      %p320 = scmp.eq.s32.totalorder %s28, 0
      %p321 = por %p319, %p320
      %p322 = scmp.ne.s32.totalorder %s314, %s316
      %p323 = scmp.eq.s32.totalorder %s33, 1
      %p324 = por %p322, %p323
      %p325 = scmp.ne.s32.totalorder %s316, %s317
      %p326 = scmp.eq.s32.totalorder %s33, 0
      %p327 = por %p325, %p326
      %p328 = scmp.ne.s32.totalorder %s316, %s317
      %p329 = scmp.eq.s32.totalorder %s34, 1
      %p330 = por %p328, %p329
      %p332 = scmp.ne.s32.totalorder %s317, %s331
      %p333 = scmp.eq.s32.totalorder %s34, 0
      %p334 = por %p332, %p333
      %s335 = ssub.s32 %s28, %s35
      %p336 = scmp.eq.s32.totalorder %s335, 0
      %s338 = sadd.s32 %s337, 1
      %s339 = scalar_select %p336, %s337, %s338
      %p342 = pneg %p336
      %p343 = scmp.eq.s32.totalorder %s28, 1
      %p344 = por %p342, %p343
      %p345 = scmp.ne.s32.totalorder %s337, %s340
      %p346 = scmp.eq.s32.totalorder %s28, 0
      %p347 = por %p345, %p346
      %p348 = scmp.ne.s32.totalorder %s337, %s340
      %p349 = scmp.eq.s32.totalorder %s33, 1
      %p350 = por %p348, %p349
      %p351 = scmp.ne.s32.totalorder %s340, %s341
      %p352 = scmp.eq.s32.totalorder %s33, 0
      %p353 = por %p351, %p352
      %p354 = scmp.ne.s32.totalorder %s340, %s341
      %p355 = scmp.eq.s32.totalorder %s34, 1
      %p356 = por %p354, %p355
      %p358 = scmp.ne.s32.totalorder %s341, %s357
      %p359 = scmp.eq.s32.totalorder %s34, 0
      %p360 = por %p358, %p359
      %p361 = scmp.le.s32.totalorder 1, %s28
      %p362 = scmp.lt.s32.totalorder %s28, 3
      %p363 = pnand %p361, %p362
      %p364 = pneg %p363
      // Predicated region
      $region9: #{tpu_custom_call.1} parent=5 // pred_check
        _
      $region10: #{tpu_custom_call.1} parent=5 // pred_check_branch
        %366 = sbr.rel (%p363) target = $region12
      $region11: #{tpu_custom_call.1} parent=5 // pred_region
        %s367 = ssub.s32 %s28, 1
        // Predicated region
        $region13: #{tpu_custom_call.1} parent=11 // pred_check
          %p368 = pneg %p75
        $region14: #{tpu_custom_call.1} parent=11 // pred_check_branch
          %370 = sbr.rel (%p368) target = $region16
        $region15: #{tpu_custom_call.1} parent=11 // pred_region
          _
        $region16: #{tpu_custom_call.1} parent=11 // pred_fallthru
          _
        // Predicated region
        $region17: #{tpu_custom_call.1} parent=11 // pred_check
          %p371 = pneg %p96
        $region18: #{tpu_custom_call.1} parent=11 // pred_check_branch
          %373 = sbr.rel (%p371) target = $region20
        $region19: #{tpu_custom_call.1} parent=11 // pred_region
          %s375 = ssub.s32 2880, 2880
          %376 = vsyncadd [#allocation6], %s375
          %s377 = sshll.u32 [#allocation5], 4
          %s378 = int_to_ptr.vmem [resolvable:$true] %s377
          %383 = dma.hbm_to_vmem [thread:$0]  %s2, 2880, %s378, [#allocation6], 64, 64, 4
        $region20: #{tpu_custom_call.1} parent=11 // pred_fallthru
          _
        // Predicated region
        $region21: #{tpu_custom_call.1} parent=11 // pred_check
          %p384 = pneg %p117
        $region22: #{tpu_custom_call.1} parent=11 // pred_check_branch
          %386 = sbr.rel (%p384) target = $region24
        $region23: #{tpu_custom_call.1} parent=11 // pred_region
          _
        $region24: #{tpu_custom_call.1} parent=11 // pred_fallthru
          _
        // Predicated region
        $region25: #{tpu_custom_call.1} parent=11 // pred_check
          %p387 = pneg %p138
        $region26: #{tpu_custom_call.1} parent=11 // pred_check_branch
          %389 = sbr.rel (%p387) target = $region28
        $region27: #{tpu_custom_call.1} parent=11 // pred_region
          _
        $region28: #{tpu_custom_call.1} parent=11 // pred_fallthru
          _
        // Predicated region
        $region29: #{tpu_custom_call.1} parent=11 // pred_check
          %p390 = pneg %p159
        $region30: #{tpu_custom_call.1} parent=11 // pred_check_branch
          %392 = sbr.rel (%p390) target = $region32
        $region31: #{tpu_custom_call.1} parent=11 // pred_region
          _
        $region32: #{tpu_custom_call.1} parent=11 // pred_fallthru
          _
        // Predicated region
        $region33: #{tpu_custom_call.1} parent=11 // pred_check
          %p393 = pneg %p180
        $region34: #{tpu_custom_call.1} parent=11 // pred_check_branch
          %395 = sbr.rel (%p393) target = $region36
        $region35: #{tpu_custom_call.1} parent=11 // pred_region
          %s397 = ssub.s32 2880, 2880
          %398 = vsyncadd [#allocation6], %s397
          %s399 = sshll.u32 [#allocation7], 4
          %s400 = int_to_ptr.vmem [resolvable:$true] %s399
          %405 = dma.hbm_to_vmem [thread:$0]  %s6, 2880, %s400, [#allocation6], 64, 64, 4
        $region36: #{tpu_custom_call.1} parent=11 // pred_fallthru
          _
        // Predicated region
        $region37: #{tpu_custom_call.1} parent=11 // pred_check
          %p406 = pneg %p201
        $region38: #{tpu_custom_call.1} parent=11 // pred_check_branch
          %408 = sbr.rel (%p406) target = $region40
        $region39: #{tpu_custom_call.1} parent=11 // pred_region
          _
        $region40: #{tpu_custom_call.1} parent=11 // pred_fallthru
          _
        // Predicated region
        $region41: #{tpu_custom_call.1} parent=11 // pred_check
          %p409 = pneg %p222
        $region42: #{tpu_custom_call.1} parent=11 // pred_check_branch
          %411 = sbr.rel (%p409) target = $region44
        $region43: #{tpu_custom_call.1} parent=11 // pred_region
          _
        $region44: #{tpu_custom_call.1} parent=11 // pred_fallthru
          _
        // Predicated region
        $region45: #{tpu_custom_call.1} parent=11 // pred_check
          %p412 = pneg %p243
        $region46: #{tpu_custom_call.1} parent=11 // pred_check_branch
          %414 = sbr.rel (%p412) target = $region48
        $region47: #{tpu_custom_call.1} parent=11 // pred_region
          _
        $region48: #{tpu_custom_call.1} parent=11 // pred_fallthru
          _
        // Predicated region
        $region49: #{tpu_custom_call.1} parent=11 // pred_check
          %p415 = pneg %p264
        $region50: #{tpu_custom_call.1} parent=11 // pred_check_branch
          %417 = sbr.rel (%p415) target = $region52
        $region51: #{tpu_custom_call.1} parent=11 // pred_region
          %s419 = ssub.s32 6144, 6144
          %420 = vsyncadd [#allocation9], %s419
          %s421 = sshll.u32 [#allocation8], 4
          %s422 = int_to_ptr.vmem [resolvable:$true] %s421
          %427 = dma.hbm_to_vmem [thread:$0]  %s10, 6144, %s422, [#allocation9], 128, 128, 8
        $region52: #{tpu_custom_call.1} parent=11 // pred_fallthru
          _
        // Predicated region
        $region53: #{tpu_custom_call.1} parent=11 // pred_check
          %p428 = pneg %p285
        $region54: #{tpu_custom_call.1} parent=11 // pred_check_branch
          %430 = sbr.rel (%p428) target = $region56
        $region55: #{tpu_custom_call.1} parent=11 // pred_region
          _
        $region56: #{tpu_custom_call.1} parent=11 // pred_fallthru
          _
        // Predicated region
        $region57: #{tpu_custom_call.1} parent=11 // pred_check
          %p431 = pneg %p306
        $region58: #{tpu_custom_call.1} parent=11 // pred_check_branch
          %433 = sbr.rel (%p431) target = $region60
        $region59: #{tpu_custom_call.1} parent=11 // pred_region
          %s435 = ssub.s32 768, 768
          %436 = vsyncadd [#allocation9], %s435
          %s437 = sshll.u32 [#allocation10], 4
          %s438 = int_to_ptr.vmem [resolvable:$true] %s437
          %443 = dma.hbm_to_vmem [thread:$0]  %s12, 768, %s438, [#allocation9], 256, 256, 16
        $region60: #{tpu_custom_call.1} parent=11 // pred_fallthru
          _
        // Predicated region
        $region61: #{tpu_custom_call.1} parent=11 // pred_check
          %p444 = pneg %p327
        $region62: #{tpu_custom_call.1} parent=11 // pred_check_branch
          %446 = sbr.rel (%p444) target = $region64
        $region63: #{tpu_custom_call.1} parent=11 // pred_region
          _
        $region64: #{tpu_custom_call.1} parent=11 // pred_fallthru
          _
      $region12: #{tpu_custom_call.1} parent=5 // pred_fallthru
        _
      %p447 = scmp.lt.s32.totalorder %s28, 2
      // Predicated region
      $region65: #{tpu_custom_call.1} parent=5 // pred_check
        %p448 = pneg %p447
      $region66: #{tpu_custom_call.1} parent=5 // pred_check_branch
        %450 = sbr.rel (%p448) target = $region68
      $region67: #{tpu_custom_call.1} parent=5 // pred_region
        // Predicated region
        $region69: #{tpu_custom_call.1} parent=67 // pred_check
          %p451 = pneg %p48
        $region70: #{tpu_custom_call.1} parent=67 // pred_check_branch
          %453 = sbr.rel (%p451) target = $region72
        $region71: #{tpu_custom_call.1} parent=67 // pred_region
          %s454 = sand.u32 %s38, 1
          %s455 = scalar_lea.sflag [#allocation3], %s454
          %s456 = sand.u32 %s38, 1
          %s457 = smul.addr %s456, 72
          %s458 = scalar_lea.vmem [#allocation2], %s457
          %s460 = ssub.s32 1152, 1152
          %461 = vsyncadd %s455, %s460
          %s462 = smul.addr %s28, 9
          %s463 = smul.addr %s462, 128
          %s464 = scalar_lea.hbm %s0, %s463
          %s465 = sshll.u32 %s458, 4
          %s466 = int_to_ptr.vmem [resolvable:$true] %s465
          %471 = dma.hbm_to_vmem [thread:$0]  %s464, 1152, %s466, %s455, 128, 128, 8
        $region72: #{tpu_custom_call.1} parent=67 // pred_fallthru
          _
      $region68: #{tpu_custom_call.1} parent=5 // pred_fallthru
        _
      %p472 = scmp.le.s32.totalorder 1, %s28
      %p473 = scmp.lt.s32.totalorder %s28, 3
      %p474 = pnand %p472, %p473
      %p475 = pneg %p474
      // Predicated region
      $region73: #{tpu_custom_call.1} parent=5 // pred_check
        _
      $region74: #{tpu_custom_call.1} parent=5 // pred_check_branch
        %477 = sbr.rel (%p474) target = $region76
      $region75: #{tpu_custom_call.1} parent=5 // pred_region
        %s478 = ssub.s32 %s28, 1
        %s479 = sand.u32 %s41, 1
        %s480 = scalar_lea.sflag [#allocation3], %s479
        %s481 = sand.u32 %s41, 1
        %s482 = smul.addr %s481, 72
        %s483 = scalar_lea.vmem [#allocation2], %s482
        // Predicated region
        $region77: #{tpu_custom_call.1} parent=75 // pred_check
          %p484 = pneg %p54
        $region78: #{tpu_custom_call.1} parent=75 // pred_check_branch
          %486 = sbr.rel (%p484) target = $region80
        $region79: #{tpu_custom_call.1} parent=75 // pred_region
          %487 = dma.done %s480, 1152
        $region80: #{tpu_custom_call.1} parent=75 // pred_fallthru
          _
        // Predicated region
        $region81: #{tpu_custom_call.1} parent=75 // pred_check
          %p488 = pneg %p96
        $region82: #{tpu_custom_call.1} parent=75 // pred_check_branch
          %490 = sbr.rel (%p488) target = $region84
        $region83: #{tpu_custom_call.1} parent=75 // pred_region
          %491 = dma.done [#allocation6], 2880
        $region84: #{tpu_custom_call.1} parent=75 // pred_fallthru
          _
        // Predicated region
        $region85: #{tpu_custom_call.1} parent=75 // pred_check
          %p492 = pneg %p180
        $region86: #{tpu_custom_call.1} parent=75 // pred_check_branch
          %494 = sbr.rel (%p492) target = $region88
        $region87: #{tpu_custom_call.1} parent=75 // pred_region
          %495 = dma.done [#allocation6], 2880
        $region88: #{tpu_custom_call.1} parent=75 // pred_fallthru
          _
        // Predicated region
        $region89: #{tpu_custom_call.1} parent=75 // pred_check
          %p496 = pneg %p264
        $region90: #{tpu_custom_call.1} parent=75 // pred_check_branch
          %498 = sbr.rel (%p496) target = $region92
        $region91: #{tpu_custom_call.1} parent=75 // pred_region
          %499 = dma.done [#allocation9], 6144
        $region92: #{tpu_custom_call.1} parent=75 // pred_fallthru
          _
        // Predicated region
        $region93: #{tpu_custom_call.1} parent=75 // pred_check
          %p500 = pneg %p306
        $region94: #{tpu_custom_call.1} parent=75 // pred_check_branch
          %502 = sbr.rel (%p500) target = $region96
        $region95: #{tpu_custom_call.1} parent=75 // pred_region
          %503 = dma.done [#allocation9], 768
        $region96: #{tpu_custom_call.1} parent=75 // pred_fallthru
          _
        %s504 = sand.u32 %s41, 1
        %s505 = scalar_lea.sflag [#allocation3], %s504
        %s506 = sand.u32 %s41, 1
        %s507 = smul.addr %s506, 72
        %s508 = scalar_lea.vmem [#allocation2], %s507
        %p509 = pneg %p54
        %p510 = pneg %p51
        %p511 = pneg %p75
        %p512 = pneg %p72
        %p513 = pneg %p96
        %p514 = pneg %p93
        %p515 = pneg %p117
        %p516 = pneg %p114
        %p517 = pneg %p138
        %p518 = pneg %p135
        %p519 = pneg %p159
        %p520 = pneg %p156
        %p521 = pneg %p180
        %p522 = pneg %p177
        %p523 = pneg %p201
        %p524 = pneg %p198
        %p525 = pneg %p222
        %p526 = pneg %p219
        %p527 = pneg %p243
        %p528 = pneg %p240
        %p529 = pneg %p264
        %p530 = pneg %p261
        %p531 = pneg %p285
        %p532 = pneg %p282
        %p533 = pneg %p306
        %p534 = pneg %p303
        %p535 = pneg %p327
        %p536 = pneg %p324
        %p537 = pneg %p353
        %p538 = pneg %p350
        %s539 = sand.u32 %s340, 1
        %s540 = scalar_lea.sflag [#allocation4], %s539
        %s541 = sand.u32 %s340, 1
        %s542 = smul.addr %s541, 16
        %s543 = scalar_lea.vmem [#allocation11], %s542
        %v545 = vld [vmem:[%s483] sm:$0xff]
        %v546 = vld [vmem:[%s483 + $0x8] sm:$0xff]
        %v547 = vld [vmem:[%s483 + $0x10] sm:$0xff]
        %v548 = vld [vmem:[%s483 + $0x18] sm:$0xff]
        %v549 = vld [vmem:[%s483 + $0x20] sm:$0xff]
        %v550 = vld [vmem:[%s483 + $0x28] sm:$0xff]
        %v551 = vld [vmem:[%s483 + $0x30] sm:$0xff]
        %v552 = vld [vmem:[%s483 + $0x38] sm:$0xff]
        %v553 = vld [vmem:[%s483 + $0x40] sm:$0xff]
        %v554 = vpack.c.bf16 %v546, %v545
        %v555 = vpack.c.bf16 %v548, %v547
        %v556 = vpack.c.bf16 %v550, %v549
        %v557 = vpack.c.bf16 %v552, %v551
        %v558 = vpack.c.bf16 %v553, %v553
        %v559 = vld [vmem:[#allocation5] sm:$0xf]
        %v560 = vld [vmem:[#allocation5 + $0x4] sm:$0xf]
        %v561 = vld [vmem:[#allocation5 + $0x8] sm:$0xf]
        %v562 = vld [vmem:[#allocation5 + $0xc] sm:$0xf]
        %v563 = vld [vmem:[#allocation5 + $0x10] sm:$0xf]
        %v564 = vld [vmem:[#allocation5 + $0x14] sm:$0xf]
        %v565 = vld [vmem:[#allocation5 + $0x18] sm:$0xf]
        %v566 = vld [vmem:[#allocation5 + $0x1c] sm:$0xf]
        %v567 = vld [vmem:[#allocation5 + $0x20] sm:$0xf]
        %v568 = vld [vmem:[%s3] sm:$0xff]
        %v569 = vld [vmem:[%s3 + $0x8] sm:$0xff]
        %v570 = vld [vmem:[%s3 + $0x10] sm:$0xff]
        %v571 = vld [vmem:[%s3 + $0x18] sm:$0xff]
        %v572 = vld [vmem:[%s3 + $0x20] sm:$0xff]
        %v573 = vld [vmem:[%s3 + $0x28] sm:$0xff]
        %v574 = vld [vmem:[%s3 + $0x30] sm:$0xff]
        %v575 = vld [vmem:[%s3 + $0x38] sm:$0xff]
        %v576 = vld [vmem:[%s3 + $0x40] sm:$0xff]
        %578 = vset.pattern.permute.xlu0 0
        %579 = vperm.xlu0 %578, %v568
        %v580 = vpop.permute.xlu0 %579
        %583 = vset.pattern.permute.xlu0 0
        %584 = vperm.xlu0 %583, %v569
        %v585 = vpop.permute.xlu0 %584
        %588 = vset.pattern.permute.xlu0 0
        %589 = vperm.xlu0 %588, %v570
        %v590 = vpop.permute.xlu0 %589
        %593 = vset.pattern.permute.xlu0 0
        %594 = vperm.xlu0 %593, %v571
        %v595 = vpop.permute.xlu0 %594
        %598 = vset.pattern.permute.xlu0 0
        %599 = vperm.xlu0 %598, %v572
        %v600 = vpop.permute.xlu0 %599
        %603 = vset.pattern.permute.xlu0 0
        %604 = vperm.xlu0 %603, %v573
        %v605 = vpop.permute.xlu0 %604
        %608 = vset.pattern.permute.xlu0 0
        %609 = vperm.xlu0 %608, %v574
        %v610 = vpop.permute.xlu0 %609
        %613 = vset.pattern.permute.xlu0 0
        %614 = vperm.xlu0 %613, %v575
        %v615 = vpop.permute.xlu0 %614
        %618 = vset.pattern.permute.xlu0 0
        %619 = vperm.xlu0 %618, %v576
        %v620 = vpop.permute.xlu0 %619
        %v631 = vunpack.c.l.b16 %v559
        %v632 = vunpack.c.l.b16 %v560
        %v633 = vunpack.c.l.b16 %v561
        %v634 = vunpack.c.l.b16 %v562
        %v635 = vunpack.c.l.b16 %v563
        %v636 = vunpack.c.l.b16 %v564
        %v637 = vunpack.c.l.b16 %v565
        %v638 = vunpack.c.l.b16 %v566
        %v639 = vunpack.c.l.b16 %v567
        %v640 = vpack.c.b16 %v632, %v631
        %v641 = vpack.c.b16 %v634, %v633
        %v642 = vpack.c.b16 %v636, %v635
        %v643 = vpack.c.b16 %v638, %v637
        %v644 = vpack.c.b16 %v639, %v639
        %vm645 = vcmask 588800
        %v647 = vsel %vm645, %v640, 0
        %v650 = vsel %vm645, %v641, 0
        %v653 = vsel %vm645, %v642, 0
        %v656 = vsel %vm645, %v643, 0
        %v659 = vsel %vm645, %v644, 0
        %vm661 = vcmask 1043456
        %v663 = vsel %vm661, %v558, 0
        %665 = vmatprep.subr.bf16.mxu0 0
        %666 = vmatpush1.bf16.msra.mxu0 %v554
        %667 = vmatprep.subr.bf16.mxu0 0
        %668 = vmatpush1.bf16.msra.mxu0 %v555
        %669 = vmatprep.subr.bf16.mxu0 0
        %670 = vmatpush1.bf16.msra.mxu0 %v556
        %671 = vmatprep.subr.bf16.mxu0 0
        %672 = vmatpush1.bf16.msra.mxu0 %v557
        %673 = vmatprep.subr.bf16.mxu0 0
        %674 = vmatpush1.bf16.msra.mxu0 %v663
        %675 = vmatprep.subr.bf16.mxu0 0
        %676 = vmatpush1.bf16.msra.mxu0 0
        %677 = vmatprep.subr.bf16.mxu0 0
        %678 = vmatpush1.bf16.msra.mxu0 0
        %679 = vmatprep.subr.bf16.mxu0 0
        %680 = vmatpush1.bf16.msra.mxu0 0
        %681 = vmatprep.subr.bf16.mxu0 0
        %682 = vmatpush1.bf16.msra.mxu0 0
        %683 = vmatprep.subr.bf16.mxu0 0
        %684 = vmatpush1.bf16.msra.mxu0 0
        %685 = vmatprep.subr.bf16.mxu0 0
        %686 = vmatpush1.bf16.msra.mxu0 0
        %687 = vmatprep.subr.bf16.mxu0 0
        %688 = vmatpush1.bf16.msra.mxu0 0
        %689 = vmatprep.subr.bf16.mxu0 0
        %690 = vmatpush1.bf16.msra.mxu0 0
        %691 = vmatprep.subr.bf16.mxu0 0
        %692 = vmatpush1.bf16.msra.mxu0 0
        %693 = vmatprep.subr.bf16.mxu0 0
        %694 = vmatpush1.bf16.msra.mxu0 0
        %695 = vmatprep.subr.bf16.mxu0 0
        %696 = vmatpush1.bf16.msra.mxu0 0
        %697 = vmatprep.mubr.bf16.mxu0 0
        %698 = vmatmul.mubr.bf16.gmra.mrb[0].mxu0 %v647
        %v699 = vpop.f32.mrb[0].mxu0
        %v700 = vadd.f32 %v580, %v699
        %v701 = vpop.f32.mrb[0].mxu0
        %v702 = vpop.f32.mrb[0].mxu0
        %v703 = vadd.f32 %v585, %v702
        %v704 = vpop.f32.mrb[0].mxu0
        %705 = vmatprep.mubr.bf16.mxu0 0
        %706 = vmatmul.mubr.bf16.gmra.mrb[0].mxu0 %v650
        %v707 = vpop.f32.mrb[0].mxu0
        %v708 = vadd.f32 %v590, %v707
        %v709 = vpop.f32.mrb[0].mxu0
        %v710 = vpop.f32.mrb[0].mxu0
        %v711 = vadd.f32 %v595, %v710
        %v712 = vpop.f32.mrb[0].mxu0
        %713 = vmatprep.mubr.bf16.mxu0 0
        %714 = vmatmul.mubr.bf16.gmra.mrb[0].mxu0 %v653
        %v715 = vpop.f32.mrb[0].mxu0
        %v716 = vadd.f32 %v600, %v715
        %v717 = vpop.f32.mrb[0].mxu0
        %v718 = vpop.f32.mrb[0].mxu0
        %v719 = vadd.f32 %v605, %v718
        %v720 = vpop.f32.mrb[0].mxu0
        %721 = vmatprep.mubr.bf16.mxu0 0
        %722 = vmatmul.mubr.bf16.gmra.mrb[0].mxu0 %v656
        %v723 = vpop.f32.mrb[0].mxu0
        %v724 = vadd.f32 %v610, %v723
        %v725 = vpop.f32.mrb[0].mxu0
        %v726 = vpop.f32.mrb[0].mxu0
        %v727 = vadd.f32 %v615, %v726
        %v728 = vpop.f32.mrb[0].mxu0
        %729 = vmatprep.mubr.bf16.mxu0 0
        %730 = vmatmul.mubr.bf16.gmra.mrb[0].mxu0 %v659
        %v731 = vpop.f32.mrb[0].mxu0
        %v732 = vadd.f32 %v620, %v731
        %v733 = vpop.f32.mrb[0].mxu0
        %v734 = vpop.f32.mrb[0].mxu0
        %v735 = vpop.f32.mrb[0].mxu0
        %736 = vdwg.mxu0
        %v737 = vld [vmem:[%s1] sm:$0xf]
        %v738 = vld [vmem:[%s1 + $0x4] sm:$0xf]
        %v739 = vld [vmem:[%s1 + $0x8] sm:$0xf]
        %v740 = vld [vmem:[%s1 + $0xc] sm:$0xf]
        %v741 = vld [vmem:[%s1 + $0x10] sm:$0xf]
        %v742 = vld [vmem:[%s1 + $0x14] sm:$0xf]
        %v743 = vld [vmem:[%s1 + $0x18] sm:$0xf]
        %v744 = vld [vmem:[%s1 + $0x1c] sm:$0xf]
        %v745 = vld [vmem:[%s1 + $0x20] sm:$0xf]
        %v746 = vld [vmem:[%s1 + $0x24] sm:$0xf]
        %v747 = vld [vmem:[%s1 + $0x28] sm:$0xf]
        %v748 = vld [vmem:[%s1 + $0x2c] sm:$0xf]
        %v749 = vld [vmem:[%s1 + $0x30] sm:$0xf]
        %v750 = vld [vmem:[%s1 + $0x34] sm:$0xf]
        %v751 = vld [vmem:[%s1 + $0x38] sm:$0xf]
        %v752 = vld [vmem:[%s1 + $0x3c] sm:$0xf]
        %v769 = vunpack.c.l.b16 %v737
        %v770 = vunpack.c.l.b16 %v738
        %v771 = vunpack.c.l.b16 %v739
        %v772 = vunpack.c.l.b16 %v740
        %v773 = vunpack.c.l.b16 %v741
        %v774 = vunpack.c.l.b16 %v742
        %v775 = vunpack.c.l.b16 %v743
        %v776 = vunpack.c.l.b16 %v744
        %v777 = vunpack.c.l.b16 %v745
        %v778 = vunpack.c.l.b16 %v746
        %v779 = vunpack.c.l.b16 %v747
        %v780 = vunpack.c.l.b16 %v748
        %v781 = vunpack.c.l.b16 %v749
        %v782 = vunpack.c.l.b16 %v750
        %v783 = vunpack.c.l.b16 %v751
        %v784 = vunpack.c.l.b16 %v752
        %v785 = vpack.c.b16 %v770, %v769
        %v786 = vpack.c.b16 %v772, %v771
        %v787 = vpack.c.b16 %v774, %v773
        %v788 = vpack.c.b16 %v776, %v775
        %v789 = vpack.c.b16 %v778, %v777
        %v790 = vpack.c.b16 %v780, %v779
        %v791 = vpack.c.b16 %v782, %v781
        %v792 = vpack.c.b16 %v784, %v783
        %801 = vmatprep.subr.bf16.mxu0 0
        %802 = vmatpush1.bf16.msra.mxu0 %v785
        %803 = vmatprep.subr.bf16.mxu0 0
        %804 = vmatpush1.bf16.msra.mxu0 %v786
        %805 = vmatprep.subr.bf16.mxu0 0
        %806 = vmatpush1.bf16.msra.mxu0 %v787
        %807 = vmatprep.subr.bf16.mxu0 0
        %808 = vmatpush1.bf16.msra.mxu0 %v788
        %809 = vmatprep.subr.bf16.mxu0 0
        %810 = vmatpush1.bf16.msra.mxu0 %v789
        %811 = vmatprep.subr.bf16.mxu0 0
        %812 = vmatpush1.bf16.msra.mxu0 %v790
        %813 = vmatprep.subr.bf16.mxu0 0
        %814 = vmatpush1.bf16.msra.mxu0 %v791
        %815 = vmatprep.subr.bf16.mxu0 0
        %816 = vmatpush1.bf16.msra.mxu0 %v792
        %817 = vmatprep.subr.bf16.mxu0 0
        %818 = vmatpush1.bf16.msra.mxu0 0
        %819 = vmatprep.subr.bf16.mxu0 0
        %820 = vmatpush1.bf16.msra.mxu0 0
        %821 = vmatprep.subr.bf16.mxu0 0
        %822 = vmatpush1.bf16.msra.mxu0 0
        %823 = vmatprep.subr.bf16.mxu0 0
        %824 = vmatpush1.bf16.msra.mxu0 0
        %825 = vmatprep.subr.bf16.mxu0 0
        %826 = vmatpush1.bf16.msra.mxu0 0
        %827 = vmatprep.subr.bf16.mxu0 0
        %828 = vmatpush1.bf16.msra.mxu0 0
        %829 = vmatprep.subr.bf16.mxu0 0
        %830 = vmatpush1.bf16.msra.mxu0 0
        %831 = vmatprep.subr.bf16.mxu0 0
        %832 = vmatpush1.bf16.msra.mxu0 0
        %833 = vmatprep.mubr.bf16.mxu0 0
        %834 = vmatmul.mubr.bf16.gmra.mrb[0].mxu0 %v554
        %v835 = vpop.f32.mrb[0].mxu0
        %v836 = vadd.f32 0.0, %v835
        %v837 = vpop.f32.mrb[0].mxu0
        %v838 = vpop.f32.mrb[0].mxu0
        %v839 = vadd.f32 0.0, %v838
        %v840 = vpop.f32.mrb[0].mxu0
        %841 = vmatprep.mubr.bf16.mxu0 0
        %842 = vmatmul.mubr.bf16.gmra.mrb[0].mxu0 %v555
        %v843 = vpop.f32.mrb[0].mxu0
        %v844 = vadd.f32 0.0, %v843
        %v845 = vpop.f32.mrb[0].mxu0
        %v846 = vpop.f32.mrb[0].mxu0
        %v847 = vadd.f32 0.0, %v846
        %v848 = vpop.f32.mrb[0].mxu0
        %849 = vmatprep.mubr.bf16.mxu0 0
        %850 = vmatmul.mubr.bf16.gmra.mrb[0].mxu0 %v556
        %v851 = vpop.f32.mrb[0].mxu0
        %v852 = vadd.f32 0.0, %v851
        %v853 = vpop.f32.mrb[0].mxu0
        %v854 = vpop.f32.mrb[0].mxu0
        %v855 = vadd.f32 0.0, %v854
        %v856 = vpop.f32.mrb[0].mxu0
        %857 = vmatprep.mubr.bf16.mxu0 0
        %858 = vmatmul.mubr.bf16.gmra.mrb[0].mxu0 %v557
        %v859 = vpop.f32.mrb[0].mxu0
        %v860 = vadd.f32 0.0, %v859
        %v861 = vpop.f32.mrb[0].mxu0
        %v862 = vpop.f32.mrb[0].mxu0
        %v863 = vadd.f32 0.0, %v862
        %v864 = vpop.f32.mrb[0].mxu0
        %865 = vmatprep.mubr.bf16.mxu0 0
        %866 = vmatmul.mubr.bf16.gmra.mrb[0].mxu0 %v558
        %v867 = vpop.f32.mrb[0].mxu0
        %v868 = vadd.f32 0.0, %v867
        %v869 = vpop.f32.mrb[0].mxu0
        %v870 = vpop.f32.mrb[0].mxu0
        %v871 = vpop.f32.mrb[0].mxu0
        %872 = vdwg.mxu0
        %v873 = vld [vmem:[%s4] sm:$0xff]
        %v874 = vld [vmem:[%s4 + $0x8] sm:$0xff]
        %v875 = vld [vmem:[%s4 + $0x10] sm:$0xff]
        %v876 = vld [vmem:[%s4 + $0x18] sm:$0xff]
        %v877 = vld [vmem:[%s4 + $0x20] sm:$0xff]
        %v878 = vld [vmem:[%s4 + $0x28] sm:$0xff]
        %v879 = vld [vmem:[%s4 + $0x30] sm:$0xff]
        %v880 = vld [vmem:[%s4 + $0x38] sm:$0xff]
        %v881 = vld [vmem:[%s4 + $0x40] sm:$0xff]
        %883 = vset.pattern.permute.xlu0 0
        %884 = vperm.xlu0 %883, %v873
        %v885 = vpop.permute.xlu0 %884
        %888 = vset.pattern.permute.xlu0 0
        %889 = vperm.xlu0 %888, %v874
        %v890 = vpop.permute.xlu0 %889
        %893 = vset.pattern.permute.xlu0 0
        %894 = vperm.xlu0 %893, %v875
        %v895 = vpop.permute.xlu0 %894
        %898 = vset.pattern.permute.xlu0 0
        %899 = vperm.xlu0 %898, %v876
        %v900 = vpop.permute.xlu0 %899
        %903 = vset.pattern.permute.xlu0 0
        %904 = vperm.xlu0 %903, %v877
        %v905 = vpop.permute.xlu0 %904
        %908 = vset.pattern.permute.xlu0 0
        %909 = vperm.xlu0 %908, %v878
        %v910 = vpop.permute.xlu0 %909
        %913 = vset.pattern.permute.xlu0 0
        %914 = vperm.xlu0 %913, %v879
        %v915 = vpop.permute.xlu0 %914
        %918 = vset.pattern.permute.xlu0 0
        %919 = vperm.xlu0 %918, %v880
        %v920 = vpop.permute.xlu0 %919
        %923 = vset.pattern.permute.xlu0 0
        %924 = vperm.xlu0 %923, %v881
        %v925 = vpop.permute.xlu0 %924
        %v927 = vmul.f32 %v836, %v885
        %v928 = vmul.f32 %v839, %v890
        %v929 = vmul.f32 %v844, %v895
        %v930 = vmul.f32 %v847, %v900
        %v931 = vmul.f32 %v852, %v905
        %v932 = vmul.f32 %v855, %v910
        %v933 = vmul.f32 %v860, %v915
        %v934 = vmul.f32 %v863, %v920
        %v935 = vmul.f32 %v868, %v925
        %v936 = vld [vmem:[%s5] sm:$0xff]
        %v937 = vld [vmem:[%s5 + $0x8] sm:$0xff]
        %v938 = vld [vmem:[%s5 + $0x10] sm:$0xff]
        %v939 = vld [vmem:[%s5 + $0x18] sm:$0xff]
        %v940 = vld [vmem:[%s5 + $0x20] sm:$0xff]
        %v941 = vld [vmem:[%s5 + $0x28] sm:$0xff]
        %v942 = vld [vmem:[%s5 + $0x30] sm:$0xff]
        %v943 = vld [vmem:[%s5 + $0x38] sm:$0xff]
        %v944 = vld [vmem:[%s5 + $0x40] sm:$0xff]
        %946 = vset.pattern.permute.xlu0 0
        %947 = vperm.xlu0 %946, %v936
        %v948 = vpop.permute.xlu0 %947
        %951 = vset.pattern.permute.xlu0 0
        %952 = vperm.xlu0 %951, %v937
        %v953 = vpop.permute.xlu0 %952
        %956 = vset.pattern.permute.xlu0 0
        %957 = vperm.xlu0 %956, %v938
        %v958 = vpop.permute.xlu0 %957
        %961 = vset.pattern.permute.xlu0 0
        %962 = vperm.xlu0 %961, %v939
        %v963 = vpop.permute.xlu0 %962
        %966 = vset.pattern.permute.xlu0 0
        %967 = vperm.xlu0 %966, %v940
        %v968 = vpop.permute.xlu0 %967
        %971 = vset.pattern.permute.xlu0 0
        %972 = vperm.xlu0 %971, %v941
        %v973 = vpop.permute.xlu0 %972
        %976 = vset.pattern.permute.xlu0 0
        %977 = vperm.xlu0 %976, %v942
        %v978 = vpop.permute.xlu0 %977
        %981 = vset.pattern.permute.xlu0 0
        %982 = vperm.xlu0 %981, %v943
        %v983 = vpop.permute.xlu0 %982
        %986 = vset.pattern.permute.xlu0 0
        %987 = vperm.xlu0 %986, %v944
        %v988 = vpop.permute.xlu0 %987
        %v990 = vadd.f32 %v927, %v948
        %v991 = vadd.f32 %v928, %v953
        %v992 = vadd.f32 %v929, %v958
        %v993 = vadd.f32 %v930, %v963
        %v994 = vadd.f32 %v931, %v968
        %v995 = vadd.f32 %v932, %v973
        %v996 = vadd.f32 %v933, %v978
        %v997 = vadd.f32 %v934, %v983
        %v998 = vadd.f32 %v935, %v988
        %v999 = vmax.f32 %v990, 0.0
        %v1000 = vmax.f32 %v991, 0.0
        %v1001 = vmax.f32 %v992, 0.0
        %v1002 = vmax.f32 %v993, 0.0
        %v1003 = vmax.f32 %v994, 0.0
        %v1004 = vmax.f32 %v995, 0.0
        %v1005 = vmax.f32 %v996, 0.0
        %v1006 = vmax.f32 %v997, 0.0
        %v1007 = vmax.f32 %v998, 0.0
        %v1008 = vmin.f32 %v999, 6.0
        %v1009 = vmin.f32 %v1000, 6.0
        %v1010 = vmin.f32 %v1001, 6.0
        %v1011 = vmin.f32 %v1002, 6.0
        %v1012 = vmin.f32 %v1003, 6.0
        %v1013 = vmin.f32 %v1004, 6.0
        %v1014 = vmin.f32 %v1005, 6.0
        %v1015 = vmin.f32 %v1006, 6.0
        %v1016 = vmin.f32 %v1007, 6.0
        %v1017 = vld [vmem:[#allocation7] sm:$0xf]
        %v1018 = vld [vmem:[#allocation7 + $0x4] sm:$0xf]
        %v1019 = vld [vmem:[#allocation7 + $0x8] sm:$0xf]
        %v1020 = vld [vmem:[#allocation7 + $0xc] sm:$0xf]
        %v1021 = vld [vmem:[#allocation7 + $0x10] sm:$0xf]
        %v1022 = vld [vmem:[#allocation7 + $0x14] sm:$0xf]
        %v1023 = vld [vmem:[#allocation7 + $0x18] sm:$0xf]
        %v1024 = vld [vmem:[#allocation7 + $0x1c] sm:$0xf]
        %v1025 = vld [vmem:[#allocation7 + $0x20] sm:$0xf]
        %v1026 = vpack.c.bf16 %v1009, %v1008
        %v1027 = vpack.c.bf16 %v1011, %v1010
        %v1028 = vpack.c.bf16 %v1013, %v1012
        %v1029 = vpack.c.bf16 %v1015, %v1014
        %v1030 = vpack.c.bf16 %v1016, %v1016
        %v1031 = vld [vmem:[%s7] sm:$0xff]
        %v1032 = vld [vmem:[%s7 + $0x8] sm:$0xff]
        %v1033 = vld [vmem:[%s7 + $0x10] sm:$0xff]
        %v1034 = vld [vmem:[%s7 + $0x18] sm:$0xff]
        %v1035 = vld [vmem:[%s7 + $0x20] sm:$0xff]
        %v1036 = vld [vmem:[%s7 + $0x28] sm:$0xff]
        %v1037 = vld [vmem:[%s7 + $0x30] sm:$0xff]
        %v1038 = vld [vmem:[%s7 + $0x38] sm:$0xff]
        %v1039 = vld [vmem:[%s7 + $0x40] sm:$0xff]
        %1041 = vset.pattern.permute.xlu0 0
        %1042 = vperm.xlu0 %1041, %v1031
        %v1043 = vpop.permute.xlu0 %1042
        %1046 = vset.pattern.permute.xlu0 0
        %1047 = vperm.xlu0 %1046, %v1032
        %v1048 = vpop.permute.xlu0 %1047
        %1051 = vset.pattern.permute.xlu0 0
        %1052 = vperm.xlu0 %1051, %v1033
        %v1053 = vpop.permute.xlu0 %1052
        %1056 = vset.pattern.permute.xlu0 0
        %1057 = vperm.xlu0 %1056, %v1034
        %v1058 = vpop.permute.xlu0 %1057
        %1061 = vset.pattern.permute.xlu0 0
        %1062 = vperm.xlu0 %1061, %v1035
        %v1063 = vpop.permute.xlu0 %1062
        %1066 = vset.pattern.permute.xlu0 0
        %1067 = vperm.xlu0 %1066, %v1036
        %v1068 = vpop.permute.xlu0 %1067
        %1071 = vset.pattern.permute.xlu0 0
        %1072 = vperm.xlu0 %1071, %v1037
        %v1073 = vpop.permute.xlu0 %1072
        %1076 = vset.pattern.permute.xlu0 0
        %1077 = vperm.xlu0 %1076, %v1038
        %v1078 = vpop.permute.xlu0 %1077
        %1081 = vset.pattern.permute.xlu0 0
        %1082 = vperm.xlu0 %1081, %v1039
        %v1083 = vpop.permute.xlu0 %1082
        %v1094 = vunpack.c.l.b16 %v1017
        %v1095 = vunpack.c.l.b16 %v1018
        %v1096 = vunpack.c.l.b16 %v1019
        %v1097 = vunpack.c.l.b16 %v1020
        %v1098 = vunpack.c.l.b16 %v1021
        %v1099 = vunpack.c.l.b16 %v1022
        %v1100 = vunpack.c.l.b16 %v1023
        %v1101 = vunpack.c.l.b16 %v1024
        %v1102 = vunpack.c.l.b16 %v1025
        %v1103 = vpack.c.b16 %v1095, %v1094
        %v1104 = vpack.c.b16 %v1097, %v1096
        %v1105 = vpack.c.b16 %v1099, %v1098
        %v1106 = vpack.c.b16 %v1101, %v1100
        %v1107 = vpack.c.b16 %v1102, %v1102
        %v1109 = vsel %vm645, %v1103, 0
        %v1112 = vsel %vm645, %v1104, 0
        %v1115 = vsel %vm645, %v1105, 0
        %v1118 = vsel %vm645, %v1106, 0
        %v1121 = vsel %vm645, %v1107, 0
        %v1124 = vsel %vm661, %v1030, 0
        %1126 = vmatprep.subr.bf16.mxu0 0
        %1127 = vmatpush1.bf16.msra.mxu0 %v1026
        %1128 = vmatprep.subr.bf16.mxu0 0
        %1129 = vmatpush1.bf16.msra.mxu0 %v1027
        %1130 = vmatprep.subr.bf16.mxu0 0
        %1131 = vmatpush1.bf16.msra.mxu0 %v1028
        %1132 = vmatprep.subr.bf16.mxu0 0
        %1133 = vmatpush1.bf16.msra.mxu0 %v1029
        %1134 = vmatprep.subr.bf16.mxu0 0
        %1135 = vmatpush1.bf16.msra.mxu0 %v1124
        %1136 = vmatprep.subr.bf16.mxu0 0
        %1137 = vmatpush1.bf16.msra.mxu0 0
        %1138 = vmatprep.subr.bf16.mxu0 0
        %1139 = vmatpush1.bf16.msra.mxu0 0
        %1140 = vmatprep.subr.bf16.mxu0 0
        %1141 = vmatpush1.bf16.msra.mxu0 0
        %1142 = vmatprep.subr.bf16.mxu0 0
        %1143 = vmatpush1.bf16.msra.mxu0 0
        %1144 = vmatprep.subr.bf16.mxu0 0
        %1145 = vmatpush1.bf16.msra.mxu0 0
        %1146 = vmatprep.subr.bf16.mxu0 0
        %1147 = vmatpush1.bf16.msra.mxu0 0
        %1148 = vmatprep.subr.bf16.mxu0 0
        %1149 = vmatpush1.bf16.msra.mxu0 0
        %1150 = vmatprep.subr.bf16.mxu0 0
        %1151 = vmatpush1.bf16.msra.mxu0 0
        %1152 = vmatprep.subr.bf16.mxu0 0
        %1153 = vmatpush1.bf16.msra.mxu0 0
        %1154 = vmatprep.subr.bf16.mxu0 0
        %1155 = vmatpush1.bf16.msra.mxu0 0
        %1156 = vmatprep.subr.bf16.mxu0 0
        %1157 = vmatpush1.bf16.msra.mxu0 0
        %1158 = vmatprep.mubr.bf16.mxu0 0
        %1159 = vmatmul.mubr.bf16.gmra.mrb[0].mxu0 %v1109
        %v1160 = vpop.f32.mrb[0].mxu0
        %v1161 = vadd.f32 %v1043, %v1160
        %v1162 = vpop.f32.mrb[0].mxu0
        %v1163 = vpop.f32.mrb[0].mxu0
        %v1164 = vadd.f32 %v1048, %v1163
        %v1165 = vpop.f32.mrb[0].mxu0
        %1166 = vmatprep.mubr.bf16.mxu0 0
        %1167 = vmatmul.mubr.bf16.gmra.mrb[0].mxu0 %v1112
        %v1168 = vpop.f32.mrb[0].mxu0
        %v1169 = vadd.f32 %v1053, %v1168
        %v1170 = vpop.f32.mrb[0].mxu0
        %v1171 = vpop.f32.mrb[0].mxu0
        %v1172 = vadd.f32 %v1058, %v1171
        %v1173 = vpop.f32.mrb[0].mxu0
        %1174 = vmatprep.mubr.bf16.mxu0 0
        %1175 = vmatmul.mubr.bf16.gmra.mrb[0].mxu0 %v1115
        %v1176 = vpop.f32.mrb[0].mxu0
        %v1177 = vadd.f32 %v1063, %v1176
        %v1178 = vpop.f32.mrb[0].mxu0
        %v1179 = vpop.f32.mrb[0].mxu0
        %v1180 = vadd.f32 %v1068, %v1179
        %v1181 = vpop.f32.mrb[0].mxu0
        %1182 = vmatprep.mubr.bf16.mxu0 0
        %1183 = vmatmul.mubr.bf16.gmra.mrb[0].mxu0 %v1118
        %v1184 = vpop.f32.mrb[0].mxu0
        %v1185 = vadd.f32 %v1073, %v1184
        %v1186 = vpop.f32.mrb[0].mxu0
        %v1187 = vpop.f32.mrb[0].mxu0
        %v1188 = vadd.f32 %v1078, %v1187
        %v1189 = vpop.f32.mrb[0].mxu0
        %1190 = vmatprep.mubr.bf16.mxu0 0
        %1191 = vmatmul.mubr.bf16.gmra.mrb[0].mxu0 %v1121
        %v1192 = vpop.f32.mrb[0].mxu0
        %v1193 = vadd.f32 %v1083, %v1192
        %v1194 = vpop.f32.mrb[0].mxu0
        %v1195 = vpop.f32.mrb[0].mxu0
        %v1196 = vpop.f32.mrb[0].mxu0
        %1197 = vdwg.mxu0
        %v1198 = vadd.f32 %v1161, %v700
        %v1199 = vadd.f32 %v1164, %v703
        %v1200 = vadd.f32 %v1169, %v708
        %v1201 = vadd.f32 %v1172, %v711
        %v1202 = vadd.f32 %v1177, %v716
        %v1203 = vadd.f32 %v1180, %v719
        %v1204 = vadd.f32 %v1185, %v724
        %v1205 = vadd.f32 %v1188, %v727
        %v1206 = vadd.f32 %v1193, %v732
        %vm1207 = vcmp.ge.f32.partialorder %v1198, 0.0
        %vm1208 = vcmp.ge.f32.partialorder %v1199, 0.0
        %vm1209 = vcmp.ge.f32.partialorder %v1200, 0.0
        %vm1210 = vcmp.ge.f32.partialorder %v1201, 0.0
        %vm1211 = vcmp.ge.f32.partialorder %v1202, 0.0
        %vm1212 = vcmp.ge.f32.partialorder %v1203, 0.0
        %vm1213 = vcmp.ge.f32.partialorder %v1204, 0.0
        %vm1214 = vcmp.ge.f32.partialorder %v1205, 0.0
        %vm1215 = vcmp.ge.f32.partialorder %v1206, 0.0
        %v1216 = vld [vmem:[%s8] sm:$0xff]
        %v1217 = vld [vmem:[%s8 + $0x8] sm:$0xff]
        %v1218 = vld [vmem:[%s8 + $0x10] sm:$0xff]
        %v1219 = vld [vmem:[%s8 + $0x18] sm:$0xff]
        %v1220 = vld [vmem:[%s8 + $0x20] sm:$0xff]
        %v1221 = vld [vmem:[%s8 + $0x28] sm:$0xff]
        %v1222 = vld [vmem:[%s8 + $0x30] sm:$0xff]
        %v1223 = vld [vmem:[%s8 + $0x38] sm:$0xff]
        %v1224 = vld [vmem:[%s8 + $0x40] sm:$0xff]
        %1226 = vset.pattern.permute.xlu0 0
        %1227 = vperm.xlu0 %1226, %v1216
        %v1228 = vpop.permute.xlu0 %1227
        %1231 = vset.pattern.permute.xlu0 0
        %1232 = vperm.xlu0 %1231, %v1217
        %v1233 = vpop.permute.xlu0 %1232
        %1236 = vset.pattern.permute.xlu0 0
        %1237 = vperm.xlu0 %1236, %v1218
        %v1238 = vpop.permute.xlu0 %1237
        %1241 = vset.pattern.permute.xlu0 0
        %1242 = vperm.xlu0 %1241, %v1219
        %v1243 = vpop.permute.xlu0 %1242
        %1246 = vset.pattern.permute.xlu0 0
        %1247 = vperm.xlu0 %1246, %v1220
        %v1248 = vpop.permute.xlu0 %1247
        %1251 = vset.pattern.permute.xlu0 0
        %1252 = vperm.xlu0 %1251, %v1221
        %v1253 = vpop.permute.xlu0 %1252
        %1256 = vset.pattern.permute.xlu0 0
        %1257 = vperm.xlu0 %1256, %v1222
        %v1258 = vpop.permute.xlu0 %1257
        %1261 = vset.pattern.permute.xlu0 0
        %1262 = vperm.xlu0 %1261, %v1223
        %v1263 = vpop.permute.xlu0 %1262
        %1266 = vset.pattern.permute.xlu0 0
        %1267 = vperm.xlu0 %1266, %v1224
        %v1268 = vpop.permute.xlu0 %1267
        %v1270 = vmul.f32 %v1228, %v1198
        %v1271 = vmul.f32 %v1233, %v1199
        %v1272 = vmul.f32 %v1238, %v1200
        %v1273 = vmul.f32 %v1243, %v1201
        %v1274 = vmul.f32 %v1248, %v1202
        %v1275 = vmul.f32 %v1253, %v1203
        %v1276 = vmul.f32 %v1258, %v1204
        %v1277 = vmul.f32 %v1263, %v1205
        %v1278 = vmul.f32 %v1268, %v1206
        %v1279 = vsel %vm1207, %v1198, %v1270
        %v1280 = vsel %vm1208, %v1199, %v1271
        %v1281 = vsel %vm1209, %v1200, %v1272
        %v1282 = vsel %vm1210, %v1201, %v1273
        %v1283 = vsel %vm1211, %v1202, %v1274
        %v1284 = vsel %vm1212, %v1203, %v1275
        %v1285 = vsel %vm1213, %v1204, %v1276
        %v1286 = vsel %vm1214, %v1205, %v1277
        %v1287 = vsel %vm1215, %v1206, %v1278
        %v1288 = vpack.c.bf16 %v1280, %v1279
        %v1289 = vpack.c.bf16 %v1282, %v1281
        %v1290 = vpack.c.bf16 %v1284, %v1283
        %v1291 = vpack.c.bf16 %v1286, %v1285
        %v1292 = vpack.c.bf16 %v1287, %v1287
        %s1293 = scalar_lea.vmem [#allocation5], 36
        %v1294 = vld [vmem:[%s1293] sm:$0xf]
        %v1295 = vld [vmem:[%s1293 + $0x4] sm:$0xf]
        %v1296 = vld [vmem:[%s1293 + $0x8] sm:$0xf]
        %v1297 = vld [vmem:[%s1293 + $0xc] sm:$0xf]
        %v1298 = vld [vmem:[%s1293 + $0x10] sm:$0xf]
        %v1299 = vld [vmem:[%s1293 + $0x14] sm:$0xf]
        %v1300 = vld [vmem:[%s1293 + $0x18] sm:$0xf]
        %v1301 = vld [vmem:[%s1293 + $0x1c] sm:$0xf]
        %v1302 = vld [vmem:[%s1293 + $0x20] sm:$0xf]
        %s1303 = scalar_lea.vmem %s3, 72
        %v1304 = vld [vmem:[%s1303] sm:$0xff]
        %v1305 = vld [vmem:[%s1303 + $0x8] sm:$0xff]
        %v1306 = vld [vmem:[%s1303 + $0x10] sm:$0xff]
        %v1307 = vld [vmem:[%s1303 + $0x18] sm:$0xff]
        %v1308 = vld [vmem:[%s1303 + $0x20] sm:$0xff]
        %v1309 = vld [vmem:[%s1303 + $0x28] sm:$0xff]
        %v1310 = vld [vmem:[%s1303 + $0x30] sm:$0xff]
        %v1311 = vld [vmem:[%s1303 + $0x38] sm:$0xff]
        %v1312 = vld [vmem:[%s1303 + $0x40] sm:$0xff]
        %1314 = vset.pattern.permute.xlu0 0
        %1315 = vperm.xlu0 %1314, %v1304
        %v1316 = vpop.permute.xlu0 %1315
        %1319 = vset.pattern.permute.xlu0 0
        %1320 = vperm.xlu0 %1319, %v1305
        %v1321 = vpop.permute.xlu0 %1320
        %1324 = vset.pattern.permute.xlu0 0
        %1325 = vperm.xlu0 %1324, %v1306
        %v1326 = vpop.permute.xlu0 %1325
        %1329 = vset.pattern.permute.xlu0 0
        %1330 = vperm.xlu0 %1329, %v1307
        %v1331 = vpop.permute.xlu0 %1330
        %1334 = vset.pattern.permute.xlu0 0
        %1335 = vperm.xlu0 %1334, %v1308
        %v1336 = vpop.permute.xlu0 %1335
        %1339 = vset.pattern.permute.xlu0 0
        %1340 = vperm.xlu0 %1339, %v1309
        %v1341 = vpop.permute.xlu0 %1340
        %1344 = vset.pattern.permute.xlu0 0
        %1345 = vperm.xlu0 %1344, %v1310
        %v1346 = vpop.permute.xlu0 %1345
        %1349 = vset.pattern.permute.xlu0 0
        %1350 = vperm.xlu0 %1349, %v1311
        %v1351 = vpop.permute.xlu0 %1350
        %1354 = vset.pattern.permute.xlu0 0
        %1355 = vperm.xlu0 %1354, %v1312
        %v1356 = vpop.permute.xlu0 %1355
        %v1367 = vunpack.c.l.b16 %v1294
        %v1368 = vunpack.c.l.b16 %v1295
        %v1369 = vunpack.c.l.b16 %v1296
        %v1370 = vunpack.c.l.b16 %v1297
        %v1371 = vunpack.c.l.b16 %v1298
        %v1372 = vunpack.c.l.b16 %v1299
        %v1373 = vunpack.c.l.b16 %v1300
        %v1374 = vunpack.c.l.b16 %v1301
        %v1375 = vunpack.c.l.b16 %v1302
        %v1376 = vpack.c.b16 %v1368, %v1367
        %v1377 = vpack.c.b16 %v1370, %v1369
        %v1378 = vpack.c.b16 %v1372, %v1371
        %v1379 = vpack.c.b16 %v1374, %v1373
        %v1380 = vpack.c.b16 %v1375, %v1375
        %v1382 = vsel %vm645, %v1376, 0
        %v1385 = vsel %vm645, %v1377, 0
        %v1388 = vsel %vm645, %v1378, 0
        %v1391 = vsel %vm645, %v1379, 0
        %v1394 = vsel %vm645, %v1380, 0
        %v1397 = vsel %vm661, %v1292, 0
        %1399 = vmatprep.subr.bf16.mxu0 0
        %1400 = vmatpush1.bf16.msra.mxu0 %v1288
        %1401 = vmatprep.subr.bf16.mxu0 0
        %1402 = vmatpush1.bf16.msra.mxu0 %v1289
        %1403 = vmatprep.subr.bf16.mxu0 0
        %1404 = vmatpush1.bf16.msra.mxu0 %v1290
        %1405 = vmatprep.subr.bf16.mxu0 0
        %1406 = vmatpush1.bf16.msra.mxu0 %v1291
        %1407 = vmatprep.subr.bf16.mxu0 0
        %1408 = vmatpush1.bf16.msra.mxu0 %v1397
        %1409 = vmatprep.subr.bf16.mxu0 0
        %1410 = vmatpush1.bf16.msra.mxu0 0
        %1411 = vmatprep.subr.bf16.mxu0 0
        %1412 = vmatpush1.bf16.msra.mxu0 0
        %1413 = vmatprep.subr.bf16.mxu0 0
        %1414 = vmatpush1.bf16.msra.mxu0 0
        %1415 = vmatprep.subr.bf16.mxu0 0
        %1416 = vmatpush1.bf16.msra.mxu0 0
        %1417 = vmatprep.subr.bf16.mxu0 0
        %1418 = vmatpush1.bf16.msra.mxu0 0
        %1419 = vmatprep.subr.bf16.mxu0 0
        %1420 = vmatpush1.bf16.msra.mxu0 0
        %1421 = vmatprep.subr.bf16.mxu0 0
        %1422 = vmatpush1.bf16.msra.mxu0 0
        %1423 = vmatprep.subr.bf16.mxu0 0
        %1424 = vmatpush1.bf16.msra.mxu0 0
        %1425 = vmatprep.subr.bf16.mxu0 0
        %1426 = vmatpush1.bf16.msra.mxu0 0
        %1427 = vmatprep.subr.bf16.mxu0 0
        %1428 = vmatpush1.bf16.msra.mxu0 0
        %1429 = vmatprep.subr.bf16.mxu0 0
        %1430 = vmatpush1.bf16.msra.mxu0 0
        %1431 = vmatprep.mubr.bf16.mxu0 0
        %1432 = vmatmul.mubr.bf16.gmra.mrb[0].mxu0 %v1382
        %v1433 = vpop.f32.mrb[0].mxu0
        %v1434 = vadd.f32 %v1316, %v1433
        %v1435 = vpop.f32.mrb[0].mxu0
        %v1436 = vpop.f32.mrb[0].mxu0
        %v1437 = vadd.f32 %v1321, %v1436
        %v1438 = vpop.f32.mrb[0].mxu0
        %1439 = vmatprep.mubr.bf16.mxu0 0
        %1440 = vmatmul.mubr.bf16.gmra.mrb[0].mxu0 %v1385
        %v1441 = vpop.f32.mrb[0].mxu0
        %v1442 = vadd.f32 %v1326, %v1441
        %v1443 = vpop.f32.mrb[0].mxu0
        %v1444 = vpop.f32.mrb[0].mxu0
        %v1445 = vadd.f32 %v1331, %v1444
        %v1446 = vpop.f32.mrb[0].mxu0
        %1447 = vmatprep.mubr.bf16.mxu0 0
        %1448 = vmatmul.mubr.bf16.gmra.mrb[0].mxu0 %v1388
        %v1449 = vpop.f32.mrb[0].mxu0
        %v1450 = vadd.f32 %v1336, %v1449
        %v1451 = vpop.f32.mrb[0].mxu0
        %v1452 = vpop.f32.mrb[0].mxu0
        %v1453 = vadd.f32 %v1341, %v1452
        %v1454 = vpop.f32.mrb[0].mxu0
        %1455 = vmatprep.mubr.bf16.mxu0 0
        %1456 = vmatmul.mubr.bf16.gmra.mrb[0].mxu0 %v1391
        %v1457 = vpop.f32.mrb[0].mxu0
        %v1458 = vadd.f32 %v1346, %v1457
        %v1459 = vpop.f32.mrb[0].mxu0
        %v1460 = vpop.f32.mrb[0].mxu0
        %v1461 = vadd.f32 %v1351, %v1460
        %v1462 = vpop.f32.mrb[0].mxu0
        %1463 = vmatprep.mubr.bf16.mxu0 0
        %1464 = vmatmul.mubr.bf16.gmra.mrb[0].mxu0 %v1394
        %v1465 = vpop.f32.mrb[0].mxu0
        %v1466 = vadd.f32 %v1356, %v1465
        %v1467 = vpop.f32.mrb[0].mxu0
        %v1468 = vpop.f32.mrb[0].mxu0
        %v1469 = vpop.f32.mrb[0].mxu0
        %1470 = vdwg.mxu0
        %s1471 = scalar_lea.vmem %s1, 64
        %v1472 = vld [vmem:[%s1471] sm:$0xf]
        %v1473 = vld [vmem:[%s1471 + $0x4] sm:$0xf]
        %v1474 = vld [vmem:[%s1471 + $0x8] sm:$0xf]
        %v1475 = vld [vmem:[%s1471 + $0xc] sm:$0xf]
        %v1476 = vld [vmem:[%s1471 + $0x10] sm:$0xf]
        %v1477 = vld [vmem:[%s1471 + $0x14] sm:$0xf]
        %v1478 = vld [vmem:[%s1471 + $0x18] sm:$0xf]
        %v1479 = vld [vmem:[%s1471 + $0x1c] sm:$0xf]
        %v1480 = vld [vmem:[%s1471 + $0x20] sm:$0xf]
        %v1481 = vld [vmem:[%s1471 + $0x24] sm:$0xf]
        %v1482 = vld [vmem:[%s1471 + $0x28] sm:$0xf]
        %v1483 = vld [vmem:[%s1471 + $0x2c] sm:$0xf]
        %v1484 = vld [vmem:[%s1471 + $0x30] sm:$0xf]
        %v1485 = vld [vmem:[%s1471 + $0x34] sm:$0xf]
        %v1486 = vld [vmem:[%s1471 + $0x38] sm:$0xf]
        %v1487 = vld [vmem:[%s1471 + $0x3c] sm:$0xf]
        %v1504 = vunpack.c.l.b16 %v1472
        %v1505 = vunpack.c.l.b16 %v1473
        %v1506 = vunpack.c.l.b16 %v1474
        %v1507 = vunpack.c.l.b16 %v1475
        %v1508 = vunpack.c.l.b16 %v1476
        %v1509 = vunpack.c.l.b16 %v1477
        %v1510 = vunpack.c.l.b16 %v1478
        %v1511 = vunpack.c.l.b16 %v1479
        %v1512 = vunpack.c.l.b16 %v1480
        %v1513 = vunpack.c.l.b16 %v1481
        %v1514 = vunpack.c.l.b16 %v1482
        %v1515 = vunpack.c.l.b16 %v1483
        %v1516 = vunpack.c.l.b16 %v1484
        %v1517 = vunpack.c.l.b16 %v1485
        %v1518 = vunpack.c.l.b16 %v1486
        %v1519 = vunpack.c.l.b16 %v1487
        %v1520 = vpack.c.b16 %v1505, %v1504
        %v1521 = vpack.c.b16 %v1507, %v1506
        %v1522 = vpack.c.b16 %v1509, %v1508
        %v1523 = vpack.c.b16 %v1511, %v1510
        %v1524 = vpack.c.b16 %v1513, %v1512
        %v1525 = vpack.c.b16 %v1515, %v1514
        %v1526 = vpack.c.b16 %v1517, %v1516
        %v1527 = vpack.c.b16 %v1519, %v1518
        %1536 = vmatprep.subr.bf16.mxu0 0
        %1537 = vmatpush1.bf16.msra.mxu0 %v1520
        %1538 = vmatprep.subr.bf16.mxu0 0
        %1539 = vmatpush1.bf16.msra.mxu0 %v1521
        %1540 = vmatprep.subr.bf16.mxu0 0
        %1541 = vmatpush1.bf16.msra.mxu0 %v1522
        %1542 = vmatprep.subr.bf16.mxu0 0
        %1543 = vmatpush1.bf16.msra.mxu0 %v1523
        %1544 = vmatprep.subr.bf16.mxu0 0
        %1545 = vmatpush1.bf16.msra.mxu0 %v1524
        %1546 = vmatprep.subr.bf16.mxu0 0
        %1547 = vmatpush1.bf16.msra.mxu0 %v1525
        %1548 = vmatprep.subr.bf16.mxu0 0
        %1549 = vmatpush1.bf16.msra.mxu0 %v1526
        %1550 = vmatprep.subr.bf16.mxu0 0
        %1551 = vmatpush1.bf16.msra.mxu0 %v1527
        %1552 = vmatprep.subr.bf16.mxu0 0
        %1553 = vmatpush1.bf16.msra.mxu0 0
        %1554 = vmatprep.subr.bf16.mxu0 0
        %1555 = vmatpush1.bf16.msra.mxu0 0
        %1556 = vmatprep.subr.bf16.mxu0 0
        %1557 = vmatpush1.bf16.msra.mxu0 0
        %1558 = vmatprep.subr.bf16.mxu0 0
        %1559 = vmatpush1.bf16.msra.mxu0 0
        %1560 = vmatprep.subr.bf16.mxu0 0
        %1561 = vmatpush1.bf16.msra.mxu0 0
        %1562 = vmatprep.subr.bf16.mxu0 0
        %1563 = vmatpush1.bf16.msra.mxu0 0
        %1564 = vmatprep.subr.bf16.mxu0 0
        %1565 = vmatpush1.bf16.msra.mxu0 0
        %1566 = vmatprep.subr.bf16.mxu0 0
        %1567 = vmatpush1.bf16.msra.mxu0 0
        %1568 = vmatprep.mubr.bf16.mxu0 0
        %1569 = vmatmul.mubr.bf16.gmra.mrb[0].mxu0 %v1288
        %v1570 = vpop.f32.mrb[0].mxu0
        %v1571 = vadd.f32 0.0, %v1570
        %v1572 = vpop.f32.mrb[0].mxu0
        %v1573 = vpop.f32.mrb[0].mxu0
        %v1574 = vadd.f32 0.0, %v1573
        %v1575 = vpop.f32.mrb[0].mxu0
        %1576 = vmatprep.mubr.bf16.mxu0 0
        %1577 = vmatmul.mubr.bf16.gmra.mrb[0].mxu0 %v1289
        %v1578 = vpop.f32.mrb[0].mxu0
        %v1579 = vadd.f32 0.0, %v1578
        %v1580 = vpop.f32.mrb[0].mxu0
        %v1581 = vpop.f32.mrb[0].mxu0
        %v1582 = vadd.f32 0.0, %v1581
        %v1583 = vpop.f32.mrb[0].mxu0
        %1584 = vmatprep.mubr.bf16.mxu0 0
        %1585 = vmatmul.mubr.bf16.gmra.mrb[0].mxu0 %v1290
        %v1586 = vpop.f32.mrb[0].mxu0
        %v1587 = vadd.f32 0.0, %v1586
        %v1588 = vpop.f32.mrb[0].mxu0
        %v1589 = vpop.f32.mrb[0].mxu0
        %v1590 = vadd.f32 0.0, %v1589
        %v1591 = vpop.f32.mrb[0].mxu0
        %1592 = vmatprep.mubr.bf16.mxu0 0
        %1593 = vmatmul.mubr.bf16.gmra.mrb[0].mxu0 %v1291
        %v1594 = vpop.f32.mrb[0].mxu0
        %v1595 = vadd.f32 0.0, %v1594
        %v1596 = vpop.f32.mrb[0].mxu0
        %v1597 = vpop.f32.mrb[0].mxu0
        %v1598 = vadd.f32 0.0, %v1597
        %v1599 = vpop.f32.mrb[0].mxu0
        %1600 = vmatprep.mubr.bf16.mxu0 0
        %1601 = vmatmul.mubr.bf16.gmra.mrb[0].mxu0 %v1292
        %v1602 = vpop.f32.mrb[0].mxu0
        %v1603 = vadd.f32 0.0, %v1602
        %v1604 = vpop.f32.mrb[0].mxu0
        %v1605 = vpop.f32.mrb[0].mxu0
        %v1606 = vpop.f32.mrb[0].mxu0
        %1607 = vdwg.mxu0
        %s1608 = scalar_lea.vmem %s4, 72
        %v1609 = vld [vmem:[%s1608] sm:$0xff]
        %v1610 = vld [vmem:[%s1608 + $0x8] sm:$0xff]
        %v1611 = vld [vmem:[%s1608 + $0x10] sm:$0xff]
        %v1612 = vld [vmem:[%s1608 + $0x18] sm:$0xff]
        %v1613 = vld [vmem:[%s1608 + $0x20] sm:$0xff]
        %v1614 = vld [vmem:[%s1608 + $0x28] sm:$0xff]
        %v1615 = vld [vmem:[%s1608 + $0x30] sm:$0xff]
        %v1616 = vld [vmem:[%s1608 + $0x38] sm:$0xff]
        %v1617 = vld [vmem:[%s1608 + $0x40] sm:$0xff]
        %1619 = vset.pattern.permute.xlu0 0
        %1620 = vperm.xlu0 %1619, %v1609
        %v1621 = vpop.permute.xlu0 %1620
        %1624 = vset.pattern.permute.xlu0 0
        %1625 = vperm.xlu0 %1624, %v1610
        %v1626 = vpop.permute.xlu0 %1625
        %1629 = vset.pattern.permute.xlu0 0
        %1630 = vperm.xlu0 %1629, %v1611
        %v1631 = vpop.permute.xlu0 %1630
        %1634 = vset.pattern.permute.xlu0 0
        %1635 = vperm.xlu0 %1634, %v1612
        %v1636 = vpop.permute.xlu0 %1635
        %1639 = vset.pattern.permute.xlu0 0
        %1640 = vperm.xlu0 %1639, %v1613
        %v1641 = vpop.permute.xlu0 %1640
        %1644 = vset.pattern.permute.xlu0 0
        %1645 = vperm.xlu0 %1644, %v1614
        %v1646 = vpop.permute.xlu0 %1645
        %1649 = vset.pattern.permute.xlu0 0
        %1650 = vperm.xlu0 %1649, %v1615
        %v1651 = vpop.permute.xlu0 %1650
        %1654 = vset.pattern.permute.xlu0 0
        %1655 = vperm.xlu0 %1654, %v1616
        %v1656 = vpop.permute.xlu0 %1655
        %1659 = vset.pattern.permute.xlu0 0
        %1660 = vperm.xlu0 %1659, %v1617
        %v1661 = vpop.permute.xlu0 %1660
        %v1663 = vmul.f32 %v1571, %v1621
        %v1664 = vmul.f32 %v1574, %v1626
        %v1665 = vmul.f32 %v1579, %v1631
        %v1666 = vmul.f32 %v1582, %v1636
        %v1667 = vmul.f32 %v1587, %v1641
        %v1668 = vmul.f32 %v1590, %v1646
        %v1669 = vmul.f32 %v1595, %v1651
        %v1670 = vmul.f32 %v1598, %v1656
        %v1671 = vmul.f32 %v1603, %v1661
        %s1672 = scalar_lea.vmem %s5, 72
        %v1673 = vld [vmem:[%s1672] sm:$0xff]
        %v1674 = vld [vmem:[%s1672 + $0x8] sm:$0xff]
        %v1675 = vld [vmem:[%s1672 + $0x10] sm:$0xff]
        %v1676 = vld [vmem:[%s1672 + $0x18] sm:$0xff]
        %v1677 = vld [vmem:[%s1672 + $0x20] sm:$0xff]
        %v1678 = vld [vmem:[%s1672 + $0x28] sm:$0xff]
        %v1679 = vld [vmem:[%s1672 + $0x30] sm:$0xff]
        %v1680 = vld [vmem:[%s1672 + $0x38] sm:$0xff]
        %v1681 = vld [vmem:[%s1672 + $0x40] sm:$0xff]
        %1683 = vset.pattern.permute.xlu0 0
        %1684 = vperm.xlu0 %1683, %v1673
        %v1685 = vpop.permute.xlu0 %1684
        %1688 = vset.pattern.permute.xlu0 0
        %1689 = vperm.xlu0 %1688, %v1674
        %v1690 = vpop.permute.xlu0 %1689
        %1693 = vset.pattern.permute.xlu0 0
        %1694 = vperm.xlu0 %1693, %v1675
        %v1695 = vpop.permute.xlu0 %1694
        %1698 = vset.pattern.permute.xlu0 0
        %1699 = vperm.xlu0 %1698, %v1676
        %v1700 = vpop.permute.xlu0 %1699
        %1703 = vset.pattern.permute.xlu0 0
        %1704 = vperm.xlu0 %1703, %v1677
        %v1705 = vpop.permute.xlu0 %1704
        %1708 = vset.pattern.permute.xlu0 0
        %1709 = vperm.xlu0 %1708, %v1678
        %v1710 = vpop.permute.xlu0 %1709
        %1713 = vset.pattern.permute.xlu0 0
        %1714 = vperm.xlu0 %1713, %v1679
        %v1715 = vpop.permute.xlu0 %1714
        %1718 = vset.pattern.permute.xlu0 0
        %1719 = vperm.xlu0 %1718, %v1680
        %v1720 = vpop.permute.xlu0 %1719
        %1723 = vset.pattern.permute.xlu0 0
        %1724 = vperm.xlu0 %1723, %v1681
        %v1725 = vpop.permute.xlu0 %1724
        %v1727 = vadd.f32 %v1663, %v1685
        %v1728 = vadd.f32 %v1664, %v1690
        %v1729 = vadd.f32 %v1665, %v1695
        %v1730 = vadd.f32 %v1666, %v1700
        %v1731 = vadd.f32 %v1667, %v1705
        %v1732 = vadd.f32 %v1668, %v1710
        %v1733 = vadd.f32 %v1669, %v1715
        %v1734 = vadd.f32 %v1670, %v1720
        %v1735 = vadd.f32 %v1671, %v1725
        %v1736 = vmax.f32 %v1727, 0.0
        %v1737 = vmax.f32 %v1728, 0.0
        %v1738 = vmax.f32 %v1729, 0.0
        %v1739 = vmax.f32 %v1730, 0.0
        %v1740 = vmax.f32 %v1731, 0.0
        %v1741 = vmax.f32 %v1732, 0.0
        %v1742 = vmax.f32 %v1733, 0.0
        %v1743 = vmax.f32 %v1734, 0.0
        %v1744 = vmax.f32 %v1735, 0.0
        %v1745 = vmin.f32 %v1736, 6.0
        %v1746 = vmin.f32 %v1737, 6.0
        %v1747 = vmin.f32 %v1738, 6.0
        %v1748 = vmin.f32 %v1739, 6.0
        %v1749 = vmin.f32 %v1740, 6.0
        %v1750 = vmin.f32 %v1741, 6.0
        %v1751 = vmin.f32 %v1742, 6.0
        %v1752 = vmin.f32 %v1743, 6.0
        %v1753 = vmin.f32 %v1744, 6.0
        %s1754 = scalar_lea.vmem [#allocation7], 36
        %v1755 = vld [vmem:[%s1754] sm:$0xf]
        %v1756 = vld [vmem:[%s1754 + $0x4] sm:$0xf]
        %v1757 = vld [vmem:[%s1754 + $0x8] sm:$0xf]
        %v1758 = vld [vmem:[%s1754 + $0xc] sm:$0xf]
        %v1759 = vld [vmem:[%s1754 + $0x10] sm:$0xf]
        %v1760 = vld [vmem:[%s1754 + $0x14] sm:$0xf]
        %v1761 = vld [vmem:[%s1754 + $0x18] sm:$0xf]
        %v1762 = vld [vmem:[%s1754 + $0x1c] sm:$0xf]
        %v1763 = vld [vmem:[%s1754 + $0x20] sm:$0xf]
        %v1764 = vpack.c.bf16 %v1746, %v1745
        %v1765 = vpack.c.bf16 %v1748, %v1747
        %v1766 = vpack.c.bf16 %v1750, %v1749
        %v1767 = vpack.c.bf16 %v1752, %v1751
        %v1768 = vpack.c.bf16 %v1753, %v1753
        %s1769 = scalar_lea.vmem %s7, 72
        %v1770 = vld [vmem:[%s1769] sm:$0xff]
        %v1771 = vld [vmem:[%s1769 + $0x8] sm:$0xff]
        %v1772 = vld [vmem:[%s1769 + $0x10] sm:$0xff]
        %v1773 = vld [vmem:[%s1769 + $0x18] sm:$0xff]
        %v1774 = vld [vmem:[%s1769 + $0x20] sm:$0xff]
        %v1775 = vld [vmem:[%s1769 + $0x28] sm:$0xff]
        %v1776 = vld [vmem:[%s1769 + $0x30] sm:$0xff]
        %v1777 = vld [vmem:[%s1769 + $0x38] sm:$0xff]
        %v1778 = vld [vmem:[%s1769 + $0x40] sm:$0xff]
        %1780 = vset.pattern.permute.xlu0 0
        %1781 = vperm.xlu0 %1780, %v1770
        %v1782 = vpop.permute.xlu0 %1781
        %1785 = vset.pattern.permute.xlu0 0
        %1786 = vperm.xlu0 %1785, %v1771
        %v1787 = vpop.permute.xlu0 %1786
        %1790 = vset.pattern.permute.xlu0 0
        %1791 = vperm.xlu0 %1790, %v1772
        %v1792 = vpop.permute.xlu0 %1791
        %1795 = vset.pattern.permute.xlu0 0
        %1796 = vperm.xlu0 %1795, %v1773
        %v1797 = vpop.permute.xlu0 %1796
        %1800 = vset.pattern.permute.xlu0 0
        %1801 = vperm.xlu0 %1800, %v1774
        %v1802 = vpop.permute.xlu0 %1801
        %1805 = vset.pattern.permute.xlu0 0
        %1806 = vperm.xlu0 %1805, %v1775
        %v1807 = vpop.permute.xlu0 %1806
        %1810 = vset.pattern.permute.xlu0 0
        %1811 = vperm.xlu0 %1810, %v1776
        %v1812 = vpop.permute.xlu0 %1811
        %1815 = vset.pattern.permute.xlu0 0
        %1816 = vperm.xlu0 %1815, %v1777
        %v1817 = vpop.permute.xlu0 %1816
        %1820 = vset.pattern.permute.xlu0 0
        %1821 = vperm.xlu0 %1820, %v1778
        %v1822 = vpop.permute.xlu0 %1821
        %v1833 = vunpack.c.l.b16 %v1755
        %v1834 = vunpack.c.l.b16 %v1756
        %v1835 = vunpack.c.l.b16 %v1757
        %v1836 = vunpack.c.l.b16 %v1758
        %v1837 = vunpack.c.l.b16 %v1759
        %v1838 = vunpack.c.l.b16 %v1760
        %v1839 = vunpack.c.l.b16 %v1761
        %v1840 = vunpack.c.l.b16 %v1762
        %v1841 = vunpack.c.l.b16 %v1763
        %v1842 = vpack.c.b16 %v1834, %v1833
        %v1843 = vpack.c.b16 %v1836, %v1835
        %v1844 = vpack.c.b16 %v1838, %v1837
        %v1845 = vpack.c.b16 %v1840, %v1839
        %v1846 = vpack.c.b16 %v1841, %v1841
        %v1848 = vsel %vm645, %v1842, 0
        %v1851 = vsel %vm645, %v1843, 0
        %v1854 = vsel %vm645, %v1844, 0
        %v1857 = vsel %vm645, %v1845, 0
        %v1860 = vsel %vm645, %v1846, 0
        %v1863 = vsel %vm661, %v1768, 0
        %1865 = vmatprep.subr.bf16.mxu0 0
        %1866 = vmatpush1.bf16.msra.mxu0 %v1764
        %1867 = vmatprep.subr.bf16.mxu0 0
        %1868 = vmatpush1.bf16.msra.mxu0 %v1765
        %1869 = vmatprep.subr.bf16.mxu0 0
        %1870 = vmatpush1.bf16.msra.mxu0 %v1766
        %1871 = vmatprep.subr.bf16.mxu0 0
        %1872 = vmatpush1.bf16.msra.mxu0 %v1767
        %1873 = vmatprep.subr.bf16.mxu0 0
        %1874 = vmatpush1.bf16.msra.mxu0 %v1863
        %1875 = vmatprep.subr.bf16.mxu0 0
        %1876 = vmatpush1.bf16.msra.mxu0 0
        %1877 = vmatprep.subr.bf16.mxu0 0
        %1878 = vmatpush1.bf16.msra.mxu0 0
        %1879 = vmatprep.subr.bf16.mxu0 0
        %1880 = vmatpush1.bf16.msra.mxu0 0
        %1881 = vmatprep.subr.bf16.mxu0 0
        %1882 = vmatpush1.bf16.msra.mxu0 0
        %1883 = vmatprep.subr.bf16.mxu0 0
        %1884 = vmatpush1.bf16.msra.mxu0 0
        %1885 = vmatprep.subr.bf16.mxu0 0
        %1886 = vmatpush1.bf16.msra.mxu0 0
        %1887 = vmatprep.subr.bf16.mxu0 0
        %1888 = vmatpush1.bf16.msra.mxu0 0
        %1889 = vmatprep.subr.bf16.mxu0 0
        %1890 = vmatpush1.bf16.msra.mxu0 0
        %1891 = vmatprep.subr.bf16.mxu0 0
        %1892 = vmatpush1.bf16.msra.mxu0 0
        %1893 = vmatprep.subr.bf16.mxu0 0
        %1894 = vmatpush1.bf16.msra.mxu0 0
        %1895 = vmatprep.subr.bf16.mxu0 0
        %1896 = vmatpush1.bf16.msra.mxu0 0
        %1897 = vmatprep.mubr.bf16.mxu0 0
        %1898 = vmatmul.mubr.bf16.gmra.mrb[0].mxu0 %v1848
        %v1899 = vpop.f32.mrb[0].mxu0
        %v1900 = vadd.f32 %v1782, %v1899
        %v1901 = vpop.f32.mrb[0].mxu0
        %v1902 = vpop.f32.mrb[0].mxu0
        %v1903 = vadd.f32 %v1787, %v1902
        %v1904 = vpop.f32.mrb[0].mxu0
        %1905 = vmatprep.mubr.bf16.mxu0 0
        %1906 = vmatmul.mubr.bf16.gmra.mrb[0].mxu0 %v1851
        %v1907 = vpop.f32.mrb[0].mxu0
        %v1908 = vadd.f32 %v1792, %v1907
        %v1909 = vpop.f32.mrb[0].mxu0
        %v1910 = vpop.f32.mrb[0].mxu0
        %v1911 = vadd.f32 %v1797, %v1910
        %v1912 = vpop.f32.mrb[0].mxu0
        %1913 = vmatprep.mubr.bf16.mxu0 0
        %1914 = vmatmul.mubr.bf16.gmra.mrb[0].mxu0 %v1854
        %v1915 = vpop.f32.mrb[0].mxu0
        %v1916 = vadd.f32 %v1802, %v1915
        %v1917 = vpop.f32.mrb[0].mxu0
        %v1918 = vpop.f32.mrb[0].mxu0
        %v1919 = vadd.f32 %v1807, %v1918
        %v1920 = vpop.f32.mrb[0].mxu0
        %1921 = vmatprep.mubr.bf16.mxu0 0
        %1922 = vmatmul.mubr.bf16.gmra.mrb[0].mxu0 %v1857
        %v1923 = vpop.f32.mrb[0].mxu0
        %v1924 = vadd.f32 %v1812, %v1923
        %v1925 = vpop.f32.mrb[0].mxu0
        %v1926 = vpop.f32.mrb[0].mxu0
        %v1927 = vadd.f32 %v1817, %v1926
        %v1928 = vpop.f32.mrb[0].mxu0
        %1929 = vmatprep.mubr.bf16.mxu0 0
        %1930 = vmatmul.mubr.bf16.gmra.mrb[0].mxu0 %v1860
        %v1931 = vpop.f32.mrb[0].mxu0
        %v1932 = vadd.f32 %v1822, %v1931
        %v1933 = vpop.f32.mrb[0].mxu0
        %v1934 = vpop.f32.mrb[0].mxu0
        %v1935 = vpop.f32.mrb[0].mxu0
        %1936 = vdwg.mxu0
        %v1937 = vadd.f32 %v1900, %v1434
        %v1938 = vadd.f32 %v1903, %v1437
        %v1939 = vadd.f32 %v1908, %v1442
        %v1940 = vadd.f32 %v1911, %v1445
        %v1941 = vadd.f32 %v1916, %v1450
        %v1942 = vadd.f32 %v1919, %v1453
        %v1943 = vadd.f32 %v1924, %v1458
        %v1944 = vadd.f32 %v1927, %v1461
        %v1945 = vadd.f32 %v1932, %v1466
        %vm1946 = vcmp.ge.f32.partialorder %v1937, 0.0
        %vm1947 = vcmp.ge.f32.partialorder %v1938, 0.0
        %vm1948 = vcmp.ge.f32.partialorder %v1939, 0.0
        %vm1949 = vcmp.ge.f32.partialorder %v1940, 0.0
        %vm1950 = vcmp.ge.f32.partialorder %v1941, 0.0
        %vm1951 = vcmp.ge.f32.partialorder %v1942, 0.0
        %vm1952 = vcmp.ge.f32.partialorder %v1943, 0.0
        %vm1953 = vcmp.ge.f32.partialorder %v1944, 0.0
        %vm1954 = vcmp.ge.f32.partialorder %v1945, 0.0
        %s1955 = scalar_lea.vmem %s8, 72
        %v1956 = vld [vmem:[%s1955] sm:$0xff]
        %v1957 = vld [vmem:[%s1955 + $0x8] sm:$0xff]
        %v1958 = vld [vmem:[%s1955 + $0x10] sm:$0xff]
        %v1959 = vld [vmem:[%s1955 + $0x18] sm:$0xff]
        %v1960 = vld [vmem:[%s1955 + $0x20] sm:$0xff]
        %v1961 = vld [vmem:[%s1955 + $0x28] sm:$0xff]
        %v1962 = vld [vmem:[%s1955 + $0x30] sm:$0xff]
        %v1963 = vld [vmem:[%s1955 + $0x38] sm:$0xff]
        %v1964 = vld [vmem:[%s1955 + $0x40] sm:$0xff]
        %1966 = vset.pattern.permute.xlu0 0
        %1967 = vperm.xlu0 %1966, %v1956
        %v1968 = vpop.permute.xlu0 %1967
        %1971 = vset.pattern.permute.xlu0 0
        %1972 = vperm.xlu0 %1971, %v1957
        %v1973 = vpop.permute.xlu0 %1972
        %1976 = vset.pattern.permute.xlu0 0
        %1977 = vperm.xlu0 %1976, %v1958
        %v1978 = vpop.permute.xlu0 %1977
        %1981 = vset.pattern.permute.xlu0 0
        %1982 = vperm.xlu0 %1981, %v1959
        %v1983 = vpop.permute.xlu0 %1982
        %1986 = vset.pattern.permute.xlu0 0
        %1987 = vperm.xlu0 %1986, %v1960
        %v1988 = vpop.permute.xlu0 %1987
        %1991 = vset.pattern.permute.xlu0 0
        %1992 = vperm.xlu0 %1991, %v1961
        %v1993 = vpop.permute.xlu0 %1992
        %1996 = vset.pattern.permute.xlu0 0
        %1997 = vperm.xlu0 %1996, %v1962
        %v1998 = vpop.permute.xlu0 %1997
        %2001 = vset.pattern.permute.xlu0 0
        %2002 = vperm.xlu0 %2001, %v1963
        %v2003 = vpop.permute.xlu0 %2002
        %2006 = vset.pattern.permute.xlu0 0
        %2007 = vperm.xlu0 %2006, %v1964
        %v2008 = vpop.permute.xlu0 %2007
        %v2010 = vmul.f32 %v1968, %v1937
        %v2011 = vmul.f32 %v1973, %v1938
        %v2012 = vmul.f32 %v1978, %v1939
        %v2013 = vmul.f32 %v1983, %v1940
        %v2014 = vmul.f32 %v1988, %v1941
        %v2015 = vmul.f32 %v1993, %v1942
        %v2016 = vmul.f32 %v1998, %v1943
        %v2017 = vmul.f32 %v2003, %v1944
        %v2018 = vmul.f32 %v2008, %v1945
        %v2019 = vsel %vm1946, %v1937, %v2010
        %v2020 = vsel %vm1947, %v1938, %v2011
        %v2021 = vsel %vm1948, %v1939, %v2012
        %v2022 = vsel %vm1949, %v1940, %v2013
        %v2023 = vsel %vm1950, %v1941, %v2014
        %v2024 = vsel %vm1951, %v1942, %v2015
        %v2025 = vsel %vm1952, %v1943, %v2016
        %v2026 = vsel %vm1953, %v1944, %v2017
        %v2027 = vsel %vm1954, %v1945, %v2018
        %v2028 = vpack.c.bf16 %v2020, %v2019
        %v2029 = vpack.c.bf16 %v2022, %v2021
        %v2030 = vpack.c.bf16 %v2024, %v2023
        %v2031 = vpack.c.bf16 %v2026, %v2025
        %v2032 = vpack.c.bf16 %v2027, %v2027
        %s2033 = scalar_lea.vmem [#allocation5], 72
        %v2034 = vld [vmem:[%s2033] sm:$0xf]
        %v2035 = vld [vmem:[%s2033 + $0x4] sm:$0xf]
        %v2036 = vld [vmem:[%s2033 + $0x8] sm:$0xf]
        %v2037 = vld [vmem:[%s2033 + $0xc] sm:$0xf]
        %v2038 = vld [vmem:[%s2033 + $0x10] sm:$0xf]
        %v2039 = vld [vmem:[%s2033 + $0x14] sm:$0xf]
        %v2040 = vld [vmem:[%s2033 + $0x18] sm:$0xf]
        %v2041 = vld [vmem:[%s2033 + $0x1c] sm:$0xf]
        %v2042 = vld [vmem:[%s2033 + $0x20] sm:$0xf]
        %s2043 = scalar_lea.vmem %s3, 144
        %v2044 = vld [vmem:[%s2043] sm:$0xff]
        %v2045 = vld [vmem:[%s2043 + $0x8] sm:$0xff]
        %v2046 = vld [vmem:[%s2043 + $0x10] sm:$0xff]
        %v2047 = vld [vmem:[%s2043 + $0x18] sm:$0xff]
        %v2048 = vld [vmem:[%s2043 + $0x20] sm:$0xff]
        %v2049 = vld [vmem:[%s2043 + $0x28] sm:$0xff]
        %v2050 = vld [vmem:[%s2043 + $0x30] sm:$0xff]
        %v2051 = vld [vmem:[%s2043 + $0x38] sm:$0xff]
        %v2052 = vld [vmem:[%s2043 + $0x40] sm:$0xff]
        %2054 = vset.pattern.permute.xlu0 0
        %2055 = vperm.xlu0 %2054, %v2044
        %v2056 = vpop.permute.xlu0 %2055
        %2059 = vset.pattern.permute.xlu0 0
        %2060 = vperm.xlu0 %2059, %v2045
        %v2061 = vpop.permute.xlu0 %2060
        %2064 = vset.pattern.permute.xlu0 0
        %2065 = vperm.xlu0 %2064, %v2046
        %v2066 = vpop.permute.xlu0 %2065
        %2069 = vset.pattern.permute.xlu0 0
        %2070 = vperm.xlu0 %2069, %v2047
        %v2071 = vpop.permute.xlu0 %2070
        %2074 = vset.pattern.permute.xlu0 0
        %2075 = vperm.xlu0 %2074, %v2048
        %v2076 = vpop.permute.xlu0 %2075
        %2079 = vset.pattern.permute.xlu0 0
        %2080 = vperm.xlu0 %2079, %v2049
        %v2081 = vpop.permute.xlu0 %2080
        %2084 = vset.pattern.permute.xlu0 0
        %2085 = vperm.xlu0 %2084, %v2050
        %v2086 = vpop.permute.xlu0 %2085
        %2089 = vset.pattern.permute.xlu0 0
        %2090 = vperm.xlu0 %2089, %v2051
        %v2091 = vpop.permute.xlu0 %2090
        %2094 = vset.pattern.permute.xlu0 0
        %2095 = vperm.xlu0 %2094, %v2052
        %v2096 = vpop.permute.xlu0 %2095
        %v2107 = vunpack.c.l.b16 %v2034
        %v2108 = vunpack.c.l.b16 %v2035
        %v2109 = vunpack.c.l.b16 %v2036
        %v2110 = vunpack.c.l.b16 %v2037
        %v2111 = vunpack.c.l.b16 %v2038
        %v2112 = vunpack.c.l.b16 %v2039
        %v2113 = vunpack.c.l.b16 %v2040
        %v2114 = vunpack.c.l.b16 %v2041
        %v2115 = vunpack.c.l.b16 %v2042
        %v2116 = vpack.c.b16 %v2108, %v2107
        %v2117 = vpack.c.b16 %v2110, %v2109
        %v2118 = vpack.c.b16 %v2112, %v2111
        %v2119 = vpack.c.b16 %v2114, %v2113
        %v2120 = vpack.c.b16 %v2115, %v2115
        %v2122 = vsel %vm645, %v2116, 0
        %v2125 = vsel %vm645, %v2117, 0
        %v2128 = vsel %vm645, %v2118, 0
        %v2131 = vsel %vm645, %v2119, 0
        %v2134 = vsel %vm645, %v2120, 0
        %v2137 = vsel %vm661, %v2032, 0
        %2139 = vmatprep.subr.bf16.mxu0 0
        %2140 = vmatpush1.bf16.msra.mxu0 %v2028
        %2141 = vmatprep.subr.bf16.mxu0 0
        %2142 = vmatpush1.bf16.msra.mxu0 %v2029
        %2143 = vmatprep.subr.bf16.mxu0 0
        %2144 = vmatpush1.bf16.msra.mxu0 %v2030
        %2145 = vmatprep.subr.bf16.mxu0 0
        %2146 = vmatpush1.bf16.msra.mxu0 %v2031
        %2147 = vmatprep.subr.bf16.mxu0 0
        %2148 = vmatpush1.bf16.msra.mxu0 %v2137
        %2149 = vmatprep.subr.bf16.mxu0 0
        %2150 = vmatpush1.bf16.msra.mxu0 0
        %2151 = vmatprep.subr.bf16.mxu0 0
        %2152 = vmatpush1.bf16.msra.mxu0 0
        %2153 = vmatprep.subr.bf16.mxu0 0
        %2154 = vmatpush1.bf16.msra.mxu0 0
        %2155 = vmatprep.subr.bf16.mxu0 0
        %2156 = vmatpush1.bf16.msra.mxu0 0
        %2157 = vmatprep.subr.bf16.mxu0 0
        %2158 = vmatpush1.bf16.msra.mxu0 0
        %2159 = vmatprep.subr.bf16.mxu0 0
        %2160 = vmatpush1.bf16.msra.mxu0 0
        %2161 = vmatprep.subr.bf16.mxu0 0
        %2162 = vmatpush1.bf16.msra.mxu0 0
        %2163 = vmatprep.subr.bf16.mxu0 0
        %2164 = vmatpush1.bf16.msra.mxu0 0
        %2165 = vmatprep.subr.bf16.mxu0 0
        %2166 = vmatpush1.bf16.msra.mxu0 0
        %2167 = vmatprep.subr.bf16.mxu0 0
        %2168 = vmatpush1.bf16.msra.mxu0 0
        %2169 = vmatprep.subr.bf16.mxu0 0
        %2170 = vmatpush1.bf16.msra.mxu0 0
        %2171 = vmatprep.mubr.bf16.mxu0 0
        %2172 = vmatmul.mubr.bf16.gmra.mrb[0].mxu0 %v2122
        %v2173 = vpop.f32.mrb[0].mxu0
        %v2174 = vadd.f32 %v2056, %v2173
        %v2175 = vpop.f32.mrb[0].mxu0
        %v2176 = vpop.f32.mrb[0].mxu0
        %v2177 = vadd.f32 %v2061, %v2176
        %v2178 = vpop.f32.mrb[0].mxu0
        %2179 = vmatprep.mubr.bf16.mxu0 0
        %2180 = vmatmul.mubr.bf16.gmra.mrb[0].mxu0 %v2125
        %v2181 = vpop.f32.mrb[0].mxu0
        %v2182 = vadd.f32 %v2066, %v2181
        %v2183 = vpop.f32.mrb[0].mxu0
        %v2184 = vpop.f32.mrb[0].mxu0
        %v2185 = vadd.f32 %v2071, %v2184
        %v2186 = vpop.f32.mrb[0].mxu0
        %2187 = vmatprep.mubr.bf16.mxu0 0
        %2188 = vmatmul.mubr.bf16.gmra.mrb[0].mxu0 %v2128
        %v2189 = vpop.f32.mrb[0].mxu0
        %v2190 = vadd.f32 %v2076, %v2189
        %v2191 = vpop.f32.mrb[0].mxu0
        %v2192 = vpop.f32.mrb[0].mxu0
        %v2193 = vadd.f32 %v2081, %v2192
        %v2194 = vpop.f32.mrb[0].mxu0
        %2195 = vmatprep.mubr.bf16.mxu0 0
        %2196 = vmatmul.mubr.bf16.gmra.mrb[0].mxu0 %v2131
        %v2197 = vpop.f32.mrb[0].mxu0
        %v2198 = vadd.f32 %v2086, %v2197
        %v2199 = vpop.f32.mrb[0].mxu0
        %v2200 = vpop.f32.mrb[0].mxu0
        %v2201 = vadd.f32 %v2091, %v2200
        %v2202 = vpop.f32.mrb[0].mxu0
        %2203 = vmatprep.mubr.bf16.mxu0 0
        %2204 = vmatmul.mubr.bf16.gmra.mrb[0].mxu0 %v2134
        %v2205 = vpop.f32.mrb[0].mxu0
        %v2206 = vadd.f32 %v2096, %v2205
        %v2207 = vpop.f32.mrb[0].mxu0
        %v2208 = vpop.f32.mrb[0].mxu0
        %v2209 = vpop.f32.mrb[0].mxu0
        %2210 = vdwg.mxu0
        %s2211 = scalar_lea.vmem %s1, 128
        %v2212 = vld [vmem:[%s2211] sm:$0xf]
        %v2213 = vld [vmem:[%s2211 + $0x4] sm:$0xf]
        %v2214 = vld [vmem:[%s2211 + $0x8] sm:$0xf]
        %v2215 = vld [vmem:[%s2211 + $0xc] sm:$0xf]
        %v2216 = vld [vmem:[%s2211 + $0x10] sm:$0xf]
        %v2217 = vld [vmem:[%s2211 + $0x14] sm:$0xf]
        %v2218 = vld [vmem:[%s2211 + $0x18] sm:$0xf]
        %v2219 = vld [vmem:[%s2211 + $0x1c] sm:$0xf]
        %v2220 = vld [vmem:[%s2211 + $0x20] sm:$0xf]
        %v2221 = vld [vmem:[%s2211 + $0x24] sm:$0xf]
        %v2222 = vld [vmem:[%s2211 + $0x28] sm:$0xf]
        %v2223 = vld [vmem:[%s2211 + $0x2c] sm:$0xf]
        %v2224 = vld [vmem:[%s2211 + $0x30] sm:$0xf]
        %v2225 = vld [vmem:[%s2211 + $0x34] sm:$0xf]
        %v2226 = vld [vmem:[%s2211 + $0x38] sm:$0xf]
        %v2227 = vld [vmem:[%s2211 + $0x3c] sm:$0xf]
        %v2244 = vunpack.c.l.b16 %v2212
        %v2245 = vunpack.c.l.b16 %v2213
        %v2246 = vunpack.c.l.b16 %v2214
        %v2247 = vunpack.c.l.b16 %v2215
        %v2248 = vunpack.c.l.b16 %v2216
        %v2249 = vunpack.c.l.b16 %v2217
        %v2250 = vunpack.c.l.b16 %v2218
        %v2251 = vunpack.c.l.b16 %v2219
        %v2252 = vunpack.c.l.b16 %v2220
        %v2253 = vunpack.c.l.b16 %v2221
        %v2254 = vunpack.c.l.b16 %v2222
        %v2255 = vunpack.c.l.b16 %v2223
        %v2256 = vunpack.c.l.b16 %v2224
        %v2257 = vunpack.c.l.b16 %v2225
        %v2258 = vunpack.c.l.b16 %v2226
        %v2259 = vunpack.c.l.b16 %v2227
        %v2260 = vpack.c.b16 %v2245, %v2244
        %v2261 = vpack.c.b16 %v2247, %v2246
        %v2262 = vpack.c.b16 %v2249, %v2248
        %v2263 = vpack.c.b16 %v2251, %v2250
        %v2264 = vpack.c.b16 %v2253, %v2252
        %v2265 = vpack.c.b16 %v2255, %v2254
        %v2266 = vpack.c.b16 %v2257, %v2256
        %v2267 = vpack.c.b16 %v2259, %v2258
        %2276 = vmatprep.subr.bf16.mxu0 0
        %2277 = vmatpush1.bf16.msra.mxu0 %v2260
        %2278 = vmatprep.subr.bf16.mxu0 0
        %2279 = vmatpush1.bf16.msra.mxu0 %v2261
        %2280 = vmatprep.subr.bf16.mxu0 0
        %2281 = vmatpush1.bf16.msra.mxu0 %v2262
        %2282 = vmatprep.subr.bf16.mxu0 0
        %2283 = vmatpush1.bf16.msra.mxu0 %v2263
        %2284 = vmatprep.subr.bf16.mxu0 0
        %2285 = vmatpush1.bf16.msra.mxu0 %v2264
        %2286 = vmatprep.subr.bf16.mxu0 0
        %2287 = vmatpush1.bf16.msra.mxu0 %v2265
        %2288 = vmatprep.subr.bf16.mxu0 0
        %2289 = vmatpush1.bf16.msra.mxu0 %v2266
        %2290 = vmatprep.subr.bf16.mxu0 0
        %2291 = vmatpush1.bf16.msra.mxu0 %v2267
        %2292 = vmatprep.subr.bf16.mxu0 0
        %2293 = vmatpush1.bf16.msra.mxu0 0
        %2294 = vmatprep.subr.bf16.mxu0 0
        %2295 = vmatpush1.bf16.msra.mxu0 0
        %2296 = vmatprep.subr.bf16.mxu0 0
        %2297 = vmatpush1.bf16.msra.mxu0 0
        %2298 = vmatprep.subr.bf16.mxu0 0
        %2299 = vmatpush1.bf16.msra.mxu0 0
        %2300 = vmatprep.subr.bf16.mxu0 0
        %2301 = vmatpush1.bf16.msra.mxu0 0
        %2302 = vmatprep.subr.bf16.mxu0 0
        %2303 = vmatpush1.bf16.msra.mxu0 0
        %2304 = vmatprep.subr.bf16.mxu0 0
        %2305 = vmatpush1.bf16.msra.mxu0 0
        %2306 = vmatprep.subr.bf16.mxu0 0
        %2307 = vmatpush1.bf16.msra.mxu0 0
        %2308 = vmatprep.mubr.bf16.mxu0 0
        %2309 = vmatmul.mubr.bf16.gmra.mrb[0].mxu0 %v2028
        %v2310 = vpop.f32.mrb[0].mxu0
        %v2311 = vadd.f32 0.0, %v2310
        %v2312 = vpop.f32.mrb[0].mxu0
        %v2313 = vpop.f32.mrb[0].mxu0
        %v2314 = vadd.f32 0.0, %v2313
        %v2315 = vpop.f32.mrb[0].mxu0
        %2316 = vmatprep.mubr.bf16.mxu0 0
        %2317 = vmatmul.mubr.bf16.gmra.mrb[0].mxu0 %v2029
        %v2318 = vpop.f32.mrb[0].mxu0
        %v2319 = vadd.f32 0.0, %v2318
        %v2320 = vpop.f32.mrb[0].mxu0
        %v2321 = vpop.f32.mrb[0].mxu0
        %v2322 = vadd.f32 0.0, %v2321
        %v2323 = vpop.f32.mrb[0].mxu0
        %2324 = vmatprep.mubr.bf16.mxu0 0
        %2325 = vmatmul.mubr.bf16.gmra.mrb[0].mxu0 %v2030
        %v2326 = vpop.f32.mrb[0].mxu0
        %v2327 = vadd.f32 0.0, %v2326
        %v2328 = vpop.f32.mrb[0].mxu0
        %v2329 = vpop.f32.mrb[0].mxu0
        %v2330 = vadd.f32 0.0, %v2329
        %v2331 = vpop.f32.mrb[0].mxu0
        %2332 = vmatprep.mubr.bf16.mxu0 0
        %2333 = vmatmul.mubr.bf16.gmra.mrb[0].mxu0 %v2031
        %v2334 = vpop.f32.mrb[0].mxu0
        %v2335 = vadd.f32 0.0, %v2334
        %v2336 = vpop.f32.mrb[0].mxu0
        %v2337 = vpop.f32.mrb[0].mxu0
        %v2338 = vadd.f32 0.0, %v2337
        %v2339 = vpop.f32.mrb[0].mxu0
        %2340 = vmatprep.mubr.bf16.mxu0 0
        %2341 = vmatmul.mubr.bf16.gmra.mrb[0].mxu0 %v2032
        %v2342 = vpop.f32.mrb[0].mxu0
        %v2343 = vadd.f32 0.0, %v2342
        %v2344 = vpop.f32.mrb[0].mxu0
        %v2345 = vpop.f32.mrb[0].mxu0
        %v2346 = vpop.f32.mrb[0].mxu0
        %2347 = vdwg.mxu0
        %s2348 = scalar_lea.vmem %s4, 144
        %v2349 = vld [vmem:[%s2348] sm:$0xff]
        %v2350 = vld [vmem:[%s2348 + $0x8] sm:$0xff]
        %v2351 = vld [vmem:[%s2348 + $0x10] sm:$0xff]
        %v2352 = vld [vmem:[%s2348 + $0x18] sm:$0xff]
        %v2353 = vld [vmem:[%s2348 + $0x20] sm:$0xff]
        %v2354 = vld [vmem:[%s2348 + $0x28] sm:$0xff]
        %v2355 = vld [vmem:[%s2348 + $0x30] sm:$0xff]
        %v2356 = vld [vmem:[%s2348 + $0x38] sm:$0xff]
        %v2357 = vld [vmem:[%s2348 + $0x40] sm:$0xff]
        %2359 = vset.pattern.permute.xlu0 0
        %2360 = vperm.xlu0 %2359, %v2349
        %v2361 = vpop.permute.xlu0 %2360
        %2364 = vset.pattern.permute.xlu0 0
        %2365 = vperm.xlu0 %2364, %v2350
        %v2366 = vpop.permute.xlu0 %2365
        %2369 = vset.pattern.permute.xlu0 0
        %2370 = vperm.xlu0 %2369, %v2351
        %v2371 = vpop.permute.xlu0 %2370
        %2374 = vset.pattern.permute.xlu0 0
        %2375 = vperm.xlu0 %2374, %v2352
        %v2376 = vpop.permute.xlu0 %2375
        %2379 = vset.pattern.permute.xlu0 0
        %2380 = vperm.xlu0 %2379, %v2353
        %v2381 = vpop.permute.xlu0 %2380
        %2384 = vset.pattern.permute.xlu0 0
        %2385 = vperm.xlu0 %2384, %v2354
        %v2386 = vpop.permute.xlu0 %2385
        %2389 = vset.pattern.permute.xlu0 0
        %2390 = vperm.xlu0 %2389, %v2355
        %v2391 = vpop.permute.xlu0 %2390
        %2394 = vset.pattern.permute.xlu0 0
        %2395 = vperm.xlu0 %2394, %v2356
        %v2396 = vpop.permute.xlu0 %2395
        %2399 = vset.pattern.permute.xlu0 0
        %2400 = vperm.xlu0 %2399, %v2357
        %v2401 = vpop.permute.xlu0 %2400
        %v2403 = vmul.f32 %v2311, %v2361
        %v2404 = vmul.f32 %v2314, %v2366
        %v2405 = vmul.f32 %v2319, %v2371
        %v2406 = vmul.f32 %v2322, %v2376
        %v2407 = vmul.f32 %v2327, %v2381
        %v2408 = vmul.f32 %v2330, %v2386
        %v2409 = vmul.f32 %v2335, %v2391
        %v2410 = vmul.f32 %v2338, %v2396
        %v2411 = vmul.f32 %v2343, %v2401
        %s2412 = scalar_lea.vmem %s5, 144
        %v2413 = vld [vmem:[%s2412] sm:$0xff]
        %v2414 = vld [vmem:[%s2412 + $0x8] sm:$0xff]
        %v2415 = vld [vmem:[%s2412 + $0x10] sm:$0xff]
        %v2416 = vld [vmem:[%s2412 + $0x18] sm:$0xff]
        %v2417 = vld [vmem:[%s2412 + $0x20] sm:$0xff]
        %v2418 = vld [vmem:[%s2412 + $0x28] sm:$0xff]
        %v2419 = vld [vmem:[%s2412 + $0x30] sm:$0xff]
        %v2420 = vld [vmem:[%s2412 + $0x38] sm:$0xff]
        %v2421 = vld [vmem:[%s2412 + $0x40] sm:$0xff]
        %2423 = vset.pattern.permute.xlu0 0
        %2424 = vperm.xlu0 %2423, %v2413
        %v2425 = vpop.permute.xlu0 %2424
        %2428 = vset.pattern.permute.xlu0 0
        %2429 = vperm.xlu0 %2428, %v2414
        %v2430 = vpop.permute.xlu0 %2429
        %2433 = vset.pattern.permute.xlu0 0
        %2434 = vperm.xlu0 %2433, %v2415
        %v2435 = vpop.permute.xlu0 %2434
        %2438 = vset.pattern.permute.xlu0 0
        %2439 = vperm.xlu0 %2438, %v2416
        %v2440 = vpop.permute.xlu0 %2439
        %2443 = vset.pattern.permute.xlu0 0
        %2444 = vperm.xlu0 %2443, %v2417
        %v2445 = vpop.permute.xlu0 %2444
        %2448 = vset.pattern.permute.xlu0 0
        %2449 = vperm.xlu0 %2448, %v2418
        %v2450 = vpop.permute.xlu0 %2449
        %2453 = vset.pattern.permute.xlu0 0
        %2454 = vperm.xlu0 %2453, %v2419
        %v2455 = vpop.permute.xlu0 %2454
        %2458 = vset.pattern.permute.xlu0 0
        %2459 = vperm.xlu0 %2458, %v2420
        %v2460 = vpop.permute.xlu0 %2459
        %2463 = vset.pattern.permute.xlu0 0
        %2464 = vperm.xlu0 %2463, %v2421
        %v2465 = vpop.permute.xlu0 %2464
        %v2467 = vadd.f32 %v2403, %v2425
        %v2468 = vadd.f32 %v2404, %v2430
        %v2469 = vadd.f32 %v2405, %v2435
        %v2470 = vadd.f32 %v2406, %v2440
        %v2471 = vadd.f32 %v2407, %v2445
        %v2472 = vadd.f32 %v2408, %v2450
        %v2473 = vadd.f32 %v2409, %v2455
        %v2474 = vadd.f32 %v2410, %v2460
        %v2475 = vadd.f32 %v2411, %v2465
        %v2476 = vmax.f32 %v2467, 0.0
        %v2477 = vmax.f32 %v2468, 0.0
        %v2478 = vmax.f32 %v2469, 0.0
        %v2479 = vmax.f32 %v2470, 0.0
        %v2480 = vmax.f32 %v2471, 0.0
        %v2481 = vmax.f32 %v2472, 0.0
        %v2482 = vmax.f32 %v2473, 0.0
        %v2483 = vmax.f32 %v2474, 0.0
        %v2484 = vmax.f32 %v2475, 0.0
        %v2485 = vmin.f32 %v2476, 6.0
        %v2486 = vmin.f32 %v2477, 6.0
        %v2487 = vmin.f32 %v2478, 6.0
        %v2488 = vmin.f32 %v2479, 6.0
        %v2489 = vmin.f32 %v2480, 6.0
        %v2490 = vmin.f32 %v2481, 6.0
        %v2491 = vmin.f32 %v2482, 6.0
        %v2492 = vmin.f32 %v2483, 6.0
        %v2493 = vmin.f32 %v2484, 6.0
        %s2494 = scalar_lea.vmem [#allocation7], 72
        %v2495 = vld [vmem:[%s2494] sm:$0xf]
        %v2496 = vld [vmem:[%s2494 + $0x4] sm:$0xf]
        %v2497 = vld [vmem:[%s2494 + $0x8] sm:$0xf]
        %v2498 = vld [vmem:[%s2494 + $0xc] sm:$0xf]
        %v2499 = vld [vmem:[%s2494 + $0x10] sm:$0xf]
        %v2500 = vld [vmem:[%s2494 + $0x14] sm:$0xf]
        %v2501 = vld [vmem:[%s2494 + $0x18] sm:$0xf]
        %v2502 = vld [vmem:[%s2494 + $0x1c] sm:$0xf]
        %v2503 = vld [vmem:[%s2494 + $0x20] sm:$0xf]
        %v2504 = vpack.c.bf16 %v2486, %v2485
        %v2505 = vpack.c.bf16 %v2488, %v2487
        %v2506 = vpack.c.bf16 %v2490, %v2489
        %v2507 = vpack.c.bf16 %v2492, %v2491
        %v2508 = vpack.c.bf16 %v2493, %v2493
        %s2509 = scalar_lea.vmem %s7, 144
        %v2510 = vld [vmem:[%s2509] sm:$0xff]
        %v2511 = vld [vmem:[%s2509 + $0x8] sm:$0xff]
        %v2512 = vld [vmem:[%s2509 + $0x10] sm:$0xff]
        %v2513 = vld [vmem:[%s2509 + $0x18] sm:$0xff]
        %v2514 = vld [vmem:[%s2509 + $0x20] sm:$0xff]
        %v2515 = vld [vmem:[%s2509 + $0x28] sm:$0xff]
        %v2516 = vld [vmem:[%s2509 + $0x30] sm:$0xff]
        %v2517 = vld [vmem:[%s2509 + $0x38] sm:$0xff]
        %v2518 = vld [vmem:[%s2509 + $0x40] sm:$0xff]
        %2520 = vset.pattern.permute.xlu0 0
        %2521 = vperm.xlu0 %2520, %v2510
        %v2522 = vpop.permute.xlu0 %2521
        %2525 = vset.pattern.permute.xlu0 0
        %2526 = vperm.xlu0 %2525, %v2511
        %v2527 = vpop.permute.xlu0 %2526
        %2530 = vset.pattern.permute.xlu0 0
        %2531 = vperm.xlu0 %2530, %v2512
        %v2532 = vpop.permute.xlu0 %2531
        %2535 = vset.pattern.permute.xlu0 0
        %2536 = vperm.xlu0 %2535, %v2513
        %v2537 = vpop.permute.xlu0 %2536
        %2540 = vset.pattern.permute.xlu0 0
        %2541 = vperm.xlu0 %2540, %v2514
        %v2542 = vpop.permute.xlu0 %2541
        %2545 = vset.pattern.permute.xlu0 0
        %2546 = vperm.xlu0 %2545, %v2515
        %v2547 = vpop.permute.xlu0 %2546
        %2550 = vset.pattern.permute.xlu0 0
        %2551 = vperm.xlu0 %2550, %v2516
        %v2552 = vpop.permute.xlu0 %2551
        %2555 = vset.pattern.permute.xlu0 0
        %2556 = vperm.xlu0 %2555, %v2517
        %v2557 = vpop.permute.xlu0 %2556
        %2560 = vset.pattern.permute.xlu0 0
        %2561 = vperm.xlu0 %2560, %v2518
        %v2562 = vpop.permute.xlu0 %2561
        %v2573 = vunpack.c.l.b16 %v2495
        %v2574 = vunpack.c.l.b16 %v2496
        %v2575 = vunpack.c.l.b16 %v2497
        %v2576 = vunpack.c.l.b16 %v2498
        %v2577 = vunpack.c.l.b16 %v2499
        %v2578 = vunpack.c.l.b16 %v2500
        %v2579 = vunpack.c.l.b16 %v2501
        %v2580 = vunpack.c.l.b16 %v2502
        %v2581 = vunpack.c.l.b16 %v2503
        %v2582 = vpack.c.b16 %v2574, %v2573
        %v2583 = vpack.c.b16 %v2576, %v2575
        %v2584 = vpack.c.b16 %v2578, %v2577
        %v2585 = vpack.c.b16 %v2580, %v2579
        %v2586 = vpack.c.b16 %v2581, %v2581
        %v2588 = vsel %vm645, %v2582, 0
        %v2591 = vsel %vm645, %v2583, 0
        %v2594 = vsel %vm645, %v2584, 0
        %v2597 = vsel %vm645, %v2585, 0
        %v2600 = vsel %vm645, %v2586, 0
        %v2603 = vsel %vm661, %v2508, 0
        %2605 = vmatprep.subr.bf16.mxu0 0
        %2606 = vmatpush1.bf16.msra.mxu0 %v2504
        %2607 = vmatprep.subr.bf16.mxu0 0
        %2608 = vmatpush1.bf16.msra.mxu0 %v2505
        %2609 = vmatprep.subr.bf16.mxu0 0
        %2610 = vmatpush1.bf16.msra.mxu0 %v2506
        %2611 = vmatprep.subr.bf16.mxu0 0
        %2612 = vmatpush1.bf16.msra.mxu0 %v2507
        %2613 = vmatprep.subr.bf16.mxu0 0
        %2614 = vmatpush1.bf16.msra.mxu0 %v2603
        %2615 = vmatprep.subr.bf16.mxu0 0
        %2616 = vmatpush1.bf16.msra.mxu0 0
        %2617 = vmatprep.subr.bf16.mxu0 0
        %2618 = vmatpush1.bf16.msra.mxu0 0
        %2619 = vmatprep.subr.bf16.mxu0 0
        %2620 = vmatpush1.bf16.msra.mxu0 0
        %2621 = vmatprep.subr.bf16.mxu0 0
        %2622 = vmatpush1.bf16.msra.mxu0 0
        %2623 = vmatprep.subr.bf16.mxu0 0
        %2624 = vmatpush1.bf16.msra.mxu0 0
        %2625 = vmatprep.subr.bf16.mxu0 0
        %2626 = vmatpush1.bf16.msra.mxu0 0
        %2627 = vmatprep.subr.bf16.mxu0 0
        %2628 = vmatpush1.bf16.msra.mxu0 0
        %2629 = vmatprep.subr.bf16.mxu0 0
        %2630 = vmatpush1.bf16.msra.mxu0 0
        %2631 = vmatprep.subr.bf16.mxu0 0
        %2632 = vmatpush1.bf16.msra.mxu0 0
        %2633 = vmatprep.subr.bf16.mxu0 0
        %2634 = vmatpush1.bf16.msra.mxu0 0
        %2635 = vmatprep.subr.bf16.mxu0 0
        %2636 = vmatpush1.bf16.msra.mxu0 0
        %2637 = vmatprep.mubr.bf16.mxu0 0
        %2638 = vmatmul.mubr.bf16.gmra.mrb[0].mxu0 %v2588
        %v2639 = vpop.f32.mrb[0].mxu0
        %v2640 = vadd.f32 %v2522, %v2639
        %v2641 = vpop.f32.mrb[0].mxu0
        %v2642 = vpop.f32.mrb[0].mxu0
        %v2643 = vadd.f32 %v2527, %v2642
        %v2644 = vpop.f32.mrb[0].mxu0
        %2645 = vmatprep.mubr.bf16.mxu0 0
        %2646 = vmatmul.mubr.bf16.gmra.mrb[0].mxu0 %v2591
        %v2647 = vpop.f32.mrb[0].mxu0
        %v2648 = vadd.f32 %v2532, %v2647
        %v2649 = vpop.f32.mrb[0].mxu0
        %v2650 = vpop.f32.mrb[0].mxu0
        %v2651 = vadd.f32 %v2537, %v2650
        %v2652 = vpop.f32.mrb[0].mxu0
        %2653 = vmatprep.mubr.bf16.mxu0 0
        %2654 = vmatmul.mubr.bf16.gmra.mrb[0].mxu0 %v2594
        %v2655 = vpop.f32.mrb[0].mxu0
        %v2656 = vadd.f32 %v2542, %v2655
        %v2657 = vpop.f32.mrb[0].mxu0
        %v2658 = vpop.f32.mrb[0].mxu0
        %v2659 = vadd.f32 %v2547, %v2658
        %v2660 = vpop.f32.mrb[0].mxu0
        %2661 = vmatprep.mubr.bf16.mxu0 0
        %2662 = vmatmul.mubr.bf16.gmra.mrb[0].mxu0 %v2597
        %v2663 = vpop.f32.mrb[0].mxu0
        %v2664 = vadd.f32 %v2552, %v2663
        %v2665 = vpop.f32.mrb[0].mxu0
        %v2666 = vpop.f32.mrb[0].mxu0
        %v2667 = vadd.f32 %v2557, %v2666
        %v2668 = vpop.f32.mrb[0].mxu0
        %2669 = vmatprep.mubr.bf16.mxu0 0
        %2670 = vmatmul.mubr.bf16.gmra.mrb[0].mxu0 %v2600
        %v2671 = vpop.f32.mrb[0].mxu0
        %v2672 = vadd.f32 %v2562, %v2671
        %v2673 = vpop.f32.mrb[0].mxu0
        %v2674 = vpop.f32.mrb[0].mxu0
        %v2675 = vpop.f32.mrb[0].mxu0
        %2676 = vdwg.mxu0
        %v2677 = vadd.f32 %v2640, %v2174
        %v2678 = vadd.f32 %v2643, %v2177
        %v2679 = vadd.f32 %v2648, %v2182
        %v2680 = vadd.f32 %v2651, %v2185
        %v2681 = vadd.f32 %v2656, %v2190
        %v2682 = vadd.f32 %v2659, %v2193
        %v2683 = vadd.f32 %v2664, %v2198
        %v2684 = vadd.f32 %v2667, %v2201
        %v2685 = vadd.f32 %v2672, %v2206
        %vm2686 = vcmp.ge.f32.partialorder %v2677, 0.0
        %vm2687 = vcmp.ge.f32.partialorder %v2678, 0.0
        %vm2688 = vcmp.ge.f32.partialorder %v2679, 0.0
        %vm2689 = vcmp.ge.f32.partialorder %v2680, 0.0
        %vm2690 = vcmp.ge.f32.partialorder %v2681, 0.0
        %vm2691 = vcmp.ge.f32.partialorder %v2682, 0.0
        %vm2692 = vcmp.ge.f32.partialorder %v2683, 0.0
        %vm2693 = vcmp.ge.f32.partialorder %v2684, 0.0
        %vm2694 = vcmp.ge.f32.partialorder %v2685, 0.0
        %s2695 = scalar_lea.vmem %s8, 144
        %v2696 = vld [vmem:[%s2695] sm:$0xff]
        %v2697 = vld [vmem:[%s2695 + $0x8] sm:$0xff]
        %v2698 = vld [vmem:[%s2695 + $0x10] sm:$0xff]
        %v2699 = vld [vmem:[%s2695 + $0x18] sm:$0xff]
        %v2700 = vld [vmem:[%s2695 + $0x20] sm:$0xff]
        %v2701 = vld [vmem:[%s2695 + $0x28] sm:$0xff]
        %v2702 = vld [vmem:[%s2695 + $0x30] sm:$0xff]
        %v2703 = vld [vmem:[%s2695 + $0x38] sm:$0xff]
        %v2704 = vld [vmem:[%s2695 + $0x40] sm:$0xff]
        %2706 = vset.pattern.permute.xlu0 0
        %2707 = vperm.xlu0 %2706, %v2696
        %v2708 = vpop.permute.xlu0 %2707
        %2711 = vset.pattern.permute.xlu0 0
        %2712 = vperm.xlu0 %2711, %v2697
        %v2713 = vpop.permute.xlu0 %2712
        %2716 = vset.pattern.permute.xlu0 0
        %2717 = vperm.xlu0 %2716, %v2698
        %v2718 = vpop.permute.xlu0 %2717
        %2721 = vset.pattern.permute.xlu0 0
        %2722 = vperm.xlu0 %2721, %v2699
        %v2723 = vpop.permute.xlu0 %2722
        %2726 = vset.pattern.permute.xlu0 0
        %2727 = vperm.xlu0 %2726, %v2700
        %v2728 = vpop.permute.xlu0 %2727
        %2731 = vset.pattern.permute.xlu0 0
        %2732 = vperm.xlu0 %2731, %v2701
        %v2733 = vpop.permute.xlu0 %2732
        %2736 = vset.pattern.permute.xlu0 0
        %2737 = vperm.xlu0 %2736, %v2702
        %v2738 = vpop.permute.xlu0 %2737
        %2741 = vset.pattern.permute.xlu0 0
        %2742 = vperm.xlu0 %2741, %v2703
        %v2743 = vpop.permute.xlu0 %2742
        %2746 = vset.pattern.permute.xlu0 0
        %2747 = vperm.xlu0 %2746, %v2704
        %v2748 = vpop.permute.xlu0 %2747
        %v2750 = vmul.f32 %v2708, %v2677
        %v2751 = vmul.f32 %v2713, %v2678
        %v2752 = vmul.f32 %v2718, %v2679
        %v2753 = vmul.f32 %v2723, %v2680
        %v2754 = vmul.f32 %v2728, %v2681
        %v2755 = vmul.f32 %v2733, %v2682
        %v2756 = vmul.f32 %v2738, %v2683
        %v2757 = vmul.f32 %v2743, %v2684
        %v2758 = vmul.f32 %v2748, %v2685
        %v2759 = vsel %vm2686, %v2677, %v2750
        %v2760 = vsel %vm2687, %v2678, %v2751
        %v2761 = vsel %vm2688, %v2679, %v2752
        %v2762 = vsel %vm2689, %v2680, %v2753
        %v2763 = vsel %vm2690, %v2681, %v2754
        %v2764 = vsel %vm2691, %v2682, %v2755
        %v2765 = vsel %vm2692, %v2683, %v2756
        %v2766 = vsel %vm2693, %v2684, %v2757
        %v2767 = vsel %vm2694, %v2685, %v2758
        %v2768 = vpack.c.bf16 %v2760, %v2759
        %v2769 = vpack.c.bf16 %v2762, %v2761
        %v2770 = vpack.c.bf16 %v2764, %v2763
        %v2771 = vpack.c.bf16 %v2766, %v2765
        %v2772 = vpack.c.bf16 %v2767, %v2767
        %s2773 = scalar_lea.vmem [#allocation5], 108
        %v2774 = vld [vmem:[%s2773] sm:$0xf]
        %v2775 = vld [vmem:[%s2773 + $0x4] sm:$0xf]
        %v2776 = vld [vmem:[%s2773 + $0x8] sm:$0xf]
        %v2777 = vld [vmem:[%s2773 + $0xc] sm:$0xf]
        %v2778 = vld [vmem:[%s2773 + $0x10] sm:$0xf]
        %v2779 = vld [vmem:[%s2773 + $0x14] sm:$0xf]
        %v2780 = vld [vmem:[%s2773 + $0x18] sm:$0xf]
        %v2781 = vld [vmem:[%s2773 + $0x1c] sm:$0xf]
        %v2782 = vld [vmem:[%s2773 + $0x20] sm:$0xf]
        %s2783 = scalar_lea.vmem %s3, 216
        %v2784 = vld [vmem:[%s2783] sm:$0xff]
        %v2785 = vld [vmem:[%s2783 + $0x8] sm:$0xff]
        %v2786 = vld [vmem:[%s2783 + $0x10] sm:$0xff]
        %v2787 = vld [vmem:[%s2783 + $0x18] sm:$0xff]
        %v2788 = vld [vmem:[%s2783 + $0x20] sm:$0xff]
        %v2789 = vld [vmem:[%s2783 + $0x28] sm:$0xff]
        %v2790 = vld [vmem:[%s2783 + $0x30] sm:$0xff]
        %v2791 = vld [vmem:[%s2783 + $0x38] sm:$0xff]
        %v2792 = vld [vmem:[%s2783 + $0x40] sm:$0xff]
        %2794 = vset.pattern.permute.xlu0 0
        %2795 = vperm.xlu0 %2794, %v2784
        %v2796 = vpop.permute.xlu0 %2795
        %2799 = vset.pattern.permute.xlu0 0
        %2800 = vperm.xlu0 %2799, %v2785
        %v2801 = vpop.permute.xlu0 %2800
        %2804 = vset.pattern.permute.xlu0 0
        %2805 = vperm.xlu0 %2804, %v2786
        %v2806 = vpop.permute.xlu0 %2805
        %2809 = vset.pattern.permute.xlu0 0
        %2810 = vperm.xlu0 %2809, %v2787
        %v2811 = vpop.permute.xlu0 %2810
        %2814 = vset.pattern.permute.xlu0 0
        %2815 = vperm.xlu0 %2814, %v2788
        %v2816 = vpop.permute.xlu0 %2815
        %2819 = vset.pattern.permute.xlu0 0
        %2820 = vperm.xlu0 %2819, %v2789
        %v2821 = vpop.permute.xlu0 %2820
        %2824 = vset.pattern.permute.xlu0 0
        %2825 = vperm.xlu0 %2824, %v2790
        %v2826 = vpop.permute.xlu0 %2825
        %2829 = vset.pattern.permute.xlu0 0
        %2830 = vperm.xlu0 %2829, %v2791
        %v2831 = vpop.permute.xlu0 %2830
        %2834 = vset.pattern.permute.xlu0 0
        %2835 = vperm.xlu0 %2834, %v2792
        %v2836 = vpop.permute.xlu0 %2835
        %v2847 = vunpack.c.l.b16 %v2774
        %v2848 = vunpack.c.l.b16 %v2775
        %v2849 = vunpack.c.l.b16 %v2776
        %v2850 = vunpack.c.l.b16 %v2777
        %v2851 = vunpack.c.l.b16 %v2778
        %v2852 = vunpack.c.l.b16 %v2779
        %v2853 = vunpack.c.l.b16 %v2780
        %v2854 = vunpack.c.l.b16 %v2781
        %v2855 = vunpack.c.l.b16 %v2782
        %v2856 = vpack.c.b16 %v2848, %v2847
        %v2857 = vpack.c.b16 %v2850, %v2849
        %v2858 = vpack.c.b16 %v2852, %v2851
        %v2859 = vpack.c.b16 %v2854, %v2853
        %v2860 = vpack.c.b16 %v2855, %v2855
        %v2862 = vsel %vm645, %v2856, 0
        %v2865 = vsel %vm645, %v2857, 0
        %v2868 = vsel %vm645, %v2858, 0
        %v2871 = vsel %vm645, %v2859, 0
        %v2874 = vsel %vm645, %v2860, 0
        %v2877 = vsel %vm661, %v2772, 0
        %2879 = vmatprep.subr.bf16.mxu0 0
        %2880 = vmatpush1.bf16.msra.mxu0 %v2768
        %2881 = vmatprep.subr.bf16.mxu0 0
        %2882 = vmatpush1.bf16.msra.mxu0 %v2769
        %2883 = vmatprep.subr.bf16.mxu0 0
        %2884 = vmatpush1.bf16.msra.mxu0 %v2770
        %2885 = vmatprep.subr.bf16.mxu0 0
        %2886 = vmatpush1.bf16.msra.mxu0 %v2771
        %2887 = vmatprep.subr.bf16.mxu0 0
        %2888 = vmatpush1.bf16.msra.mxu0 %v2877
        %2889 = vmatprep.subr.bf16.mxu0 0
        %2890 = vmatpush1.bf16.msra.mxu0 0
        %2891 = vmatprep.subr.bf16.mxu0 0
        %2892 = vmatpush1.bf16.msra.mxu0 0
        %2893 = vmatprep.subr.bf16.mxu0 0
        %2894 = vmatpush1.bf16.msra.mxu0 0
        %2895 = vmatprep.subr.bf16.mxu0 0
        %2896 = vmatpush1.bf16.msra.mxu0 0
        %2897 = vmatprep.subr.bf16.mxu0 0
        %2898 = vmatpush1.bf16.msra.mxu0 0
        %2899 = vmatprep.subr.bf16.mxu0 0
        %2900 = vmatpush1.bf16.msra.mxu0 0
        %2901 = vmatprep.subr.bf16.mxu0 0
        %2902 = vmatpush1.bf16.msra.mxu0 0
        %2903 = vmatprep.subr.bf16.mxu0 0
        %2904 = vmatpush1.bf16.msra.mxu0 0
        %2905 = vmatprep.subr.bf16.mxu0 0
        %2906 = vmatpush1.bf16.msra.mxu0 0
        %2907 = vmatprep.subr.bf16.mxu0 0
        %2908 = vmatpush1.bf16.msra.mxu0 0
        %2909 = vmatprep.subr.bf16.mxu0 0
        %2910 = vmatpush1.bf16.msra.mxu0 0
        %2911 = vmatprep.mubr.bf16.mxu0 0
        %2912 = vmatmul.mubr.bf16.gmra.mrb[0].mxu0 %v2862
        %v2913 = vpop.f32.mrb[0].mxu0
        %v2914 = vadd.f32 %v2796, %v2913
        %v2915 = vpop.f32.mrb[0].mxu0
        %v2916 = vpop.f32.mrb[0].mxu0
        %v2917 = vadd.f32 %v2801, %v2916
        %v2918 = vpop.f32.mrb[0].mxu0
        %2919 = vmatprep.mubr.bf16.mxu0 0
        %2920 = vmatmul.mubr.bf16.gmra.mrb[0].mxu0 %v2865
        %v2921 = vpop.f32.mrb[0].mxu0
        %v2922 = vadd.f32 %v2806, %v2921
        %v2923 = vpop.f32.mrb[0].mxu0
        %v2924 = vpop.f32.mrb[0].mxu0
        %v2925 = vadd.f32 %v2811, %v2924
        %v2926 = vpop.f32.mrb[0].mxu0
        %2927 = vmatprep.mubr.bf16.mxu0 0
        %2928 = vmatmul.mubr.bf16.gmra.mrb[0].mxu0 %v2868
        %v2929 = vpop.f32.mrb[0].mxu0
        %v2930 = vadd.f32 %v2816, %v2929
        %v2931 = vpop.f32.mrb[0].mxu0
        %v2932 = vpop.f32.mrb[0].mxu0
        %v2933 = vadd.f32 %v2821, %v2932
        %v2934 = vpop.f32.mrb[0].mxu0
        %2935 = vmatprep.mubr.bf16.mxu0 0
        %2936 = vmatmul.mubr.bf16.gmra.mrb[0].mxu0 %v2871
        %v2937 = vpop.f32.mrb[0].mxu0
        %v2938 = vadd.f32 %v2826, %v2937
        %v2939 = vpop.f32.mrb[0].mxu0
        %v2940 = vpop.f32.mrb[0].mxu0
        %v2941 = vadd.f32 %v2831, %v2940
        %v2942 = vpop.f32.mrb[0].mxu0
        %2943 = vmatprep.mubr.bf16.mxu0 0
        %2944 = vmatmul.mubr.bf16.gmra.mrb[0].mxu0 %v2874
        %v2945 = vpop.f32.mrb[0].mxu0
        %v2946 = vadd.f32 %v2836, %v2945
        %v2947 = vpop.f32.mrb[0].mxu0
        %v2948 = vpop.f32.mrb[0].mxu0
        %v2949 = vpop.f32.mrb[0].mxu0
        %2950 = vdwg.mxu0
        %s2951 = scalar_lea.vmem %s1, 192
        %v2952 = vld [vmem:[%s2951] sm:$0xf]
        %v2953 = vld [vmem:[%s2951 + $0x4] sm:$0xf]
        %v2954 = vld [vmem:[%s2951 + $0x8] sm:$0xf]
        %v2955 = vld [vmem:[%s2951 + $0xc] sm:$0xf]
        %v2956 = vld [vmem:[%s2951 + $0x10] sm:$0xf]
        %v2957 = vld [vmem:[%s2951 + $0x14] sm:$0xf]
        %v2958 = vld [vmem:[%s2951 + $0x18] sm:$0xf]
        %v2959 = vld [vmem:[%s2951 + $0x1c] sm:$0xf]
        %v2960 = vld [vmem:[%s2951 + $0x20] sm:$0xf]
        %v2961 = vld [vmem:[%s2951 + $0x24] sm:$0xf]
        %v2962 = vld [vmem:[%s2951 + $0x28] sm:$0xf]
        %v2963 = vld [vmem:[%s2951 + $0x2c] sm:$0xf]
        %v2964 = vld [vmem:[%s2951 + $0x30] sm:$0xf]
        %v2965 = vld [vmem:[%s2951 + $0x34] sm:$0xf]
        %v2966 = vld [vmem:[%s2951 + $0x38] sm:$0xf]
        %v2967 = vld [vmem:[%s2951 + $0x3c] sm:$0xf]
        %v2984 = vunpack.c.l.b16 %v2952
        %v2985 = vunpack.c.l.b16 %v2953
        %v2986 = vunpack.c.l.b16 %v2954
        %v2987 = vunpack.c.l.b16 %v2955
        %v2988 = vunpack.c.l.b16 %v2956
        %v2989 = vunpack.c.l.b16 %v2957
        %v2990 = vunpack.c.l.b16 %v2958
        %v2991 = vunpack.c.l.b16 %v2959
        %v2992 = vunpack.c.l.b16 %v2960
        %v2993 = vunpack.c.l.b16 %v2961
        %v2994 = vunpack.c.l.b16 %v2962
        %v2995 = vunpack.c.l.b16 %v2963
        %v2996 = vunpack.c.l.b16 %v2964
        %v2997 = vunpack.c.l.b16 %v2965
        %v2998 = vunpack.c.l.b16 %v2966
        %v2999 = vunpack.c.l.b16 %v2967
        %v3000 = vpack.c.b16 %v2985, %v2984
        %v3001 = vpack.c.b16 %v2987, %v2986
        %v3002 = vpack.c.b16 %v2989, %v2988
        %v3003 = vpack.c.b16 %v2991, %v2990
        %v3004 = vpack.c.b16 %v2993, %v2992
        %v3005 = vpack.c.b16 %v2995, %v2994
        %v3006 = vpack.c.b16 %v2997, %v2996
        %v3007 = vpack.c.b16 %v2999, %v2998
        %3016 = vmatprep.subr.bf16.mxu0 0
        %3017 = vmatpush1.bf16.msra.mxu0 %v3000
        %3018 = vmatprep.subr.bf16.mxu0 0
        %3019 = vmatpush1.bf16.msra.mxu0 %v3001
        %3020 = vmatprep.subr.bf16.mxu0 0
        %3021 = vmatpush1.bf16.msra.mxu0 %v3002
        %3022 = vmatprep.subr.bf16.mxu0 0
        %3023 = vmatpush1.bf16.msra.mxu0 %v3003
        %3024 = vmatprep.subr.bf16.mxu0 0
        %3025 = vmatpush1.bf16.msra.mxu0 %v3004
        %3026 = vmatprep.subr.bf16.mxu0 0
        %3027 = vmatpush1.bf16.msra.mxu0 %v3005
        %3028 = vmatprep.subr.bf16.mxu0 0
        %3029 = vmatpush1.bf16.msra.mxu0 %v3006
        %3030 = vmatprep.subr.bf16.mxu0 0
        %3031 = vmatpush1.bf16.msra.mxu0 %v3007
        %3032 = vmatprep.subr.bf16.mxu0 0
        %3033 = vmatpush1.bf16.msra.mxu0 0
        %3034 = vmatprep.subr.bf16.mxu0 0
        %3035 = vmatpush1.bf16.msra.mxu0 0
        %3036 = vmatprep.subr.bf16.mxu0 0
        %3037 = vmatpush1.bf16.msra.mxu0 0
        %3038 = vmatprep.subr.bf16.mxu0 0
        %3039 = vmatpush1.bf16.msra.mxu0 0
        %3040 = vmatprep.subr.bf16.mxu0 0
        %3041 = vmatpush1.bf16.msra.mxu0 0
        %3042 = vmatprep.subr.bf16.mxu0 0
        %3043 = vmatpush1.bf16.msra.mxu0 0
        %3044 = vmatprep.subr.bf16.mxu0 0
        %3045 = vmatpush1.bf16.msra.mxu0 0
        %3046 = vmatprep.subr.bf16.mxu0 0
        %3047 = vmatpush1.bf16.msra.mxu0 0
        %3048 = vmatprep.mubr.bf16.mxu0 0
        %3049 = vmatmul.mubr.bf16.gmra.mrb[0].mxu0 %v2768
        %v3050 = vpop.f32.mrb[0].mxu0
        %v3051 = vadd.f32 0.0, %v3050
        %v3052 = vpop.f32.mrb[0].mxu0
        %v3053 = vpop.f32.mrb[0].mxu0
        %v3054 = vadd.f32 0.0, %v3053
        %v3055 = vpop.f32.mrb[0].mxu0
        %3056 = vmatprep.mubr.bf16.mxu0 0
        %3057 = vmatmul.mubr.bf16.gmra.mrb[0].mxu0 %v2769
        %v3058 = vpop.f32.mrb[0].mxu0
        %v3059 = vadd.f32 0.0, %v3058
        %v3060 = vpop.f32.mrb[0].mxu0
        %v3061 = vpop.f32.mrb[0].mxu0
        %v3062 = vadd.f32 0.0, %v3061
        %v3063 = vpop.f32.mrb[0].mxu0
        %3064 = vmatprep.mubr.bf16.mxu0 0
        %3065 = vmatmul.mubr.bf16.gmra.mrb[0].mxu0 %v2770
        %v3066 = vpop.f32.mrb[0].mxu0
        %v3067 = vadd.f32 0.0, %v3066
        %v3068 = vpop.f32.mrb[0].mxu0
        %v3069 = vpop.f32.mrb[0].mxu0
        %v3070 = vadd.f32 0.0, %v3069
        %v3071 = vpop.f32.mrb[0].mxu0
        %3072 = vmatprep.mubr.bf16.mxu0 0
        %3073 = vmatmul.mubr.bf16.gmra.mrb[0].mxu0 %v2771
        %v3074 = vpop.f32.mrb[0].mxu0
        %v3075 = vadd.f32 0.0, %v3074
        %v3076 = vpop.f32.mrb[0].mxu0
        %v3077 = vpop.f32.mrb[0].mxu0
        %v3078 = vadd.f32 0.0, %v3077
        %v3079 = vpop.f32.mrb[0].mxu0
        %3080 = vmatprep.mubr.bf16.mxu0 0
        %3081 = vmatmul.mubr.bf16.gmra.mrb[0].mxu0 %v2772
        %v3082 = vpop.f32.mrb[0].mxu0
        %v3083 = vadd.f32 0.0, %v3082
        %v3084 = vpop.f32.mrb[0].mxu0
        %v3085 = vpop.f32.mrb[0].mxu0
        %v3086 = vpop.f32.mrb[0].mxu0
        %3087 = vdwg.mxu0
        %s3088 = scalar_lea.vmem %s4, 216
        %v3089 = vld [vmem:[%s3088] sm:$0xff]
        %v3090 = vld [vmem:[%s3088 + $0x8] sm:$0xff]
        %v3091 = vld [vmem:[%s3088 + $0x10] sm:$0xff]
        %v3092 = vld [vmem:[%s3088 + $0x18] sm:$0xff]
        %v3093 = vld [vmem:[%s3088 + $0x20] sm:$0xff]
        %v3094 = vld [vmem:[%s3088 + $0x28] sm:$0xff]
        %v3095 = vld [vmem:[%s3088 + $0x30] sm:$0xff]
        %v3096 = vld [vmem:[%s3088 + $0x38] sm:$0xff]
        %v3097 = vld [vmem:[%s3088 + $0x40] sm:$0xff]
        %3099 = vset.pattern.permute.xlu0 0
        %3100 = vperm.xlu0 %3099, %v3089
        %v3101 = vpop.permute.xlu0 %3100
        %3104 = vset.pattern.permute.xlu0 0
        %3105 = vperm.xlu0 %3104, %v3090
        %v3106 = vpop.permute.xlu0 %3105
        %3109 = vset.pattern.permute.xlu0 0
        %3110 = vperm.xlu0 %3109, %v3091
        %v3111 = vpop.permute.xlu0 %3110
        %3114 = vset.pattern.permute.xlu0 0
        %3115 = vperm.xlu0 %3114, %v3092
        %v3116 = vpop.permute.xlu0 %3115
        %3119 = vset.pattern.permute.xlu0 0
        %3120 = vperm.xlu0 %3119, %v3093
        %v3121 = vpop.permute.xlu0 %3120
        %3124 = vset.pattern.permute.xlu0 0
        %3125 = vperm.xlu0 %3124, %v3094
        %v3126 = vpop.permute.xlu0 %3125
        %3129 = vset.pattern.permute.xlu0 0
        %3130 = vperm.xlu0 %3129, %v3095
        %v3131 = vpop.permute.xlu0 %3130
        %3134 = vset.pattern.permute.xlu0 0
        %3135 = vperm.xlu0 %3134, %v3096
        %v3136 = vpop.permute.xlu0 %3135
        %3139 = vset.pattern.permute.xlu0 0
        %3140 = vperm.xlu0 %3139, %v3097
        %v3141 = vpop.permute.xlu0 %3140
        %v3143 = vmul.f32 %v3051, %v3101
        %v3144 = vmul.f32 %v3054, %v3106
        %v3145 = vmul.f32 %v3059, %v3111
        %v3146 = vmul.f32 %v3062, %v3116
        %v3147 = vmul.f32 %v3067, %v3121
        %v3148 = vmul.f32 %v3070, %v3126
        %v3149 = vmul.f32 %v3075, %v3131
        %v3150 = vmul.f32 %v3078, %v3136
        %v3151 = vmul.f32 %v3083, %v3141
        %s3152 = scalar_lea.vmem %s5, 216
        %v3153 = vld [vmem:[%s3152] sm:$0xff]
        %v3154 = vld [vmem:[%s3152 + $0x8] sm:$0xff]
        %v3155 = vld [vmem:[%s3152 + $0x10] sm:$0xff]
        %v3156 = vld [vmem:[%s3152 + $0x18] sm:$0xff]
        %v3157 = vld [vmem:[%s3152 + $0x20] sm:$0xff]
        %v3158 = vld [vmem:[%s3152 + $0x28] sm:$0xff]
        %v3159 = vld [vmem:[%s3152 + $0x30] sm:$0xff]
        %v3160 = vld [vmem:[%s3152 + $0x38] sm:$0xff]
        %v3161 = vld [vmem:[%s3152 + $0x40] sm:$0xff]
        %3163 = vset.pattern.permute.xlu0 0
        %3164 = vperm.xlu0 %3163, %v3153
        %v3165 = vpop.permute.xlu0 %3164
        %3168 = vset.pattern.permute.xlu0 0
        %3169 = vperm.xlu0 %3168, %v3154
        %v3170 = vpop.permute.xlu0 %3169
        %3173 = vset.pattern.permute.xlu0 0
        %3174 = vperm.xlu0 %3173, %v3155
        %v3175 = vpop.permute.xlu0 %3174
        %3178 = vset.pattern.permute.xlu0 0
        %3179 = vperm.xlu0 %3178, %v3156
        %v3180 = vpop.permute.xlu0 %3179
        %3183 = vset.pattern.permute.xlu0 0
        %3184 = vperm.xlu0 %3183, %v3157
        %v3185 = vpop.permute.xlu0 %3184
        %3188 = vset.pattern.permute.xlu0 0
        %3189 = vperm.xlu0 %3188, %v3158
        %v3190 = vpop.permute.xlu0 %3189
        %3193 = vset.pattern.permute.xlu0 0
        %3194 = vperm.xlu0 %3193, %v3159
        %v3195 = vpop.permute.xlu0 %3194
        %3198 = vset.pattern.permute.xlu0 0
        %3199 = vperm.xlu0 %3198, %v3160
        %v3200 = vpop.permute.xlu0 %3199
        %3203 = vset.pattern.permute.xlu0 0
        %3204 = vperm.xlu0 %3203, %v3161
        %v3205 = vpop.permute.xlu0 %3204
        %v3207 = vadd.f32 %v3143, %v3165
        %v3208 = vadd.f32 %v3144, %v3170
        %v3209 = vadd.f32 %v3145, %v3175
        %v3210 = vadd.f32 %v3146, %v3180
        %v3211 = vadd.f32 %v3147, %v3185
        %v3212 = vadd.f32 %v3148, %v3190
        %v3213 = vadd.f32 %v3149, %v3195
        %v3214 = vadd.f32 %v3150, %v3200
        %v3215 = vadd.f32 %v3151, %v3205
        %v3216 = vmax.f32 %v3207, 0.0
        %v3217 = vmax.f32 %v3208, 0.0
        %v3218 = vmax.f32 %v3209, 0.0
        %v3219 = vmax.f32 %v3210, 0.0
        %v3220 = vmax.f32 %v3211, 0.0
        %v3221 = vmax.f32 %v3212, 0.0
        %v3222 = vmax.f32 %v3213, 0.0
        %v3223 = vmax.f32 %v3214, 0.0
        %v3224 = vmax.f32 %v3215, 0.0
        %v3225 = vmin.f32 %v3216, 6.0
        %v3226 = vmin.f32 %v3217, 6.0
        %v3227 = vmin.f32 %v3218, 6.0
        %v3228 = vmin.f32 %v3219, 6.0
        %v3229 = vmin.f32 %v3220, 6.0
        %v3230 = vmin.f32 %v3221, 6.0
        %v3231 = vmin.f32 %v3222, 6.0
        %v3232 = vmin.f32 %v3223, 6.0
        %v3233 = vmin.f32 %v3224, 6.0
        %s3234 = scalar_lea.vmem [#allocation7], 108
        %v3235 = vld [vmem:[%s3234] sm:$0xf]
        %v3236 = vld [vmem:[%s3234 + $0x4] sm:$0xf]
        %v3237 = vld [vmem:[%s3234 + $0x8] sm:$0xf]
        %v3238 = vld [vmem:[%s3234 + $0xc] sm:$0xf]
        %v3239 = vld [vmem:[%s3234 + $0x10] sm:$0xf]
        %v3240 = vld [vmem:[%s3234 + $0x14] sm:$0xf]
        %v3241 = vld [vmem:[%s3234 + $0x18] sm:$0xf]
        %v3242 = vld [vmem:[%s3234 + $0x1c] sm:$0xf]
        %v3243 = vld [vmem:[%s3234 + $0x20] sm:$0xf]
        %v3244 = vpack.c.bf16 %v3226, %v3225
        %v3245 = vpack.c.bf16 %v3228, %v3227
        %v3246 = vpack.c.bf16 %v3230, %v3229
        %v3247 = vpack.c.bf16 %v3232, %v3231
        %v3248 = vpack.c.bf16 %v3233, %v3233
        %s3249 = scalar_lea.vmem %s7, 216
        %v3250 = vld [vmem:[%s3249] sm:$0xff]
        %v3251 = vld [vmem:[%s3249 + $0x8] sm:$0xff]
        %v3252 = vld [vmem:[%s3249 + $0x10] sm:$0xff]
        %v3253 = vld [vmem:[%s3249 + $0x18] sm:$0xff]
        %v3254 = vld [vmem:[%s3249 + $0x20] sm:$0xff]
        %v3255 = vld [vmem:[%s3249 + $0x28] sm:$0xff]
        %v3256 = vld [vmem:[%s3249 + $0x30] sm:$0xff]
        %v3257 = vld [vmem:[%s3249 + $0x38] sm:$0xff]
        %v3258 = vld [vmem:[%s3249 + $0x40] sm:$0xff]
        %3260 = vset.pattern.permute.xlu0 0
        %3261 = vperm.xlu0 %3260, %v3250
        %v3262 = vpop.permute.xlu0 %3261
        %3265 = vset.pattern.permute.xlu0 0
        %3266 = vperm.xlu0 %3265, %v3251
        %v3267 = vpop.permute.xlu0 %3266
        %3270 = vset.pattern.permute.xlu0 0
        %3271 = vperm.xlu0 %3270, %v3252
        %v3272 = vpop.permute.xlu0 %3271
        %3275 = vset.pattern.permute.xlu0 0
        %3276 = vperm.xlu0 %3275, %v3253
        %v3277 = vpop.permute.xlu0 %3276
        %3280 = vset.pattern.permute.xlu0 0
        %3281 = vperm.xlu0 %3280, %v3254
        %v3282 = vpop.permute.xlu0 %3281
        %3285 = vset.pattern.permute.xlu0 0
        %3286 = vperm.xlu0 %3285, %v3255
        %v3287 = vpop.permute.xlu0 %3286
        %3290 = vset.pattern.permute.xlu0 0
        %3291 = vperm.xlu0 %3290, %v3256
        %v3292 = vpop.permute.xlu0 %3291
        %3295 = vset.pattern.permute.xlu0 0
        %3296 = vperm.xlu0 %3295, %v3257
        %v3297 = vpop.permute.xlu0 %3296
        %3300 = vset.pattern.permute.xlu0 0
        %3301 = vperm.xlu0 %3300, %v3258
        %v3302 = vpop.permute.xlu0 %3301
        %v3313 = vunpack.c.l.b16 %v3235
        %v3314 = vunpack.c.l.b16 %v3236
        %v3315 = vunpack.c.l.b16 %v3237
        %v3316 = vunpack.c.l.b16 %v3238
        %v3317 = vunpack.c.l.b16 %v3239
        %v3318 = vunpack.c.l.b16 %v3240
        %v3319 = vunpack.c.l.b16 %v3241
        %v3320 = vunpack.c.l.b16 %v3242
        %v3321 = vunpack.c.l.b16 %v3243
        %v3322 = vpack.c.b16 %v3314, %v3313
        %v3323 = vpack.c.b16 %v3316, %v3315
        %v3324 = vpack.c.b16 %v3318, %v3317
        %v3325 = vpack.c.b16 %v3320, %v3319
        %v3326 = vpack.c.b16 %v3321, %v3321
        %v3328 = vsel %vm645, %v3322, 0
        %v3331 = vsel %vm645, %v3323, 0
        %v3334 = vsel %vm645, %v3324, 0
        %v3337 = vsel %vm645, %v3325, 0
        %v3340 = vsel %vm645, %v3326, 0
        %v3343 = vsel %vm661, %v3248, 0
        %3345 = vmatprep.subr.bf16.mxu0 0
        %3346 = vmatpush1.bf16.msra.mxu0 %v3244
        %3347 = vmatprep.subr.bf16.mxu0 0
        %3348 = vmatpush1.bf16.msra.mxu0 %v3245
        %3349 = vmatprep.subr.bf16.mxu0 0
        %3350 = vmatpush1.bf16.msra.mxu0 %v3246
        %3351 = vmatprep.subr.bf16.mxu0 0
        %3352 = vmatpush1.bf16.msra.mxu0 %v3247
        %3353 = vmatprep.subr.bf16.mxu0 0
        %3354 = vmatpush1.bf16.msra.mxu0 %v3343
        %3355 = vmatprep.subr.bf16.mxu0 0
        %3356 = vmatpush1.bf16.msra.mxu0 0
        %3357 = vmatprep.subr.bf16.mxu0 0
        %3358 = vmatpush1.bf16.msra.mxu0 0
        %3359 = vmatprep.subr.bf16.mxu0 0
        %3360 = vmatpush1.bf16.msra.mxu0 0
        %3361 = vmatprep.subr.bf16.mxu0 0
        %3362 = vmatpush1.bf16.msra.mxu0 0
        %3363 = vmatprep.subr.bf16.mxu0 0
        %3364 = vmatpush1.bf16.msra.mxu0 0
        %3365 = vmatprep.subr.bf16.mxu0 0
        %3366 = vmatpush1.bf16.msra.mxu0 0
        %3367 = vmatprep.subr.bf16.mxu0 0
        %3368 = vmatpush1.bf16.msra.mxu0 0
        %3369 = vmatprep.subr.bf16.mxu0 0
        %3370 = vmatpush1.bf16.msra.mxu0 0
        %3371 = vmatprep.subr.bf16.mxu0 0
        %3372 = vmatpush1.bf16.msra.mxu0 0
        %3373 = vmatprep.subr.bf16.mxu0 0
        %3374 = vmatpush1.bf16.msra.mxu0 0
        %3375 = vmatprep.subr.bf16.mxu0 0
        %3376 = vmatpush1.bf16.msra.mxu0 0
        %3377 = vmatprep.mubr.bf16.mxu0 0
        %3378 = vmatmul.mubr.bf16.gmra.mrb[0].mxu0 %v3328
        %v3379 = vpop.f32.mrb[0].mxu0
        %v3380 = vadd.f32 %v3262, %v3379
        %v3381 = vpop.f32.mrb[0].mxu0
        %v3382 = vpop.f32.mrb[0].mxu0
        %v3383 = vadd.f32 %v3267, %v3382
        %v3384 = vpop.f32.mrb[0].mxu0
        %3385 = vmatprep.mubr.bf16.mxu0 0
        %3386 = vmatmul.mubr.bf16.gmra.mrb[0].mxu0 %v3331
        %v3387 = vpop.f32.mrb[0].mxu0
        %v3388 = vadd.f32 %v3272, %v3387
        %v3389 = vpop.f32.mrb[0].mxu0
        %v3390 = vpop.f32.mrb[0].mxu0
        %v3391 = vadd.f32 %v3277, %v3390
        %v3392 = vpop.f32.mrb[0].mxu0
        %3393 = vmatprep.mubr.bf16.mxu0 0
        %3394 = vmatmul.mubr.bf16.gmra.mrb[0].mxu0 %v3334
        %v3395 = vpop.f32.mrb[0].mxu0
        %v3396 = vadd.f32 %v3282, %v3395
        %v3397 = vpop.f32.mrb[0].mxu0
        %v3398 = vpop.f32.mrb[0].mxu0
        %v3399 = vadd.f32 %v3287, %v3398
        %v3400 = vpop.f32.mrb[0].mxu0
        %3401 = vmatprep.mubr.bf16.mxu0 0
        %3402 = vmatmul.mubr.bf16.gmra.mrb[0].mxu0 %v3337
        %v3403 = vpop.f32.mrb[0].mxu0
        %v3404 = vadd.f32 %v3292, %v3403
        %v3405 = vpop.f32.mrb[0].mxu0
        %v3406 = vpop.f32.mrb[0].mxu0
        %v3407 = vadd.f32 %v3297, %v3406
        %v3408 = vpop.f32.mrb[0].mxu0
        %3409 = vmatprep.mubr.bf16.mxu0 0
        %3410 = vmatmul.mubr.bf16.gmra.mrb[0].mxu0 %v3340
        %v3411 = vpop.f32.mrb[0].mxu0
        %v3412 = vadd.f32 %v3302, %v3411
        %v3413 = vpop.f32.mrb[0].mxu0
        %v3414 = vpop.f32.mrb[0].mxu0
        %v3415 = vpop.f32.mrb[0].mxu0
        %3416 = vdwg.mxu0
        %v3417 = vadd.f32 %v3380, %v2914
        %v3418 = vadd.f32 %v3383, %v2917
        %v3419 = vadd.f32 %v3388, %v2922
        %v3420 = vadd.f32 %v3391, %v2925
        %v3421 = vadd.f32 %v3396, %v2930
        %v3422 = vadd.f32 %v3399, %v2933
        %v3423 = vadd.f32 %v3404, %v2938
        %v3424 = vadd.f32 %v3407, %v2941
        %v3425 = vadd.f32 %v3412, %v2946
        %vm3426 = vcmp.ge.f32.partialorder %v3417, 0.0
        %vm3427 = vcmp.ge.f32.partialorder %v3418, 0.0
        %vm3428 = vcmp.ge.f32.partialorder %v3419, 0.0
        %vm3429 = vcmp.ge.f32.partialorder %v3420, 0.0
        %vm3430 = vcmp.ge.f32.partialorder %v3421, 0.0
        %vm3431 = vcmp.ge.f32.partialorder %v3422, 0.0
        %vm3432 = vcmp.ge.f32.partialorder %v3423, 0.0
        %vm3433 = vcmp.ge.f32.partialorder %v3424, 0.0
        %vm3434 = vcmp.ge.f32.partialorder %v3425, 0.0
        %s3435 = scalar_lea.vmem %s8, 216
        %v3436 = vld [vmem:[%s3435] sm:$0xff]
        %v3437 = vld [vmem:[%s3435 + $0x8] sm:$0xff]
        %v3438 = vld [vmem:[%s3435 + $0x10] sm:$0xff]
        %v3439 = vld [vmem:[%s3435 + $0x18] sm:$0xff]
        %v3440 = vld [vmem:[%s3435 + $0x20] sm:$0xff]
        %v3441 = vld [vmem:[%s3435 + $0x28] sm:$0xff]
        %v3442 = vld [vmem:[%s3435 + $0x30] sm:$0xff]
        %v3443 = vld [vmem:[%s3435 + $0x38] sm:$0xff]
        %v3444 = vld [vmem:[%s3435 + $0x40] sm:$0xff]
        %3446 = vset.pattern.permute.xlu0 0
        %3447 = vperm.xlu0 %3446, %v3436
        %v3448 = vpop.permute.xlu0 %3447
        %3451 = vset.pattern.permute.xlu0 0
        %3452 = vperm.xlu0 %3451, %v3437
        %v3453 = vpop.permute.xlu0 %3452
        %3456 = vset.pattern.permute.xlu0 0
        %3457 = vperm.xlu0 %3456, %v3438
        %v3458 = vpop.permute.xlu0 %3457
        %3461 = vset.pattern.permute.xlu0 0
        %3462 = vperm.xlu0 %3461, %v3439
        %v3463 = vpop.permute.xlu0 %3462
        %3466 = vset.pattern.permute.xlu0 0
        %3467 = vperm.xlu0 %3466, %v3440
        %v3468 = vpop.permute.xlu0 %3467
        %3471 = vset.pattern.permute.xlu0 0
        %3472 = vperm.xlu0 %3471, %v3441
        %v3473 = vpop.permute.xlu0 %3472
        %3476 = vset.pattern.permute.xlu0 0
        %3477 = vperm.xlu0 %3476, %v3442
        %v3478 = vpop.permute.xlu0 %3477
        %3481 = vset.pattern.permute.xlu0 0
        %3482 = vperm.xlu0 %3481, %v3443
        %v3483 = vpop.permute.xlu0 %3482
        %3486 = vset.pattern.permute.xlu0 0
        %3487 = vperm.xlu0 %3486, %v3444
        %v3488 = vpop.permute.xlu0 %3487
        %v3490 = vmul.f32 %v3448, %v3417
        %v3491 = vmul.f32 %v3453, %v3418
        %v3492 = vmul.f32 %v3458, %v3419
        %v3493 = vmul.f32 %v3463, %v3420
        %v3494 = vmul.f32 %v3468, %v3421
        %v3495 = vmul.f32 %v3473, %v3422
        %v3496 = vmul.f32 %v3478, %v3423
        %v3497 = vmul.f32 %v3483, %v3424
        %v3498 = vmul.f32 %v3488, %v3425
        %v3499 = vsel %vm3426, %v3417, %v3490
        %v3500 = vsel %vm3427, %v3418, %v3491
        %v3501 = vsel %vm3428, %v3419, %v3492
        %v3502 = vsel %vm3429, %v3420, %v3493
        %v3503 = vsel %vm3430, %v3421, %v3494
        %v3504 = vsel %vm3431, %v3422, %v3495
        %v3505 = vsel %vm3432, %v3423, %v3496
        %v3506 = vsel %vm3433, %v3424, %v3497
        %v3507 = vsel %vm3434, %v3425, %v3498
        %v3508 = vpack.c.bf16 %v3500, %v3499
        %v3509 = vpack.c.bf16 %v3502, %v3501
        %v3510 = vpack.c.bf16 %v3504, %v3503
        %v3511 = vpack.c.bf16 %v3506, %v3505
        %v3512 = vpack.c.bf16 %v3507, %v3507
        %s3513 = scalar_lea.vmem [#allocation5], 144
        %v3514 = vld [vmem:[%s3513] sm:$0xf]
        %v3515 = vld [vmem:[%s3513 + $0x4] sm:$0xf]
        %v3516 = vld [vmem:[%s3513 + $0x8] sm:$0xf]
        %v3517 = vld [vmem:[%s3513 + $0xc] sm:$0xf]
        %v3518 = vld [vmem:[%s3513 + $0x10] sm:$0xf]
        %v3519 = vld [vmem:[%s3513 + $0x14] sm:$0xf]
        %v3520 = vld [vmem:[%s3513 + $0x18] sm:$0xf]
        %v3521 = vld [vmem:[%s3513 + $0x1c] sm:$0xf]
        %v3522 = vld [vmem:[%s3513 + $0x20] sm:$0xf]
        %s3523 = scalar_lea.vmem %s3, 288
        %v3524 = vld [vmem:[%s3523] sm:$0xff]
        %v3525 = vld [vmem:[%s3523 + $0x8] sm:$0xff]
        %v3526 = vld [vmem:[%s3523 + $0x10] sm:$0xff]
        %v3527 = vld [vmem:[%s3523 + $0x18] sm:$0xff]
        %v3528 = vld [vmem:[%s3523 + $0x20] sm:$0xff]
        %v3529 = vld [vmem:[%s3523 + $0x28] sm:$0xff]
        %v3530 = vld [vmem:[%s3523 + $0x30] sm:$0xff]
        %v3531 = vld [vmem:[%s3523 + $0x38] sm:$0xff]
        %v3532 = vld [vmem:[%s3523 + $0x40] sm:$0xff]
        %3534 = vset.pattern.permute.xlu0 0
        %3535 = vperm.xlu0 %3534, %v3524
        %v3536 = vpop.permute.xlu0 %3535
        %3539 = vset.pattern.permute.xlu0 0
        %3540 = vperm.xlu0 %3539, %v3525
        %v3541 = vpop.permute.xlu0 %3540
        %3543 = vset.pattern.permute.xlu0 0
        %3544 = vperm.xlu0 %3543, %v3526
        %v3545 = vpop.permute.xlu0 %3544
        %3547 = vset.pattern.permute.xlu0 0
        %3548 = vperm.xlu0 %3547, %v3527
        %v3549 = vpop.permute.xlu0 %3548
        %3551 = vset.pattern.permute.xlu0 0
        %3552 = vperm.xlu0 %3551, %v3528
        %v3553 = vpop.permute.xlu0 %3552
        %3555 = vset.pattern.permute.xlu0 0
        %3556 = vperm.xlu0 %3555, %v3529
        %v3557 = vpop.permute.xlu0 %3556
        %3559 = vset.pattern.permute.xlu0 0
        %3560 = vperm.xlu0 %3559, %v3530
        %v3561 = vpop.permute.xlu0 %3560
        %3563 = vset.pattern.permute.xlu0 0
        %3564 = vperm.xlu0 %3563, %v3531
        %v3565 = vpop.permute.xlu0 %3564
        %3567 = vset.pattern.permute.xlu0 0
        %3568 = vperm.xlu0 %3567, %v3532
        %v3569 = vpop.permute.xlu0 %3568
        %v3579 = vunpack.c.l.b16 %v3514
        %v3580 = vunpack.c.l.b16 %v3515
        %v3581 = vunpack.c.l.b16 %v3516
        %v3582 = vunpack.c.l.b16 %v3517
        %v3583 = vunpack.c.l.b16 %v3518
        %v3584 = vunpack.c.l.b16 %v3519
        %v3585 = vunpack.c.l.b16 %v3520
        %v3586 = vunpack.c.l.b16 %v3521
        %v3587 = vunpack.c.l.b16 %v3522
        %v3588 = vpack.c.b16 %v3580, %v3579
        %v3589 = vpack.c.b16 %v3582, %v3581
        %v3590 = vpack.c.b16 %v3584, %v3583
        %v3591 = vpack.c.b16 %v3586, %v3585
        %v3592 = vpack.c.b16 %v3587, %v3587
        %v3594 = vsel %vm645, %v3588, 0
        %v3597 = vsel %vm645, %v3589, 0
        %v3600 = vsel %vm645, %v3590, 0
        %v3603 = vsel %vm645, %v3591, 0
        %v3606 = vsel %vm645, %v3592, 0
        %v3609 = vsel %vm661, %v3512, 0
        %3611 = vmatprep.subr.bf16.mxu0 0
        %3612 = vmatpush1.bf16.msra.mxu0 %v3508
        %3613 = vmatprep.subr.bf16.mxu0 0
        %3614 = vmatpush1.bf16.msra.mxu0 %v3509
        %3615 = vmatprep.subr.bf16.mxu0 0
        %3616 = vmatpush1.bf16.msra.mxu0 %v3510
        %3617 = vmatprep.subr.bf16.mxu0 0
        %3618 = vmatpush1.bf16.msra.mxu0 %v3511
        %3619 = vmatprep.subr.bf16.mxu0 0
        %3620 = vmatpush1.bf16.msra.mxu0 %v3609
        %3621 = vmatprep.subr.bf16.mxu0 0
        %3622 = vmatpush1.bf16.msra.mxu0 0
        %3623 = vmatprep.subr.bf16.mxu0 0
        %3624 = vmatpush1.bf16.msra.mxu0 0
        %3625 = vmatprep.subr.bf16.mxu0 0
        %3626 = vmatpush1.bf16.msra.mxu0 0
        %3627 = vmatprep.subr.bf16.mxu0 0
        %3628 = vmatpush1.bf16.msra.mxu0 0
        %3629 = vmatprep.subr.bf16.mxu0 0
        %3630 = vmatpush1.bf16.msra.mxu0 0
        %3631 = vmatprep.subr.bf16.mxu0 0
        %3632 = vmatpush1.bf16.msra.mxu0 0
        %3633 = vmatprep.subr.bf16.mxu0 0
        %3634 = vmatpush1.bf16.msra.mxu0 0
        %3635 = vmatprep.subr.bf16.mxu0 0
        %3636 = vmatpush1.bf16.msra.mxu0 0
        %3637 = vmatprep.subr.bf16.mxu0 0
        %3638 = vmatpush1.bf16.msra.mxu0 0
        %3639 = vmatprep.subr.bf16.mxu0 0
        %3640 = vmatpush1.bf16.msra.mxu0 0
        %3641 = vmatprep.subr.bf16.mxu0 0
        %3642 = vmatpush1.bf16.msra.mxu0 0
        %3643 = vmatprep.mubr.bf16.mxu0 0
        %3644 = vmatmul.mubr.bf16.gmra.mrb[0].mxu0 %v3594
        %v3645 = vpop.f32.mrb[0].mxu0
        %v3646 = vadd.f32 %v3536, %v3645
        %v3647 = vpop.f32.mrb[0].mxu0
        %v3648 = vpop.f32.mrb[0].mxu0
        %v3649 = vpop.f32.mrb[0].mxu0
        %3650 = vmatprep.mubr.bf16.mxu0 0
        %3651 = vmatmul.mubr.bf16.gmra.mrb[0].mxu0 %v3597
        %v3652 = vpop.f32.mrb[0].mxu0
        %v3653 = vpop.f32.mrb[0].mxu0
        %v3654 = vpop.f32.mrb[0].mxu0
        %v3655 = vpop.f32.mrb[0].mxu0
        %3656 = vmatprep.mubr.bf16.mxu0 0
        %3657 = vmatmul.mubr.bf16.gmra.mrb[0].mxu0 %v3600
        %v3658 = vpop.f32.mrb[0].mxu0
        %v3659 = vpop.f32.mrb[0].mxu0
        %v3660 = vpop.f32.mrb[0].mxu0
        %v3661 = vpop.f32.mrb[0].mxu0
        %3662 = vmatprep.mubr.bf16.mxu0 0
        %3663 = vmatmul.mubr.bf16.gmra.mrb[0].mxu0 %v3603
        %v3664 = vpop.f32.mrb[0].mxu0
        %v3665 = vpop.f32.mrb[0].mxu0
        %v3666 = vpop.f32.mrb[0].mxu0
        %v3667 = vpop.f32.mrb[0].mxu0
        %3668 = vmatprep.mubr.bf16.mxu0 0
        %3669 = vmatmul.mubr.bf16.gmra.mrb[0].mxu0 %v3606
        %v3670 = vpop.f32.mrb[0].mxu0
        %v3671 = vpop.f32.mrb[0].mxu0
        %v3672 = vpop.f32.mrb[0].mxu0
        %v3673 = vpop.f32.mrb[0].mxu0
        %3674 = vdwg.mxu0
        %s3675 = scalar_lea.vmem %s1, 256
        %v3676 = vld [vmem:[%s3675] sm:$0xf]
        %v3677 = vld [vmem:[%s3675 + $0x4] sm:$0xf]
        %v3678 = vld [vmem:[%s3675 + $0x8] sm:$0xf]
        %v3679 = vld [vmem:[%s3675 + $0xc] sm:$0xf]
        %v3680 = vld [vmem:[%s3675 + $0x10] sm:$0xf]
        %v3681 = vld [vmem:[%s3675 + $0x14] sm:$0xf]
        %v3682 = vld [vmem:[%s3675 + $0x18] sm:$0xf]
        %v3683 = vld [vmem:[%s3675 + $0x1c] sm:$0xf]
        %v3684 = vld [vmem:[%s3675 + $0x20] sm:$0xf]
        %v3685 = vld [vmem:[%s3675 + $0x24] sm:$0xf]
        %v3686 = vld [vmem:[%s3675 + $0x28] sm:$0xf]
        %v3687 = vld [vmem:[%s3675 + $0x2c] sm:$0xf]
        %v3688 = vld [vmem:[%s3675 + $0x30] sm:$0xf]
        %v3689 = vld [vmem:[%s3675 + $0x34] sm:$0xf]
        %v3690 = vld [vmem:[%s3675 + $0x38] sm:$0xf]
        %v3691 = vld [vmem:[%s3675 + $0x3c] sm:$0xf]
        %v3708 = vunpack.c.l.b16 %v3676
        %v3709 = vunpack.c.l.b16 %v3677
        %v3710 = vunpack.c.l.b16 %v3678
        %v3711 = vunpack.c.l.b16 %v3679
        %v3712 = vunpack.c.l.b16 %v3680
        %v3713 = vunpack.c.l.b16 %v3681
        %v3714 = vunpack.c.l.b16 %v3682
        %v3715 = vunpack.c.l.b16 %v3683
        %v3716 = vunpack.c.l.b16 %v3684
        %v3717 = vunpack.c.l.b16 %v3685
        %v3718 = vunpack.c.l.b16 %v3686
        %v3719 = vunpack.c.l.b16 %v3687
        %v3720 = vunpack.c.l.b16 %v3688
        %v3721 = vunpack.c.l.b16 %v3689
        %v3722 = vunpack.c.l.b16 %v3690
        %v3723 = vunpack.c.l.b16 %v3691
        %v3724 = vpack.c.b16 %v3709, %v3708
        %v3725 = vpack.c.b16 %v3711, %v3710
        %v3726 = vpack.c.b16 %v3713, %v3712
        %v3727 = vpack.c.b16 %v3715, %v3714
        %v3728 = vpack.c.b16 %v3717, %v3716
        %v3729 = vpack.c.b16 %v3719, %v3718
        %v3730 = vpack.c.b16 %v3721, %v3720
        %v3731 = vpack.c.b16 %v3723, %v3722
        %3740 = vmatprep.subr.bf16.mxu0 0
        %3741 = vmatpush1.bf16.msra.mxu0 %v3724
        %3742 = vmatprep.subr.bf16.mxu0 0
        %3743 = vmatpush1.bf16.msra.mxu0 %v3725
        %3744 = vmatprep.subr.bf16.mxu0 0
        %3745 = vmatpush1.bf16.msra.mxu0 %v3726
        %3746 = vmatprep.subr.bf16.mxu0 0
        %3747 = vmatpush1.bf16.msra.mxu0 %v3727
        %3748 = vmatprep.subr.bf16.mxu0 0
        %3749 = vmatpush1.bf16.msra.mxu0 %v3728
        %3750 = vmatprep.subr.bf16.mxu0 0
        %3751 = vmatpush1.bf16.msra.mxu0 %v3729
        %3752 = vmatprep.subr.bf16.mxu0 0
        %3753 = vmatpush1.bf16.msra.mxu0 %v3730
        %3754 = vmatprep.subr.bf16.mxu0 0
        %3755 = vmatpush1.bf16.msra.mxu0 %v3731
        %3756 = vmatprep.subr.bf16.mxu0 0
        %3757 = vmatpush1.bf16.msra.mxu0 0
        %3758 = vmatprep.subr.bf16.mxu0 0
        %3759 = vmatpush1.bf16.msra.mxu0 0
        %3760 = vmatprep.subr.bf16.mxu0 0
        %3761 = vmatpush1.bf16.msra.mxu0 0
        %3762 = vmatprep.subr.bf16.mxu0 0
        %3763 = vmatpush1.bf16.msra.mxu0 0
        %3764 = vmatprep.subr.bf16.mxu0 0
        %3765 = vmatpush1.bf16.msra.mxu0 0
        %3766 = vmatprep.subr.bf16.mxu0 0
        %3767 = vmatpush1.bf16.msra.mxu0 0
        %3768 = vmatprep.subr.bf16.mxu0 0
        %3769 = vmatpush1.bf16.msra.mxu0 0
        %3770 = vmatprep.subr.bf16.mxu0 0
        %3771 = vmatpush1.bf16.msra.mxu0 0
        %3772 = vmatprep.mubr.bf16.mxu0 0
        %3773 = vmatmul.mubr.bf16.gmra.mrb[0].mxu0 %v3508
        %v3774 = vpop.f32.mrb[0].mxu0
        %v3775 = vadd.f32 0.0, %v3774
        %v3776 = vpop.f32.mrb[0].mxu0
        %v3777 = vpop.f32.mrb[0].mxu0
        %v3778 = vadd.f32 0.0, %v3777
        %v3779 = vpop.f32.mrb[0].mxu0
        %3780 = vmatprep.mubr.bf16.mxu0 0
        %3781 = vmatmul.mubr.bf16.gmra.mrb[0].mxu0 %v3509
        %v3782 = vpop.f32.mrb[0].mxu0
        %v3783 = vadd.f32 0.0, %v3782
        %v3784 = vpop.f32.mrb[0].mxu0
        %v3785 = vpop.f32.mrb[0].mxu0
        %v3786 = vadd.f32 0.0, %v3785
        %v3787 = vpop.f32.mrb[0].mxu0
        %3788 = vmatprep.mubr.bf16.mxu0 0
        %3789 = vmatmul.mubr.bf16.gmra.mrb[0].mxu0 %v3510
        %v3790 = vpop.f32.mrb[0].mxu0
        %v3791 = vadd.f32 0.0, %v3790
        %v3792 = vpop.f32.mrb[0].mxu0
        %v3793 = vpop.f32.mrb[0].mxu0
        %v3794 = vadd.f32 0.0, %v3793
        %v3795 = vpop.f32.mrb[0].mxu0
        %3796 = vmatprep.mubr.bf16.mxu0 0
        %3797 = vmatmul.mubr.bf16.gmra.mrb[0].mxu0 %v3511
        %v3798 = vpop.f32.mrb[0].mxu0
        %v3799 = vadd.f32 0.0, %v3798
        %v3800 = vpop.f32.mrb[0].mxu0
        %v3801 = vpop.f32.mrb[0].mxu0
        %v3802 = vadd.f32 0.0, %v3801
        %v3803 = vpop.f32.mrb[0].mxu0
        %3804 = vmatprep.mubr.bf16.mxu0 0
        %3805 = vmatmul.mubr.bf16.gmra.mrb[0].mxu0 %v3512
        %v3806 = vpop.f32.mrb[0].mxu0
        %v3807 = vadd.f32 0.0, %v3806
        %v3808 = vpop.f32.mrb[0].mxu0
        %v3809 = vpop.f32.mrb[0].mxu0
        %v3810 = vpop.f32.mrb[0].mxu0
        %3811 = vdwg.mxu0
        %s3812 = scalar_lea.vmem %s4, 288
        %v3813 = vld [vmem:[%s3812] sm:$0xff]
        %v3814 = vld [vmem:[%s3812 + $0x8] sm:$0xff]
        %v3815 = vld [vmem:[%s3812 + $0x10] sm:$0xff]
        %v3816 = vld [vmem:[%s3812 + $0x18] sm:$0xff]
        %v3817 = vld [vmem:[%s3812 + $0x20] sm:$0xff]
        %v3818 = vld [vmem:[%s3812 + $0x28] sm:$0xff]
        %v3819 = vld [vmem:[%s3812 + $0x30] sm:$0xff]
        %v3820 = vld [vmem:[%s3812 + $0x38] sm:$0xff]
        %v3821 = vld [vmem:[%s3812 + $0x40] sm:$0xff]
        %3823 = vset.pattern.permute.xlu0 0
        %3824 = vperm.xlu0 %3823, %v3813
        %v3825 = vpop.permute.xlu0 %3824
        %3828 = vset.pattern.permute.xlu0 0
        %3829 = vperm.xlu0 %3828, %v3814
        %v3830 = vpop.permute.xlu0 %3829
        %3833 = vset.pattern.permute.xlu0 0
        %3834 = vperm.xlu0 %3833, %v3815
        %v3835 = vpop.permute.xlu0 %3834
        %3838 = vset.pattern.permute.xlu0 0
        %3839 = vperm.xlu0 %3838, %v3816
        %v3840 = vpop.permute.xlu0 %3839
        %3843 = vset.pattern.permute.xlu0 0
        %3844 = vperm.xlu0 %3843, %v3817
        %v3845 = vpop.permute.xlu0 %3844
        %3848 = vset.pattern.permute.xlu0 0
        %3849 = vperm.xlu0 %3848, %v3818
        %v3850 = vpop.permute.xlu0 %3849
        %3853 = vset.pattern.permute.xlu0 0
        %3854 = vperm.xlu0 %3853, %v3819
        %v3855 = vpop.permute.xlu0 %3854
        %3858 = vset.pattern.permute.xlu0 0
        %3859 = vperm.xlu0 %3858, %v3820
        %v3860 = vpop.permute.xlu0 %3859
        %3863 = vset.pattern.permute.xlu0 0
        %3864 = vperm.xlu0 %3863, %v3821
        %v3865 = vpop.permute.xlu0 %3864
        %v3867 = vmul.f32 %v3775, %v3825
        %v3868 = vmul.f32 %v3778, %v3830
        %v3869 = vmul.f32 %v3783, %v3835
        %v3870 = vmul.f32 %v3786, %v3840
        %v3871 = vmul.f32 %v3791, %v3845
        %v3872 = vmul.f32 %v3794, %v3850
        %v3873 = vmul.f32 %v3799, %v3855
        %v3874 = vmul.f32 %v3802, %v3860
        %v3875 = vmul.f32 %v3807, %v3865
        %s3876 = scalar_lea.vmem %s5, 288
        %v3877 = vld [vmem:[%s3876] sm:$0xff]
        %v3878 = vld [vmem:[%s3876 + $0x8] sm:$0xff]
        %v3879 = vld [vmem:[%s3876 + $0x10] sm:$0xff]
        %v3880 = vld [vmem:[%s3876 + $0x18] sm:$0xff]
        %v3881 = vld [vmem:[%s3876 + $0x20] sm:$0xff]
        %v3882 = vld [vmem:[%s3876 + $0x28] sm:$0xff]
        %v3883 = vld [vmem:[%s3876 + $0x30] sm:$0xff]
        %v3884 = vld [vmem:[%s3876 + $0x38] sm:$0xff]
        %v3885 = vld [vmem:[%s3876 + $0x40] sm:$0xff]
        %3887 = vset.pattern.permute.xlu0 0
        %3888 = vperm.xlu0 %3887, %v3877
        %v3889 = vpop.permute.xlu0 %3888
        %3892 = vset.pattern.permute.xlu0 0
        %3893 = vperm.xlu0 %3892, %v3878
        %v3894 = vpop.permute.xlu0 %3893
        %3897 = vset.pattern.permute.xlu0 0
        %3898 = vperm.xlu0 %3897, %v3879
        %v3899 = vpop.permute.xlu0 %3898
        %3902 = vset.pattern.permute.xlu0 0
        %3903 = vperm.xlu0 %3902, %v3880
        %v3904 = vpop.permute.xlu0 %3903
        %3907 = vset.pattern.permute.xlu0 0
        %3908 = vperm.xlu0 %3907, %v3881
        %v3909 = vpop.permute.xlu0 %3908
        %3912 = vset.pattern.permute.xlu0 0
        %3913 = vperm.xlu0 %3912, %v3882
        %v3914 = vpop.permute.xlu0 %3913
        %3917 = vset.pattern.permute.xlu0 0
        %3918 = vperm.xlu0 %3917, %v3883
        %v3919 = vpop.permute.xlu0 %3918
        %3922 = vset.pattern.permute.xlu0 0
        %3923 = vperm.xlu0 %3922, %v3884
        %v3924 = vpop.permute.xlu0 %3923
        %3927 = vset.pattern.permute.xlu0 0
        %3928 = vperm.xlu0 %3927, %v3885
        %v3929 = vpop.permute.xlu0 %3928
        %v3931 = vadd.f32 %v3867, %v3889
        %v3932 = vadd.f32 %v3868, %v3894
        %v3933 = vadd.f32 %v3869, %v3899
        %v3934 = vadd.f32 %v3870, %v3904
        %v3935 = vadd.f32 %v3871, %v3909
        %v3936 = vadd.f32 %v3872, %v3914
        %v3937 = vadd.f32 %v3873, %v3919
        %v3938 = vadd.f32 %v3874, %v3924
        %v3939 = vadd.f32 %v3875, %v3929
        %v3940 = vmax.f32 %v3931, 0.0
        %v3941 = vmax.f32 %v3932, 0.0
        %v3942 = vmax.f32 %v3933, 0.0
        %v3943 = vmax.f32 %v3934, 0.0
        %v3944 = vmax.f32 %v3935, 0.0
        %v3945 = vmax.f32 %v3936, 0.0
        %v3946 = vmax.f32 %v3937, 0.0
        %v3947 = vmax.f32 %v3938, 0.0
        %v3948 = vmax.f32 %v3939, 0.0
        %v3949 = vmin.f32 %v3940, 6.0
        %v3950 = vmin.f32 %v3941, 6.0
        %v3951 = vmin.f32 %v3942, 6.0
        %v3952 = vmin.f32 %v3943, 6.0
        %v3953 = vmin.f32 %v3944, 6.0
        %v3954 = vmin.f32 %v3945, 6.0
        %v3955 = vmin.f32 %v3946, 6.0
        %v3956 = vmin.f32 %v3947, 6.0
        %v3957 = vmin.f32 %v3948, 6.0
        %s3958 = scalar_lea.vmem [#allocation7], 144
        %v3959 = vld [vmem:[%s3958] sm:$0xf]
        %v3960 = vld [vmem:[%s3958 + $0x4] sm:$0xf]
        %v3961 = vld [vmem:[%s3958 + $0x8] sm:$0xf]
        %v3962 = vld [vmem:[%s3958 + $0xc] sm:$0xf]
        %v3963 = vld [vmem:[%s3958 + $0x10] sm:$0xf]
        %v3964 = vld [vmem:[%s3958 + $0x14] sm:$0xf]
        %v3965 = vld [vmem:[%s3958 + $0x18] sm:$0xf]
        %v3966 = vld [vmem:[%s3958 + $0x1c] sm:$0xf]
        %v3967 = vld [vmem:[%s3958 + $0x20] sm:$0xf]
        %v3968 = vpack.c.bf16 %v3950, %v3949
        %v3969 = vpack.c.bf16 %v3952, %v3951
        %v3970 = vpack.c.bf16 %v3954, %v3953
        %v3971 = vpack.c.bf16 %v3956, %v3955
        %v3972 = vpack.c.bf16 %v3957, %v3957
        %s3973 = scalar_lea.vmem %s7, 288
        %v3974 = vld [vmem:[%s3973] sm:$0xff]
        %v3975 = vld [vmem:[%s3973 + $0x8] sm:$0xff]
        %v3976 = vld [vmem:[%s3973 + $0x10] sm:$0xff]
        %v3977 = vld [vmem:[%s3973 + $0x18] sm:$0xff]
        %v3978 = vld [vmem:[%s3973 + $0x20] sm:$0xff]
        %v3979 = vld [vmem:[%s3973 + $0x28] sm:$0xff]
        %v3980 = vld [vmem:[%s3973 + $0x30] sm:$0xff]
        %v3981 = vld [vmem:[%s3973 + $0x38] sm:$0xff]
        %v3982 = vld [vmem:[%s3973 + $0x40] sm:$0xff]
        %3984 = vset.pattern.permute.xlu0 0
        %3985 = vperm.xlu0 %3984, %v3974
        %v3986 = vpop.permute.xlu0 %3985
        %3989 = vset.pattern.permute.xlu0 0
        %3990 = vperm.xlu0 %3989, %v3975
        %v3991 = vpop.permute.xlu0 %3990
        %3993 = vset.pattern.permute.xlu0 0
        %3994 = vperm.xlu0 %3993, %v3976
        %v3995 = vpop.permute.xlu0 %3994
        %3997 = vset.pattern.permute.xlu0 0
        %3998 = vperm.xlu0 %3997, %v3977
        %v3999 = vpop.permute.xlu0 %3998
        %4001 = vset.pattern.permute.xlu0 0
        %4002 = vperm.xlu0 %4001, %v3978
        %v4003 = vpop.permute.xlu0 %4002
        %4005 = vset.pattern.permute.xlu0 0
        %4006 = vperm.xlu0 %4005, %v3979
        %v4007 = vpop.permute.xlu0 %4006
        %4009 = vset.pattern.permute.xlu0 0
        %4010 = vperm.xlu0 %4009, %v3980
        %v4011 = vpop.permute.xlu0 %4010
        %4013 = vset.pattern.permute.xlu0 0
        %4014 = vperm.xlu0 %4013, %v3981
        %v4015 = vpop.permute.xlu0 %4014
        %4017 = vset.pattern.permute.xlu0 0
        %4018 = vperm.xlu0 %4017, %v3982
        %v4019 = vpop.permute.xlu0 %4018
        %v4029 = vunpack.c.l.b16 %v3959
        %v4030 = vunpack.c.l.b16 %v3960
        %v4031 = vunpack.c.l.b16 %v3961
        %v4032 = vunpack.c.l.b16 %v3962
        %v4033 = vunpack.c.l.b16 %v3963
        %v4034 = vunpack.c.l.b16 %v3964
        %v4035 = vunpack.c.l.b16 %v3965
        %v4036 = vunpack.c.l.b16 %v3966
        %v4037 = vunpack.c.l.b16 %v3967
        %v4038 = vpack.c.b16 %v4030, %v4029
        %v4039 = vpack.c.b16 %v4032, %v4031
        %v4040 = vpack.c.b16 %v4034, %v4033
        %v4041 = vpack.c.b16 %v4036, %v4035
        %v4042 = vpack.c.b16 %v4037, %v4037
        %v4044 = vsel %vm645, %v4038, 0
        %v4047 = vsel %vm645, %v4039, 0
        %v4050 = vsel %vm645, %v4040, 0
        %v4053 = vsel %vm645, %v4041, 0
        %v4056 = vsel %vm645, %v4042, 0
        %v4059 = vsel %vm661, %v3972, 0
        %4061 = vmatprep.subr.bf16.mxu0 0
        %4062 = vmatpush1.bf16.msra.mxu0 %v3968
        %4063 = vmatprep.subr.bf16.mxu0 0
        %4064 = vmatpush1.bf16.msra.mxu0 %v3969
        %4065 = vmatprep.subr.bf16.mxu0 0
        %4066 = vmatpush1.bf16.msra.mxu0 %v3970
        %4067 = vmatprep.subr.bf16.mxu0 0
        %4068 = vmatpush1.bf16.msra.mxu0 %v3971
        %4069 = vmatprep.subr.bf16.mxu0 0
        %4070 = vmatpush1.bf16.msra.mxu0 %v4059
        %4071 = vmatprep.subr.bf16.mxu0 0
        %4072 = vmatpush1.bf16.msra.mxu0 0
        %4073 = vmatprep.subr.bf16.mxu0 0
        %4074 = vmatpush1.bf16.msra.mxu0 0
        %4075 = vmatprep.subr.bf16.mxu0 0
        %4076 = vmatpush1.bf16.msra.mxu0 0
        %4077 = vmatprep.subr.bf16.mxu0 0
        %4078 = vmatpush1.bf16.msra.mxu0 0
        %4079 = vmatprep.subr.bf16.mxu0 0
        %4080 = vmatpush1.bf16.msra.mxu0 0
        %4081 = vmatprep.subr.bf16.mxu0 0
        %4082 = vmatpush1.bf16.msra.mxu0 0
        %4083 = vmatprep.subr.bf16.mxu0 0
        %4084 = vmatpush1.bf16.msra.mxu0 0
        %4085 = vmatprep.subr.bf16.mxu0 0
        %4086 = vmatpush1.bf16.msra.mxu0 0
        %4087 = vmatprep.subr.bf16.mxu0 0
        %4088 = vmatpush1.bf16.msra.mxu0 0
        %4089 = vmatprep.subr.bf16.mxu0 0
        %4090 = vmatpush1.bf16.msra.mxu0 0
        %4091 = vmatprep.subr.bf16.mxu0 0
        %4092 = vmatpush1.bf16.msra.mxu0 0
        %4093 = vmatprep.mubr.bf16.mxu0 0
        %4094 = vmatmul.mubr.bf16.gmra.mrb[0].mxu0 %v4044
        %v4095 = vpop.f32.mrb[0].mxu0
        %v4096 = vadd.f32 %v3986, %v4095
        %v4097 = vpop.f32.mrb[0].mxu0
        %v4098 = vpop.f32.mrb[0].mxu0
        %v4099 = vpop.f32.mrb[0].mxu0
        %4100 = vmatprep.mubr.bf16.mxu0 0
        %4101 = vmatmul.mubr.bf16.gmra.mrb[0].mxu0 %v4047
        %v4102 = vpop.f32.mrb[0].mxu0
        %v4103 = vpop.f32.mrb[0].mxu0
        %v4104 = vpop.f32.mrb[0].mxu0
        %v4105 = vpop.f32.mrb[0].mxu0
        %4106 = vmatprep.mubr.bf16.mxu0 0
        %4107 = vmatmul.mubr.bf16.gmra.mrb[0].mxu0 %v4050
        %v4108 = vpop.f32.mrb[0].mxu0
        %v4109 = vpop.f32.mrb[0].mxu0
        %v4110 = vpop.f32.mrb[0].mxu0
        %v4111 = vpop.f32.mrb[0].mxu0
        %4112 = vmatprep.mubr.bf16.mxu0 0
        %4113 = vmatmul.mubr.bf16.gmra.mrb[0].mxu0 %v4053
        %v4114 = vpop.f32.mrb[0].mxu0
        %v4115 = vpop.f32.mrb[0].mxu0
        %v4116 = vpop.f32.mrb[0].mxu0
        %v4117 = vpop.f32.mrb[0].mxu0
        %4118 = vmatprep.mubr.bf16.mxu0 0
        %4119 = vmatmul.mubr.bf16.gmra.mrb[0].mxu0 %v4056
        %v4120 = vpop.f32.mrb[0].mxu0
        %v4121 = vpop.f32.mrb[0].mxu0
        %v4122 = vpop.f32.mrb[0].mxu0
        %v4123 = vpop.f32.mrb[0].mxu0
        %4124 = vdwg.mxu0
        %v4125 = vadd.f32 %v4096, %v3646
        %vm4126 = vcmp.ge.f32.partialorder %v4125, 0.0
        %s4127 = scalar_lea.vmem %s8, 288
        %v4128 = vld [vmem:[%s4127] sm:$0xff]
        %4130 = vset.pattern.permute.xlu0 0
        %4131 = vperm.xlu0 %4130, %v4128
        %v4132 = vpop.permute.xlu0 %4131
        %v4134 = vmul.f32 %v4132, %v4125
        %v4135 = vsel %vm4126, %v4125, %v4134
        %v4136 = vld [vmem:[#allocation10] sm:$0xff]
        %v4137 = vld [vmem:[#allocation10 + $0x8] sm:$0xff]
        %v4138 = vpack.c.bf16 %v4135, %v4135
        %v4139 = vld [vmem:[%s9] sm:$0xf]
        %vm4140 = vcmask 64512
        %v4142 = vsel %vm4140, %v4139, 0
        %v4145 = vsel %vm661, %v4138, 0
        %4147 = vmatprep.subr.bf16.mxu0 0
        %4148 = vmatpush1.bf16.msra.mxu0 %v4145
        %4149 = vmatprep.subr.bf16.mxu0 0
        %4150 = vmatpush1.bf16.msra.mxu0 0
        %4151 = vmatprep.subr.bf16.mxu0 0
        %4152 = vmatpush1.bf16.msra.mxu0 0
        %4153 = vmatprep.subr.bf16.mxu0 0
        %4154 = vmatpush1.bf16.msra.mxu0 0
        %4155 = vmatprep.subr.bf16.mxu0 0
        %4156 = vmatpush1.bf16.msra.mxu0 0
        %4157 = vmatprep.subr.bf16.mxu0 0
        %4158 = vmatpush1.bf16.msra.mxu0 0
        %4159 = vmatprep.subr.bf16.mxu0 0
        %4160 = vmatpush1.bf16.msra.mxu0 0
        %4161 = vmatprep.subr.bf16.mxu0 0
        %4162 = vmatpush1.bf16.msra.mxu0 0
        %4163 = vmatprep.subr.bf16.mxu0 0
        %4164 = vmatpush1.bf16.msra.mxu0 0
        %4165 = vmatprep.subr.bf16.mxu0 0
        %4166 = vmatpush1.bf16.msra.mxu0 0
        %4167 = vmatprep.subr.bf16.mxu0 0
        %4168 = vmatpush1.bf16.msra.mxu0 0
        %4169 = vmatprep.subr.bf16.mxu0 0
        %4170 = vmatpush1.bf16.msra.mxu0 0
        %4171 = vmatprep.subr.bf16.mxu0 0
        %4172 = vmatpush1.bf16.msra.mxu0 0
        %4173 = vmatprep.subr.bf16.mxu0 0
        %4174 = vmatpush1.bf16.msra.mxu0 0
        %4175 = vmatprep.subr.bf16.mxu0 0
        %4176 = vmatpush1.bf16.msra.mxu0 0
        %4177 = vmatprep.subr.bf16.mxu0 0
        %4178 = vmatpush1.bf16.msra.mxu0 0
        %4179 = vmatprep.mubr.bf16.mxu0 0
        %4180 = vmatmul.mubr.bf16.gmra.mrb[0].mxu0 %v4142
        %v4181 = vpop.f32.mrb[0].mxu0
        %v4182 = vadd.f32 0.0, %v4181
        %v4183 = vpop.f32.mrb[0].mxu0
        %v4184 = vpop.f32.mrb[0].mxu0
        %v4185 = vpop.f32.mrb[0].mxu0
        %4186 = vdwg.mxu0
        %v4187 = vpack.c.bf16 %v4182, %v4182
        %v4188 = vld [vmem:[#allocation8] sm:$0xff]
        %v4189 = vld [vmem:[#allocation8 + $0x8] sm:$0xff]
        %v4190 = vld [vmem:[#allocation8 + $0x10] sm:$0xff]
        %v4191 = vld [vmem:[#allocation8 + $0x18] sm:$0xff]
        %v4192 = vld [vmem:[#allocation8 + $0x20] sm:$0xff]
        %v4193 = vld [vmem:[#allocation8 + $0x28] sm:$0xff]
        %v4194 = vld [vmem:[#allocation8 + $0x30] sm:$0xff]
        %v4195 = vld [vmem:[#allocation8 + $0x38] sm:$0xff]
        %v4196 = vld [vmem:[#allocation8 + $0x40] sm:$0xff]
        %v4197 = vld [vmem:[#allocation8 + $0x48] sm:$0xff]
        %v4198 = vld [vmem:[#allocation8 + $0x50] sm:$0xff]
        %v4199 = vld [vmem:[#allocation8 + $0x58] sm:$0xff]
        %v4200 = vld [vmem:[#allocation8 + $0x60] sm:$0xff]
        %v4201 = vld [vmem:[#allocation8 + $0x68] sm:$0xff]
        %v4202 = vld [vmem:[#allocation8 + $0x70] sm:$0xff]
        %v4203 = vld [vmem:[#allocation8 + $0x78] sm:$0xff]
        %v4220 = vunpack.c.l.b16 %v4188
        %v4221 = vunpack.c.h.b16 %v4188
        %v4222 = vunpack.c.l.b16 %v4189
        %v4223 = vunpack.c.h.b16 %v4189
        %v4224 = vunpack.c.l.b16 %v4190
        %v4225 = vunpack.c.h.b16 %v4190
        %v4226 = vunpack.c.l.b16 %v4191
        %v4227 = vunpack.c.h.b16 %v4191
        %v4228 = vunpack.c.l.b16 %v4192
        %v4229 = vunpack.c.h.b16 %v4192
        %v4230 = vunpack.c.l.b16 %v4193
        %v4231 = vunpack.c.h.b16 %v4193
        %v4232 = vunpack.c.l.b16 %v4194
        %v4233 = vunpack.c.h.b16 %v4194
        %v4234 = vunpack.c.l.b16 %v4195
        %v4235 = vunpack.c.h.b16 %v4195
        %v4236 = vunpack.c.l.b16 %v4196
        %v4237 = vunpack.c.h.b16 %v4196
        %v4238 = vunpack.c.l.b16 %v4197
        %v4239 = vunpack.c.h.b16 %v4197
        %v4240 = vunpack.c.l.b16 %v4198
        %v4241 = vunpack.c.h.b16 %v4198
        %v4242 = vunpack.c.l.b16 %v4199
        %v4243 = vunpack.c.h.b16 %v4199
        %v4244 = vunpack.c.l.b16 %v4200
        %v4245 = vunpack.c.h.b16 %v4200
        %v4246 = vunpack.c.l.b16 %v4201
        %v4247 = vunpack.c.h.b16 %v4201
        %v4248 = vunpack.c.l.b16 %v4202
        %v4249 = vunpack.c.h.b16 %v4202
        %v4250 = vunpack.c.l.b16 %v4203
        %v4251 = vunpack.c.h.b16 %v4203
        %v4252 = vpack.c.b16 %v4222, %v4220
        %v4253 = vpack.c.b16 %v4223, %v4221
        %v4254 = vpack.c.b16 %v4226, %v4224
        %v4255 = vpack.c.b16 %v4227, %v4225
        %v4256 = vpack.c.b16 %v4230, %v4228
        %v4257 = vpack.c.b16 %v4231, %v4229
        %v4258 = vpack.c.b16 %v4234, %v4232
        %v4259 = vpack.c.b16 %v4235, %v4233
        %v4260 = vpack.c.b16 %v4238, %v4236
        %v4261 = vpack.c.b16 %v4239, %v4237
        %v4262 = vpack.c.b16 %v4242, %v4240
        %v4263 = vpack.c.b16 %v4243, %v4241
        %v4264 = vpack.c.b16 %v4246, %v4244
        %v4265 = vpack.c.b16 %v4247, %v4245
        %v4266 = vpack.c.b16 %v4250, %v4248
        %v4267 = vpack.c.b16 %v4251, %v4249
        %4284 = vmatprep.subr.bf16.mxu0 %v4253
        %4285 = vmatpush1.bf16.msra.mxu0 %v4252
        %4286 = vmatprep.subr.bf16.mxu0 %v4255
        %4287 = vmatpush1.bf16.msra.mxu0 %v4254
        %4288 = vmatprep.subr.bf16.mxu0 %v4257
        %4289 = vmatpush1.bf16.msra.mxu0 %v4256
        %4290 = vmatprep.subr.bf16.mxu0 %v4259
        %4291 = vmatpush1.bf16.msra.mxu0 %v4258
        %4292 = vmatprep.subr.bf16.mxu0 %v4261
        %4293 = vmatpush1.bf16.msra.mxu0 %v4260
        %4294 = vmatprep.subr.bf16.mxu0 %v4263
        %4295 = vmatpush1.bf16.msra.mxu0 %v4262
        %4296 = vmatprep.subr.bf16.mxu0 %v4265
        %4297 = vmatpush1.bf16.msra.mxu0 %v4264
        %4298 = vmatprep.subr.bf16.mxu0 %v4267
        %4299 = vmatpush1.bf16.msra.mxu0 %v4266
        %4300 = vmatprep.subr.bf16.mxu0 0
        %4301 = vmatpush1.bf16.msra.mxu0 0
        %4302 = vmatprep.subr.bf16.mxu0 0
        %4303 = vmatpush1.bf16.msra.mxu0 0
        %4304 = vmatprep.subr.bf16.mxu0 0
        %4305 = vmatpush1.bf16.msra.mxu0 0
        %4306 = vmatprep.subr.bf16.mxu0 0
        %4307 = vmatpush1.bf16.msra.mxu0 0
        %4308 = vmatprep.subr.bf16.mxu0 0
        %4309 = vmatpush1.bf16.msra.mxu0 0
        %4310 = vmatprep.subr.bf16.mxu0 0
        %4311 = vmatpush1.bf16.msra.mxu0 0
        %4312 = vmatprep.subr.bf16.mxu0 0
        %4313 = vmatpush1.bf16.msra.mxu0 0
        %4314 = vmatprep.subr.bf16.mxu0 0
        %4315 = vmatpush1.bf16.msra.mxu0 0
        %4316 = vmatprep.mubr.bf16.mxu0 0
        %4317 = vmatmul.mubr.bf16.gmra.mrb[0].mxu0 %v4187
        %v4318 = vpop.f32.mrb[0].mxu0
        %v4319 = vadd.f32 0.0, %v4318
        %v4320 = vpop.f32.mrb[0].mxu0
        %v4321 = vadd.f32 0.0, %v4320
        %v4322 = vpop.f32.mrb[0].mxu0
        %v4323 = vpop.f32.mrb[0].mxu0
        %4324 = vdwg.mxu0
        %v4325 = vadd.f32 %v4136, %v4319
        %v4326 = vadd.f32 %v4137, %v4321
        %s4327 = scalar_lea.vmem %s9, 4
        %v4328 = vld [vmem:[%s4327] sm:$0xf]
        %v4330 = vsel %vm4140, %v4328, 0
        %4332 = vmatprep.subr.bf16.mxu0 0
        %4333 = vmatpush1.bf16.msra.mxu0 %v4145
        %4334 = vmatprep.subr.bf16.mxu0 0
        %4335 = vmatpush1.bf16.msra.mxu0 0
        %4336 = vmatprep.subr.bf16.mxu0 0
        %4337 = vmatpush1.bf16.msra.mxu0 0
        %4338 = vmatprep.subr.bf16.mxu0 0
        %4339 = vmatpush1.bf16.msra.mxu0 0
        %4340 = vmatprep.subr.bf16.mxu0 0
        %4341 = vmatpush1.bf16.msra.mxu0 0
        %4342 = vmatprep.subr.bf16.mxu0 0
        %4343 = vmatpush1.bf16.msra.mxu0 0
        %4344 = vmatprep.subr.bf16.mxu0 0
        %4345 = vmatpush1.bf16.msra.mxu0 0
        %4346 = vmatprep.subr.bf16.mxu0 0
        %4347 = vmatpush1.bf16.msra.mxu0 0
        %4348 = vmatprep.subr.bf16.mxu0 0
        %4349 = vmatpush1.bf16.msra.mxu0 0
        %4350 = vmatprep.subr.bf16.mxu0 0
        %4351 = vmatpush1.bf16.msra.mxu0 0
        %4352 = vmatprep.subr.bf16.mxu0 0
        %4353 = vmatpush1.bf16.msra.mxu0 0
        %4354 = vmatprep.subr.bf16.mxu0 0
        %4355 = vmatpush1.bf16.msra.mxu0 0
        %4356 = vmatprep.subr.bf16.mxu0 0
        %4357 = vmatpush1.bf16.msra.mxu0 0
        %4358 = vmatprep.subr.bf16.mxu0 0
        %4359 = vmatpush1.bf16.msra.mxu0 0
        %4360 = vmatprep.subr.bf16.mxu0 0
        %4361 = vmatpush1.bf16.msra.mxu0 0
        %4362 = vmatprep.subr.bf16.mxu0 0
        %4363 = vmatpush1.bf16.msra.mxu0 0
        %4364 = vmatprep.mubr.bf16.mxu0 0
        %4365 = vmatmul.mubr.bf16.gmra.mrb[0].mxu0 %v4330
        %v4366 = vpop.f32.mrb[0].mxu0
        %v4367 = vadd.f32 0.0, %v4366
        %v4368 = vpop.f32.mrb[0].mxu0
        %v4369 = vpop.f32.mrb[0].mxu0
        %v4370 = vpop.f32.mrb[0].mxu0
        %4371 = vdwg.mxu0
        %v4372 = vpack.c.bf16 %v4367, %v4367
        %s4373 = scalar_lea.vmem [#allocation8], 128
        %v4374 = vld [vmem:[%s4373] sm:$0xff]
        %v4375 = vld [vmem:[%s4373 + $0x8] sm:$0xff]
        %v4376 = vld [vmem:[%s4373 + $0x10] sm:$0xff]
        %v4377 = vld [vmem:[%s4373 + $0x18] sm:$0xff]
        %v4378 = vld [vmem:[%s4373 + $0x20] sm:$0xff]
        %v4379 = vld [vmem:[%s4373 + $0x28] sm:$0xff]
        %v4380 = vld [vmem:[%s4373 + $0x30] sm:$0xff]
        %v4381 = vld [vmem:[%s4373 + $0x38] sm:$0xff]
        %v4382 = vld [vmem:[%s4373 + $0x40] sm:$0xff]
        %v4383 = vld [vmem:[%s4373 + $0x48] sm:$0xff]
        %v4384 = vld [vmem:[%s4373 + $0x50] sm:$0xff]
        %v4385 = vld [vmem:[%s4373 + $0x58] sm:$0xff]
        %v4386 = vld [vmem:[%s4373 + $0x60] sm:$0xff]
        %v4387 = vld [vmem:[%s4373 + $0x68] sm:$0xff]
        %v4388 = vld [vmem:[%s4373 + $0x70] sm:$0xff]
        %v4389 = vld [vmem:[%s4373 + $0x78] sm:$0xff]
        %v4406 = vunpack.c.l.b16 %v4374
        %v4407 = vunpack.c.h.b16 %v4374
        %v4408 = vunpack.c.l.b16 %v4375
        %v4409 = vunpack.c.h.b16 %v4375
        %v4410 = vunpack.c.l.b16 %v4376
        %v4411 = vunpack.c.h.b16 %v4376
        %v4412 = vunpack.c.l.b16 %v4377
        %v4413 = vunpack.c.h.b16 %v4377
        %v4414 = vunpack.c.l.b16 %v4378
        %v4415 = vunpack.c.h.b16 %v4378
        %v4416 = vunpack.c.l.b16 %v4379
        %v4417 = vunpack.c.h.b16 %v4379
        %v4418 = vunpack.c.l.b16 %v4380
        %v4419 = vunpack.c.h.b16 %v4380
        %v4420 = vunpack.c.l.b16 %v4381
        %v4421 = vunpack.c.h.b16 %v4381
        %v4422 = vunpack.c.l.b16 %v4382
        %v4423 = vunpack.c.h.b16 %v4382
        %v4424 = vunpack.c.l.b16 %v4383
        %v4425 = vunpack.c.h.b16 %v4383
        %v4426 = vunpack.c.l.b16 %v4384
        %v4427 = vunpack.c.h.b16 %v4384
        %v4428 = vunpack.c.l.b16 %v4385
        %v4429 = vunpack.c.h.b16 %v4385
        %v4430 = vunpack.c.l.b16 %v4386
        %v4431 = vunpack.c.h.b16 %v4386
        %v4432 = vunpack.c.l.b16 %v4387
        %v4433 = vunpack.c.h.b16 %v4387
        %v4434 = vunpack.c.l.b16 %v4388
        %v4435 = vunpack.c.h.b16 %v4388
        %v4436 = vunpack.c.l.b16 %v4389
        %v4437 = vunpack.c.h.b16 %v4389
        %v4438 = vpack.c.b16 %v4408, %v4406
        %v4439 = vpack.c.b16 %v4409, %v4407
        %v4440 = vpack.c.b16 %v4412, %v4410
        %v4441 = vpack.c.b16 %v4413, %v4411
        %v4442 = vpack.c.b16 %v4416, %v4414
        %v4443 = vpack.c.b16 %v4417, %v4415
        %v4444 = vpack.c.b16 %v4420, %v4418
        %v4445 = vpack.c.b16 %v4421, %v4419
        %v4446 = vpack.c.b16 %v4424, %v4422
        %v4447 = vpack.c.b16 %v4425, %v4423
        %v4448 = vpack.c.b16 %v4428, %v4426
        %v4449 = vpack.c.b16 %v4429, %v4427
        %v4450 = vpack.c.b16 %v4432, %v4430
        %v4451 = vpack.c.b16 %v4433, %v4431
        %v4452 = vpack.c.b16 %v4436, %v4434
        %v4453 = vpack.c.b16 %v4437, %v4435
        %4470 = vmatprep.subr.bf16.mxu0 %v4439
        %4471 = vmatpush1.bf16.msra.mxu0 %v4438
        %4472 = vmatprep.subr.bf16.mxu0 %v4441
        %4473 = vmatpush1.bf16.msra.mxu0 %v4440
        %4474 = vmatprep.subr.bf16.mxu0 %v4443
        %4475 = vmatpush1.bf16.msra.mxu0 %v4442
        %4476 = vmatprep.subr.bf16.mxu0 %v4445
        %4477 = vmatpush1.bf16.msra.mxu0 %v4444
        %4478 = vmatprep.subr.bf16.mxu0 %v4447
        %4479 = vmatpush1.bf16.msra.mxu0 %v4446
        %4480 = vmatprep.subr.bf16.mxu0 %v4449
        %4481 = vmatpush1.bf16.msra.mxu0 %v4448
        %4482 = vmatprep.subr.bf16.mxu0 %v4451
        %4483 = vmatpush1.bf16.msra.mxu0 %v4450
        %4484 = vmatprep.subr.bf16.mxu0 %v4453
        %4485 = vmatpush1.bf16.msra.mxu0 %v4452
        %4486 = vmatprep.subr.bf16.mxu0 0
        %4487 = vmatpush1.bf16.msra.mxu0 0
        %4488 = vmatprep.subr.bf16.mxu0 0
        %4489 = vmatpush1.bf16.msra.mxu0 0
        %4490 = vmatprep.subr.bf16.mxu0 0
        %4491 = vmatpush1.bf16.msra.mxu0 0
        %4492 = vmatprep.subr.bf16.mxu0 0
        %4493 = vmatpush1.bf16.msra.mxu0 0
        %4494 = vmatprep.subr.bf16.mxu0 0
        %4495 = vmatpush1.bf16.msra.mxu0 0
        %4496 = vmatprep.subr.bf16.mxu0 0
        %4497 = vmatpush1.bf16.msra.mxu0 0
        %4498 = vmatprep.subr.bf16.mxu0 0
        %4499 = vmatpush1.bf16.msra.mxu0 0
        %4500 = vmatprep.subr.bf16.mxu0 0
        %4501 = vmatpush1.bf16.msra.mxu0 0
        %4502 = vmatprep.mubr.bf16.mxu0 0
        %4503 = vmatmul.mubr.bf16.gmra.mrb[0].mxu0 %v4372
        %v4504 = vpop.f32.mrb[0].mxu0
        %v4505 = vadd.f32 0.0, %v4504
        %v4506 = vpop.f32.mrb[0].mxu0
        %v4507 = vadd.f32 0.0, %v4506
        %v4508 = vpop.f32.mrb[0].mxu0
        %v4509 = vpop.f32.mrb[0].mxu0
        %4510 = vdwg.mxu0
        %v4511 = vadd.f32 %v4325, %v4505
        %v4512 = vadd.f32 %v4326, %v4507
        %s4513 = scalar_lea.vmem %s9, 8
        %v4514 = vld [vmem:[%s4513] sm:$0xf]
        %v4516 = vsel %vm4140, %v4514, 0
        %4518 = vmatprep.subr.bf16.mxu0 0
        %4519 = vmatpush1.bf16.msra.mxu0 %v4145
        %4520 = vmatprep.subr.bf16.mxu0 0
        %4521 = vmatpush1.bf16.msra.mxu0 0
        %4522 = vmatprep.subr.bf16.mxu0 0
        %4523 = vmatpush1.bf16.msra.mxu0 0
        %4524 = vmatprep.subr.bf16.mxu0 0
        %4525 = vmatpush1.bf16.msra.mxu0 0
        %4526 = vmatprep.subr.bf16.mxu0 0
        %4527 = vmatpush1.bf16.msra.mxu0 0
        %4528 = vmatprep.subr.bf16.mxu0 0
        %4529 = vmatpush1.bf16.msra.mxu0 0
        %4530 = vmatprep.subr.bf16.mxu0 0
        %4531 = vmatpush1.bf16.msra.mxu0 0
        %4532 = vmatprep.subr.bf16.mxu0 0
        %4533 = vmatpush1.bf16.msra.mxu0 0
        %4534 = vmatprep.subr.bf16.mxu0 0
        %4535 = vmatpush1.bf16.msra.mxu0 0
        %4536 = vmatprep.subr.bf16.mxu0 0
        %4537 = vmatpush1.bf16.msra.mxu0 0
        %4538 = vmatprep.subr.bf16.mxu0 0
        %4539 = vmatpush1.bf16.msra.mxu0 0
        %4540 = vmatprep.subr.bf16.mxu0 0
        %4541 = vmatpush1.bf16.msra.mxu0 0
        %4542 = vmatprep.subr.bf16.mxu0 0
        %4543 = vmatpush1.bf16.msra.mxu0 0
        %4544 = vmatprep.subr.bf16.mxu0 0
        %4545 = vmatpush1.bf16.msra.mxu0 0
        %4546 = vmatprep.subr.bf16.mxu0 0
        %4547 = vmatpush1.bf16.msra.mxu0 0
        %4548 = vmatprep.subr.bf16.mxu0 0
        %4549 = vmatpush1.bf16.msra.mxu0 0
        %4550 = vmatprep.mubr.bf16.mxu0 0
        %4551 = vmatmul.mubr.bf16.gmra.mrb[0].mxu0 %v4516
        %v4552 = vpop.f32.mrb[0].mxu0
        %v4553 = vadd.f32 0.0, %v4552
        %v4554 = vpop.f32.mrb[0].mxu0
        %v4555 = vpop.f32.mrb[0].mxu0
        %v4556 = vpop.f32.mrb[0].mxu0
        %4557 = vdwg.mxu0
        %v4558 = vpack.c.bf16 %v4553, %v4553
        %s4559 = scalar_lea.vmem [#allocation8], 256
        %v4560 = vld [vmem:[%s4559] sm:$0xff]
        %v4561 = vld [vmem:[%s4559 + $0x8] sm:$0xff]
        %v4562 = vld [vmem:[%s4559 + $0x10] sm:$0xff]
        %v4563 = vld [vmem:[%s4559 + $0x18] sm:$0xff]
        %v4564 = vld [vmem:[%s4559 + $0x20] sm:$0xff]
        %v4565 = vld [vmem:[%s4559 + $0x28] sm:$0xff]
        %v4566 = vld [vmem:[%s4559 + $0x30] sm:$0xff]
        %v4567 = vld [vmem:[%s4559 + $0x38] sm:$0xff]
        %v4568 = vld [vmem:[%s4559 + $0x40] sm:$0xff]
        %v4569 = vld [vmem:[%s4559 + $0x48] sm:$0xff]
        %v4570 = vld [vmem:[%s4559 + $0x50] sm:$0xff]
        %v4571 = vld [vmem:[%s4559 + $0x58] sm:$0xff]
        %v4572 = vld [vmem:[%s4559 + $0x60] sm:$0xff]
        %v4573 = vld [vmem:[%s4559 + $0x68] sm:$0xff]
        %v4574 = vld [vmem:[%s4559 + $0x70] sm:$0xff]
        %v4575 = vld [vmem:[%s4559 + $0x78] sm:$0xff]
        %v4592 = vunpack.c.l.b16 %v4560
        %v4593 = vunpack.c.h.b16 %v4560
        %v4594 = vunpack.c.l.b16 %v4561
        %v4595 = vunpack.c.h.b16 %v4561
        %v4596 = vunpack.c.l.b16 %v4562
        %v4597 = vunpack.c.h.b16 %v4562
        %v4598 = vunpack.c.l.b16 %v4563
        %v4599 = vunpack.c.h.b16 %v4563
        %v4600 = vunpack.c.l.b16 %v4564
        %v4601 = vunpack.c.h.b16 %v4564
        %v4602 = vunpack.c.l.b16 %v4565
        %v4603 = vunpack.c.h.b16 %v4565
        %v4604 = vunpack.c.l.b16 %v4566
        %v4605 = vunpack.c.h.b16 %v4566
        %v4606 = vunpack.c.l.b16 %v4567
        %v4607 = vunpack.c.h.b16 %v4567
        %v4608 = vunpack.c.l.b16 %v4568
        %v4609 = vunpack.c.h.b16 %v4568
        %v4610 = vunpack.c.l.b16 %v4569
        %v4611 = vunpack.c.h.b16 %v4569
        %v4612 = vunpack.c.l.b16 %v4570
        %v4613 = vunpack.c.h.b16 %v4570
        %v4614 = vunpack.c.l.b16 %v4571
        %v4615 = vunpack.c.h.b16 %v4571
        %v4616 = vunpack.c.l.b16 %v4572
        %v4617 = vunpack.c.h.b16 %v4572
        %v4618 = vunpack.c.l.b16 %v4573
        %v4619 = vunpack.c.h.b16 %v4573
        %v4620 = vunpack.c.l.b16 %v4574
        %v4621 = vunpack.c.h.b16 %v4574
        %v4622 = vunpack.c.l.b16 %v4575
        %v4623 = vunpack.c.h.b16 %v4575
        %v4624 = vpack.c.b16 %v4594, %v4592
        %v4625 = vpack.c.b16 %v4595, %v4593
        %v4626 = vpack.c.b16 %v4598, %v4596
        %v4627 = vpack.c.b16 %v4599, %v4597
        %v4628 = vpack.c.b16 %v4602, %v4600
        %v4629 = vpack.c.b16 %v4603, %v4601
        %v4630 = vpack.c.b16 %v4606, %v4604
        %v4631 = vpack.c.b16 %v4607, %v4605
        %v4632 = vpack.c.b16 %v4610, %v4608
        %v4633 = vpack.c.b16 %v4611, %v4609
        %v4634 = vpack.c.b16 %v4614, %v4612
        %v4635 = vpack.c.b16 %v4615, %v4613
        %v4636 = vpack.c.b16 %v4618, %v4616
        %v4637 = vpack.c.b16 %v4619, %v4617
        %v4638 = vpack.c.b16 %v4622, %v4620
        %v4639 = vpack.c.b16 %v4623, %v4621
        %4656 = vmatprep.subr.bf16.mxu0 %v4625
        %4657 = vmatpush1.bf16.msra.mxu0 %v4624
        %4658 = vmatprep.subr.bf16.mxu0 %v4627
        %4659 = vmatpush1.bf16.msra.mxu0 %v4626
        %4660 = vmatprep.subr.bf16.mxu0 %v4629
        %4661 = vmatpush1.bf16.msra.mxu0 %v4628
        %4662 = vmatprep.subr.bf16.mxu0 %v4631
        %4663 = vmatpush1.bf16.msra.mxu0 %v4630
        %4664 = vmatprep.subr.bf16.mxu0 %v4633
        %4665 = vmatpush1.bf16.msra.mxu0 %v4632
        %4666 = vmatprep.subr.bf16.mxu0 %v4635
        %4667 = vmatpush1.bf16.msra.mxu0 %v4634
        %4668 = vmatprep.subr.bf16.mxu0 %v4637
        %4669 = vmatpush1.bf16.msra.mxu0 %v4636
        %4670 = vmatprep.subr.bf16.mxu0 %v4639
        %4671 = vmatpush1.bf16.msra.mxu0 %v4638
        %4672 = vmatprep.subr.bf16.mxu0 0
        %4673 = vmatpush1.bf16.msra.mxu0 0
        %4674 = vmatprep.subr.bf16.mxu0 0
        %4675 = vmatpush1.bf16.msra.mxu0 0
        %4676 = vmatprep.subr.bf16.mxu0 0
        %4677 = vmatpush1.bf16.msra.mxu0 0
        %4678 = vmatprep.subr.bf16.mxu0 0
        %4679 = vmatpush1.bf16.msra.mxu0 0
        %4680 = vmatprep.subr.bf16.mxu0 0
        %4681 = vmatpush1.bf16.msra.mxu0 0
        %4682 = vmatprep.subr.bf16.mxu0 0
        %4683 = vmatpush1.bf16.msra.mxu0 0
        %4684 = vmatprep.subr.bf16.mxu0 0
        %4685 = vmatpush1.bf16.msra.mxu0 0
        %4686 = vmatprep.subr.bf16.mxu0 0
        %4687 = vmatpush1.bf16.msra.mxu0 0
        %4688 = vmatprep.mubr.bf16.mxu0 0
        %4689 = vmatmul.mubr.bf16.gmra.mrb[0].mxu0 %v4558
        %v4690 = vpop.f32.mrb[0].mxu0
        %v4691 = vadd.f32 0.0, %v4690
        %v4692 = vpop.f32.mrb[0].mxu0
        %v4693 = vadd.f32 0.0, %v4692
        %v4694 = vpop.f32.mrb[0].mxu0
        %v4695 = vpop.f32.mrb[0].mxu0
        %4696 = vdwg.mxu0
        %v4697 = vadd.f32 %v4511, %v4691
        %v4698 = vadd.f32 %v4512, %v4693
        %vm4699 = vcmp.ge.f32.partialorder %v4697, 0.0
        %vm4700 = vcmp.ge.f32.partialorder %v4698, 0.0
        %v4701 = vld [vmem:[%s13] sm:$0xff]
        %4703 = vset.pattern.permute.xlu0 0
        %4704 = vperm.xlu0 %4703, %v4701
        %v4705 = vpop.permute.xlu0 %4704
        %v4707 = vmul.f32 %v4705, %v4697
        %v4708 = vmul.f32 %v4705, %v4698
        %v4709 = vsel %vm4699, %v4697, %v4707
        %v4710 = vsel %vm4700, %v4698, %v4708
        %v4711 = vpack.c.bf16 %v4709, %v4709
        %v4712 = vpack.c.bf16 %v4710, %v4710
        %s4713 = scalar_lea.vmem [#allocation10], 16
        %v4714 = vld [vmem:[%s4713] sm:$0xff]
        %v4715 = vld [vmem:[%s4713 + $0x8] sm:$0xff]
        %v4717 = vsel %vm661, %v4711, 0
        %v4720 = vsel %vm661, %v4712, 0
        %4722 = vmatprep.subr.bf16.mxu0 %v4720
        %4723 = vmatpush1.bf16.msra.mxu0 %v4717
        %4724 = vmatprep.subr.bf16.mxu0 0
        %4725 = vmatpush1.bf16.msra.mxu0 0
        %4726 = vmatprep.subr.bf16.mxu0 0
        %4727 = vmatpush1.bf16.msra.mxu0 0
        %4728 = vmatprep.subr.bf16.mxu0 0
        %4729 = vmatpush1.bf16.msra.mxu0 0
        %4730 = vmatprep.subr.bf16.mxu0 0
        %4731 = vmatpush1.bf16.msra.mxu0 0
        %4732 = vmatprep.subr.bf16.mxu0 0
        %4733 = vmatpush1.bf16.msra.mxu0 0
        %4734 = vmatprep.subr.bf16.mxu0 0
        %4735 = vmatpush1.bf16.msra.mxu0 0
        %4736 = vmatprep.subr.bf16.mxu0 0
        %4737 = vmatpush1.bf16.msra.mxu0 0
        %4738 = vmatprep.subr.bf16.mxu0 0
        %4739 = vmatpush1.bf16.msra.mxu0 0
        %4740 = vmatprep.subr.bf16.mxu0 0
        %4741 = vmatpush1.bf16.msra.mxu0 0
        %4742 = vmatprep.subr.bf16.mxu0 0
        %4743 = vmatpush1.bf16.msra.mxu0 0
        %4744 = vmatprep.subr.bf16.mxu0 0
        %4745 = vmatpush1.bf16.msra.mxu0 0
        %4746 = vmatprep.subr.bf16.mxu0 0
        %4747 = vmatpush1.bf16.msra.mxu0 0
        %4748 = vmatprep.subr.bf16.mxu0 0
        %4749 = vmatpush1.bf16.msra.mxu0 0
        %4750 = vmatprep.subr.bf16.mxu0 0
        %4751 = vmatpush1.bf16.msra.mxu0 0
        %4752 = vmatprep.subr.bf16.mxu0 0
        %4753 = vmatpush1.bf16.msra.mxu0 0
        %4754 = vmatprep.mubr.bf16.mxu0 0
        %4755 = vmatmul.mubr.bf16.gmra.mrb[0].mxu0 %v4142
        %v4756 = vpop.f32.mrb[0].mxu0
        %v4757 = vadd.f32 0.0, %v4756
        %v4758 = vpop.f32.mrb[0].mxu0
        %v4759 = vadd.f32 0.0, %v4758
        %v4760 = vpop.f32.mrb[0].mxu0
        %v4761 = vpop.f32.mrb[0].mxu0
        %4762 = vdwg.mxu0
        %v4763 = vpack.c.bf16 %v4757, %v4757
        %v4764 = vpack.c.bf16 %v4759, %v4759
        %v4765 = vld [vmem:[%s11] sm:$0xff]
        %v4766 = vld [vmem:[%s11 + $0x8] sm:$0xff]
        %v4767 = vld [vmem:[%s11 + $0x10] sm:$0xff]
        %v4768 = vld [vmem:[%s11 + $0x18] sm:$0xff]
        %v4769 = vld [vmem:[%s11 + $0x20] sm:$0xff]
        %v4770 = vld [vmem:[%s11 + $0x28] sm:$0xff]
        %v4771 = vld [vmem:[%s11 + $0x30] sm:$0xff]
        %v4772 = vld [vmem:[%s11 + $0x38] sm:$0xff]
        %v4773 = vld [vmem:[%s11 + $0x40] sm:$0xff]
        %v4774 = vld [vmem:[%s11 + $0x48] sm:$0xff]
        %v4775 = vld [vmem:[%s11 + $0x50] sm:$0xff]
        %v4776 = vld [vmem:[%s11 + $0x58] sm:$0xff]
        %v4777 = vld [vmem:[%s11 + $0x60] sm:$0xff]
        %v4778 = vld [vmem:[%s11 + $0x68] sm:$0xff]
        %v4779 = vld [vmem:[%s11 + $0x70] sm:$0xff]
        %v4780 = vld [vmem:[%s11 + $0x78] sm:$0xff]
        %v4781 = vld [vmem:[%s11 + $0x80] sm:$0xff]
        %v4782 = vld [vmem:[%s11 + $0x88] sm:$0xff]
        %v4783 = vld [vmem:[%s11 + $0x90] sm:$0xff]
        %v4784 = vld [vmem:[%s11 + $0x98] sm:$0xff]
        %v4785 = vld [vmem:[%s11 + $0xa0] sm:$0xff]
        %v4786 = vld [vmem:[%s11 + $0xa8] sm:$0xff]
        %v4787 = vld [vmem:[%s11 + $0xb0] sm:$0xff]
        %v4788 = vld [vmem:[%s11 + $0xb8] sm:$0xff]
        %v4789 = vld [vmem:[%s11 + $0xc0] sm:$0xff]
        %v4790 = vld [vmem:[%s11 + $0xc8] sm:$0xff]
        %v4791 = vld [vmem:[%s11 + $0xd0] sm:$0xff]
        %v4792 = vld [vmem:[%s11 + $0xd8] sm:$0xff]
        %v4793 = vld [vmem:[%s11 + $0xe0] sm:$0xff]
        %v4794 = vld [vmem:[%s11 + $0xe8] sm:$0xff]
        %v4795 = vld [vmem:[%s11 + $0xf0] sm:$0xff]
        %v4796 = vld [vmem:[%s11 + $0xf8] sm:$0xff]
        %v4829 = vunpack.c.l.b16 %v4765
        %v4830 = vunpack.c.h.b16 %v4765
        %v4831 = vunpack.c.l.b16 %v4766
        %v4832 = vunpack.c.h.b16 %v4766
        %v4833 = vunpack.c.l.b16 %v4767
        %v4834 = vunpack.c.h.b16 %v4767
        %v4835 = vunpack.c.l.b16 %v4768
        %v4836 = vunpack.c.h.b16 %v4768
        %v4837 = vunpack.c.l.b16 %v4769
        %v4838 = vunpack.c.h.b16 %v4769
        %v4839 = vunpack.c.l.b16 %v4770
        %v4840 = vunpack.c.h.b16 %v4770
        %v4841 = vunpack.c.l.b16 %v4771
        %v4842 = vunpack.c.h.b16 %v4771
        %v4843 = vunpack.c.l.b16 %v4772
        %v4844 = vunpack.c.h.b16 %v4772
        %v4845 = vunpack.c.l.b16 %v4773
        %v4846 = vunpack.c.h.b16 %v4773
        %v4847 = vunpack.c.l.b16 %v4774
        %v4848 = vunpack.c.h.b16 %v4774
        %v4849 = vunpack.c.l.b16 %v4775
        %v4850 = vunpack.c.h.b16 %v4775
        %v4851 = vunpack.c.l.b16 %v4776
        %v4852 = vunpack.c.h.b16 %v4776
        %v4853 = vunpack.c.l.b16 %v4777
        %v4854 = vunpack.c.h.b16 %v4777
        %v4855 = vunpack.c.l.b16 %v4778
        %v4856 = vunpack.c.h.b16 %v4778
        %v4857 = vunpack.c.l.b16 %v4779
        %v4858 = vunpack.c.h.b16 %v4779
        %v4859 = vunpack.c.l.b16 %v4780
        %v4860 = vunpack.c.h.b16 %v4780
        %v4861 = vunpack.c.l.b16 %v4781
        %v4862 = vunpack.c.h.b16 %v4781
        %v4863 = vunpack.c.l.b16 %v4782
        %v4864 = vunpack.c.h.b16 %v4782
        %v4865 = vunpack.c.l.b16 %v4783
        %v4866 = vunpack.c.h.b16 %v4783
        %v4867 = vunpack.c.l.b16 %v4784
        %v4868 = vunpack.c.h.b16 %v4784
        %v4869 = vunpack.c.l.b16 %v4785
        %v4870 = vunpack.c.h.b16 %v4785
        %v4871 = vunpack.c.l.b16 %v4786
        %v4872 = vunpack.c.h.b16 %v4786
        %v4873 = vunpack.c.l.b16 %v4787
        %v4874 = vunpack.c.h.b16 %v4787
        %v4875 = vunpack.c.l.b16 %v4788
        %v4876 = vunpack.c.h.b16 %v4788
        %v4877 = vunpack.c.l.b16 %v4789
        %v4878 = vunpack.c.h.b16 %v4789
        %v4879 = vunpack.c.l.b16 %v4790
        %v4880 = vunpack.c.h.b16 %v4790
        %v4881 = vunpack.c.l.b16 %v4791
        %v4882 = vunpack.c.h.b16 %v4791
        %v4883 = vunpack.c.l.b16 %v4792
        %v4884 = vunpack.c.h.b16 %v4792
        %v4885 = vunpack.c.l.b16 %v4793
        %v4886 = vunpack.c.h.b16 %v4793
        %v4887 = vunpack.c.l.b16 %v4794
        %v4888 = vunpack.c.h.b16 %v4794
        %v4889 = vunpack.c.l.b16 %v4795
        %v4890 = vunpack.c.h.b16 %v4795
        %v4891 = vunpack.c.l.b16 %v4796
        %v4892 = vunpack.c.h.b16 %v4796
        %v4893 = vpack.c.b16 %v4831, %v4829
        %v4894 = vpack.c.b16 %v4832, %v4830
        %v4895 = vpack.c.b16 %v4835, %v4833
        %v4896 = vpack.c.b16 %v4836, %v4834
        %v4897 = vpack.c.b16 %v4839, %v4837
        %v4898 = vpack.c.b16 %v4840, %v4838
        %v4899 = vpack.c.b16 %v4843, %v4841
        %v4900 = vpack.c.b16 %v4844, %v4842
        %v4901 = vpack.c.b16 %v4847, %v4845
        %v4902 = vpack.c.b16 %v4848, %v4846
        %v4903 = vpack.c.b16 %v4851, %v4849
        %v4904 = vpack.c.b16 %v4852, %v4850
        %v4905 = vpack.c.b16 %v4855, %v4853
        %v4906 = vpack.c.b16 %v4856, %v4854
        %v4907 = vpack.c.b16 %v4859, %v4857
        %v4908 = vpack.c.b16 %v4860, %v4858
        %v4909 = vpack.c.b16 %v4863, %v4861
        %v4910 = vpack.c.b16 %v4864, %v4862
        %v4911 = vpack.c.b16 %v4867, %v4865
        %v4912 = vpack.c.b16 %v4868, %v4866
        %v4913 = vpack.c.b16 %v4871, %v4869
        %v4914 = vpack.c.b16 %v4872, %v4870
        %v4915 = vpack.c.b16 %v4875, %v4873
        %v4916 = vpack.c.b16 %v4876, %v4874
        %v4917 = vpack.c.b16 %v4879, %v4877
        %v4918 = vpack.c.b16 %v4880, %v4878
        %v4919 = vpack.c.b16 %v4883, %v4881
        %v4920 = vpack.c.b16 %v4884, %v4882
        %v4921 = vpack.c.b16 %v4887, %v4885
        %v4922 = vpack.c.b16 %v4888, %v4886
        %v4923 = vpack.c.b16 %v4891, %v4889
        %v4924 = vpack.c.b16 %v4892, %v4890
        %4957 = vmatprep.subr.bf16.mxu0 %v4894
        %4958 = vmatpush1.bf16.msra.mxu0 %v4893
        %4959 = vmatprep.subr.bf16.mxu0 %v4896
        %4960 = vmatpush1.bf16.msra.mxu0 %v4895
        %4961 = vmatprep.subr.bf16.mxu0 %v4898
        %4962 = vmatpush1.bf16.msra.mxu0 %v4897
        %4963 = vmatprep.subr.bf16.mxu0 %v4900
        %4964 = vmatpush1.bf16.msra.mxu0 %v4899
        %4965 = vmatprep.subr.bf16.mxu0 %v4902
        %4966 = vmatpush1.bf16.msra.mxu0 %v4901
        %4967 = vmatprep.subr.bf16.mxu0 %v4904
        %4968 = vmatpush1.bf16.msra.mxu0 %v4903
        %4969 = vmatprep.subr.bf16.mxu0 %v4906
        %4970 = vmatpush1.bf16.msra.mxu0 %v4905
        %4971 = vmatprep.subr.bf16.mxu0 %v4908
        %4972 = vmatpush1.bf16.msra.mxu0 %v4907
        %4973 = vmatprep.subr.bf16.mxu0 %v4910
        %4974 = vmatpush1.bf16.msra.mxu0 %v4909
        %4975 = vmatprep.subr.bf16.mxu0 %v4912
        %4976 = vmatpush1.bf16.msra.mxu0 %v4911
        %4977 = vmatprep.subr.bf16.mxu0 %v4914
        %4978 = vmatpush1.bf16.msra.mxu0 %v4913
        %4979 = vmatprep.subr.bf16.mxu0 %v4916
        %4980 = vmatpush1.bf16.msra.mxu0 %v4915
        %4981 = vmatprep.subr.bf16.mxu0 %v4918
        %4982 = vmatpush1.bf16.msra.mxu0 %v4917
        %4983 = vmatprep.subr.bf16.mxu0 %v4920
        %4984 = vmatpush1.bf16.msra.mxu0 %v4919
        %4985 = vmatprep.subr.bf16.mxu0 %v4922
        %4986 = vmatpush1.bf16.msra.mxu0 %v4921
        %4987 = vmatprep.subr.bf16.mxu0 %v4924
        %4988 = vmatpush1.bf16.msra.mxu0 %v4923
        %4989 = vmatprep.mubr.bf16.mxu0 %v4764
        %4990 = vmatmul.mubr.bf16.gmra.mrb[0].mxu0 %v4763
        %v4991 = vpop.f32.mrb[0].mxu0
        %v4992 = vadd.f32 0.0, %v4991
        %v4993 = vpop.f32.mrb[0].mxu0
        %v4994 = vadd.f32 0.0, %v4993
        %v4995 = vpop.f32.mrb[0].mxu0
        %v4996 = vpop.f32.mrb[0].mxu0
        %4997 = vdwg.mxu0
        %v4998 = vadd.f32 %v4714, %v4992
        %v4999 = vadd.f32 %v4715, %v4994
        %5000 = vmatprep.subr.bf16.mxu0 %v4720
        %5001 = vmatpush1.bf16.msra.mxu0 %v4717
        %5002 = vmatprep.subr.bf16.mxu0 0
        %5003 = vmatpush1.bf16.msra.mxu0 0
        %5004 = vmatprep.subr.bf16.mxu0 0
        %5005 = vmatpush1.bf16.msra.mxu0 0
        %5006 = vmatprep.subr.bf16.mxu0 0
        %5007 = vmatpush1.bf16.msra.mxu0 0
        %5008 = vmatprep.subr.bf16.mxu0 0
        %5009 = vmatpush1.bf16.msra.mxu0 0
        %5010 = vmatprep.subr.bf16.mxu0 0
        %5011 = vmatpush1.bf16.msra.mxu0 0
        %5012 = vmatprep.subr.bf16.mxu0 0
        %5013 = vmatpush1.bf16.msra.mxu0 0
        %5014 = vmatprep.subr.bf16.mxu0 0
        %5015 = vmatpush1.bf16.msra.mxu0 0
        %5016 = vmatprep.subr.bf16.mxu0 0
        %5017 = vmatpush1.bf16.msra.mxu0 0
        %5018 = vmatprep.subr.bf16.mxu0 0
        %5019 = vmatpush1.bf16.msra.mxu0 0
        %5020 = vmatprep.subr.bf16.mxu0 0
        %5021 = vmatpush1.bf16.msra.mxu0 0
        %5022 = vmatprep.subr.bf16.mxu0 0
        %5023 = vmatpush1.bf16.msra.mxu0 0
        %5024 = vmatprep.subr.bf16.mxu0 0
        %5025 = vmatpush1.bf16.msra.mxu0 0
        %5026 = vmatprep.subr.bf16.mxu0 0
        %5027 = vmatpush1.bf16.msra.mxu0 0
        %5028 = vmatprep.subr.bf16.mxu0 0
        %5029 = vmatpush1.bf16.msra.mxu0 0
        %5030 = vmatprep.subr.bf16.mxu0 0
        %5031 = vmatpush1.bf16.msra.mxu0 0
        %5032 = vmatprep.mubr.bf16.mxu0 0
        %5033 = vmatmul.mubr.bf16.gmra.mrb[0].mxu0 %v4330
        %v5034 = vpop.f32.mrb[0].mxu0
        %v5035 = vadd.f32 0.0, %v5034
        %v5036 = vpop.f32.mrb[0].mxu0
        %v5037 = vadd.f32 0.0, %v5036
        %v5038 = vpop.f32.mrb[0].mxu0
        %v5039 = vpop.f32.mrb[0].mxu0
        %5040 = vdwg.mxu0
        %v5041 = vpack.c.bf16 %v5035, %v5035
        %v5042 = vpack.c.bf16 %v5037, %v5037
        %s5043 = scalar_lea.vmem %s11, 256
        %v5044 = vld [vmem:[%s5043] sm:$0xff]
        %v5045 = vld [vmem:[%s5043 + $0x8] sm:$0xff]
        %v5046 = vld [vmem:[%s5043 + $0x10] sm:$0xff]
        %v5047 = vld [vmem:[%s5043 + $0x18] sm:$0xff]
        %v5048 = vld [vmem:[%s5043 + $0x20] sm:$0xff]
        %v5049 = vld [vmem:[%s5043 + $0x28] sm:$0xff]
        %v5050 = vld [vmem:[%s5043 + $0x30] sm:$0xff]
        %v5051 = vld [vmem:[%s5043 + $0x38] sm:$0xff]
        %v5052 = vld [vmem:[%s5043 + $0x40] sm:$0xff]
        %v5053 = vld [vmem:[%s5043 + $0x48] sm:$0xff]
        %v5054 = vld [vmem:[%s5043 + $0x50] sm:$0xff]
        %v5055 = vld [vmem:[%s5043 + $0x58] sm:$0xff]
        %v5056 = vld [vmem:[%s5043 + $0x60] sm:$0xff]
        %v5057 = vld [vmem:[%s5043 + $0x68] sm:$0xff]
        %v5058 = vld [vmem:[%s5043 + $0x70] sm:$0xff]
        %v5059 = vld [vmem:[%s5043 + $0x78] sm:$0xff]
        %v5060 = vld [vmem:[%s5043 + $0x80] sm:$0xff]
        %v5061 = vld [vmem:[%s5043 + $0x88] sm:$0xff]
        %v5062 = vld [vmem:[%s5043 + $0x90] sm:$0xff]
        %v5063 = vld [vmem:[%s5043 + $0x98] sm:$0xff]
        %v5064 = vld [vmem:[%s5043 + $0xa0] sm:$0xff]
        %v5065 = vld [vmem:[%s5043 + $0xa8] sm:$0xff]
        %v5066 = vld [vmem:[%s5043 + $0xb0] sm:$0xff]
        %v5067 = vld [vmem:[%s5043 + $0xb8] sm:$0xff]
        %v5068 = vld [vmem:[%s5043 + $0xc0] sm:$0xff]
        %v5069 = vld [vmem:[%s5043 + $0xc8] sm:$0xff]
        %v5070 = vld [vmem:[%s5043 + $0xd0] sm:$0xff]
        %v5071 = vld [vmem:[%s5043 + $0xd8] sm:$0xff]
        %v5072 = vld [vmem:[%s5043 + $0xe0] sm:$0xff]
        %v5073 = vld [vmem:[%s5043 + $0xe8] sm:$0xff]
        %v5074 = vld [vmem:[%s5043 + $0xf0] sm:$0xff]
        %v5075 = vld [vmem:[%s5043 + $0xf8] sm:$0xff]
        %v5108 = vunpack.c.l.b16 %v5044
        %v5109 = vunpack.c.h.b16 %v5044
        %v5110 = vunpack.c.l.b16 %v5045
        %v5111 = vunpack.c.h.b16 %v5045
        %v5112 = vunpack.c.l.b16 %v5046
        %v5113 = vunpack.c.h.b16 %v5046
        %v5114 = vunpack.c.l.b16 %v5047
        %v5115 = vunpack.c.h.b16 %v5047
        %v5116 = vunpack.c.l.b16 %v5048
        %v5117 = vunpack.c.h.b16 %v5048
        %v5118 = vunpack.c.l.b16 %v5049
        %v5119 = vunpack.c.h.b16 %v5049
        %v5120 = vunpack.c.l.b16 %v5050
        %v5121 = vunpack.c.h.b16 %v5050
        %v5122 = vunpack.c.l.b16 %v5051
        %v5123 = vunpack.c.h.b16 %v5051
        %v5124 = vunpack.c.l.b16 %v5052
        %v5125 = vunpack.c.h.b16 %v5052
        %v5126 = vunpack.c.l.b16 %v5053
        %v5127 = vunpack.c.h.b16 %v5053
        %v5128 = vunpack.c.l.b16 %v5054
        %v5129 = vunpack.c.h.b16 %v5054
        %v5130 = vunpack.c.l.b16 %v5055
        %v5131 = vunpack.c.h.b16 %v5055
        %v5132 = vunpack.c.l.b16 %v5056
        %v5133 = vunpack.c.h.b16 %v5056
        %v5134 = vunpack.c.l.b16 %v5057
        %v5135 = vunpack.c.h.b16 %v5057
        %v5136 = vunpack.c.l.b16 %v5058
        %v5137 = vunpack.c.h.b16 %v5058
        %v5138 = vunpack.c.l.b16 %v5059
        %v5139 = vunpack.c.h.b16 %v5059
        %v5140 = vunpack.c.l.b16 %v5060
        %v5141 = vunpack.c.h.b16 %v5060
        %v5142 = vunpack.c.l.b16 %v5061
        %v5143 = vunpack.c.h.b16 %v5061
        %v5144 = vunpack.c.l.b16 %v5062
        %v5145 = vunpack.c.h.b16 %v5062
        %v5146 = vunpack.c.l.b16 %v5063
        %v5147 = vunpack.c.h.b16 %v5063
        %v5148 = vunpack.c.l.b16 %v5064
        %v5149 = vunpack.c.h.b16 %v5064
        %v5150 = vunpack.c.l.b16 %v5065
        %v5151 = vunpack.c.h.b16 %v5065
        %v5152 = vunpack.c.l.b16 %v5066
        %v5153 = vunpack.c.h.b16 %v5066
        %v5154 = vunpack.c.l.b16 %v5067
        %v5155 = vunpack.c.h.b16 %v5067
        %v5156 = vunpack.c.l.b16 %v5068
        %v5157 = vunpack.c.h.b16 %v5068
        %v5158 = vunpack.c.l.b16 %v5069
        %v5159 = vunpack.c.h.b16 %v5069
        %v5160 = vunpack.c.l.b16 %v5070
        %v5161 = vunpack.c.h.b16 %v5070
        %v5162 = vunpack.c.l.b16 %v5071
        %v5163 = vunpack.c.h.b16 %v5071
        %v5164 = vunpack.c.l.b16 %v5072
        %v5165 = vunpack.c.h.b16 %v5072
        %v5166 = vunpack.c.l.b16 %v5073
        %v5167 = vunpack.c.h.b16 %v5073
        %v5168 = vunpack.c.l.b16 %v5074
        %v5169 = vunpack.c.h.b16 %v5074
        %v5170 = vunpack.c.l.b16 %v5075
        %v5171 = vunpack.c.h.b16 %v5075
        %v5172 = vpack.c.b16 %v5110, %v5108
        %v5173 = vpack.c.b16 %v5111, %v5109
        %v5174 = vpack.c.b16 %v5114, %v5112
        %v5175 = vpack.c.b16 %v5115, %v5113
        %v5176 = vpack.c.b16 %v5118, %v5116
        %v5177 = vpack.c.b16 %v5119, %v5117
        %v5178 = vpack.c.b16 %v5122, %v5120
        %v5179 = vpack.c.b16 %v5123, %v5121
        %v5180 = vpack.c.b16 %v5126, %v5124
        %v5181 = vpack.c.b16 %v5127, %v5125
        %v5182 = vpack.c.b16 %v5130, %v5128
        %v5183 = vpack.c.b16 %v5131, %v5129
        %v5184 = vpack.c.b16 %v5134, %v5132
        %v5185 = vpack.c.b16 %v5135, %v5133
        %v5186 = vpack.c.b16 %v5138, %v5136
        %v5187 = vpack.c.b16 %v5139, %v5137
        %v5188 = vpack.c.b16 %v5142, %v5140
        %v5189 = vpack.c.b16 %v5143, %v5141
        %v5190 = vpack.c.b16 %v5146, %v5144
        %v5191 = vpack.c.b16 %v5147, %v5145
        %v5192 = vpack.c.b16 %v5150, %v5148
        %v5193 = vpack.c.b16 %v5151, %v5149
        %v5194 = vpack.c.b16 %v5154, %v5152
        %v5195 = vpack.c.b16 %v5155, %v5153
        %v5196 = vpack.c.b16 %v5158, %v5156
        %v5197 = vpack.c.b16 %v5159, %v5157
        %v5198 = vpack.c.b16 %v5162, %v5160
        %v5199 = vpack.c.b16 %v5163, %v5161
        %v5200 = vpack.c.b16 %v5166, %v5164
        %v5201 = vpack.c.b16 %v5167, %v5165
        %v5202 = vpack.c.b16 %v5170, %v5168
        %v5203 = vpack.c.b16 %v5171, %v5169
        %5236 = vmatprep.subr.bf16.mxu0 %v5173
        %5237 = vmatpush1.bf16.msra.mxu0 %v5172
        %5238 = vmatprep.subr.bf16.mxu0 %v5175
        %5239 = vmatpush1.bf16.msra.mxu0 %v5174
        %5240 = vmatprep.subr.bf16.mxu0 %v5177
        %5241 = vmatpush1.bf16.msra.mxu0 %v5176
        %5242 = vmatprep.subr.bf16.mxu0 %v5179
        %5243 = vmatpush1.bf16.msra.mxu0 %v5178
        %5244 = vmatprep.subr.bf16.mxu0 %v5181
        %5245 = vmatpush1.bf16.msra.mxu0 %v5180
        %5246 = vmatprep.subr.bf16.mxu0 %v5183
        %5247 = vmatpush1.bf16.msra.mxu0 %v5182
        %5248 = vmatprep.subr.bf16.mxu0 %v5185
        %5249 = vmatpush1.bf16.msra.mxu0 %v5184
        %5250 = vmatprep.subr.bf16.mxu0 %v5187
        %5251 = vmatpush1.bf16.msra.mxu0 %v5186
        %5252 = vmatprep.subr.bf16.mxu0 %v5189
        %5253 = vmatpush1.bf16.msra.mxu0 %v5188
        %5254 = vmatprep.subr.bf16.mxu0 %v5191
        %5255 = vmatpush1.bf16.msra.mxu0 %v5190
        %5256 = vmatprep.subr.bf16.mxu0 %v5193
        %5257 = vmatpush1.bf16.msra.mxu0 %v5192
        %5258 = vmatprep.subr.bf16.mxu0 %v5195
        %5259 = vmatpush1.bf16.msra.mxu0 %v5194
        %5260 = vmatprep.subr.bf16.mxu0 %v5197
        %5261 = vmatpush1.bf16.msra.mxu0 %v5196
        %5262 = vmatprep.subr.bf16.mxu0 %v5199
        %5263 = vmatpush1.bf16.msra.mxu0 %v5198
        %5264 = vmatprep.subr.bf16.mxu0 %v5201
        %5265 = vmatpush1.bf16.msra.mxu0 %v5200
        %5266 = vmatprep.subr.bf16.mxu0 %v5203
        %5267 = vmatpush1.bf16.msra.mxu0 %v5202
        %5268 = vmatprep.mubr.bf16.mxu0 %v5042
        %5269 = vmatmul.mubr.bf16.gmra.mrb[0].mxu0 %v5041
        %v5270 = vpop.f32.mrb[0].mxu0
        %v5271 = vadd.f32 0.0, %v5270
        %v5272 = vpop.f32.mrb[0].mxu0
        %v5273 = vadd.f32 0.0, %v5272
        %v5274 = vpop.f32.mrb[0].mxu0
        %v5275 = vpop.f32.mrb[0].mxu0
        %5276 = vdwg.mxu0
        %v5277 = vadd.f32 %v4998, %v5271
        %v5278 = vadd.f32 %v4999, %v5273
        %5279 = vmatprep.subr.bf16.mxu0 %v4720
        %5280 = vmatpush1.bf16.msra.mxu0 %v4717
        %5281 = vmatprep.subr.bf16.mxu0 0
        %5282 = vmatpush1.bf16.msra.mxu0 0
        %5283 = vmatprep.subr.bf16.mxu0 0
        %5284 = vmatpush1.bf16.msra.mxu0 0
        %5285 = vmatprep.subr.bf16.mxu0 0
        %5286 = vmatpush1.bf16.msra.mxu0 0
        %5287 = vmatprep.subr.bf16.mxu0 0
        %5288 = vmatpush1.bf16.msra.mxu0 0
        %5289 = vmatprep.subr.bf16.mxu0 0
        %5290 = vmatpush1.bf16.msra.mxu0 0
        %5291 = vmatprep.subr.bf16.mxu0 0
        %5292 = vmatpush1.bf16.msra.mxu0 0
        %5293 = vmatprep.subr.bf16.mxu0 0
        %5294 = vmatpush1.bf16.msra.mxu0 0
        %5295 = vmatprep.subr.bf16.mxu0 0
        %5296 = vmatpush1.bf16.msra.mxu0 0
        %5297 = vmatprep.subr.bf16.mxu0 0
        %5298 = vmatpush1.bf16.msra.mxu0 0
        %5299 = vmatprep.subr.bf16.mxu0 0
        %5300 = vmatpush1.bf16.msra.mxu0 0
        %5301 = vmatprep.subr.bf16.mxu0 0
        %5302 = vmatpush1.bf16.msra.mxu0 0
        %5303 = vmatprep.subr.bf16.mxu0 0
        %5304 = vmatpush1.bf16.msra.mxu0 0
        %5305 = vmatprep.subr.bf16.mxu0 0
        %5306 = vmatpush1.bf16.msra.mxu0 0
        %5307 = vmatprep.subr.bf16.mxu0 0
        %5308 = vmatpush1.bf16.msra.mxu0 0
        %5309 = vmatprep.subr.bf16.mxu0 0
        %5310 = vmatpush1.bf16.msra.mxu0 0
        %5311 = vmatprep.mubr.bf16.mxu0 0
        %5312 = vmatmul.mubr.bf16.gmra.mrb[0].mxu0 %v4516
        %v5313 = vpop.f32.mrb[0].mxu0
        %v5314 = vadd.f32 0.0, %v5313
        %v5315 = vpop.f32.mrb[0].mxu0
        %v5316 = vadd.f32 0.0, %v5315
        %v5317 = vpop.f32.mrb[0].mxu0
        %v5318 = vpop.f32.mrb[0].mxu0
        %5319 = vdwg.mxu0
        %v5320 = vpack.c.bf16 %v5314, %v5314
        %v5321 = vpack.c.bf16 %v5316, %v5316
        %s5322 = scalar_lea.vmem %s11, 512
        %v5323 = vld [vmem:[%s5322] sm:$0xff]
        %v5324 = vld [vmem:[%s5322 + $0x8] sm:$0xff]
        %v5325 = vld [vmem:[%s5322 + $0x10] sm:$0xff]
        %v5326 = vld [vmem:[%s5322 + $0x18] sm:$0xff]
        %v5327 = vld [vmem:[%s5322 + $0x20] sm:$0xff]
        %v5328 = vld [vmem:[%s5322 + $0x28] sm:$0xff]
        %v5329 = vld [vmem:[%s5322 + $0x30] sm:$0xff]
        %v5330 = vld [vmem:[%s5322 + $0x38] sm:$0xff]
        %v5331 = vld [vmem:[%s5322 + $0x40] sm:$0xff]
        %v5332 = vld [vmem:[%s5322 + $0x48] sm:$0xff]
        %v5333 = vld [vmem:[%s5322 + $0x50] sm:$0xff]
        %v5334 = vld [vmem:[%s5322 + $0x58] sm:$0xff]
        %v5335 = vld [vmem:[%s5322 + $0x60] sm:$0xff]
        %v5336 = vld [vmem:[%s5322 + $0x68] sm:$0xff]
        %v5337 = vld [vmem:[%s5322 + $0x70] sm:$0xff]
        %v5338 = vld [vmem:[%s5322 + $0x78] sm:$0xff]
        %v5339 = vld [vmem:[%s5322 + $0x80] sm:$0xff]
        %v5340 = vld [vmem:[%s5322 + $0x88] sm:$0xff]
        %v5341 = vld [vmem:[%s5322 + $0x90] sm:$0xff]
        %v5342 = vld [vmem:[%s5322 + $0x98] sm:$0xff]
        %v5343 = vld [vmem:[%s5322 + $0xa0] sm:$0xff]
        %v5344 = vld [vmem:[%s5322 + $0xa8] sm:$0xff]
        %v5345 = vld [vmem:[%s5322 + $0xb0] sm:$0xff]
        %v5346 = vld [vmem:[%s5322 + $0xb8] sm:$0xff]
        %v5347 = vld [vmem:[%s5322 + $0xc0] sm:$0xff]
        %v5348 = vld [vmem:[%s5322 + $0xc8] sm:$0xff]
        %v5349 = vld [vmem:[%s5322 + $0xd0] sm:$0xff]
        %v5350 = vld [vmem:[%s5322 + $0xd8] sm:$0xff]
        %v5351 = vld [vmem:[%s5322 + $0xe0] sm:$0xff]
        %v5352 = vld [vmem:[%s5322 + $0xe8] sm:$0xff]
        %v5353 = vld [vmem:[%s5322 + $0xf0] sm:$0xff]
        %v5354 = vld [vmem:[%s5322 + $0xf8] sm:$0xff]
        %v5387 = vunpack.c.l.b16 %v5323
        %v5388 = vunpack.c.h.b16 %v5323
        %v5389 = vunpack.c.l.b16 %v5324
        %v5390 = vunpack.c.h.b16 %v5324
        %v5391 = vunpack.c.l.b16 %v5325
        %v5392 = vunpack.c.h.b16 %v5325
        %v5393 = vunpack.c.l.b16 %v5326
        %v5394 = vunpack.c.h.b16 %v5326
        %v5395 = vunpack.c.l.b16 %v5327
        %v5396 = vunpack.c.h.b16 %v5327
        %v5397 = vunpack.c.l.b16 %v5328
        %v5398 = vunpack.c.h.b16 %v5328
        %v5399 = vunpack.c.l.b16 %v5329
        %v5400 = vunpack.c.h.b16 %v5329
        %v5401 = vunpack.c.l.b16 %v5330
        %v5402 = vunpack.c.h.b16 %v5330
        %v5403 = vunpack.c.l.b16 %v5331
        %v5404 = vunpack.c.h.b16 %v5331
        %v5405 = vunpack.c.l.b16 %v5332
        %v5406 = vunpack.c.h.b16 %v5332
        %v5407 = vunpack.c.l.b16 %v5333
        %v5408 = vunpack.c.h.b16 %v5333
        %v5409 = vunpack.c.l.b16 %v5334
        %v5410 = vunpack.c.h.b16 %v5334
        %v5411 = vunpack.c.l.b16 %v5335
        %v5412 = vunpack.c.h.b16 %v5335
        %v5413 = vunpack.c.l.b16 %v5336
        %v5414 = vunpack.c.h.b16 %v5336
        %v5415 = vunpack.c.l.b16 %v5337
        %v5416 = vunpack.c.h.b16 %v5337
        %v5417 = vunpack.c.l.b16 %v5338
        %v5418 = vunpack.c.h.b16 %v5338
        %v5419 = vunpack.c.l.b16 %v5339
        %v5420 = vunpack.c.h.b16 %v5339
        %v5421 = vunpack.c.l.b16 %v5340
        %v5422 = vunpack.c.h.b16 %v5340
        %v5423 = vunpack.c.l.b16 %v5341
        %v5424 = vunpack.c.h.b16 %v5341
        %v5425 = vunpack.c.l.b16 %v5342
        %v5426 = vunpack.c.h.b16 %v5342
        %v5427 = vunpack.c.l.b16 %v5343
        %v5428 = vunpack.c.h.b16 %v5343
        %v5429 = vunpack.c.l.b16 %v5344
        %v5430 = vunpack.c.h.b16 %v5344
        %v5431 = vunpack.c.l.b16 %v5345
        %v5432 = vunpack.c.h.b16 %v5345
        %v5433 = vunpack.c.l.b16 %v5346
        %v5434 = vunpack.c.h.b16 %v5346
        %v5435 = vunpack.c.l.b16 %v5347
        %v5436 = vunpack.c.h.b16 %v5347
        %v5437 = vunpack.c.l.b16 %v5348
        %v5438 = vunpack.c.h.b16 %v5348
        %v5439 = vunpack.c.l.b16 %v5349
        %v5440 = vunpack.c.h.b16 %v5349
        %v5441 = vunpack.c.l.b16 %v5350
        %v5442 = vunpack.c.h.b16 %v5350
        %v5443 = vunpack.c.l.b16 %v5351
        %v5444 = vunpack.c.h.b16 %v5351
        %v5445 = vunpack.c.l.b16 %v5352
        %v5446 = vunpack.c.h.b16 %v5352
        %v5447 = vunpack.c.l.b16 %v5353
        %v5448 = vunpack.c.h.b16 %v5353
        %v5449 = vunpack.c.l.b16 %v5354
        %v5450 = vunpack.c.h.b16 %v5354
        %v5451 = vpack.c.b16 %v5389, %v5387
        %v5452 = vpack.c.b16 %v5390, %v5388
        %v5453 = vpack.c.b16 %v5393, %v5391
        %v5454 = vpack.c.b16 %v5394, %v5392
        %v5455 = vpack.c.b16 %v5397, %v5395
        %v5456 = vpack.c.b16 %v5398, %v5396
        %v5457 = vpack.c.b16 %v5401, %v5399
        %v5458 = vpack.c.b16 %v5402, %v5400
        %v5459 = vpack.c.b16 %v5405, %v5403
        %v5460 = vpack.c.b16 %v5406, %v5404
        %v5461 = vpack.c.b16 %v5409, %v5407
        %v5462 = vpack.c.b16 %v5410, %v5408
        %v5463 = vpack.c.b16 %v5413, %v5411
        %v5464 = vpack.c.b16 %v5414, %v5412
        %v5465 = vpack.c.b16 %v5417, %v5415
        %v5466 = vpack.c.b16 %v5418, %v5416
        %v5467 = vpack.c.b16 %v5421, %v5419
        %v5468 = vpack.c.b16 %v5422, %v5420
        %v5469 = vpack.c.b16 %v5425, %v5423
        %v5470 = vpack.c.b16 %v5426, %v5424
        %v5471 = vpack.c.b16 %v5429, %v5427
        %v5472 = vpack.c.b16 %v5430, %v5428
        %v5473 = vpack.c.b16 %v5433, %v5431
        %v5474 = vpack.c.b16 %v5434, %v5432
        %v5475 = vpack.c.b16 %v5437, %v5435
        %v5476 = vpack.c.b16 %v5438, %v5436
        %v5477 = vpack.c.b16 %v5441, %v5439
        %v5478 = vpack.c.b16 %v5442, %v5440
        %v5479 = vpack.c.b16 %v5445, %v5443
        %v5480 = vpack.c.b16 %v5446, %v5444
        %v5481 = vpack.c.b16 %v5449, %v5447
        %v5482 = vpack.c.b16 %v5450, %v5448
        %5515 = vmatprep.subr.bf16.mxu0 %v5452
        %5516 = vmatpush1.bf16.msra.mxu0 %v5451
        %5517 = vmatprep.subr.bf16.mxu0 %v5454
        %5518 = vmatpush1.bf16.msra.mxu0 %v5453
        %5519 = vmatprep.subr.bf16.mxu0 %v5456
        %5520 = vmatpush1.bf16.msra.mxu0 %v5455
        %5521 = vmatprep.subr.bf16.mxu0 %v5458
        %5522 = vmatpush1.bf16.msra.mxu0 %v5457
        %5523 = vmatprep.subr.bf16.mxu0 %v5460
        %5524 = vmatpush1.bf16.msra.mxu0 %v5459
        %5525 = vmatprep.subr.bf16.mxu0 %v5462
        %5526 = vmatpush1.bf16.msra.mxu0 %v5461
        %5527 = vmatprep.subr.bf16.mxu0 %v5464
        %5528 = vmatpush1.bf16.msra.mxu0 %v5463
        %5529 = vmatprep.subr.bf16.mxu0 %v5466
        %5530 = vmatpush1.bf16.msra.mxu0 %v5465
        %5531 = vmatprep.subr.bf16.mxu0 %v5468
        %5532 = vmatpush1.bf16.msra.mxu0 %v5467
        %5533 = vmatprep.subr.bf16.mxu0 %v5470
        %5534 = vmatpush1.bf16.msra.mxu0 %v5469
        %5535 = vmatprep.subr.bf16.mxu0 %v5472
        %5536 = vmatpush1.bf16.msra.mxu0 %v5471
        %5537 = vmatprep.subr.bf16.mxu0 %v5474
        %5538 = vmatpush1.bf16.msra.mxu0 %v5473
        %5539 = vmatprep.subr.bf16.mxu0 %v5476
        %5540 = vmatpush1.bf16.msra.mxu0 %v5475
        %5541 = vmatprep.subr.bf16.mxu0 %v5478
        %5542 = vmatpush1.bf16.msra.mxu0 %v5477
        %5543 = vmatprep.subr.bf16.mxu0 %v5480
        %5544 = vmatpush1.bf16.msra.mxu0 %v5479
        %5545 = vmatprep.subr.bf16.mxu0 %v5482
        %5546 = vmatpush1.bf16.msra.mxu0 %v5481
        %5547 = vmatprep.mubr.bf16.mxu0 %v5321
        %5548 = vmatmul.mubr.bf16.gmra.mrb[0].mxu0 %v5320
        %v5549 = vpop.f32.mrb[0].mxu0
        %v5550 = vadd.f32 0.0, %v5549
        %v5551 = vpop.f32.mrb[0].mxu0
        %v5552 = vadd.f32 0.0, %v5551
        %v5553 = vpop.f32.mrb[0].mxu0
        %v5554 = vpop.f32.mrb[0].mxu0
        %5555 = vdwg.mxu0
        %v5556 = vadd.f32 %v5277, %v5550
        %v5557 = vadd.f32 %v5278, %v5552
        %vm5558 = vcmp.ge.f32.partialorder %v5556, 0.0
        %vm5559 = vcmp.ge.f32.partialorder %v5557, 0.0
        %s5560 = scalar_lea.vmem %s13, 8
        %v5561 = vld [vmem:[%s5560] sm:$0xff]
        %5563 = vset.pattern.permute.xlu0 0
        %5564 = vperm.xlu0 %5563, %v5561
        %v5565 = vpop.permute.xlu0 %5564
        %v5567 = vmul.f32 %v5565, %v5556
        %v5568 = vmul.f32 %v5565, %v5557
        %v5569 = vsel %vm5558, %v5556, %v5567
        %v5570 = vsel %vm5559, %v5557, %v5568
        %v5571 = vadd.f32 %v5569, %v4709
        %v5572 = vadd.f32 %v5570, %v4710
        %v5573 = vpack.c.bf16 %v5571, %v5571
        %v5574 = vpack.c.bf16 %v5572, %v5572
        %s5575 = scalar_lea.vmem [#allocation10], 32
        %v5576 = vld [vmem:[%s5575] sm:$0xff]
        %v5577 = vld [vmem:[%s5575 + $0x8] sm:$0xff]
        %v5579 = vsel %vm661, %v5573, 0
        %v5582 = vsel %vm661, %v5574, 0
        %5584 = vmatprep.subr.bf16.mxu0 %v5582
        %5585 = vmatpush1.bf16.msra.mxu0 %v5579
        %5586 = vmatprep.subr.bf16.mxu0 0
        %5587 = vmatpush1.bf16.msra.mxu0 0
        %5588 = vmatprep.subr.bf16.mxu0 0
        %5589 = vmatpush1.bf16.msra.mxu0 0
        %5590 = vmatprep.subr.bf16.mxu0 0
        %5591 = vmatpush1.bf16.msra.mxu0 0
        %5592 = vmatprep.subr.bf16.mxu0 0
        %5593 = vmatpush1.bf16.msra.mxu0 0
        %5594 = vmatprep.subr.bf16.mxu0 0
        %5595 = vmatpush1.bf16.msra.mxu0 0
        %5596 = vmatprep.subr.bf16.mxu0 0
        %5597 = vmatpush1.bf16.msra.mxu0 0
        %5598 = vmatprep.subr.bf16.mxu0 0
        %5599 = vmatpush1.bf16.msra.mxu0 0
        %5600 = vmatprep.subr.bf16.mxu0 0
        %5601 = vmatpush1.bf16.msra.mxu0 0
        %5602 = vmatprep.subr.bf16.mxu0 0
        %5603 = vmatpush1.bf16.msra.mxu0 0
        %5604 = vmatprep.subr.bf16.mxu0 0
        %5605 = vmatpush1.bf16.msra.mxu0 0
        %5606 = vmatprep.subr.bf16.mxu0 0
        %5607 = vmatpush1.bf16.msra.mxu0 0
        %5608 = vmatprep.subr.bf16.mxu0 0
        %5609 = vmatpush1.bf16.msra.mxu0 0
        %5610 = vmatprep.subr.bf16.mxu0 0
        %5611 = vmatpush1.bf16.msra.mxu0 0
        %5612 = vmatprep.subr.bf16.mxu0 0
        %5613 = vmatpush1.bf16.msra.mxu0 0
        %5614 = vmatprep.subr.bf16.mxu0 0
        %5615 = vmatpush1.bf16.msra.mxu0 0
        %5616 = vmatprep.mubr.bf16.mxu0 0
        %5617 = vmatmul.mubr.bf16.gmra.mrb[0].mxu0 %v4142
        %v5618 = vpop.f32.mrb[0].mxu0
        %v5619 = vadd.f32 0.0, %v5618
        %v5620 = vpop.f32.mrb[0].mxu0
        %v5621 = vadd.f32 0.0, %v5620
        %v5622 = vpop.f32.mrb[0].mxu0
        %v5623 = vpop.f32.mrb[0].mxu0
        %5624 = vdwg.mxu0
        %v5625 = vpack.c.bf16 %v5619, %v5619
        %v5626 = vpack.c.bf16 %v5621, %v5621
        %s5627 = scalar_lea.vmem %s11, 768
        %v5628 = vld [vmem:[%s5627] sm:$0xff]
        %v5629 = vld [vmem:[%s5627 + $0x8] sm:$0xff]
        %v5630 = vld [vmem:[%s5627 + $0x10] sm:$0xff]
        %v5631 = vld [vmem:[%s5627 + $0x18] sm:$0xff]
        %v5632 = vld [vmem:[%s5627 + $0x20] sm:$0xff]
        %v5633 = vld [vmem:[%s5627 + $0x28] sm:$0xff]
        %v5634 = vld [vmem:[%s5627 + $0x30] sm:$0xff]
        %v5635 = vld [vmem:[%s5627 + $0x38] sm:$0xff]
        %v5636 = vld [vmem:[%s5627 + $0x40] sm:$0xff]
        %v5637 = vld [vmem:[%s5627 + $0x48] sm:$0xff]
        %v5638 = vld [vmem:[%s5627 + $0x50] sm:$0xff]
        %v5639 = vld [vmem:[%s5627 + $0x58] sm:$0xff]
        %v5640 = vld [vmem:[%s5627 + $0x60] sm:$0xff]
        %v5641 = vld [vmem:[%s5627 + $0x68] sm:$0xff]
        %v5642 = vld [vmem:[%s5627 + $0x70] sm:$0xff]
        %v5643 = vld [vmem:[%s5627 + $0x78] sm:$0xff]
        %v5644 = vld [vmem:[%s5627 + $0x80] sm:$0xff]
        %v5645 = vld [vmem:[%s5627 + $0x88] sm:$0xff]
        %v5646 = vld [vmem:[%s5627 + $0x90] sm:$0xff]
        %v5647 = vld [vmem:[%s5627 + $0x98] sm:$0xff]
        %v5648 = vld [vmem:[%s5627 + $0xa0] sm:$0xff]
        %v5649 = vld [vmem:[%s5627 + $0xa8] sm:$0xff]
        %v5650 = vld [vmem:[%s5627 + $0xb0] sm:$0xff]
        %v5651 = vld [vmem:[%s5627 + $0xb8] sm:$0xff]
        %v5652 = vld [vmem:[%s5627 + $0xc0] sm:$0xff]
        %v5653 = vld [vmem:[%s5627 + $0xc8] sm:$0xff]
        %v5654 = vld [vmem:[%s5627 + $0xd0] sm:$0xff]
        %v5655 = vld [vmem:[%s5627 + $0xd8] sm:$0xff]
        %v5656 = vld [vmem:[%s5627 + $0xe0] sm:$0xff]
        %v5657 = vld [vmem:[%s5627 + $0xe8] sm:$0xff]
        %v5658 = vld [vmem:[%s5627 + $0xf0] sm:$0xff]
        %v5659 = vld [vmem:[%s5627 + $0xf8] sm:$0xff]
        %v5692 = vunpack.c.l.b16 %v5628
        %v5693 = vunpack.c.h.b16 %v5628
        %v5694 = vunpack.c.l.b16 %v5629
        %v5695 = vunpack.c.h.b16 %v5629
        %v5696 = vunpack.c.l.b16 %v5630
        %v5697 = vunpack.c.h.b16 %v5630
        %v5698 = vunpack.c.l.b16 %v5631
        %v5699 = vunpack.c.h.b16 %v5631
        %v5700 = vunpack.c.l.b16 %v5632
        %v5701 = vunpack.c.h.b16 %v5632
        %v5702 = vunpack.c.l.b16 %v5633
        %v5703 = vunpack.c.h.b16 %v5633
        %v5704 = vunpack.c.l.b16 %v5634
        %v5705 = vunpack.c.h.b16 %v5634
        %v5706 = vunpack.c.l.b16 %v5635
        %v5707 = vunpack.c.h.b16 %v5635
        %v5708 = vunpack.c.l.b16 %v5636
        %v5709 = vunpack.c.h.b16 %v5636
        %v5710 = vunpack.c.l.b16 %v5637
        %v5711 = vunpack.c.h.b16 %v5637
        %v5712 = vunpack.c.l.b16 %v5638
        %v5713 = vunpack.c.h.b16 %v5638
        %v5714 = vunpack.c.l.b16 %v5639
        %v5715 = vunpack.c.h.b16 %v5639
        %v5716 = vunpack.c.l.b16 %v5640
        %v5717 = vunpack.c.h.b16 %v5640
        %v5718 = vunpack.c.l.b16 %v5641
        %v5719 = vunpack.c.h.b16 %v5641
        %v5720 = vunpack.c.l.b16 %v5642
        %v5721 = vunpack.c.h.b16 %v5642
        %v5722 = vunpack.c.l.b16 %v5643
        %v5723 = vunpack.c.h.b16 %v5643
        %v5724 = vunpack.c.l.b16 %v5644
        %v5725 = vunpack.c.h.b16 %v5644
        %v5726 = vunpack.c.l.b16 %v5645
        %v5727 = vunpack.c.h.b16 %v5645
        %v5728 = vunpack.c.l.b16 %v5646
        %v5729 = vunpack.c.h.b16 %v5646
        %v5730 = vunpack.c.l.b16 %v5647
        %v5731 = vunpack.c.h.b16 %v5647
        %v5732 = vunpack.c.l.b16 %v5648
        %v5733 = vunpack.c.h.b16 %v5648
        %v5734 = vunpack.c.l.b16 %v5649
        %v5735 = vunpack.c.h.b16 %v5649
        %v5736 = vunpack.c.l.b16 %v5650
        %v5737 = vunpack.c.h.b16 %v5650
        %v5738 = vunpack.c.l.b16 %v5651
        %v5739 = vunpack.c.h.b16 %v5651
        %v5740 = vunpack.c.l.b16 %v5652
        %v5741 = vunpack.c.h.b16 %v5652
        %v5742 = vunpack.c.l.b16 %v5653
        %v5743 = vunpack.c.h.b16 %v5653
        %v5744 = vunpack.c.l.b16 %v5654
        %v5745 = vunpack.c.h.b16 %v5654
        %v5746 = vunpack.c.l.b16 %v5655
        %v5747 = vunpack.c.h.b16 %v5655
        %v5748 = vunpack.c.l.b16 %v5656
        %v5749 = vunpack.c.h.b16 %v5656
        %v5750 = vunpack.c.l.b16 %v5657
        %v5751 = vunpack.c.h.b16 %v5657
        %v5752 = vunpack.c.l.b16 %v5658
        %v5753 = vunpack.c.h.b16 %v5658
        %v5754 = vunpack.c.l.b16 %v5659
        %v5755 = vunpack.c.h.b16 %v5659
        %v5756 = vpack.c.b16 %v5694, %v5692
        %v5757 = vpack.c.b16 %v5695, %v5693
        %v5758 = vpack.c.b16 %v5698, %v5696
        %v5759 = vpack.c.b16 %v5699, %v5697
        %v5760 = vpack.c.b16 %v5702, %v5700
        %v5761 = vpack.c.b16 %v5703, %v5701
        %v5762 = vpack.c.b16 %v5706, %v5704
        %v5763 = vpack.c.b16 %v5707, %v5705
        %v5764 = vpack.c.b16 %v5710, %v5708
        %v5765 = vpack.c.b16 %v5711, %v5709
        %v5766 = vpack.c.b16 %v5714, %v5712
        %v5767 = vpack.c.b16 %v5715, %v5713
        %v5768 = vpack.c.b16 %v5718, %v5716
        %v5769 = vpack.c.b16 %v5719, %v5717
        %v5770 = vpack.c.b16 %v5722, %v5720
        %v5771 = vpack.c.b16 %v5723, %v5721
        %v5772 = vpack.c.b16 %v5726, %v5724
        %v5773 = vpack.c.b16 %v5727, %v5725
        %v5774 = vpack.c.b16 %v5730, %v5728
        %v5775 = vpack.c.b16 %v5731, %v5729
        %v5776 = vpack.c.b16 %v5734, %v5732
        %v5777 = vpack.c.b16 %v5735, %v5733
        %v5778 = vpack.c.b16 %v5738, %v5736
        %v5779 = vpack.c.b16 %v5739, %v5737
        %v5780 = vpack.c.b16 %v5742, %v5740
        %v5781 = vpack.c.b16 %v5743, %v5741
        %v5782 = vpack.c.b16 %v5746, %v5744
        %v5783 = vpack.c.b16 %v5747, %v5745
        %v5784 = vpack.c.b16 %v5750, %v5748
        %v5785 = vpack.c.b16 %v5751, %v5749
        %v5786 = vpack.c.b16 %v5754, %v5752
        %v5787 = vpack.c.b16 %v5755, %v5753
        %5820 = vmatprep.subr.bf16.mxu0 %v5757
        %5821 = vmatpush1.bf16.msra.mxu0 %v5756
        %5822 = vmatprep.subr.bf16.mxu0 %v5759
        %5823 = vmatpush1.bf16.msra.mxu0 %v5758
        %5824 = vmatprep.subr.bf16.mxu0 %v5761
        %5825 = vmatpush1.bf16.msra.mxu0 %v5760
        %5826 = vmatprep.subr.bf16.mxu0 %v5763
        %5827 = vmatpush1.bf16.msra.mxu0 %v5762
        %5828 = vmatprep.subr.bf16.mxu0 %v5765
        %5829 = vmatpush1.bf16.msra.mxu0 %v5764
        %5830 = vmatprep.subr.bf16.mxu0 %v5767
        %5831 = vmatpush1.bf16.msra.mxu0 %v5766
        %5832 = vmatprep.subr.bf16.mxu0 %v5769
        %5833 = vmatpush1.bf16.msra.mxu0 %v5768
        %5834 = vmatprep.subr.bf16.mxu0 %v5771
        %5835 = vmatpush1.bf16.msra.mxu0 %v5770
        %5836 = vmatprep.subr.bf16.mxu0 %v5773
        %5837 = vmatpush1.bf16.msra.mxu0 %v5772
        %5838 = vmatprep.subr.bf16.mxu0 %v5775
        %5839 = vmatpush1.bf16.msra.mxu0 %v5774
        %5840 = vmatprep.subr.bf16.mxu0 %v5777
        %5841 = vmatpush1.bf16.msra.mxu0 %v5776
        %5842 = vmatprep.subr.bf16.mxu0 %v5779
        %5843 = vmatpush1.bf16.msra.mxu0 %v5778
        %5844 = vmatprep.subr.bf16.mxu0 %v5781
        %5845 = vmatpush1.bf16.msra.mxu0 %v5780
        %5846 = vmatprep.subr.bf16.mxu0 %v5783
        %5847 = vmatpush1.bf16.msra.mxu0 %v5782
        %5848 = vmatprep.subr.bf16.mxu0 %v5785
        %5849 = vmatpush1.bf16.msra.mxu0 %v5784
        %5850 = vmatprep.subr.bf16.mxu0 %v5787
        %5851 = vmatpush1.bf16.msra.mxu0 %v5786
        %5852 = vmatprep.mubr.bf16.mxu0 %v5626
        %5853 = vmatmul.mubr.bf16.gmra.mrb[0].mxu0 %v5625
        %v5854 = vpop.f32.mrb[0].mxu0
        %v5855 = vadd.f32 0.0, %v5854
        %v5856 = vpop.f32.mrb[0].mxu0
        %v5857 = vadd.f32 0.0, %v5856
        %v5858 = vpop.f32.mrb[0].mxu0
        %v5859 = vpop.f32.mrb[0].mxu0
        %5860 = vdwg.mxu0
        %v5861 = vadd.f32 %v5576, %v5855
        %v5862 = vadd.f32 %v5577, %v5857
        %5863 = vmatprep.subr.bf16.mxu0 %v5582
        %5864 = vmatpush1.bf16.msra.mxu0 %v5579
        %5865 = vmatprep.subr.bf16.mxu0 0
        %5866 = vmatpush1.bf16.msra.mxu0 0
        %5867 = vmatprep.subr.bf16.mxu0 0
        %5868 = vmatpush1.bf16.msra.mxu0 0
        %5869 = vmatprep.subr.bf16.mxu0 0
        %5870 = vmatpush1.bf16.msra.mxu0 0
        %5871 = vmatprep.subr.bf16.mxu0 0
        %5872 = vmatpush1.bf16.msra.mxu0 0
        %5873 = vmatprep.subr.bf16.mxu0 0
        %5874 = vmatpush1.bf16.msra.mxu0 0
        %5875 = vmatprep.subr.bf16.mxu0 0
        %5876 = vmatpush1.bf16.msra.mxu0 0
        %5877 = vmatprep.subr.bf16.mxu0 0
        %5878 = vmatpush1.bf16.msra.mxu0 0
        %5879 = vmatprep.subr.bf16.mxu0 0
        %5880 = vmatpush1.bf16.msra.mxu0 0
        %5881 = vmatprep.subr.bf16.mxu0 0
        %5882 = vmatpush1.bf16.msra.mxu0 0
        %5883 = vmatprep.subr.bf16.mxu0 0
        %5884 = vmatpush1.bf16.msra.mxu0 0
        %5885 = vmatprep.subr.bf16.mxu0 0
        %5886 = vmatpush1.bf16.msra.mxu0 0
        %5887 = vmatprep.subr.bf16.mxu0 0
        %5888 = vmatpush1.bf16.msra.mxu0 0
        %5889 = vmatprep.subr.bf16.mxu0 0
        %5890 = vmatpush1.bf16.msra.mxu0 0
        %5891 = vmatprep.subr.bf16.mxu0 0
        %5892 = vmatpush1.bf16.msra.mxu0 0
        %5893 = vmatprep.subr.bf16.mxu0 0
        %5894 = vmatpush1.bf16.msra.mxu0 0
        %5895 = vmatprep.mubr.bf16.mxu0 0
        %5896 = vmatmul.mubr.bf16.gmra.mrb[0].mxu0 %v4330
        %v5897 = vpop.f32.mrb[0].mxu0
        %v5898 = vadd.f32 0.0, %v5897
        %v5899 = vpop.f32.mrb[0].mxu0
        %v5900 = vadd.f32 0.0, %v5899
        %v5901 = vpop.f32.mrb[0].mxu0
        %v5902 = vpop.f32.mrb[0].mxu0
        %5903 = vdwg.mxu0
        %v5904 = vpack.c.bf16 %v5898, %v5898
        %v5905 = vpack.c.bf16 %v5900, %v5900
        %s5906 = scalar_lea.vmem %s11, 1024
        %v5907 = vld [vmem:[%s5906] sm:$0xff]
        %v5908 = vld [vmem:[%s5906 + $0x8] sm:$0xff]
        %v5909 = vld [vmem:[%s5906 + $0x10] sm:$0xff]
        %v5910 = vld [vmem:[%s5906 + $0x18] sm:$0xff]
        %v5911 = vld [vmem:[%s5906 + $0x20] sm:$0xff]
        %v5912 = vld [vmem:[%s5906 + $0x28] sm:$0xff]
        %v5913 = vld [vmem:[%s5906 + $0x30] sm:$0xff]
        %v5914 = vld [vmem:[%s5906 + $0x38] sm:$0xff]
        %v5915 = vld [vmem:[%s5906 + $0x40] sm:$0xff]
        %v5916 = vld [vmem:[%s5906 + $0x48] sm:$0xff]
        %v5917 = vld [vmem:[%s5906 + $0x50] sm:$0xff]
        %v5918 = vld [vmem:[%s5906 + $0x58] sm:$0xff]
        %v5919 = vld [vmem:[%s5906 + $0x60] sm:$0xff]
        %v5920 = vld [vmem:[%s5906 + $0x68] sm:$0xff]
        %v5921 = vld [vmem:[%s5906 + $0x70] sm:$0xff]
        %v5922 = vld [vmem:[%s5906 + $0x78] sm:$0xff]
        %v5923 = vld [vmem:[%s5906 + $0x80] sm:$0xff]
        %v5924 = vld [vmem:[%s5906 + $0x88] sm:$0xff]
        %v5925 = vld [vmem:[%s5906 + $0x90] sm:$0xff]
        %v5926 = vld [vmem:[%s5906 + $0x98] sm:$0xff]
        %v5927 = vld [vmem:[%s5906 + $0xa0] sm:$0xff]
        %v5928 = vld [vmem:[%s5906 + $0xa8] sm:$0xff]
        %v5929 = vld [vmem:[%s5906 + $0xb0] sm:$0xff]
        %v5930 = vld [vmem:[%s5906 + $0xb8] sm:$0xff]
        %v5931 = vld [vmem:[%s5906 + $0xc0] sm:$0xff]
        %v5932 = vld [vmem:[%s5906 + $0xc8] sm:$0xff]
        %v5933 = vld [vmem:[%s5906 + $0xd0] sm:$0xff]
        %v5934 = vld [vmem:[%s5906 + $0xd8] sm:$0xff]
        %v5935 = vld [vmem:[%s5906 + $0xe0] sm:$0xff]
        %v5936 = vld [vmem:[%s5906 + $0xe8] sm:$0xff]
        %v5937 = vld [vmem:[%s5906 + $0xf0] sm:$0xff]
        %v5938 = vld [vmem:[%s5906 + $0xf8] sm:$0xff]
        %v5971 = vunpack.c.l.b16 %v5907
        %v5972 = vunpack.c.h.b16 %v5907
        %v5973 = vunpack.c.l.b16 %v5908
        %v5974 = vunpack.c.h.b16 %v5908
        %v5975 = vunpack.c.l.b16 %v5909
        %v5976 = vunpack.c.h.b16 %v5909
        %v5977 = vunpack.c.l.b16 %v5910
        %v5978 = vunpack.c.h.b16 %v5910
        %v5979 = vunpack.c.l.b16 %v5911
        %v5980 = vunpack.c.h.b16 %v5911
        %v5981 = vunpack.c.l.b16 %v5912
        %v5982 = vunpack.c.h.b16 %v5912
        %v5983 = vunpack.c.l.b16 %v5913
        %v5984 = vunpack.c.h.b16 %v5913
        %v5985 = vunpack.c.l.b16 %v5914
        %v5986 = vunpack.c.h.b16 %v5914
        %v5987 = vunpack.c.l.b16 %v5915
        %v5988 = vunpack.c.h.b16 %v5915
        %v5989 = vunpack.c.l.b16 %v5916
        %v5990 = vunpack.c.h.b16 %v5916
        %v5991 = vunpack.c.l.b16 %v5917
        %v5992 = vunpack.c.h.b16 %v5917
        %v5993 = vunpack.c.l.b16 %v5918
        %v5994 = vunpack.c.h.b16 %v5918
        %v5995 = vunpack.c.l.b16 %v5919
        %v5996 = vunpack.c.h.b16 %v5919
        %v5997 = vunpack.c.l.b16 %v5920
        %v5998 = vunpack.c.h.b16 %v5920
        %v5999 = vunpack.c.l.b16 %v5921
        %v6000 = vunpack.c.h.b16 %v5921
        %v6001 = vunpack.c.l.b16 %v5922
        %v6002 = vunpack.c.h.b16 %v5922
        %v6003 = vunpack.c.l.b16 %v5923
        %v6004 = vunpack.c.h.b16 %v5923
        %v6005 = vunpack.c.l.b16 %v5924
        %v6006 = vunpack.c.h.b16 %v5924
        %v6007 = vunpack.c.l.b16 %v5925
        %v6008 = vunpack.c.h.b16 %v5925
        %v6009 = vunpack.c.l.b16 %v5926
        %v6010 = vunpack.c.h.b16 %v5926
        %v6011 = vunpack.c.l.b16 %v5927
        %v6012 = vunpack.c.h.b16 %v5927
        %v6013 = vunpack.c.l.b16 %v5928
        %v6014 = vunpack.c.h.b16 %v5928
        %v6015 = vunpack.c.l.b16 %v5929
        %v6016 = vunpack.c.h.b16 %v5929
        %v6017 = vunpack.c.l.b16 %v5930
        %v6018 = vunpack.c.h.b16 %v5930
        %v6019 = vunpack.c.l.b16 %v5931
        %v6020 = vunpack.c.h.b16 %v5931
        %v6021 = vunpack.c.l.b16 %v5932
        %v6022 = vunpack.c.h.b16 %v5932
        %v6023 = vunpack.c.l.b16 %v5933
        %v6024 = vunpack.c.h.b16 %v5933
        %v6025 = vunpack.c.l.b16 %v5934
        %v6026 = vunpack.c.h.b16 %v5934
        %v6027 = vunpack.c.l.b16 %v5935
        %v6028 = vunpack.c.h.b16 %v5935
        %v6029 = vunpack.c.l.b16 %v5936
        %v6030 = vunpack.c.h.b16 %v5936
        %v6031 = vunpack.c.l.b16 %v5937
        %v6032 = vunpack.c.h.b16 %v5937
        %v6033 = vunpack.c.l.b16 %v5938
        %v6034 = vunpack.c.h.b16 %v5938
        %v6035 = vpack.c.b16 %v5973, %v5971
        %v6036 = vpack.c.b16 %v5974, %v5972
        %v6037 = vpack.c.b16 %v5977, %v5975
        %v6038 = vpack.c.b16 %v5978, %v5976
        %v6039 = vpack.c.b16 %v5981, %v5979
        %v6040 = vpack.c.b16 %v5982, %v5980
        %v6041 = vpack.c.b16 %v5985, %v5983
        %v6042 = vpack.c.b16 %v5986, %v5984
        %v6043 = vpack.c.b16 %v5989, %v5987
        %v6044 = vpack.c.b16 %v5990, %v5988
        %v6045 = vpack.c.b16 %v5993, %v5991
        %v6046 = vpack.c.b16 %v5994, %v5992
        %v6047 = vpack.c.b16 %v5997, %v5995
        %v6048 = vpack.c.b16 %v5998, %v5996
        %v6049 = vpack.c.b16 %v6001, %v5999
        %v6050 = vpack.c.b16 %v6002, %v6000
        %v6051 = vpack.c.b16 %v6005, %v6003
        %v6052 = vpack.c.b16 %v6006, %v6004
        %v6053 = vpack.c.b16 %v6009, %v6007
        %v6054 = vpack.c.b16 %v6010, %v6008
        %v6055 = vpack.c.b16 %v6013, %v6011
        %v6056 = vpack.c.b16 %v6014, %v6012
        %v6057 = vpack.c.b16 %v6017, %v6015
        %v6058 = vpack.c.b16 %v6018, %v6016
        %v6059 = vpack.c.b16 %v6021, %v6019
        %v6060 = vpack.c.b16 %v6022, %v6020
        %v6061 = vpack.c.b16 %v6025, %v6023
        %v6062 = vpack.c.b16 %v6026, %v6024
        %v6063 = vpack.c.b16 %v6029, %v6027
        %v6064 = vpack.c.b16 %v6030, %v6028
        %v6065 = vpack.c.b16 %v6033, %v6031
        %v6066 = vpack.c.b16 %v6034, %v6032
        %6099 = vmatprep.subr.bf16.mxu0 %v6036
        %6100 = vmatpush1.bf16.msra.mxu0 %v6035
        %6101 = vmatprep.subr.bf16.mxu0 %v6038
        %6102 = vmatpush1.bf16.msra.mxu0 %v6037
        %6103 = vmatprep.subr.bf16.mxu0 %v6040
        %6104 = vmatpush1.bf16.msra.mxu0 %v6039
        %6105 = vmatprep.subr.bf16.mxu0 %v6042
        %6106 = vmatpush1.bf16.msra.mxu0 %v6041
        %6107 = vmatprep.subr.bf16.mxu0 %v6044
        %6108 = vmatpush1.bf16.msra.mxu0 %v6043
        %6109 = vmatprep.subr.bf16.mxu0 %v6046
        %6110 = vmatpush1.bf16.msra.mxu0 %v6045
        %6111 = vmatprep.subr.bf16.mxu0 %v6048
        %6112 = vmatpush1.bf16.msra.mxu0 %v6047
        %6113 = vmatprep.subr.bf16.mxu0 %v6050
        %6114 = vmatpush1.bf16.msra.mxu0 %v6049
        %6115 = vmatprep.subr.bf16.mxu0 %v6052
        %6116 = vmatpush1.bf16.msra.mxu0 %v6051
        %6117 = vmatprep.subr.bf16.mxu0 %v6054
        %6118 = vmatpush1.bf16.msra.mxu0 %v6053
        %6119 = vmatprep.subr.bf16.mxu0 %v6056
        %6120 = vmatpush1.bf16.msra.mxu0 %v6055
        %6121 = vmatprep.subr.bf16.mxu0 %v6058
        %6122 = vmatpush1.bf16.msra.mxu0 %v6057
        %6123 = vmatprep.subr.bf16.mxu0 %v6060
        %6124 = vmatpush1.bf16.msra.mxu0 %v6059
        %6125 = vmatprep.subr.bf16.mxu0 %v6062
        %6126 = vmatpush1.bf16.msra.mxu0 %v6061
        %6127 = vmatprep.subr.bf16.mxu0 %v6064
        %6128 = vmatpush1.bf16.msra.mxu0 %v6063
        %6129 = vmatprep.subr.bf16.mxu0 %v6066
        %6130 = vmatpush1.bf16.msra.mxu0 %v6065
        %6131 = vmatprep.mubr.bf16.mxu0 %v5905
        %6132 = vmatmul.mubr.bf16.gmra.mrb[0].mxu0 %v5904
        %v6133 = vpop.f32.mrb[0].mxu0
        %v6134 = vadd.f32 0.0, %v6133
        %v6135 = vpop.f32.mrb[0].mxu0
        %v6136 = vadd.f32 0.0, %v6135
        %v6137 = vpop.f32.mrb[0].mxu0
        %v6138 = vpop.f32.mrb[0].mxu0
        %6139 = vdwg.mxu0
        %v6140 = vadd.f32 %v5861, %v6134
        %v6141 = vadd.f32 %v5862, %v6136
        %6142 = vmatprep.subr.bf16.mxu0 %v5582
        %6143 = vmatpush1.bf16.msra.mxu0 %v5579
        %6144 = vmatprep.subr.bf16.mxu0 0
        %6145 = vmatpush1.bf16.msra.mxu0 0
        %6146 = vmatprep.subr.bf16.mxu0 0
        %6147 = vmatpush1.bf16.msra.mxu0 0
        %6148 = vmatprep.subr.bf16.mxu0 0
        %6149 = vmatpush1.bf16.msra.mxu0 0
        %6150 = vmatprep.subr.bf16.mxu0 0
        %6151 = vmatpush1.bf16.msra.mxu0 0
        %6152 = vmatprep.subr.bf16.mxu0 0
        %6153 = vmatpush1.bf16.msra.mxu0 0
        %6154 = vmatprep.subr.bf16.mxu0 0
        %6155 = vmatpush1.bf16.msra.mxu0 0
        %6156 = vmatprep.subr.bf16.mxu0 0
        %6157 = vmatpush1.bf16.msra.mxu0 0
        %6158 = vmatprep.subr.bf16.mxu0 0
        %6159 = vmatpush1.bf16.msra.mxu0 0
        %6160 = vmatprep.subr.bf16.mxu0 0
        %6161 = vmatpush1.bf16.msra.mxu0 0
        %6162 = vmatprep.subr.bf16.mxu0 0
        %6163 = vmatpush1.bf16.msra.mxu0 0
        %6164 = vmatprep.subr.bf16.mxu0 0
        %6165 = vmatpush1.bf16.msra.mxu0 0
        %6166 = vmatprep.subr.bf16.mxu0 0
        %6167 = vmatpush1.bf16.msra.mxu0 0
        %6168 = vmatprep.subr.bf16.mxu0 0
        %6169 = vmatpush1.bf16.msra.mxu0 0
        %6170 = vmatprep.subr.bf16.mxu0 0
        %6171 = vmatpush1.bf16.msra.mxu0 0
        %6172 = vmatprep.subr.bf16.mxu0 0
        %6173 = vmatpush1.bf16.msra.mxu0 0
        %6174 = vmatprep.mubr.bf16.mxu0 0
        %6175 = vmatmul.mubr.bf16.gmra.mrb[0].mxu0 %v4516
        %v6176 = vpop.f32.mrb[0].mxu0
        %v6177 = vadd.f32 0.0, %v6176
        %v6178 = vpop.f32.mrb[0].mxu0
        %v6179 = vadd.f32 0.0, %v6178
        %v6180 = vpop.f32.mrb[0].mxu0
        %v6181 = vpop.f32.mrb[0].mxu0
        %6182 = vdwg.mxu0
        %v6183 = vpack.c.bf16 %v6177, %v6177
        %v6184 = vpack.c.bf16 %v6179, %v6179
        %s6185 = scalar_lea.vmem %s11, 1280
        %v6186 = vld [vmem:[%s6185] sm:$0xff]
        %v6187 = vld [vmem:[%s6185 + $0x8] sm:$0xff]
        %v6188 = vld [vmem:[%s6185 + $0x10] sm:$0xff]
        %v6189 = vld [vmem:[%s6185 + $0x18] sm:$0xff]
        %v6190 = vld [vmem:[%s6185 + $0x20] sm:$0xff]
        %v6191 = vld [vmem:[%s6185 + $0x28] sm:$0xff]
        %v6192 = vld [vmem:[%s6185 + $0x30] sm:$0xff]
        %v6193 = vld [vmem:[%s6185 + $0x38] sm:$0xff]
        %v6194 = vld [vmem:[%s6185 + $0x40] sm:$0xff]
        %v6195 = vld [vmem:[%s6185 + $0x48] sm:$0xff]
        %v6196 = vld [vmem:[%s6185 + $0x50] sm:$0xff]
        %v6197 = vld [vmem:[%s6185 + $0x58] sm:$0xff]
        %v6198 = vld [vmem:[%s6185 + $0x60] sm:$0xff]
        %v6199 = vld [vmem:[%s6185 + $0x68] sm:$0xff]
        %v6200 = vld [vmem:[%s6185 + $0x70] sm:$0xff]
        %v6201 = vld [vmem:[%s6185 + $0x78] sm:$0xff]
        %v6202 = vld [vmem:[%s6185 + $0x80] sm:$0xff]
        %v6203 = vld [vmem:[%s6185 + $0x88] sm:$0xff]
        %v6204 = vld [vmem:[%s6185 + $0x90] sm:$0xff]
        %v6205 = vld [vmem:[%s6185 + $0x98] sm:$0xff]
        %v6206 = vld [vmem:[%s6185 + $0xa0] sm:$0xff]
        %v6207 = vld [vmem:[%s6185 + $0xa8] sm:$0xff]
        %v6208 = vld [vmem:[%s6185 + $0xb0] sm:$0xff]
        %v6209 = vld [vmem:[%s6185 + $0xb8] sm:$0xff]
        %v6210 = vld [vmem:[%s6185 + $0xc0] sm:$0xff]
        %v6211 = vld [vmem:[%s6185 + $0xc8] sm:$0xff]
        %v6212 = vld [vmem:[%s6185 + $0xd0] sm:$0xff]
        %v6213 = vld [vmem:[%s6185 + $0xd8] sm:$0xff]
        %v6214 = vld [vmem:[%s6185 + $0xe0] sm:$0xff]
        %v6215 = vld [vmem:[%s6185 + $0xe8] sm:$0xff]
        %v6216 = vld [vmem:[%s6185 + $0xf0] sm:$0xff]
        %v6217 = vld [vmem:[%s6185 + $0xf8] sm:$0xff]
        %v6250 = vunpack.c.l.b16 %v6186
        %v6251 = vunpack.c.h.b16 %v6186
        %v6252 = vunpack.c.l.b16 %v6187
        %v6253 = vunpack.c.h.b16 %v6187
        %v6254 = vunpack.c.l.b16 %v6188
        %v6255 = vunpack.c.h.b16 %v6188
        %v6256 = vunpack.c.l.b16 %v6189
        %v6257 = vunpack.c.h.b16 %v6189
        %v6258 = vunpack.c.l.b16 %v6190
        %v6259 = vunpack.c.h.b16 %v6190
        %v6260 = vunpack.c.l.b16 %v6191
        %v6261 = vunpack.c.h.b16 %v6191
        %v6262 = vunpack.c.l.b16 %v6192
        %v6263 = vunpack.c.h.b16 %v6192
        %v6264 = vunpack.c.l.b16 %v6193
        %v6265 = vunpack.c.h.b16 %v6193
        %v6266 = vunpack.c.l.b16 %v6194
        %v6267 = vunpack.c.h.b16 %v6194
        %v6268 = vunpack.c.l.b16 %v6195
        %v6269 = vunpack.c.h.b16 %v6195
        %v6270 = vunpack.c.l.b16 %v6196
        %v6271 = vunpack.c.h.b16 %v6196
        %v6272 = vunpack.c.l.b16 %v6197
        %v6273 = vunpack.c.h.b16 %v6197
        %v6274 = vunpack.c.l.b16 %v6198
        %v6275 = vunpack.c.h.b16 %v6198
        %v6276 = vunpack.c.l.b16 %v6199
        %v6277 = vunpack.c.h.b16 %v6199
        %v6278 = vunpack.c.l.b16 %v6200
        %v6279 = vunpack.c.h.b16 %v6200
        %v6280 = vunpack.c.l.b16 %v6201
        %v6281 = vunpack.c.h.b16 %v6201
        %v6282 = vunpack.c.l.b16 %v6202
        %v6283 = vunpack.c.h.b16 %v6202
        %v6284 = vunpack.c.l.b16 %v6203
        %v6285 = vunpack.c.h.b16 %v6203
        %v6286 = vunpack.c.l.b16 %v6204
        %v6287 = vunpack.c.h.b16 %v6204
        %v6288 = vunpack.c.l.b16 %v6205
        %v6289 = vunpack.c.h.b16 %v6205
        %v6290 = vunpack.c.l.b16 %v6206
        %v6291 = vunpack.c.h.b16 %v6206
        %v6292 = vunpack.c.l.b16 %v6207
        %v6293 = vunpack.c.h.b16 %v6207
        %v6294 = vunpack.c.l.b16 %v6208
        %v6295 = vunpack.c.h.b16 %v6208
        %v6296 = vunpack.c.l.b16 %v6209
        %v6297 = vunpack.c.h.b16 %v6209
        %v6298 = vunpack.c.l.b16 %v6210
        %v6299 = vunpack.c.h.b16 %v6210
        %v6300 = vunpack.c.l.b16 %v6211
        %v6301 = vunpack.c.h.b16 %v6211
        %v6302 = vunpack.c.l.b16 %v6212
        %v6303 = vunpack.c.h.b16 %v6212
        %v6304 = vunpack.c.l.b16 %v6213
        %v6305 = vunpack.c.h.b16 %v6213
        %v6306 = vunpack.c.l.b16 %v6214
        %v6307 = vunpack.c.h.b16 %v6214
        %v6308 = vunpack.c.l.b16 %v6215
        %v6309 = vunpack.c.h.b16 %v6215
        %v6310 = vunpack.c.l.b16 %v6216
        %v6311 = vunpack.c.h.b16 %v6216
        %v6312 = vunpack.c.l.b16 %v6217
        %v6313 = vunpack.c.h.b16 %v6217
        %v6314 = vpack.c.b16 %v6252, %v6250
        %v6315 = vpack.c.b16 %v6253, %v6251
        %v6316 = vpack.c.b16 %v6256, %v6254
        %v6317 = vpack.c.b16 %v6257, %v6255
        %v6318 = vpack.c.b16 %v6260, %v6258
        %v6319 = vpack.c.b16 %v6261, %v6259
        %v6320 = vpack.c.b16 %v6264, %v6262
        %v6321 = vpack.c.b16 %v6265, %v6263
        %v6322 = vpack.c.b16 %v6268, %v6266
        %v6323 = vpack.c.b16 %v6269, %v6267
        %v6324 = vpack.c.b16 %v6272, %v6270
        %v6325 = vpack.c.b16 %v6273, %v6271
        %v6326 = vpack.c.b16 %v6276, %v6274
        %v6327 = vpack.c.b16 %v6277, %v6275
        %v6328 = vpack.c.b16 %v6280, %v6278
        %v6329 = vpack.c.b16 %v6281, %v6279
        %v6330 = vpack.c.b16 %v6284, %v6282
        %v6331 = vpack.c.b16 %v6285, %v6283
        %v6332 = vpack.c.b16 %v6288, %v6286
        %v6333 = vpack.c.b16 %v6289, %v6287
        %v6334 = vpack.c.b16 %v6292, %v6290
        %v6335 = vpack.c.b16 %v6293, %v6291
        %v6336 = vpack.c.b16 %v6296, %v6294
        %v6337 = vpack.c.b16 %v6297, %v6295
        %v6338 = vpack.c.b16 %v6300, %v6298
        %v6339 = vpack.c.b16 %v6301, %v6299
        %v6340 = vpack.c.b16 %v6304, %v6302
        %v6341 = vpack.c.b16 %v6305, %v6303
        %v6342 = vpack.c.b16 %v6308, %v6306
        %v6343 = vpack.c.b16 %v6309, %v6307
        %v6344 = vpack.c.b16 %v6312, %v6310
        %v6345 = vpack.c.b16 %v6313, %v6311
        %6378 = vmatprep.subr.bf16.mxu0 %v6315
        %6379 = vmatpush1.bf16.msra.mxu0 %v6314
        %6380 = vmatprep.subr.bf16.mxu0 %v6317
        %6381 = vmatpush1.bf16.msra.mxu0 %v6316
        %6382 = vmatprep.subr.bf16.mxu0 %v6319
        %6383 = vmatpush1.bf16.msra.mxu0 %v6318
        %6384 = vmatprep.subr.bf16.mxu0 %v6321
        %6385 = vmatpush1.bf16.msra.mxu0 %v6320
        %6386 = vmatprep.subr.bf16.mxu0 %v6323
        %6387 = vmatpush1.bf16.msra.mxu0 %v6322
        %6388 = vmatprep.subr.bf16.mxu0 %v6325
        %6389 = vmatpush1.bf16.msra.mxu0 %v6324
        %6390 = vmatprep.subr.bf16.mxu0 %v6327
        %6391 = vmatpush1.bf16.msra.mxu0 %v6326
        %6392 = vmatprep.subr.bf16.mxu0 %v6329
        %6393 = vmatpush1.bf16.msra.mxu0 %v6328
        %6394 = vmatprep.subr.bf16.mxu0 %v6331
        %6395 = vmatpush1.bf16.msra.mxu0 %v6330
        %6396 = vmatprep.subr.bf16.mxu0 %v6333
        %6397 = vmatpush1.bf16.msra.mxu0 %v6332
        %6398 = vmatprep.subr.bf16.mxu0 %v6335
        %6399 = vmatpush1.bf16.msra.mxu0 %v6334
        %6400 = vmatprep.subr.bf16.mxu0 %v6337
        %6401 = vmatpush1.bf16.msra.mxu0 %v6336
        %6402 = vmatprep.subr.bf16.mxu0 %v6339
        %6403 = vmatpush1.bf16.msra.mxu0 %v6338
        %6404 = vmatprep.subr.bf16.mxu0 %v6341
        %6405 = vmatpush1.bf16.msra.mxu0 %v6340
        %6406 = vmatprep.subr.bf16.mxu0 %v6343
        %6407 = vmatpush1.bf16.msra.mxu0 %v6342
        %6408 = vmatprep.subr.bf16.mxu0 %v6345
        %6409 = vmatpush1.bf16.msra.mxu0 %v6344
        %6410 = vmatprep.mubr.bf16.mxu0 %v6184
        %6411 = vmatmul.mubr.bf16.gmra.mrb[0].mxu0 %v6183
        %v6412 = vpop.f32.mrb[0].mxu0
        %v6413 = vadd.f32 0.0, %v6412
        %v6414 = vpop.f32.mrb[0].mxu0
        %v6415 = vadd.f32 0.0, %v6414
        %v6416 = vpop.f32.mrb[0].mxu0
        %v6417 = vpop.f32.mrb[0].mxu0
        %6418 = vdwg.mxu0
        %v6419 = vadd.f32 %v6140, %v6413
        %v6420 = vadd.f32 %v6141, %v6415
        %vm6421 = vcmp.ge.f32.partialorder %v6419, 0.0
        %vm6422 = vcmp.ge.f32.partialorder %v6420, 0.0
        %s6423 = scalar_lea.vmem %s13, 16
        %v6424 = vld [vmem:[%s6423] sm:$0xff]
        %6426 = vset.pattern.permute.xlu0 0
        %6427 = vperm.xlu0 %6426, %v6424
        %v6428 = vpop.permute.xlu0 %6427
        %v6430 = vmul.f32 %v6428, %v6419
        %v6431 = vmul.f32 %v6428, %v6420
        %v6432 = vsel %vm6421, %v6419, %v6430
        %v6433 = vsel %vm6422, %v6420, %v6431
        %v6434 = vadd.f32 %v6432, %v5571
        %v6435 = vadd.f32 %v6433, %v5572
        %6436 = vst [vmem:[%s543] sm:$0xff] %v6434
        %6437 = vst [vmem:[%s543 + $0x8] sm:$0xff] %v6435
        %s6438 = sand.u32 %s340, 1
        %s6439 = scalar_lea.sflag [#allocation4], %s6438
        %s6440 = sand.u32 %s340, 1
        %s6441 = smul.addr %s6440, 16
        %s6442 = scalar_lea.vmem [#allocation11], %s6441
        // Predicated region
        $region97: #{tpu_custom_call.1} parent=75 // pred_check
          %p6443 = pneg %p350
        $region98: #{tpu_custom_call.1} parent=75 // pred_check_branch
          %6445 = sbr.rel (%p6443) target = $region100
        $region99: #{tpu_custom_call.1} parent=75 // pred_region
          %s6447 = ssub.s32 256, 256
          %6448 = vsyncadd %s6439, %s6447
          %s6449 = smul.addr %s33, 2
          %s6450 = smul.addr %s6449, 128
          %s6451 = scalar_lea.hbm %s14, %s6450
          %s6453 = sshll.u32 %s6442, 4
          %s6454 = int_to_ptr.vmem [resolvable:$true] %s6453
          %6456 = dma.vmem_to_hbm [thread:$0]  %s6454, 256, %s6451, %s6439
        $region100: #{tpu_custom_call.1} parent=75 // pred_fallthru
          _
      $region76: #{tpu_custom_call.1} parent=5 // pred_fallthru
        _
      %p6457 = scmp.le.s32.totalorder 2, %s28
      // Predicated region
      $region101: #{tpu_custom_call.1} parent=5 // pred_check
        %p6458 = pneg %p6457
      $region102: #{tpu_custom_call.1} parent=5 // pred_check_branch
        %6460 = sbr.rel (%p6458) target = $region104
      $region103: #{tpu_custom_call.1} parent=5 // pred_region
        %s6461 = ssub.s32 %s28, 2
        // Predicated region
        $region105: #{tpu_custom_call.1} parent=103 // pred_check
          %p6462 = pneg %p356
        $region106: #{tpu_custom_call.1} parent=103 // pred_check_branch
          %6464 = sbr.rel (%p6462) target = $region108
        $region107: #{tpu_custom_call.1} parent=103 // pred_region
          %s6465 = sand.u32 %s341, 1
          %s6466 = scalar_lea.sflag [#allocation4], %s6465
          %s6467 = sand.u32 %s341, 1
          %s6468 = smul.addr %s6467, 16
          %s6469 = scalar_lea.vmem [#allocation11], %s6468
          %6470 = dma.done %s6466, 256
        $region108: #{tpu_custom_call.1} parent=103 // pred_fallthru
          _
      $region104: #{tpu_custom_call.1} parent=5 // pred_fallthru
        _
    $region6: #{tpu_custom_call.1} parent=1 // loop_footer
      %s32 = sadd.s32 1, %s28
    $region7: #{tpu_custom_call.1} parent=1 // loop_footer_branch
      %27 = sbr.rel target = $region3
    $region8: #{tpu_custom_call.1} parent=1 // loop_exit
      _
    %6471 = vsyncpa [#allocation3], 1
    %s6472 = scalar_lea.sflag [#allocation3], 1
    %6473 = vsyncpa %s6472, 1
    %6474 = vsyncpa [#allocation6], 1
    %6475 = vsyncpa [#allocation9], 1
    %6476 = vsyncpa [#allocation4], 1
    %s6477 = scalar_lea.sflag [#allocation4], 1
    %6478 = vsyncpa %s6477, 1

</llo_original>
